<compile_context>
chip_gen: v6e
topology: v6e:2x2x1
jax: 0.10.0
libtpu: 0.0.40
codegen_flags: <defaults>
</compile_context>

<pallas_src>
import math
from functools import partial

import numpy as np
import jax
import jax.numpy as jnp
from jax.experimental import pallas as pl
from jax.experimental.pallas import tpu as pltpu

# ----- fixed hyper-parameters (from BasicNet4.__init__) ----------------------
INPUT_DIM = 512
NUM_HEADS = 4
HEAD_DIM = INPUT_DIM // NUM_HEADS        # 128
FFN_DIM = 128
NUM_LAYERS = 4
SEGMENT_LENGTH = 4
RIGHT_CONTEXT_LENGTH = 1
NEG_INF = -1e8                           # torchaudio default negative_inf
SCALING = HEAD_DIM ** -0.5
LN_EPS = 1e-5

PARAM_ORDER = ("ln_in_g", "ln_in_b", "wq", "bq", "wkv", "bkv", "wo", "bo",
               "ln_ff_g", "ln_ff_b", "w1", "b1", "w2", "b2",
               "ln_out_g", "ln_out_b")


# ============================ fused Pallas kernel =============================

def _layer_norm(x, g, b):
    # PyTorch LayerNorm semantics: biased variance, eps=1e-5.
    mean = jnp.mean(x, axis=-1, keepdims=True)
    var = jnp.mean(jnp.square(x - mean), axis=-1, keepdims=True)
    return (x - mean) * jax.lax.rsqrt(var + LN_EPS) * g + b


def _fused_emformer_kernel(tokens_ref, mask_ref,
                           ln_in_g_ref, ln_in_b_ref, wq_ref, bq_ref,
                           wkv_ref, bkv_ref, wo_ref, bo_ref,
                           ln_ff_g_ref, ln_ff_b_ref, w1_ref, b1_ref,
                           w2_ref, b2_ref, ln_out_g_ref, ln_out_b_ref,
                           out_ref,
                           tok_ref, q_scr, k_scr, v_scr, attn_scr,
                           *, batch, tq, rc):
    """One grid step == one Emformer layer. Token state lives in tok_ref."""
    layer = pl.program_id(0)
    d = INPUT_DIM

    # Load the [right_context; utterance] tokens into resident VMEM scratch.
    @pl.when(layer == 0)
    def _init():
        tok_ref[...] = tokens_ref[...]

    z = tok_ref[...]                                         # (B*TQ, 512) f32

    # ---- multi-head self-attention (pre-LN) ---------------------------------
    ln = _layer_norm(z, ln_in_g_ref[...], ln_in_b_ref[...])
    q_scr[...] = (jnp.dot(ln, wq_ref[...], preferred_element_type=jnp.float32)
                  + bq_ref[...]) * SCALING
    kv = jnp.dot(ln, wkv_ref[...], preferred_element_type=jnp.float32) + bkv_ref[...]
    k_scr[...] = kv[:, :d]
    v_scr[...] = kv[:, d:]

    bias = mask_ref[...]                                     # (TQ, TQ) additive mask
    for b in range(batch):                                   # static unroll: B*H = 8
        r0 = b * tq
        for h in range(NUM_HEADS):
            c0 = h * HEAD_DIM
            qh = q_scr[r0:r0 + tq, c0:c0 + HEAD_DIM]         # (TQ, 128)
            kh = k_scr[r0:r0 + tq, c0:c0 + HEAD_DIM]
            vh = v_scr[r0:r0 + tq, c0:c0 + HEAD_DIM]
            s = jax.lax.dot_general(qh, kh, (((1,), (1,)), ((), ())),
                                    preferred_element_type=jnp.float32) + bias
            m = jnp.max(s, axis=-1, keepdims=True)
            e = jnp.exp(s - m)
            p = e * pl.reciprocal(jnp.sum(e, axis=-1, keepdims=True), approx=True)
            attn_scr[r0:r0 + tq, c0:c0 + HEAD_DIM] = jnp.dot(
                p, vh, preferred_element_type=jnp.float32)

    rc_out = jnp.dot(attn_scr[...], wo_ref[...],
                     preferred_element_type=jnp.float32) + bo_ref[...]

    # ---- residual + position-wise FFN + output LayerNorm --------------------
    res1 = rc_out + z                                        # dropout p=0 -> identity
    ff = _layer_norm(res1, ln_ff_g_ref[...], ln_ff_b_ref[...])
    ff = jnp.maximum(jnp.dot(ff, w1_ref[...], preferred_element_type=jnp.float32)
                     + b1_ref[...], 0.0)
    ff = jnp.dot(ff, w2_ref[...], preferred_element_type=jnp.float32) + b2_ref[...]
    res2 = ff + res1
    z_new = _layer_norm(res2, ln_out_g_ref[...], ln_out_b_ref[...])
    tok_ref[...] = z_new                                     # carried to next layer

    # ---- last layer: per-batch mean over utterance time -> (B, 512) ---------
    @pl.when(layer == NUM_LAYERS - 1)
    def _finish():
        for b in range(batch):
            utt = tok_ref[b * tq + rc:(b + 1) * tq, :]       # (U, 512)
            out_ref[b:b + 1, :] = jnp.mean(utt, axis=0, keepdims=True)


# =========================== host-side glue (trace time) =====================

def _right_context_time_indices(t_in):
    """Time indices picked by torchaudio Emformer._gen_right_context."""
    r = RIGHT_CONTEXT_LENGTH
    u = t_in - r
    num_segs = math.ceil(u / SEGMENT_LENGTH)
    idx = []
    for seg in range(num_segs - 1):
        start = (seg + 1) * SEGMENT_LENGTH
        idx.extend(range(start, start + r))
    idx.extend(range(t_in - r, t_in))
    return idx


def _build_attention_mask_bias(u):
    """torchaudio _gen_attention_mask (use_mem=False, left_context=0) as an
    additive bias: 0.0 where attention is allowed, NEG_INF where disallowed."""
    r = RIGHT_CONTEXT_LENGTH
    num_segs = math.ceil(u / SEGMENT_LENGTH)
    rc_length = r * num_segs
    col_mask = (False, True, False, False, True, False)

    def block(col_widths, num_rows):
        cols = [np.ones((num_rows, w)) if allowed else np.zeros((num_rows, w))
                for w, allowed in zip(col_widths, col_mask)]
        return np.concatenate(cols, axis=1)

    rc_blocks, q_blocks = [], []
    for seg in range(num_segs):
        rc_start = seg * r
        rc_end = rc_start + r
        seg_start = max(seg * SEGMENT_LENGTH, 0)
        seg_end = min((seg + 1) * SEGMENT_LENGTH, u)
        col_widths = [rc_start, r, rc_length - rc_end,
                      seg_start, seg_end - seg_start, u - seg_end]
        rc_blocks.append(block(col_widths, r))
        q_blocks.append(block(col_widths,
                              min(SEGMENT_LENGTH, u - seg * SEGMENT_LENGTH)))
    allowed = np.concatenate([np.concatenate(rc_blocks, axis=0),
                              np.concatenate(q_blocks, axis=0)], axis=0)
    return np.where(allowed > 0.5, 0.0, NEG_INF).astype(np.float32)


@jax.jit
def basic_net4_forward(x, params):
    """x: (B, T_in, 512) with T_in = T + right_context_length. Returns (B, 512)."""
    batch, t_in, d = x.shape
    assert d == INPUT_DIM
    u = t_in - RIGHT_CONTEXT_LENGTH
    num_segs = math.ceil(u / SEGMENT_LENGTH)
    rc_len = RIGHT_CONTEXT_LENGTH * num_segs
    tq = rc_len + u
    n_tok = batch * tq

    # Single tiny host-side gather: per batch, rows = [right_context; utterance].
    time_idx = np.array(_right_context_time_indices(t_in) + list(range(u)), np.int32)
    tokens = x[:, time_idx, :].reshape(n_tok, INPUT_DIM)

    mask_bias = jnp.asarray(_build_attention_mask_bias(u))           # (TQ, TQ)

    stacked = [params[name] for name in PARAM_ORDER]                 # each (L, r, c)

    def stacked_spec(arr):
        _, rr, cc = arr.shape
        return pl.BlockSpec((None, rr, cc), lambda l: (l, 0, 0))

    kernel = partial(_fused_emformer_kernel, batch=batch, tq=tq, rc=rc_len)

    return pl.pallas_call(
        kernel,
        out_shape=jax.ShapeDtypeStruct((batch, INPUT_DIM), jnp.float32),
        grid=(NUM_LAYERS,),
        in_specs=[pl.BlockSpec((n_tok, INPUT_DIM), lambda l: (0, 0)),
                  pl.BlockSpec((tq, tq), lambda l: (0, 0))]
                 + [stacked_spec(a) for a in stacked],
        out_specs=pl.BlockSpec((batch, INPUT_DIM), lambda l: (0, 0)),
        scratch_shapes=[pltpu.VMEM((n_tok, INPUT_DIM), jnp.float32),   # token state
                        pltpu.VMEM((n_tok, INPUT_DIM), jnp.float32),   # q
                        pltpu.VMEM((n_tok, INPUT_DIM), jnp.float32),   # k
                        pltpu.VMEM((n_tok, INPUT_DIM), jnp.float32),   # v
                        pltpu.VMEM((n_tok, INPUT_DIM), jnp.float32)],  # attn out
        compiler_params=pltpu.CompilerParams(
            dimension_semantics=("arbitrary",)),   # layers are sequential
    )(tokens, mask_bias, *stacked)


# ================================ parameters =================================

def init_params(key):
    k = jax.random.split(key, 5)
    s_in = 1.0 / math.sqrt(INPUT_DIM)
    s_ff = 1.0 / math.sqrt(FFN_DIM)
    L, D, F = NUM_LAYERS, INPUT_DIM, FFN_DIM
    return dict(
        ln_in_g=jnp.ones((L, 1, D), jnp.float32),
        ln_in_b=jnp.zeros((L, 1, D), jnp.float32),
        wq=jax.random.normal(k[0], (L, D, D), jnp.float32) * s_in,
        bq=jnp.zeros((L, 1, D), jnp.float32),
        wkv=jax.random.normal(k[1], (L, D, 2 * D), jnp.float32) * s_in,
        bkv=jnp.zeros((L, 1, 2 * D), jnp.float32),
        wo=jax.random.normal(k[2], (L, D, D), jnp.float32) * s_in,
        bo=jnp.zeros((L, 1, D), jnp.float32),
        ln_ff_g=jnp.ones((L, 1, D), jnp.float32),
        ln_ff_b=jnp.zeros((L, 1, D), jnp.float32),
        w1=jax.random.normal(k[3], (L, D, F), jnp.float32) * s_in,
        b1=jnp.zeros((L, 1, F), jnp.float32),
        w2=jax.random.normal(k[4], (L, F, D), jnp.float32) * s_ff,
        b2=jnp.zeros((L, 1, D), jnp.float32),
        ln_out_g=jnp.ones((L, 1, D), jnp.float32),
        ln_out_b=jnp.zeros((L, 1, D), jnp.float32),
    )


# =================================== main ====================================

if __name__ == "__main__":
    B = 2
    NUM_SEGMENTS = 2
    T_IN = NUM_SEGMENTS * SEGMENT_LENGTH + RIGHT_CONTEXT_LENGTH   # 9

    x = jax.random.normal(jax.random.PRNGKey(0), (B, T_IN, INPUT_DIM),
                          dtype=jnp.float32)
    params = init_params(jax.random.PRNGKey(1))

    out = jax.block_until_ready(basic_net4_forward(x, params))

    assert out.shape == (B, INPUT_DIM), out.shape
    assert bool(jnp.all(jnp.isfinite(out)))
    print("KERNEL_OK")
</pallas_src>

<mosaic_0001>
module attributes {stable_mosaic.version = 11 : i64} {
  func.func @_fused_emformer_kernel(%arg0: i32, %arg1: memref<20x512xf32, #tpu.memory_space<vmem>>, %arg2: memref<10x10xf32, #tpu.memory_space<vmem>>, %arg3: memref<1x1x512xf32, #tpu.memory_space<vmem>>, %arg4: memref<1x1x512xf32, #tpu.memory_space<vmem>>, %arg5: memref<1x512x512xf32, #tpu.memory_space<vmem>>, %arg6: memref<1x1x512xf32, #tpu.memory_space<vmem>>, %arg7: memref<1x512x1024xf32, #tpu.memory_space<vmem>>, %arg8: memref<1x1x1024xf32, #tpu.memory_space<vmem>>, %arg9: memref<1x512x512xf32, #tpu.memory_space<vmem>>, %arg10: memref<1x1x512xf32, #tpu.memory_space<vmem>>, %arg11: memref<1x1x512xf32, #tpu.memory_space<vmem>>, %arg12: memref<1x1x512xf32, #tpu.memory_space<vmem>>, %arg13: memref<1x512x128xf32, #tpu.memory_space<vmem>>, %arg14: memref<1x1x128xf32, #tpu.memory_space<vmem>>, %arg15: memref<1x128x512xf32, #tpu.memory_space<vmem>>, %arg16: memref<1x1x512xf32, #tpu.memory_space<vmem>>, %arg17: memref<1x1x512xf32, #tpu.memory_space<vmem>>, %arg18: memref<1x1x512xf32, #tpu.memory_space<vmem>>, %arg19: memref<2x512xf32, #tpu.memory_space<vmem>>, %arg20: memref<20x512xf32, #tpu.memory_space<vmem>>, %arg21: memref<20x512xf32, #tpu.memory_space<vmem>>, %arg22: memref<20x512xf32, #tpu.memory_space<vmem>>, %arg23: memref<20x512xf32, #tpu.memory_space<vmem>>, %arg24: memref<20x512xf32, #tpu.memory_space<vmem>>) attributes {dimension_semantics = [#tpu.dimension_semantics<arbitrary>], iteration_bounds = array<i64: 4>, scalar_prefetch = 0 : i64, scratch_operands = 5 : i64, tpu.core_type = #tpu.core_type<tc>, window_params = [{pipeline_mode = #tpu.pipeline_mode<synchronous>, transform_indices = @transform_0, window_bounds = array<i64: 20, 512>}, {pipeline_mode = #tpu.pipeline_mode<synchronous>, transform_indices = @transform_1, window_bounds = array<i64: 10, 10>}, {transform_indices = @transform_2, window_bounds = array<i64: 1, 1, 512>}, {transform_indices = @transform_3, window_bounds = array<i64: 1, 1, 512>}, {transform_indices = @transform_4, window_bounds = array<i64: 1, 512, 512>}, {transform_indices = @transform_5, window_bounds = array<i64: 1, 1, 512>}, {transform_indices = @transform_6, window_bounds = array<i64: 1, 512, 1024>}, {transform_indices = @transform_7, window_bounds = array<i64: 1, 1, 1024>}, {transform_indices = @transform_8, window_bounds = array<i64: 1, 512, 512>}, {transform_indices = @transform_9, window_bounds = array<i64: 1, 1, 512>}, {transform_indices = @transform_10, window_bounds = array<i64: 1, 1, 512>}, {transform_indices = @transform_11, window_bounds = array<i64: 1, 1, 512>}, {transform_indices = @transform_12, window_bounds = array<i64: 1, 512, 128>}, {transform_indices = @transform_13, window_bounds = array<i64: 1, 1, 128>}, {transform_indices = @transform_14, window_bounds = array<i64: 1, 128, 512>}, {transform_indices = @transform_15, window_bounds = array<i64: 1, 1, 512>}, {transform_indices = @transform_16, window_bounds = array<i64: 1, 1, 512>}, {transform_indices = @transform_17, window_bounds = array<i64: 1, 1, 512>}, {pipeline_mode = #tpu.pipeline_mode<synchronous>, transform_indices = @transform_18, window_bounds = array<i64: 2, 512>}]} {
    %c0_i32 = arith.constant 0 : i32
    %0 = arith.cmpi eq, %arg0, %c0_i32 : i32
    %1 = arith.extui %0 : i1 to i32
    %c0_i32_0 = arith.constant 0 : i32
    %2 = arith.cmpi ne, %1, %c0_i32_0 : i32
    scf.if %2 {
      %c0_176 = arith.constant 0 : index
      %c0_177 = arith.constant 0 : index
      %270 = vector.load %arg1[%c0_176, %c0_177] : memref<20x512xf32, #tpu.memory_space<vmem>>, vector<20x512xf32>
      %c0_178 = arith.constant 0 : index
      %c0_179 = arith.constant 0 : index
      %271 = vector.load %arg20[%c0_178, %c0_179] : memref<20x512xf32, #tpu.memory_space<vmem>>, vector<20x512xf32>
      tpu.vector_store %arg20[%c0_178, %c0_179], %270 {strides = array<i32>} : memref<20x512xf32, #tpu.memory_space<vmem>>, vector<20x512xf32>,
    } else {
    }
    %c0 = arith.constant 0 : index
    %c0_1 = arith.constant 0 : index
    %3 = vector.load %arg20[%c0, %c0_1] : memref<20x512xf32, #tpu.memory_space<vmem>>, vector<20x512xf32>
    %c0_2 = arith.constant 0 : index
    %c0_3 = arith.constant 0 : index
    %c0_4 = arith.constant 0 : index
    %4 = vector.load %arg3[%c0_2, %c0_3, %c0_4] : memref<1x1x512xf32, #tpu.memory_space<vmem>>, vector<1x1x512xf32>
    %5 = vector.shape_cast %4 : vector<1x1x512xf32> to vector<1x512xf32>
    %c0_5 = arith.constant 0 : index
    %c0_6 = arith.constant 0 : index
    %c0_7 = arith.constant 0 : index
    %6 = vector.load %arg4[%c0_5, %c0_6, %c0_7] : memref<1x1x512xf32, #tpu.memory_space<vmem>>, vector<1x1x512xf32>
    %7 = vector.shape_cast %6 : vector<1x1x512xf32> to vector<1x512xf32>
    %cst = arith.constant dense<0.000000e+00> : vector<20xf32>
    %8 = vector.multi_reduction <add>, %3, %cst [1] : vector<20x512xf32> to vector<20xf32>
    %9 = vector.shape_cast %8 : vector<20xf32> to vector<20x1xf32>
    %cst_8 = arith.constant 5.120000e+02 : f32
    %10 = vector.broadcast %cst_8 : f32 to vector<20x1xf32>
    %11 = arith.divf %9, %10 : vector<20x1xf32>
    %12 = vector.broadcast %11 : vector<20x1xf32> to vector<20x512xf32>
    %13 = arith.subf %3, %12 : vector<20x512xf32>
    %14 = arith.mulf %13, %13 : vector<20x512xf32>
    %cst_9 = arith.constant dense<0.000000e+00> : vector<20xf32>
    %15 = vector.multi_reduction <add>, %14, %cst_9 [1] : vector<20x512xf32> to vector<20xf32>
    %16 = vector.shape_cast %15 : vector<20xf32> to vector<20x1xf32>
    %cst_10 = arith.constant 5.120000e+02 : f32
    %17 = vector.broadcast %cst_10 : f32 to vector<20x1xf32>
    %18 = arith.divf %16, %17 : vector<20x1xf32>
    %19 = vector.broadcast %11 : vector<20x1xf32> to vector<20x512xf32>
    %20 = arith.subf %3, %19 : vector<20x512xf32>
    %cst_11 = arith.constant 9.99999974E-6 : f32
    %21 = vector.broadcast %cst_11 : f32 to vector<20x1xf32>
    %22 = arith.addf %18, %21 : vector<20x1xf32>
    %23 = math.rsqrt %22 : vector<20x1xf32>
    %24 = vector.broadcast %23 : vector<20x1xf32> to vector<20x512xf32>
    %25 = arith.mulf %20, %24 : vector<20x512xf32>
    %26 = vector.broadcast %5 : vector<1x512xf32> to vector<20x512xf32>
    %27 = arith.mulf %25, %26 : vector<20x512xf32>
    %28 = vector.broadcast %7 : vector<1x512xf32> to vector<20x512xf32>
    %29 = arith.addf %27, %28 : vector<20x512xf32>
    %c0_12 = arith.constant 0 : index
    %c0_13 = arith.constant 0 : index
    %c0_14 = arith.constant 0 : index
    %30 = vector.load %arg5[%c0_12, %c0_13, %c0_14] : memref<1x512x512xf32, #tpu.memory_space<vmem>>, vector<1x512x512xf32>
    %31 = vector.shape_cast %30 : vector<1x512x512xf32> to vector<512x512xf32>
    %cst_15 = arith.constant dense<0.000000e+00> : vector<20x512xf32>
    %32 = tpu.matmul %29, %31, %cst_15 {dimension_numbers = #tpu.dot_dimension_numbers<[1], [0], [0], [1], [0, 0, 1, 1], [], []>} : vector<20x512xf32>, vector<512x512xf32>, vector<20x512xf32> -> vector<20x512xf32>
    %c0_16 = arith.constant 0 : index
    %c0_17 = arith.constant 0 : index
    %c0_18 = arith.constant 0 : index
    %33 = vector.load %arg6[%c0_16, %c0_17, %c0_18] : memref<1x1x512xf32, #tpu.memory_space<vmem>>, vector<1x1x512xf32>
    %34 = vector.shape_cast %33 : vector<1x1x512xf32> to vector<1x512xf32>
    %35 = vector.broadcast %34 : vector<1x512xf32> to vector<20x512xf32>
    %36 = arith.addf %32, %35 : vector<20x512xf32>
    %cst_19 = arith.constant 0.0883883461 : f32
    %37 = vector.broadcast %cst_19 : f32 to vector<20x512xf32>
    %38 = arith.mulf %36, %37 : vector<20x512xf32>
    %c0_20 = arith.constant 0 : index
    %c0_21 = arith.constant 0 : index
    %39 = vector.load %arg21[%c0_20, %c0_21] : memref<20x512xf32, #tpu.memory_space<vmem>>, vector<20x512xf32>
    tpu.vector_store %arg21[%c0_20, %c0_21], %38 {strides = array<i32>} : memref<20x512xf32, #tpu.memory_space<vmem>>, vector<20x512xf32>,
    %c0_22 = arith.constant 0 : index
    %c0_23 = arith.constant 0 : index
    %c0_24 = arith.constant 0 : index
    %40 = vector.load %arg7[%c0_22, %c0_23, %c0_24] : memref<1x512x1024xf32, #tpu.memory_space<vmem>>, vector<1x512x1024xf32>
    %41 = vector.shape_cast %40 : vector<1x512x1024xf32> to vector<512x1024xf32>
    %cst_25 = arith.constant dense<0.000000e+00> : vector<20x1024xf32>
    %42 = tpu.matmul %29, %41, %cst_25 {dimension_numbers = #tpu.dot_dimension_numbers<[1], [0], [0], [1], [0, 0, 1, 1], [], []>} : vector<20x512xf32>, vector<512x1024xf32>, vector<20x1024xf32> -> vector<20x1024xf32>
    %c0_26 = arith.constant 0 : index
    %c0_27 = arith.constant 0 : index
    %c0_28 = arith.constant 0 : index
    %43 = vector.load %arg8[%c0_26, %c0_27, %c0_28] : memref<1x1x1024xf32, #tpu.memory_space<vmem>>, vector<1x1x1024xf32>
    %44 = vector.shape_cast %43 : vector<1x1x1024xf32> to vector<1x1024xf32>
    %45 = vector.broadcast %44 : vector<1x1024xf32> to vector<20x1024xf32>
    %46 = arith.addf %42, %45 : vector<20x1024xf32>
    %47 = vector.extract_strided_slice %46 {offsets = [0, 0], sizes = [20, 512], strides = [1, 1]} : vector<20x1024xf32> to vector<20x512xf32>
    %c0_29 = arith.constant 0 : index
    %c0_30 = arith.constant 0 : index
    %48 = vector.load %arg22[%c0_29, %c0_30] : memref<20x512xf32, #tpu.memory_space<vmem>>, vector<20x512xf32>
    tpu.vector_store %arg22[%c0_29, %c0_30], %47 {strides = array<i32>} : memref<20x512xf32, #tpu.memory_space<vmem>>, vector<20x512xf32>,
    %49 = vector.extract_strided_slice %46 {offsets = [0, 512], sizes = [20, 512], strides = [1, 1]} : vector<20x1024xf32> to vector<20x512xf32>
    %c0_31 = arith.constant 0 : index
    %c0_32 = arith.constant 0 : index
    %50 = vector.load %arg23[%c0_31, %c0_32] : memref<20x512xf32, #tpu.memory_space<vmem>>, vector<20x512xf32>
    tpu.vector_store %arg23[%c0_31, %c0_32], %49 {strides = array<i32>} : memref<20x512xf32, #tpu.memory_space<vmem>>, vector<20x512xf32>,
    %c0_33 = arith.constant 0 : index
    %c0_34 = arith.constant 0 : index
    %51 = vector.load %arg2[%c0_33, %c0_34] : memref<10x10xf32, #tpu.memory_space<vmem>>, vector<10x10xf32>
    %c0_35 = arith.constant 0 : index
    %c0_36 = arith.constant 0 : index
    %52 = vector.load %arg21[%c0_35, %c0_36] : memref<20x512xf32, #tpu.memory_space<vmem>>, vector<10x128xf32>
    %c0_37 = arith.constant 0 : index
    %c0_38 = arith.constant 0 : index
    %53 = vector.load %arg22[%c0_37, %c0_38] : memref<20x512xf32, #tpu.memory_space<vmem>>, vector<10x128xf32>
    %c0_39 = arith.constant 0 : index
    %c0_40 = arith.constant 0 : index
    %54 = vector.load %arg23[%c0_39, %c0_40] : memref<20x512xf32, #tpu.memory_space<vmem>>, vector<10x128xf32>
    %cst_41 = arith.constant dense<0.000000e+00> : vector<10x10xf32>
    %55 = tpu.matmul %52, %53, %cst_41 {dimension_numbers = #tpu.dot_dimension_numbers<[1], [1], [0], [0], [0, 0, 1, 0], [], []>} : vector<10x128xf32>, vector<10x128xf32>, vector<10x10xf32> -> vector<10x10xf32>
    %56 = arith.addf %55, %51 : vector<10x10xf32>
    %cst_42 = arith.constant dense<0xFF800000> : vector<10xf32>
    %57 = vector.multi_reduction <maximumf>, %56, %cst_42 [1] : vector<10x10xf32> to vector<10xf32>
    %58 = vector.shape_cast %57 : vector<10xf32> to vector<10x1xf32>
    %59 = vector.broadcast %58 : vector<10x1xf32> to vector<10x10xf32>
    %60 = arith.subf %56, %59 : vector<10x10xf32>
    %61 = math.exp %60 : vector<10x10xf32>
    %cst_43 = arith.constant dense<0.000000e+00> : vector<10xf32>
    %62 = vector.multi_reduction <add>, %61, %cst_43 [1] : vector<10x10xf32> to vector<10xf32>
    %63 = vector.shape_cast %62 : vector<10xf32> to vector<10x1xf32>
    %64 = tpu.reciprocal %63 {approx = true} : vector<10x1xf32> -> vector<10x1xf32>
    %65 = vector.broadcast %64 : vector<10x1xf32> to vector<10x10xf32>
    %66 = arith.mulf %61, %65 : vector<10x10xf32>
    %cst_44 = arith.constant dense<0.000000e+00> : vector<10x128xf32>
    %67 = tpu.matmul %66, %54, %cst_44 {dimension_numbers = #tpu.dot_dimension_numbers<[1], [0], [0], [1], [0, 0, 1, 1], [], []>} : vector<10x10xf32>, vector<10x128xf32>, vector<10x128xf32> -> vector<10x128xf32>
    %c0_45 = arith.constant 0 : index
    %c0_46 = arith.constant 0 : index
    %68 = vector.load %arg24[%c0_45, %c0_46] : memref<20x512xf32, #tpu.memory_space<vmem>>, vector<10x128xf32>
    tpu.vector_store %arg24[%c0_45, %c0_46], %67 {strides = array<i32>} : memref<20x512xf32, #tpu.memory_space<vmem>>, vector<10x128xf32>,
    %c0_47 = arith.constant 0 : index
    %c128 = arith.constant 128 : index
    %69 = vector.load %arg21[%c0_47, %c128] : memref<20x512xf32, #tpu.memory_space<vmem>>, vector<10x128xf32>
    %c0_48 = arith.constant 0 : index
    %c128_49 = arith.constant 128 : index
    %70 = vector.load %arg22[%c0_48, %c128_49] : memref<20x512xf32, #tpu.memory_space<vmem>>, vector<10x128xf32>
    %c0_50 = arith.constant 0 : index
    %c128_51 = arith.constant 128 : index
    %71 = vector.load %arg23[%c0_50, %c128_51] : memref<20x512xf32, #tpu.memory_space<vmem>>, vector<10x128xf32>
    %cst_52 = arith.constant dense<0.000000e+00> : vector<10x10xf32>
    %72 = tpu.matmul %69, %70, %cst_52 {dimension_numbers = #tpu.dot_dimension_numbers<[1], [1], [0], [0], [0, 0, 1, 0], [], []>} : vector<10x128xf32>, vector<10x128xf32>, vector<10x10xf32> -> vector<10x10xf32>
    %73 = arith.addf %72, %51 : vector<10x10xf32>
    %cst_53 = arith.constant dense<0xFF800000> : vector<10xf32>
    %74 = vector.multi_reduction <maximumf>, %73, %cst_53 [1] : vector<10x10xf32> to vector<10xf32>
    %75 = vector.shape_cast %74 : vector<10xf32> to vector<10x1xf32>
    %76 = vector.broadcast %75 : vector<10x1xf32> to vector<10x10xf32>
    %77 = arith.subf %73, %76 : vector<10x10xf32>
    %78 = math.exp %77 : vector<10x10xf32>
    %cst_54 = arith.constant dense<0.000000e+00> : vector<10xf32>
    %79 = vector.multi_reduction <add>, %78, %cst_54 [1] : vector<10x10xf32> to vector<10xf32>
    %80 = vector.shape_cast %79 : vector<10xf32> to vector<10x1xf32>
    %81 = tpu.reciprocal %80 {approx = true} : vector<10x1xf32> -> vector<10x1xf32>
    %82 = vector.broadcast %81 : vector<10x1xf32> to vector<10x10xf32>
    %83 = arith.mulf %78, %82 : vector<10x10xf32>
    %cst_55 = arith.constant dense<0.000000e+00> : vector<10x128xf32>
    %84 = tpu.matmul %83, %71, %cst_55 {dimension_numbers = #tpu.dot_dimension_numbers<[1], [0], [0], [1], [0, 0, 1, 1], [], []>} : vector<10x10xf32>, vector<10x128xf32>, vector<10x128xf32> -> vector<10x128xf32>
    %c0_56 = arith.constant 0 : index
    %c128_57 = arith.constant 128 : index
    %85 = vector.load %arg24[%c0_56, %c128_57] : memref<20x512xf32, #tpu.memory_space<vmem>>, vector<10x128xf32>
    tpu.vector_store %arg24[%c0_56, %c128_57], %84 {strides = array<i32>} : memref<20x512xf32, #tpu.memory_space<vmem>>, vector<10x128xf32>,
    %c0_58 = arith.constant 0 : index
    %c256 = arith.constant 256 : index
    %86 = vector.load %arg21[%c0_58, %c256] : memref<20x512xf32, #tpu.memory_space<vmem>>, vector<10x128xf32>
    %c0_59 = arith.constant 0 : index
    %c256_60 = arith.constant 256 : index
    %87 = vector.load %arg22[%c0_59, %c256_60] : memref<20x512xf32, #tpu.memory_space<vmem>>, vector<10x128xf32>
    %c0_61 = arith.constant 0 : index
    %c256_62 = arith.constant 256 : index
    %88 = vector.load %arg23[%c0_61, %c256_62] : memref<20x512xf32, #tpu.memory_space<vmem>>, vector<10x128xf32>
    %cst_63 = arith.constant dense<0.000000e+00> : vector<10x10xf32>
    %89 = tpu.matmul %86, %87, %cst_63 {dimension_numbers = #tpu.dot_dimension_numbers<[1], [1], [0], [0], [0, 0, 1, 0], [], []>} : vector<10x128xf32>, vector<10x128xf32>, vector<10x10xf32> -> vector<10x10xf32>
    %90 = arith.addf %89, %51 : vector<10x10xf32>
    %cst_64 = arith.constant dense<0xFF800000> : vector<10xf32>
    %91 = vector.multi_reduction <maximumf>, %90, %cst_64 [1] : vector<10x10xf32> to vector<10xf32>
    %92 = vector.shape_cast %91 : vector<10xf32> to vector<10x1xf32>
    %93 = vector.broadcast %92 : vector<10x1xf32> to vector<10x10xf32>
    %94 = arith.subf %90, %93 : vector<10x10xf32>
    %95 = math.exp %94 : vector<10x10xf32>
    %cst_65 = arith.constant dense<0.000000e+00> : vector<10xf32>
    %96 = vector.multi_reduction <add>, %95, %cst_65 [1] : vector<10x10xf32> to vector<10xf32>
    %97 = vector.shape_cast %96 : vector<10xf32> to vector<10x1xf32>
    %98 = tpu.reciprocal %97 {approx = true} : vector<10x1xf32> -> vector<10x1xf32>
    %99 = vector.broadcast %98 : vector<10x1xf32> to vector<10x10xf32>
    %100 = arith.mulf %95, %99 : vector<10x10xf32>
    %cst_66 = arith.constant dense<0.000000e+00> : vector<10x128xf32>
    %101 = tpu.matmul %100, %88, %cst_66 {dimension_numbers = #tpu.dot_dimension_numbers<[1], [0], [0], [1], [0, 0, 1, 1], [], []>} : vector<10x10xf32>, vector<10x128xf32>, vector<10x128xf32> -> vector<10x128xf32>
    %c0_67 = arith.constant 0 : index
    %c256_68 = arith.constant 256 : index
    %102 = vector.load %arg24[%c0_67, %c256_68] : memref<20x512xf32, #tpu.memory_space<vmem>>, vector<10x128xf32>
    tpu.vector_store %arg24[%c0_67, %c256_68], %101 {strides = array<i32>} : memref<20x512xf32, #tpu.memory_space<vmem>>, vector<10x128xf32>,
    %c0_69 = arith.constant 0 : index
    %c384 = arith.constant 384 : index
    %103 = vector.load %arg21[%c0_69, %c384] : memref<20x512xf32, #tpu.memory_space<vmem>>, vector<10x128xf32>
    %c0_70 = arith.constant 0 : index
    %c384_71 = arith.constant 384 : index
    %104 = vector.load %arg22[%c0_70, %c384_71] : memref<20x512xf32, #tpu.memory_space<vmem>>, vector<10x128xf32>
    %c0_72 = arith.constant 0 : index
    %c384_73 = arith.constant 384 : index
    %105 = vector.load %arg23[%c0_72, %c384_73] : memref<20x512xf32, #tpu.memory_space<vmem>>, vector<10x128xf32>
    %cst_74 = arith.constant dense<0.000000e+00> : vector<10x10xf32>
    %106 = tpu.matmul %103, %104, %cst_74 {dimension_numbers = #tpu.dot_dimension_numbers<[1], [1], [0], [0], [0, 0, 1, 0], [], []>} : vector<10x128xf32>, vector<10x128xf32>, vector<10x10xf32> -> vector<10x10xf32>
    %107 = arith.addf %106, %51 : vector<10x10xf32>
    %cst_75 = arith.constant dense<0xFF800000> : vector<10xf32>
    %108 = vector.multi_reduction <maximumf>, %107, %cst_75 [1] : vector<10x10xf32> to vector<10xf32>
    %109 = vector.shape_cast %108 : vector<10xf32> to vector<10x1xf32>
    %110 = vector.broadcast %109 : vector<10x1xf32> to vector<10x10xf32>
    %111 = arith.subf %107, %110 : vector<10x10xf32>
    %112 = math.exp %111 : vector<10x10xf32>
    %cst_76 = arith.constant dense<0.000000e+00> : vector<10xf32>
    %113 = vector.multi_reduction <add>, %112, %cst_76 [1] : vector<10x10xf32> to vector<10xf32>
    %114 = vector.shape_cast %113 : vector<10xf32> to vector<10x1xf32>
    %115 = tpu.reciprocal %114 {approx = true} : vector<10x1xf32> -> vector<10x1xf32>
    %116 = vector.broadcast %115 : vector<10x1xf32> to vector<10x10xf32>
    %117 = arith.mulf %112, %116 : vector<10x10xf32>
    %cst_77 = arith.constant dense<0.000000e+00> : vector<10x128xf32>
    %118 = tpu.matmul %117, %105, %cst_77 {dimension_numbers = #tpu.dot_dimension_numbers<[1], [0], [0], [1], [0, 0, 1, 1], [], []>} : vector<10x10xf32>, vector<10x128xf32>, vector<10x128xf32> -> vector<10x128xf32>
    %c0_78 = arith.constant 0 : index
    %c384_79 = arith.constant 384 : index
    %119 = vector.load %arg24[%c0_78, %c384_79] : memref<20x512xf32, #tpu.memory_space<vmem>>, vector<10x128xf32>
    tpu.vector_store %arg24[%c0_78, %c384_79], %118 {strides = array<i32>} : memref<20x512xf32, #tpu.memory_space<vmem>>, vector<10x128xf32>,
    %c10 = arith.constant 10 : index
    %c0_80 = arith.constant 0 : index
    %120 = vector.load %arg21[%c10, %c0_80] : memref<20x512xf32, #tpu.memory_space<vmem>>, vector<10x128xf32>
    %c10_81 = arith.constant 10 : index
    %c0_82 = arith.constant 0 : index
    %121 = vector.load %arg22[%c10_81, %c0_82] : memref<20x512xf32, #tpu.memory_space<vmem>>, vector<10x128xf32>
    %c10_83 = arith.constant 10 : index
    %c0_84 = arith.constant 0 : index
    %122 = vector.load %arg23[%c10_83, %c0_84] : memref<20x512xf32, #tpu.memory_space<vmem>>, vector<10x128xf32>
    %cst_85 = arith.constant dense<0.000000e+00> : vector<10x10xf32>
    %123 = tpu.matmul %120, %121, %cst_85 {dimension_numbers = #tpu.dot_dimension_numbers<[1], [1], [0], [0], [0, 0, 1, 0], [], []>} : vector<10x128xf32>, vector<10x128xf32>, vector<10x10xf32> -> vector<10x10xf32>
    %124 = arith.addf %123, %51 : vector<10x10xf32>
    %cst_86 = arith.constant dense<0xFF800000> : vector<10xf32>
    %125 = vector.multi_reduction <maximumf>, %124, %cst_86 [1] : vector<10x10xf32> to vector<10xf32>
    %126 = vector.shape_cast %125 : vector<10xf32> to vector<10x1xf32>
    %127 = vector.broadcast %126 : vector<10x1xf32> to vector<10x10xf32>
    %128 = arith.subf %124, %127 : vector<10x10xf32>
    %129 = math.exp %128 : vector<10x10xf32>
    %cst_87 = arith.constant dense<0.000000e+00> : vector<10xf32>
    %130 = vector.multi_reduction <add>, %129, %cst_87 [1] : vector<10x10xf32> to vector<10xf32>
    %131 = vector.shape_cast %130 : vector<10xf32> to vector<10x1xf32>
    %132 = tpu.reciprocal %131 {approx = true} : vector<10x1xf32> -> vector<10x1xf32>
    %133 = vector.broadcast %132 : vector<10x1xf32> to vector<10x10xf32>
    %134 = arith.mulf %129, %133 : vector<10x10xf32>
    %cst_88 = arith.constant dense<0.000000e+00> : vector<10x128xf32>
    %135 = tpu.matmul %134, %122, %cst_88 {dimension_numbers = #tpu.dot_dimension_numbers<[1], [0], [0], [1], [0, 0, 1, 1], [], []>} : vector<10x10xf32>, vector<10x128xf32>, vector<10x128xf32> -> vector<10x128xf32>
    %c10_89 = arith.constant 10 : index
    %c0_90 = arith.constant 0 : index
    %136 = vector.load %arg24[%c10_89, %c0_90] : memref<20x512xf32, #tpu.memory_space<vmem>>, vector<10x128xf32>
    tpu.vector_store %arg24[%c10_89, %c0_90], %135 {strides = array<i32>} : memref<20x512xf32, #tpu.memory_space<vmem>>, vector<10x128xf32>,
    %c10_91 = arith.constant 10 : index
    %c128_92 = arith.constant 128 : index
    %137 = vector.load %arg21[%c10_91, %c128_92] : memref<20x512xf32, #tpu.memory_space<vmem>>, vector<10x128xf32>
    %c10_93 = arith.constant 10 : index
    %c128_94 = arith.constant 128 : index
    %138 = vector.load %arg22[%c10_93, %c128_94] : memref<20x512xf32, #tpu.memory_space<vmem>>, vector<10x128xf32>
    %c10_95 = arith.constant 10 : index
    %c128_96 = arith.constant 128 : index
    %139 = vector.load %arg23[%c10_95, %c128_96] : memref<20x512xf32, #tpu.memory_space<vmem>>, vector<10x128xf32>
    %cst_97 = arith.constant dense<0.000000e+00> : vector<10x10xf32>
    %140 = tpu.matmul %137, %138, %cst_97 {dimension_numbers = #tpu.dot_dimension_numbers<[1], [1], [0], [0], [0, 0, 1, 0], [], []>} : vector<10x128xf32>, vector<10x128xf32>, vector<10x10xf32> -> vector<10x10xf32>
    %141 = arith.addf %140, %51 : vector<10x10xf32>
    %cst_98 = arith.constant dense<0xFF800000> : vector<10xf32>
    %142 = vector.multi_reduction <maximumf>, %141, %cst_98 [1] : vector<10x10xf32> to vector<10xf32>
    %143 = vector.shape_cast %142 : vector<10xf32> to vector<10x1xf32>
    %144 = vector.broadcast %143 : vector<10x1xf32> to vector<10x10xf32>
    %145 = arith.subf %141, %144 : vector<10x10xf32>
    %146 = math.exp %145 : vector<10x10xf32>
    %cst_99 = arith.constant dense<0.000000e+00> : vector<10xf32>
    %147 = vector.multi_reduction <add>, %146, %cst_99 [1] : vector<10x10xf32> to vector<10xf32>
    %148 = vector.shape_cast %147 : vector<10xf32> to vector<10x1xf32>
    %149 = tpu.reciprocal %148 {approx = true} : vector<10x1xf32> -> vector<10x1xf32>
    %150 = vector.broadcast %149 : vector<10x1xf32> to vector<10x10xf32>
    %151 = arith.mulf %146, %150 : vector<10x10xf32>
    %cst_100 = arith.constant dense<0.000000e+00> : vector<10x128xf32>
    %152 = tpu.matmul %151, %139, %cst_100 {dimension_numbers = #tpu.dot_dimension_numbers<[1], [0], [0], [1], [0, 0, 1, 1], [], []>} : vector<10x10xf32>, vector<10x128xf32>, vector<10x128xf32> -> vector<10x128xf32>
    %c10_101 = arith.constant 10 : index
    %c128_102 = arith.constant 128 : index
    %153 = vector.load %arg24[%c10_101, %c128_102] : memref<20x512xf32, #tpu.memory_space<vmem>>, vector<10x128xf32>
    tpu.vector_store %arg24[%c10_101, %c128_102], %152 {strides = array<i32>} : memref<20x512xf32, #tpu.memory_space<vmem>>, vector<10x128xf32>,
    %c10_103 = arith.constant 10 : index
    %c256_104 = arith.constant 256 : index
    %154 = vector.load %arg21[%c10_103, %c256_104] : memref<20x512xf32, #tpu.memory_space<vmem>>, vector<10x128xf32>
    %c10_105 = arith.constant 10 : index
    %c256_106 = arith.constant 256 : index
    %155 = vector.load %arg22[%c10_105, %c256_106] : memref<20x512xf32, #tpu.memory_space<vmem>>, vector<10x128xf32>
    %c10_107 = arith.constant 10 : index
    %c256_108 = arith.constant 256 : index
    %156 = vector.load %arg23[%c10_107, %c256_108] : memref<20x512xf32, #tpu.memory_space<vmem>>, vector<10x128xf32>
    %cst_109 = arith.constant dense<0.000000e+00> : vector<10x10xf32>
    %157 = tpu.matmul %154, %155, %cst_109 {dimension_numbers = #tpu.dot_dimension_numbers<[1], [1], [0], [0], [0, 0, 1, 0], [], []>} : vector<10x128xf32>, vector<10x128xf32>, vector<10x10xf32> -> vector<10x10xf32>
    %158 = arith.addf %157, %51 : vector<10x10xf32>
    %cst_110 = arith.constant dense<0xFF800000> : vector<10xf32>
    %159 = vector.multi_reduction <maximumf>, %158, %cst_110 [1] : vector<10x10xf32> to vector<10xf32>
    %160 = vector.shape_cast %159 : vector<10xf32> to vector<10x1xf32>
    %161 = vector.broadcast %160 : vector<10x1xf32> to vector<10x10xf32>
    %162 = arith.subf %158, %161 : vector<10x10xf32>
    %163 = math.exp %162 : vector<10x10xf32>
    %cst_111 = arith.constant dense<0.000000e+00> : vector<10xf32>
    %164 = vector.multi_reduction <add>, %163, %cst_111 [1] : vector<10x10xf32> to vector<10xf32>
    %165 = vector.shape_cast %164 : vector<10xf32> to vector<10x1xf32>
    %166 = tpu.reciprocal %165 {approx = true} : vector<10x1xf32> -> vector<10x1xf32>
    %167 = vector.broadcast %166 : vector<10x1xf32> to vector<10x10xf32>
    %168 = arith.mulf %163, %167 : vector<10x10xf32>
    %cst_112 = arith.constant dense<0.000000e+00> : vector<10x128xf32>
    %169 = tpu.matmul %168, %156, %cst_112 {dimension_numbers = #tpu.dot_dimension_numbers<[1], [0], [0], [1], [0, 0, 1, 1], [], []>} : vector<10x10xf32>, vector<10x128xf32>, vector<10x128xf32> -> vector<10x128xf32>
    %c10_113 = arith.constant 10 : index
    %c256_114 = arith.constant 256 : index
    %170 = vector.load %arg24[%c10_113, %c256_114] : memref<20x512xf32, #tpu.memory_space<vmem>>, vector<10x128xf32>
    tpu.vector_store %arg24[%c10_113, %c256_114], %169 {strides = array<i32>} : memref<20x512xf32, #tpu.memory_space<vmem>>, vector<10x128xf32>,
    %c10_115 = arith.constant 10 : index
    %c384_116 = arith.constant 384 : index
    %171 = vector.load %arg21[%c10_115, %c384_116] : memref<20x512xf32, #tpu.memory_space<vmem>>, vector<10x128xf32>
    %c10_117 = arith.constant 10 : index
    %c384_118 = arith.constant 384 : index
    %172 = vector.load %arg22[%c10_117, %c384_118] : memref<20x512xf32, #tpu.memory_space<vmem>>, vector<10x128xf32>
    %c10_119 = arith.constant 10 : index
    %c384_120 = arith.constant 384 : index
    %173 = vector.load %arg23[%c10_119, %c384_120] : memref<20x512xf32, #tpu.memory_space<vmem>>, vector<10x128xf32>
    %cst_121 = arith.constant dense<0.000000e+00> : vector<10x10xf32>
    %174 = tpu.matmul %171, %172, %cst_121 {dimension_numbers = #tpu.dot_dimension_numbers<[1], [1], [0], [0], [0, 0, 1, 0], [], []>} : vector<10x128xf32>, vector<10x128xf32>, vector<10x10xf32> -> vector<10x10xf32>
    %175 = arith.addf %174, %51 : vector<10x10xf32>
    %cst_122 = arith.constant dense<0xFF800000> : vector<10xf32>
    %176 = vector.multi_reduction <maximumf>, %175, %cst_122 [1] : vector<10x10xf32> to vector<10xf32>
    %177 = vector.shape_cast %176 : vector<10xf32> to vector<10x1xf32>
    %178 = vector.broadcast %177 : vector<10x1xf32> to vector<10x10xf32>
    %179 = arith.subf %175, %178 : vector<10x10xf32>
    %180 = math.exp %179 : vector<10x10xf32>
    %cst_123 = arith.constant dense<0.000000e+00> : vector<10xf32>
    %181 = vector.multi_reduction <add>, %180, %cst_123 [1] : vector<10x10xf32> to vector<10xf32>
    %182 = vector.shape_cast %181 : vector<10xf32> to vector<10x1xf32>
    %183 = tpu.reciprocal %182 {approx = true} : vector<10x1xf32> -> vector<10x1xf32>
    %184 = vector.broadcast %183 : vector<10x1xf32> to vector<10x10xf32>
    %185 = arith.mulf %180, %184 : vector<10x10xf32>
    %cst_124 = arith.constant dense<0.000000e+00> : vector<10x128xf32>
    %186 = tpu.matmul %185, %173, %cst_124 {dimension_numbers = #tpu.dot_dimension_numbers<[1], [0], [0], [1], [0, 0, 1, 1], [], []>} : vector<10x10xf32>, vector<10x128xf32>, vector<10x128xf32> -> vector<10x128xf32>
    %c10_125 = arith.constant 10 : index
    %c384_126 = arith.constant 384 : index
    %187 = vector.load %arg24[%c10_125, %c384_126] : memref<20x512xf32, #tpu.memory_space<vmem>>, vector<10x128xf32>
    tpu.vector_store %arg24[%c10_125, %c384_126], %186 {strides = array<i32>} : memref<20x512xf32, #tpu.memory_space<vmem>>, vector<10x128xf32>,
    %c0_127 = arith.constant 0 : index
    %c0_128 = arith.constant 0 : index
    %188 = vector.load %arg24[%c0_127, %c0_128] : memref<20x512xf32, #tpu.memory_space<vmem>>, vector<20x512xf32>
    %c0_129 = arith.constant 0 : index
    %c0_130 = arith.constant 0 : index
    %c0_131 = arith.constant 0 : index
    %189 = vector.load %arg9[%c0_129, %c0_130, %c0_131] : memref<1x512x512xf32, #tpu.memory_space<vmem>>, vector<1x512x512xf32>
    %190 = vector.shape_cast %189 : vector<1x512x512xf32> to vector<512x512xf32>
    %cst_132 = arith.constant dense<0.000000e+00> : vector<20x512xf32>
    %191 = tpu.matmul %188, %190, %cst_132 {dimension_numbers = #tpu.dot_dimension_numbers<[1], [0], [0], [1], [0, 0, 1, 1], [], []>} : vector<20x512xf32>, vector<512x512xf32>, vector<20x512xf32> -> vector<20x512xf32>
    %c0_133 = arith.constant 0 : index
    %c0_134 = arith.constant 0 : index
    %c0_135 = arith.constant 0 : index
    %192 = vector.load %arg10[%c0_133, %c0_134, %c0_135] : memref<1x1x512xf32, #tpu.memory_space<vmem>>, vector<1x1x512xf32>
    %193 = vector.shape_cast %192 : vector<1x1x512xf32> to vector<1x512xf32>
    %194 = vector.broadcast %193 : vector<1x512xf32> to vector<20x512xf32>
    %195 = arith.addf %191, %194 : vector<20x512xf32>
    %196 = arith.addf %195, %3 : vector<20x512xf32>
    %c0_136 = arith.constant 0 : index
    %c0_137 = arith.constant 0 : index
    %c0_138 = arith.constant 0 : index
    %197 = vector.load %arg11[%c0_136, %c0_137, %c0_138] : memref<1x1x512xf32, #tpu.memory_space<vmem>>, vector<1x1x512xf32>
    %198 = vector.shape_cast %197 : vector<1x1x512xf32> to vector<1x512xf32>
    %c0_139 = arith.constant 0 : index
    %c0_140 = arith.constant 0 : index
    %c0_141 = arith.constant 0 : index
    %199 = vector.load %arg12[%c0_139, %c0_140, %c0_141] : memref<1x1x512xf32, #tpu.memory_space<vmem>>, vector<1x1x512xf32>
    %200 = vector.shape_cast %199 : vector<1x1x512xf32> to vector<1x512xf32>
    %cst_142 = arith.constant dense<0.000000e+00> : vector<20xf32>
    %201 = vector.multi_reduction <add>, %196, %cst_142 [1] : vector<20x512xf32> to vector<20xf32>
    %202 = vector.shape_cast %201 : vector<20xf32> to vector<20x1xf32>
    %cst_143 = arith.constant 5.120000e+02 : f32
    %203 = vector.broadcast %cst_143 : f32 to vector<20x1xf32>
    %204 = arith.divf %202, %203 : vector<20x1xf32>
    %205 = vector.broadcast %204 : vector<20x1xf32> to vector<20x512xf32>
    %206 = arith.subf %196, %205 : vector<20x512xf32>
    %207 = arith.mulf %206, %206 : vector<20x512xf32>
    %cst_144 = arith.constant dense<0.000000e+00> : vector<20xf32>
    %208 = vector.multi_reduction <add>, %207, %cst_144 [1] : vector<20x512xf32> to vector<20xf32>
    %209 = vector.shape_cast %208 : vector<20xf32> to vector<20x1xf32>
    %cst_145 = arith.constant 5.120000e+02 : f32
    %210 = vector.broadcast %cst_145 : f32 to vector<20x1xf32>
    %211 = arith.divf %209, %210 : vector<20x1xf32>
    %212 = vector.broadcast %204 : vector<20x1xf32> to vector<20x512xf32>
    %213 = arith.subf %196, %212 : vector<20x512xf32>
    %cst_146 = arith.constant 9.99999974E-6 : f32
    %214 = vector.broadcast %cst_146 : f32 to vector<20x1xf32>
    %215 = arith.addf %211, %214 : vector<20x1xf32>
    %216 = math.rsqrt %215 : vector<20x1xf32>
    %217 = vector.broadcast %216 : vector<20x1xf32> to vector<20x512xf32>
    %218 = arith.mulf %213, %217 : vector<20x512xf32>
    %219 = vector.broadcast %198 : vector<1x512xf32> to vector<20x512xf32>
    %220 = arith.mulf %218, %219 : vector<20x512xf32>
    %221 = vector.broadcast %200 : vector<1x512xf32> to vector<20x512xf32>
    %222 = arith.addf %220, %221 : vector<20x512xf32>
    %c0_147 = arith.constant 0 : index
    %c0_148 = arith.constant 0 : index
    %c0_149 = arith.constant 0 : index
    %223 = vector.load %arg13[%c0_147, %c0_148, %c0_149] : memref<1x512x128xf32, #tpu.memory_space<vmem>>, vector<1x512x128xf32>
    %224 = vector.shape_cast %223 : vector<1x512x128xf32> to vector<512x128xf32>
    %cst_150 = arith.constant dense<0.000000e+00> : vector<20x128xf32>
    %225 = tpu.matmul %222, %224, %cst_150 {dimension_numbers = #tpu.dot_dimension_numbers<[1], [0], [0], [1], [0, 0, 1, 1], [], []>} : vector<20x512xf32>, vector<512x128xf32>, vector<20x128xf32> -> vector<20x128xf32>
    %c0_151 = arith.constant 0 : index
    %c0_152 = arith.constant 0 : index
    %c0_153 = arith.constant 0 : index
    %226 = vector.load %arg14[%c0_151, %c0_152, %c0_153] : memref<1x1x128xf32, #tpu.memory_space<vmem>>, vector<1x1x128xf32>
    %227 = vector.shape_cast %226 : vector<1x1x128xf32> to vector<1x128xf32>
    %228 = vector.broadcast %227 : vector<1x128xf32> to vector<20x128xf32>
    %229 = arith.addf %225, %228 : vector<20x128xf32>
    %cst_154 = arith.constant 0.000000e+00 : f32
    %230 = vector.broadcast %cst_154 : f32 to vector<20x128xf32>
    %231 = arith.maximumf %229, %230 : vector<20x128xf32>
    %c0_155 = arith.constant 0 : index
    %c0_156 = arith.constant 0 : index
    %c0_157 = arith.constant 0 : index
    %232 = vector.load %arg15[%c0_155, %c0_156, %c0_157] : memref<1x128x512xf32, #tpu.memory_space<vmem>>, vector<1x128x512xf32>
    %233 = vector.shape_cast %232 : vector<1x128x512xf32> to vector<128x512xf32>
    %cst_158 = arith.constant dense<0.000000e+00> : vector<20x512xf32>
    %234 = tpu.matmul %231, %233, %cst_158 {dimension_numbers = #tpu.dot_dimension_numbers<[1], [0], [0], [1], [0, 0, 1, 1], [], []>} : vector<20x128xf32>, vector<128x512xf32>, vector<20x512xf32> -> vector<20x512xf32>
    %c0_159 = arith.constant 0 : index
    %c0_160 = arith.constant 0 : index
    %c0_161 = arith.constant 0 : index
    %235 = vector.load %arg16[%c0_159, %c0_160, %c0_161] : memref<1x1x512xf32, #tpu.memory_space<vmem>>, vector<1x1x512xf32>
    %236 = vector.shape_cast %235 : vector<1x1x512xf32> to vector<1x512xf32>
    %237 = vector.broadcast %236 : vector<1x512xf32> to vector<20x512xf32>
    %238 = arith.addf %234, %237 : vector<20x512xf32>
    %239 = arith.addf %238, %196 : vector<20x512xf32>
    %c0_162 = arith.constant 0 : index
    %c0_163 = arith.constant 0 : index
    %c0_164 = arith.constant 0 : index
    %240 = vector.load %arg17[%c0_162, %c0_163, %c0_164] : memref<1x1x512xf32, #tpu.memory_space<vmem>>, vector<1x1x512xf32>
    %241 = vector.shape_cast %240 : vector<1x1x512xf32> to vector<1x512xf32>
    %c0_165 = arith.constant 0 : index
    %c0_166 = arith.constant 0 : index
    %c0_167 = arith.constant 0 : index
    %242 = vector.load %arg18[%c0_165, %c0_166, %c0_167] : memref<1x1x512xf32, #tpu.memory_space<vmem>>, vector<1x1x512xf32>
    %243 = vector.shape_cast %242 : vector<1x1x512xf32> to vector<1x512xf32>
    %cst_168 = arith.constant dense<0.000000e+00> : vector<20xf32>
    %244 = vector.multi_reduction <add>, %239, %cst_168 [1] : vector<20x512xf32> to vector<20xf32>
    %245 = vector.shape_cast %244 : vector<20xf32> to vector<20x1xf32>
    %cst_169 = arith.constant 5.120000e+02 : f32
    %246 = vector.broadcast %cst_169 : f32 to vector<20x1xf32>
    %247 = arith.divf %245, %246 : vector<20x1xf32>
    %248 = vector.broadcast %247 : vector<20x1xf32> to vector<20x512xf32>
    %249 = arith.subf %239, %248 : vector<20x512xf32>
    %250 = arith.mulf %249, %249 : vector<20x512xf32>
    %cst_170 = arith.constant dense<0.000000e+00> : vector<20xf32>
    %251 = vector.multi_reduction <add>, %250, %cst_170 [1] : vector<20x512xf32> to vector<20xf32>
    %252 = vector.shape_cast %251 : vector<20xf32> to vector<20x1xf32>
    %cst_171 = arith.constant 5.120000e+02 : f32
    %253 = vector.broadcast %cst_171 : f32 to vector<20x1xf32>
    %254 = arith.divf %252, %253 : vector<20x1xf32>
    %255 = vector.broadcast %247 : vector<20x1xf32> to vector<20x512xf32>
    %256 = arith.subf %239, %255 : vector<20x512xf32>
    %cst_172 = arith.constant 9.99999974E-6 : f32
    %257 = vector.broadcast %cst_172 : f32 to vector<20x1xf32>
    %258 = arith.addf %254, %257 : vector<20x1xf32>
    %259 = math.rsqrt %258 : vector<20x1xf32>
    %260 = vector.broadcast %259 : vector<20x1xf32> to vector<20x512xf32>
    %261 = arith.mulf %256, %260 : vector<20x512xf32>
    %262 = vector.broadcast %241 : vector<1x512xf32> to vector<20x512xf32>
    %263 = arith.mulf %261, %262 : vector<20x512xf32>
    %264 = vector.broadcast %243 : vector<1x512xf32> to vector<20x512xf32>
    %265 = arith.addf %263, %264 : vector<20x512xf32>
    %c0_173 = arith.constant 0 : index
    %c0_174 = arith.constant 0 : index
    %266 = vector.load %arg20[%c0_173, %c0_174] : memref<20x512xf32, #tpu.memory_space<vmem>>, vector<20x512xf32>
    tpu.vector_store %arg20[%c0_173, %c0_174], %265 {strides = array<i32>} : memref<20x512xf32, #tpu.memory_space<vmem>>, vector<20x512xf32>,
    %c3_i32 = arith.constant 3 : i32
    %267 = arith.cmpi eq, %arg0, %c3_i32 : i32
    %268 = arith.extui %267 : i1 to i32
    %c0_i32_175 = arith.constant 0 : i32
    %269 = arith.cmpi ne, %268, %c0_i32_175 : i32
    scf.if %269 {
      %c2 = arith.constant 2 : index
      %c0_176 = arith.constant 0 : index
      %270 = vector.load %arg20[%c2, %c0_176] : memref<20x512xf32, #tpu.memory_space<vmem>>, vector<8x512xf32>
      %cst_177 = arith.constant dense<0.000000e+00> : vector<512xf32>
      %271 = vector.multi_reduction <add>, %270, %cst_177 [0] : vector<8x512xf32> to vector<512xf32>
      %272 = vector.shape_cast %271 : vector<512xf32> to vector<1x512xf32>
      %cst_178 = arith.constant 8.000000e+00 : f32
      %273 = vector.broadcast %cst_178 : f32 to vector<1x512xf32>
      %274 = arith.divf %272, %273 : vector<1x512xf32>
      %c0_179 = arith.constant 0 : index
      %c0_180 = arith.constant 0 : index
      %275 = vector.load %arg19[%c0_179, %c0_180] : memref<2x512xf32, #tpu.memory_space<vmem>>, vector<1x512xf32>
      tpu.vector_store %arg19[%c0_179, %c0_180], %274 {strides = array<i32>} : memref<2x512xf32, #tpu.memory_space<vmem>>, vector<1x512xf32>,
      %c12 = arith.constant 12 : index
      %c0_181 = arith.constant 0 : index
      %276 = vector.load %arg20[%c12, %c0_181] : memref<20x512xf32, #tpu.memory_space<vmem>>, vector<8x512xf32>
      %cst_182 = arith.constant dense<0.000000e+00> : vector<512xf32>
      %277 = vector.multi_reduction <add>, %276, %cst_182 [0] : vector<8x512xf32> to vector<512xf32>
      %278 = vector.shape_cast %277 : vector<512xf32> to vector<1x512xf32>
      %cst_183 = arith.constant 8.000000e+00 : f32
      %279 = vector.broadcast %cst_183 : f32 to vector<1x512xf32>
      %280 = arith.divf %278, %279 : vector<1x512xf32>
      %c1 = arith.constant 1 : index
      %c0_184 = arith.constant 0 : index
      %281 = vector.load %arg19[%c1, %c0_184] : memref<2x512xf32, #tpu.memory_space<vmem>>, vector<1x512xf32>
      tpu.vector_store %arg19[%c1, %c0_184], %280 {strides = array<i32>} : memref<2x512xf32, #tpu.memory_space<vmem>>, vector<1x512xf32>,
    } else {
    }
    return
  }
  func.func @transform_0(%arg0: i32) -> (i32, i32) {
    %c0_i32 = arith.constant 0 : i32
    %c0_i32_0 = arith.constant 0 : i32
    %c0_i32_1 = arith.constant 0 : i32
    return %c0_i32, %c0_i32_0 : i32, i32
  }
  func.func @transform_1(%arg0: i32) -> (i32, i32) {
    %c0_i32 = arith.constant 0 : i32
    %c0_i32_0 = arith.constant 0 : i32
    %c0_i32_1 = arith.constant 0 : i32
    return %c0_i32, %c0_i32_0 : i32, i32
  }
  func.func @transform_2(%arg0: i32) -> (i32, i32, i32) {
    %c0_i32 = arith.constant 0 : i32
    %c0_i32_0 = arith.constant 0 : i32
    %c0_i32_1 = arith.constant 0 : i32
    return %arg0, %c0_i32, %c0_i32_0 : i32, i32, i32
  }
  func.func @transform_3(%arg0: i32) -> (i32, i32, i32) {
    %c0_i32 = arith.constant 0 : i32
    %c0_i32_0 = arith.constant 0 : i32
    %c0_i32_1 = arith.constant 0 : i32
    return %arg0, %c0_i32, %c0_i32_0 : i32, i32, i32
  }
  func.func @transform_4(%arg0: i32) -> (i32, i32, i32) {
    %c0_i32 = arith.constant 0 : i32
    %c0_i32_0 = arith.constant 0 : i32
    %c0_i32_1 = arith.constant 0 : i32
    return %arg0, %c0_i32, %c0_i32_0 : i32, i32, i32
  }
  func.func @transform_5(%arg0: i32) -> (i32, i32, i32) {
    %c0_i32 = arith.constant 0 : i32
    %c0_i32_0 = arith.constant 0 : i32
    %c0_i32_1 = arith.constant 0 : i32
    return %arg0, %c0_i32, %c0_i32_0 : i32, i32, i32
  }
  func.func @transform_6(%arg0: i32) -> (i32, i32, i32) {
    %c0_i32 = arith.constant 0 : i32
    %c0_i32_0 = arith.constant 0 : i32
    %c0_i32_1 = arith.constant 0 : i32
    return %arg0, %c0_i32, %c0_i32_0 : i32, i32, i32
  }
  func.func @transform_7(%arg0: i32) -> (i32, i32, i32) {
    %c0_i32 = arith.constant 0 : i32
    %c0_i32_0 = arith.constant 0 : i32
    %c0_i32_1 = arith.constant 0 : i32
    return %arg0, %c0_i32, %c0_i32_0 : i32, i32, i32
  }
  func.func @transform_8(%arg0: i32) -> (i32, i32, i32) {
    %c0_i32 = arith.constant 0 : i32
    %c0_i32_0 = arith.constant 0 : i32
    %c0_i32_1 = arith.constant 0 : i32
    return %arg0, %c0_i32, %c0_i32_0 : i32, i32, i32
  }
  func.func @transform_9(%arg0: i32) -> (i32, i32, i32) {
    %c0_i32 = arith.constant 0 : i32
    %c0_i32_0 = arith.constant 0 : i32
    %c0_i32_1 = arith.constant 0 : i32
    return %arg0, %c0_i32, %c0_i32_0 : i32, i32, i32
  }
  func.func @transform_10(%arg0: i32) -> (i32, i32, i32) {
    %c0_i32 = arith.constant 0 : i32
    %c0_i32_0 = arith.constant 0 : i32
    %c0_i32_1 = arith.constant 0 : i32
    return %arg0, %c0_i32, %c0_i32_0 : i32, i32, i32
  }
  func.func @transform_11(%arg0: i32) -> (i32, i32, i32) {
    %c0_i32 = arith.constant 0 : i32
    %c0_i32_0 = arith.constant 0 : i32
    %c0_i32_1 = arith.constant 0 : i32
    return %arg0, %c0_i32, %c0_i32_0 : i32, i32, i32
  }
  func.func @transform_12(%arg0: i32) -> (i32, i32, i32) {
    %c0_i32 = arith.constant 0 : i32
    %c0_i32_0 = arith.constant 0 : i32
    %c0_i32_1 = arith.constant 0 : i32
    return %arg0, %c0_i32, %c0_i32_0 : i32, i32, i32
  }
  func.func @transform_13(%arg0: i32) -> (i32, i32, i32) {
    %c0_i32 = arith.constant 0 : i32
    %c0_i32_0 = arith.constant 0 : i32
    %c0_i32_1 = arith.constant 0 : i32
    return %arg0, %c0_i32, %c0_i32_0 : i32, i32, i32
  }
  func.func @transform_14(%arg0: i32) -> (i32, i32, i32) {
    %c0_i32 = arith.constant 0 : i32
    %c0_i32_0 = arith.constant 0 : i32
    %c0_i32_1 = arith.constant 0 : i32
    return %arg0, %c0_i32, %c0_i32_0 : i32, i32, i32
  }
  func.func @transform_15(%arg0: i32) -> (i32, i32, i32) {
    %c0_i32 = arith.constant 0 : i32
    %c0_i32_0 = arith.constant 0 : i32
    %c0_i32_1 = arith.constant 0 : i32
    return %arg0, %c0_i32, %c0_i32_0 : i32, i32, i32
  }
  func.func @transform_16(%arg0: i32) -> (i32, i32, i32) {
    %c0_i32 = arith.constant 0 : i32
    %c0_i32_0 = arith.constant 0 : i32
    %c0_i32_1 = arith.constant 0 : i32
    return %arg0, %c0_i32, %c0_i32_0 : i32, i32, i32
  }
  func.func @transform_17(%arg0: i32) -> (i32, i32, i32) {
    %c0_i32 = arith.constant 0 : i32
    %c0_i32_0 = arith.constant 0 : i32
    %c0_i32_1 = arith.constant 0 : i32
    return %arg0, %c0_i32, %c0_i32_0 : i32, i32, i32
  }
  func.func @transform_18(%arg0: i32) -> (i32, i32) {
    %c0_i32 = arith.constant 0 : i32
    %c0_i32_0 = arith.constant 0 : i32
    %c0_i32_1 = arith.constant 0 : i32
    return %c0_i32, %c0_i32_0 : i32, i32
  }
}

</mosaic_0001>

<llo_original>
// kernel: basic_net4_forward.1
$region0: #{basic_net4_forward.1}
  #allocation0 [shape = 'u32[]', space=smem, size = 0x4, offset = 0x4, fixed_abs, tag = 'smem constant byte address 0x4 - core index']
  #allocation1 [shape = 'u32[144,128]{1,0:T(1,128)}', space=vmem, size = 0x12000, scoped, tag = 'internal scratch']
  #allocation2 [shape = 'f32[20,512]{1,0:T(8,128)}', space=vmem, size = 0xc000, scoped, tag = 'scratch operand']
  #allocation3 [shape = 'f32[20,512]{1,0:T(8,128)}', space=vmem, size = 0xc000, scoped, tag = 'scratch operand']
  #allocation4 [shape = 'f32[20,512]{1,0:T(8,128)}', space=vmem, size = 0xc000, scoped, tag = 'scratch operand']
  #allocation5 [shape = 'f32[20,512]{1,0:T(8,128)}', space=vmem, size = 0xc000, scoped, tag = 'scratch operand']
  #allocation6 [shape = 'f32[20,512]{1,0:T(8,128)}', space=vmem, size = 0xc000, scoped, tag = 'scratch operand']
  %s0 = inlined_call_operand.vmem [shape: f32[20,512], index: 0, kind: input, shape index: {}]
  %s1 = inlined_call_operand.hbm [shape: f32[10,10], index: 1, kind: input, shape index: {}]
  %s2 = inlined_call_operand.hbm [shape: f32[4,1,512], index: 2, kind: input, shape index: {}]
  %s3 = inlined_call_operand.hbm [shape: f32[4,1,512], index: 3, kind: input, shape index: {}]
  %s4 = inlined_call_operand.hbm [shape: f32[4,512,512], index: 4, kind: input, shape index: {}]
  %s5 = inlined_call_operand.hbm [shape: f32[4,1,512], index: 5, kind: input, shape index: {}]
  %s6 = inlined_call_operand.hbm [shape: f32[4,512,1024], index: 6, kind: input, shape index: {}]
  %s7 = inlined_call_operand.hbm [shape: f32[4,1,1024], index: 7, kind: input, shape index: {}]
  %s8 = inlined_call_operand.hbm [shape: f32[4,512,512], index: 8, kind: input, shape index: {}]
  %s9 = inlined_call_operand.hbm [shape: f32[4,1,512], index: 9, kind: input, shape index: {}]
  %s10 = inlined_call_operand.hbm [shape: f32[4,1,512], index: 10, kind: input, shape index: {}]
  %s11 = inlined_call_operand.hbm [shape: f32[4,1,512], index: 11, kind: input, shape index: {}]
  %s12 = inlined_call_operand.hbm [shape: f32[4,512,128], index: 12, kind: input, shape index: {}]
  %s13 = inlined_call_operand.hbm [shape: f32[4,1,128], index: 13, kind: input, shape index: {}]
  %s14 = inlined_call_operand.hbm [shape: f32[4,128,512], index: 14, kind: input, shape index: {}]
  %s15 = inlined_call_operand.hbm [shape: f32[4,1,512], index: 15, kind: input, shape index: {}]
  %s16 = inlined_call_operand.hbm [shape: f32[4,1,512], index: 16, kind: input, shape index: {}]
  %s17 = inlined_call_operand.hbm [shape: f32[4,1,512], index: 17, kind: input, shape index: {}]
  %s18 = inlined_call_operand.hbm [shape: f32[2,512], index: 18, kind: output, shape index: {}]
  %s19 = sld [smem:[#allocation0]]
  $region181: #{basic_net4_forward.1} parent=0
    _
  %s21 = ssub.s32 1, %s19
  %s22 = scalar_select 0, %s21, %s19
  $region1: #{basic_net4_forward.1} parent=0
    #allocation7 [shape = 'u8[8192]{0}', space=vmem, size = 0x2000, scoped, tag = 'input window, operand 1, single buffered']
    #allocation8 [shape = 's32[2]{0}', space=sflag, size = 0x8, scoped, tag = 'scoped memory for basic_net4_forward.1']
    #allocation9 [shape = 's32[2]{0}', space=sflag, size = 0x8, scoped, tag = 'scoped memory for basic_net4_forward.1']
    #allocation10 [shape = 'u8[4096]{0}', space=vmem, size = 0x1000, scoped, tag = 'input window, operand 2']
    #allocation11 [shape = 's32[2]{0}', space=sflag, size = 0x8, scoped, tag = 'scoped memory for basic_net4_forward.1']
    #allocation12 [shape = 'u8[4096]{0}', space=vmem, size = 0x1000, scoped, tag = 'input window, operand 3']
    #allocation13 [shape = 'u8[2097152]{0}', space=vmem, size = 0x200000, scoped, tag = 'input window, operand 4']
    #allocation14 [shape = 's32[2]{0}', space=sflag, size = 0x8, scoped, tag = 'scoped memory for basic_net4_forward.1']
    #allocation15 [shape = 'u8[4096]{0}', space=vmem, size = 0x1000, scoped, tag = 'input window, operand 5']
    #allocation16 [shape = 'u8[4194304]{0}', space=vmem, size = 0x400000, scoped, tag = 'input window, operand 6']
    #allocation17 [shape = 's32[2]{0}', space=sflag, size = 0x8, scoped, tag = 'scoped memory for basic_net4_forward.1']
    #allocation18 [shape = 'u8[8192]{0}', space=vmem, size = 0x2000, scoped, tag = 'input window, operand 7']
    #allocation19 [shape = 'u8[2097152]{0}', space=vmem, size = 0x200000, scoped, tag = 'input window, operand 8']
    #allocation20 [shape = 's32[2]{0}', space=sflag, size = 0x8, scoped, tag = 'scoped memory for basic_net4_forward.1']
    #allocation21 [shape = 'u8[4096]{0}', space=vmem, size = 0x1000, scoped, tag = 'input window, operand 9']
    #allocation22 [shape = 'u8[4096]{0}', space=vmem, size = 0x1000, scoped, tag = 'input window, operand 10']
    #allocation23 [shape = 's32[2]{0}', space=sflag, size = 0x8, scoped, tag = 'scoped memory for basic_net4_forward.1']
    #allocation24 [shape = 'u8[4096]{0}', space=vmem, size = 0x1000, scoped, tag = 'input window, operand 11']
    #allocation25 [shape = 'u8[524288]{0}', space=vmem, size = 0x80000, scoped, tag = 'input window, operand 12']
    #allocation26 [shape = 's32[2]{0}', space=sflag, size = 0x8, scoped, tag = 'scoped memory for basic_net4_forward.1']
    #allocation27 [shape = 'u8[1024]{0}', space=vmem, size = 0x400, scoped, tag = 'input window, operand 13']
    #allocation28 [shape = 'u8[524288]{0}', space=vmem, size = 0x80000, scoped, tag = 'input window, operand 14']
    #allocation29 [shape = 's32[2]{0}', space=sflag, size = 0x8, scoped, tag = 'scoped memory for basic_net4_forward.1']
    #allocation30 [shape = 'u8[4096]{0}', space=vmem, size = 0x1000, scoped, tag = 'input window, operand 15']
    #allocation31 [shape = 'u8[4096]{0}', space=vmem, size = 0x1000, scoped, tag = 'input window, operand 16']
    #allocation32 [shape = 's32[2]{0}', space=sflag, size = 0x8, scoped, tag = 'scoped memory for basic_net4_forward.1']
    #allocation33 [shape = 'u8[4096]{0}', space=vmem, size = 0x1000, scoped, tag = 'input window, operand 17']
    #allocation34 [shape = 'u8[4096]{0}', space=vmem, size = 0x1000, scoped, tag = 'output window, operand 0, single buffered']
    %23 = vsyncpa [#allocation8], 0
    %24 = vsyncpa [#allocation11], 0
    %s25 = scalar_lea.sflag [#allocation11], 1
    %26 = vsyncpa %s25, 0
    %27 = vsyncpa [#allocation14], 0
    %s28 = scalar_lea.sflag [#allocation14], 1
    %29 = vsyncpa %s28, 0
    %30 = vsyncpa [#allocation17], 0
    %s31 = scalar_lea.sflag [#allocation17], 1
    %32 = vsyncpa %s31, 0
    %33 = vsyncpa [#allocation20], 0
    %s34 = scalar_lea.sflag [#allocation20], 1
    %35 = vsyncpa %s34, 0
    %36 = vsyncpa [#allocation23], 0
    %s37 = scalar_lea.sflag [#allocation23], 1
    %38 = vsyncpa %s37, 0
    %39 = vsyncpa [#allocation26], 0
    %s40 = scalar_lea.sflag [#allocation26], 1
    %41 = vsyncpa %s40, 0
    %42 = vsyncpa [#allocation29], 0
    %s43 = scalar_lea.sflag [#allocation29], 1
    %44 = vsyncpa %s43, 0
    %45 = vsyncpa [#allocation32], 0
    %s46 = scalar_lea.sflag [#allocation32], 1
    %47 = vsyncpa %s46, 0
    %48 = vsyncpa [#allocation9], 0
    loop: start=0, step=1, limit=6
    $region2: #{basic_net4_forward.1} parent=1 // loop_pre_header
      _
    $region3: #{basic_net4_forward.1} parent=1 // loop_header
      %s50 = sphi 0, %s54
      %p51 = scmp.ge.s32.totalorder %s50, 6
      %s58 = sphi 0, %s58
      %s60 = sphi 0, %s58
      %s61 = sphi 0, %s60
      %s75 = sphi 0, %s61
      %s79 = sphi 0, %s79
      %s81 = sphi 0, %s79
      %s82 = sphi 0, %s81
      %s96 = sphi 0, %s82
      %s102 = sphi 0, %s104
      %s105 = sphi 0, %s102
      %s106 = sphi 0, %s105
      %s122 = sphi 0, %s106
      %s128 = sphi 0, %s130
      %s131 = sphi 0, %s128
      %s132 = sphi 0, %s131
      %s148 = sphi 0, %s132
      %s154 = sphi 0, %s156
      %s157 = sphi 0, %s154
      %s158 = sphi 0, %s157
      %s174 = sphi 0, %s158
      %s180 = sphi 0, %s182
      %s183 = sphi 0, %s180
      %s184 = sphi 0, %s183
      %s200 = sphi 0, %s184
      %s206 = sphi 0, %s208
      %s209 = sphi 0, %s206
      %s210 = sphi 0, %s209
      %s226 = sphi 0, %s210
      %s232 = sphi 0, %s234
      %s235 = sphi 0, %s232
      %s236 = sphi 0, %s235
      %s252 = sphi 0, %s236
      %s258 = sphi 0, %s260
      %s261 = sphi 0, %s258
      %s262 = sphi 0, %s261
      %s278 = sphi 0, %s262
      %s284 = sphi 0, %s286
      %s287 = sphi 0, %s284
      %s288 = sphi 0, %s287
      %s304 = sphi 0, %s288
      %s310 = sphi 0, %s312
      %s313 = sphi 0, %s310
      %s314 = sphi 0, %s313
      %s330 = sphi 0, %s314
      %s336 = sphi 0, %s338
      %s339 = sphi 0, %s336
      %s340 = sphi 0, %s339
      %s356 = sphi 0, %s340
      %s362 = sphi 0, %s364
      %s365 = sphi 0, %s362
      %s366 = sphi 0, %s365
      %s382 = sphi 0, %s366
      %s388 = sphi 0, %s390
      %s391 = sphi 0, %s388
      %s392 = sphi 0, %s391
      %s408 = sphi 0, %s392
      %s414 = sphi 0, %s416
      %s417 = sphi 0, %s414
      %s418 = sphi 0, %s417
      %s434 = sphi 0, %s418
      %s440 = sphi 0, %s442
      %s443 = sphi 0, %s440
      %s444 = sphi 0, %s443
      %s460 = sphi 0, %s444
      %s466 = sphi 0, %s468
      %s469 = sphi 0, %s466
      %s470 = sphi 0, %s469
      %s486 = sphi 0, %s470
      %s492 = sphi 0, %s494
      %s495 = sphi 0, %s492
      %s496 = sphi 0, %s495
      %s512 = sphi 0, %s496
      %s516 = sphi 0, %s516
      %s518 = sphi 0, %s516
      %s519 = sphi 0, %s518
      %s533 = sphi 0, %s519
    $region4: #{basic_net4_forward.1} parent=1 // loop_header_branch
      %53 = sbr.rel (%p51) target = $region8
    $region5: #{basic_net4_forward.1} parent=1 // loop_body
      %s55 = ssub.s32 %s50, 1
      %s56 = ssub.s32 %s50, 2
      %s57 = sadd.s32 %s50, 1
      %s59 = sadd.s32 %s58, 1
      %p62 = scmp.eq.s32.totalorder %s50, 3
      %p63 = scmp.ne.s32.totalorder %s58, %s60
      %p64 = scmp.eq.s32.totalorder %s50, 0
      %p65 = por %p63, %p64
      %p66 = scmp.ne.s32.totalorder %s58, %s60
      %p67 = scmp.eq.s32.totalorder %s55, 3
      %p68 = por %p66, %p67
      %p69 = scmp.ne.s32.totalorder %s60, %s61
      %p70 = scmp.eq.s32.totalorder %s55, 0
      %p71 = por %p69, %p70
      %p72 = scmp.ne.s32.totalorder %s60, %s61
      %p73 = scmp.eq.s32.totalorder %s56, 3
      %p74 = por %p72, %p73
      %p76 = scmp.ne.s32.totalorder %s61, %s75
      %p77 = scmp.eq.s32.totalorder %s56, 0
      %p78 = por %p76, %p77
      %s80 = sadd.s32 %s79, 1
      %p83 = scmp.eq.s32.totalorder %s50, 3
      %p84 = scmp.ne.s32.totalorder %s79, %s81
      %p85 = scmp.eq.s32.totalorder %s50, 0
      %p86 = por %p84, %p85
      %p87 = scmp.ne.s32.totalorder %s79, %s81
      %p88 = scmp.eq.s32.totalorder %s55, 3
      %p89 = por %p87, %p88
      %p90 = scmp.ne.s32.totalorder %s81, %s82
      %p91 = scmp.eq.s32.totalorder %s55, 0
      %p92 = por %p90, %p91
      %p93 = scmp.ne.s32.totalorder %s81, %s82
      %p94 = scmp.eq.s32.totalorder %s56, 3
      %p95 = por %p93, %p94
      %p97 = scmp.ne.s32.totalorder %s82, %s96
      %p98 = scmp.eq.s32.totalorder %s56, 0
      %p99 = por %p97, %p98
      %s100 = ssub.s32 %s50, %s57
      %p101 = scmp.eq.s32.totalorder %s100, 0
      %s103 = sadd.s32 %s102, 1
      %s104 = scalar_select %p101, %s102, %s103
      %p107 = pneg %p101
      %p108 = scmp.eq.s32.totalorder %s50, 3
      %p109 = por %p107, %p108
      %p110 = scmp.ne.s32.totalorder %s102, %s105
      %p111 = scmp.eq.s32.totalorder %s50, 0
      %p112 = por %p110, %p111
      %p113 = scmp.ne.s32.totalorder %s102, %s105
      %p114 = scmp.eq.s32.totalorder %s55, 3
      %p115 = por %p113, %p114
      %p116 = scmp.ne.s32.totalorder %s105, %s106
      %p117 = scmp.eq.s32.totalorder %s55, 0
      %p118 = por %p116, %p117
      %p119 = scmp.ne.s32.totalorder %s105, %s106
      %p120 = scmp.eq.s32.totalorder %s56, 3
      %p121 = por %p119, %p120
      %p123 = scmp.ne.s32.totalorder %s106, %s122
      %p124 = scmp.eq.s32.totalorder %s56, 0
      %p125 = por %p123, %p124
      %s126 = ssub.s32 %s50, %s57
      %p127 = scmp.eq.s32.totalorder %s126, 0
      %s129 = sadd.s32 %s128, 1
      %s130 = scalar_select %p127, %s128, %s129
      %p133 = pneg %p127
      %p134 = scmp.eq.s32.totalorder %s50, 3
      %p135 = por %p133, %p134
      %p136 = scmp.ne.s32.totalorder %s128, %s131
      %p137 = scmp.eq.s32.totalorder %s50, 0
      %p138 = por %p136, %p137
      %p139 = scmp.ne.s32.totalorder %s128, %s131
      %p140 = scmp.eq.s32.totalorder %s55, 3
      %p141 = por %p139, %p140
      %p142 = scmp.ne.s32.totalorder %s131, %s132
      %p143 = scmp.eq.s32.totalorder %s55, 0
      %p144 = por %p142, %p143
      %p145 = scmp.ne.s32.totalorder %s131, %s132
      %p146 = scmp.eq.s32.totalorder %s56, 3
      %p147 = por %p145, %p146
      %p149 = scmp.ne.s32.totalorder %s132, %s148
      %p150 = scmp.eq.s32.totalorder %s56, 0
      %p151 = por %p149, %p150
      %s152 = ssub.s32 %s50, %s57
      %p153 = scmp.eq.s32.totalorder %s152, 0
      %s155 = sadd.s32 %s154, 1
      %s156 = scalar_select %p153, %s154, %s155
      %p159 = pneg %p153
      %p160 = scmp.eq.s32.totalorder %s50, 3
      %p161 = por %p159, %p160
      %p162 = scmp.ne.s32.totalorder %s154, %s157
      %p163 = scmp.eq.s32.totalorder %s50, 0
      %p164 = por %p162, %p163
      %p165 = scmp.ne.s32.totalorder %s154, %s157
      %p166 = scmp.eq.s32.totalorder %s55, 3
      %p167 = por %p165, %p166
      %p168 = scmp.ne.s32.totalorder %s157, %s158
      %p169 = scmp.eq.s32.totalorder %s55, 0
      %p170 = por %p168, %p169
      %p171 = scmp.ne.s32.totalorder %s157, %s158
      %p172 = scmp.eq.s32.totalorder %s56, 3
      %p173 = por %p171, %p172
      %p175 = scmp.ne.s32.totalorder %s158, %s174
      %p176 = scmp.eq.s32.totalorder %s56, 0
      %p177 = por %p175, %p176
      %s178 = ssub.s32 %s50, %s57
      %p179 = scmp.eq.s32.totalorder %s178, 0
      %s181 = sadd.s32 %s180, 1
      %s182 = scalar_select %p179, %s180, %s181
      %p185 = pneg %p179
      %p186 = scmp.eq.s32.totalorder %s50, 3
      %p187 = por %p185, %p186
      %p188 = scmp.ne.s32.totalorder %s180, %s183
      %p189 = scmp.eq.s32.totalorder %s50, 0
      %p190 = por %p188, %p189
      %p191 = scmp.ne.s32.totalorder %s180, %s183
      %p192 = scmp.eq.s32.totalorder %s55, 3
      %p193 = por %p191, %p192
      %p194 = scmp.ne.s32.totalorder %s183, %s184
      %p195 = scmp.eq.s32.totalorder %s55, 0
      %p196 = por %p194, %p195
      %p197 = scmp.ne.s32.totalorder %s183, %s184
      %p198 = scmp.eq.s32.totalorder %s56, 3
      %p199 = por %p197, %p198
      %p201 = scmp.ne.s32.totalorder %s184, %s200
      %p202 = scmp.eq.s32.totalorder %s56, 0
      %p203 = por %p201, %p202
      %s204 = ssub.s32 %s50, %s57
      %p205 = scmp.eq.s32.totalorder %s204, 0
      %s207 = sadd.s32 %s206, 1
      %s208 = scalar_select %p205, %s206, %s207
      %p211 = pneg %p205
      %p212 = scmp.eq.s32.totalorder %s50, 3
      %p213 = por %p211, %p212
      %p214 = scmp.ne.s32.totalorder %s206, %s209
      %p215 = scmp.eq.s32.totalorder %s50, 0
      %p216 = por %p214, %p215
      %p217 = scmp.ne.s32.totalorder %s206, %s209
      %p218 = scmp.eq.s32.totalorder %s55, 3
      %p219 = por %p217, %p218
      %p220 = scmp.ne.s32.totalorder %s209, %s210
      %p221 = scmp.eq.s32.totalorder %s55, 0
      %p222 = por %p220, %p221
      %p223 = scmp.ne.s32.totalorder %s209, %s210
      %p224 = scmp.eq.s32.totalorder %s56, 3
      %p225 = por %p223, %p224
      %p227 = scmp.ne.s32.totalorder %s210, %s226
      %p228 = scmp.eq.s32.totalorder %s56, 0
      %p229 = por %p227, %p228
      %s230 = ssub.s32 %s50, %s57
      %p231 = scmp.eq.s32.totalorder %s230, 0
      %s233 = sadd.s32 %s232, 1
      %s234 = scalar_select %p231, %s232, %s233
      %p237 = pneg %p231
      %p238 = scmp.eq.s32.totalorder %s50, 3
      %p239 = por %p237, %p238
      %p240 = scmp.ne.s32.totalorder %s232, %s235
      %p241 = scmp.eq.s32.totalorder %s50, 0
      %p242 = por %p240, %p241
      %p243 = scmp.ne.s32.totalorder %s232, %s235
      %p244 = scmp.eq.s32.totalorder %s55, 3
      %p245 = por %p243, %p244
      %p246 = scmp.ne.s32.totalorder %s235, %s236
      %p247 = scmp.eq.s32.totalorder %s55, 0
      %p248 = por %p246, %p247
      %p249 = scmp.ne.s32.totalorder %s235, %s236
      %p250 = scmp.eq.s32.totalorder %s56, 3
      %p251 = por %p249, %p250
      %p253 = scmp.ne.s32.totalorder %s236, %s252
      %p254 = scmp.eq.s32.totalorder %s56, 0
      %p255 = por %p253, %p254
      %s256 = ssub.s32 %s50, %s57
      %p257 = scmp.eq.s32.totalorder %s256, 0
      %s259 = sadd.s32 %s258, 1
      %s260 = scalar_select %p257, %s258, %s259
      %p263 = pneg %p257
      %p264 = scmp.eq.s32.totalorder %s50, 3
      %p265 = por %p263, %p264
      %p266 = scmp.ne.s32.totalorder %s258, %s261
      %p267 = scmp.eq.s32.totalorder %s50, 0
      %p268 = por %p266, %p267
      %p269 = scmp.ne.s32.totalorder %s258, %s261
      %p270 = scmp.eq.s32.totalorder %s55, 3
      %p271 = por %p269, %p270
      %p272 = scmp.ne.s32.totalorder %s261, %s262
      %p273 = scmp.eq.s32.totalorder %s55, 0
      %p274 = por %p272, %p273
      %p275 = scmp.ne.s32.totalorder %s261, %s262
      %p276 = scmp.eq.s32.totalorder %s56, 3
      %p277 = por %p275, %p276
      %p279 = scmp.ne.s32.totalorder %s262, %s278
      %p280 = scmp.eq.s32.totalorder %s56, 0
      %p281 = por %p279, %p280
      %s282 = ssub.s32 %s50, %s57
      %p283 = scmp.eq.s32.totalorder %s282, 0
      %s285 = sadd.s32 %s284, 1
      %s286 = scalar_select %p283, %s284, %s285
      %p289 = pneg %p283
      %p290 = scmp.eq.s32.totalorder %s50, 3
      %p291 = por %p289, %p290
      %p292 = scmp.ne.s32.totalorder %s284, %s287
      %p293 = scmp.eq.s32.totalorder %s50, 0
      %p294 = por %p292, %p293
      %p295 = scmp.ne.s32.totalorder %s284, %s287
      %p296 = scmp.eq.s32.totalorder %s55, 3
      %p297 = por %p295, %p296
      %p298 = scmp.ne.s32.totalorder %s287, %s288
      %p299 = scmp.eq.s32.totalorder %s55, 0
      %p300 = por %p298, %p299
      %p301 = scmp.ne.s32.totalorder %s287, %s288
      %p302 = scmp.eq.s32.totalorder %s56, 3
      %p303 = por %p301, %p302
      %p305 = scmp.ne.s32.totalorder %s288, %s304
      %p306 = scmp.eq.s32.totalorder %s56, 0
      %p307 = por %p305, %p306
      %s308 = ssub.s32 %s50, %s57
      %p309 = scmp.eq.s32.totalorder %s308, 0
      %s311 = sadd.s32 %s310, 1
      %s312 = scalar_select %p309, %s310, %s311
      %p315 = pneg %p309
      %p316 = scmp.eq.s32.totalorder %s50, 3
      %p317 = por %p315, %p316
      %p318 = scmp.ne.s32.totalorder %s310, %s313
      %p319 = scmp.eq.s32.totalorder %s50, 0
      %p320 = por %p318, %p319
      %p321 = scmp.ne.s32.totalorder %s310, %s313
      %p322 = scmp.eq.s32.totalorder %s55, 3
      %p323 = por %p321, %p322
      %p324 = scmp.ne.s32.totalorder %s313, %s314
      %p325 = scmp.eq.s32.totalorder %s55, 0
      %p326 = por %p324, %p325
      %p327 = scmp.ne.s32.totalorder %s313, %s314
      %p328 = scmp.eq.s32.totalorder %s56, 3
      %p329 = por %p327, %p328
      %p331 = scmp.ne.s32.totalorder %s314, %s330
      %p332 = scmp.eq.s32.totalorder %s56, 0
      %p333 = por %p331, %p332
      %s334 = ssub.s32 %s50, %s57
      %p335 = scmp.eq.s32.totalorder %s334, 0
      %s337 = sadd.s32 %s336, 1
      %s338 = scalar_select %p335, %s336, %s337
      %p341 = pneg %p335
      %p342 = scmp.eq.s32.totalorder %s50, 3
      %p343 = por %p341, %p342
      %p344 = scmp.ne.s32.totalorder %s336, %s339
      %p345 = scmp.eq.s32.totalorder %s50, 0
      %p346 = por %p344, %p345
      %p347 = scmp.ne.s32.totalorder %s336, %s339
      %p348 = scmp.eq.s32.totalorder %s55, 3
      %p349 = por %p347, %p348
      %p350 = scmp.ne.s32.totalorder %s339, %s340
      %p351 = scmp.eq.s32.totalorder %s55, 0
      %p352 = por %p350, %p351
      %p353 = scmp.ne.s32.totalorder %s339, %s340
      %p354 = scmp.eq.s32.totalorder %s56, 3
      %p355 = por %p353, %p354
      %p357 = scmp.ne.s32.totalorder %s340, %s356
      %p358 = scmp.eq.s32.totalorder %s56, 0
      %p359 = por %p357, %p358
      %s360 = ssub.s32 %s50, %s57
      %p361 = scmp.eq.s32.totalorder %s360, 0
      %s363 = sadd.s32 %s362, 1
      %s364 = scalar_select %p361, %s362, %s363
      %p367 = pneg %p361
      %p368 = scmp.eq.s32.totalorder %s50, 3
      %p369 = por %p367, %p368
      %p370 = scmp.ne.s32.totalorder %s362, %s365
      %p371 = scmp.eq.s32.totalorder %s50, 0
      %p372 = por %p370, %p371
      %p373 = scmp.ne.s32.totalorder %s362, %s365
      %p374 = scmp.eq.s32.totalorder %s55, 3
      %p375 = por %p373, %p374
      %p376 = scmp.ne.s32.totalorder %s365, %s366
      %p377 = scmp.eq.s32.totalorder %s55, 0
      %p378 = por %p376, %p377
      %p379 = scmp.ne.s32.totalorder %s365, %s366
      %p380 = scmp.eq.s32.totalorder %s56, 3
      %p381 = por %p379, %p380
      %p383 = scmp.ne.s32.totalorder %s366, %s382
      %p384 = scmp.eq.s32.totalorder %s56, 0
      %p385 = por %p383, %p384
      %s386 = ssub.s32 %s50, %s57
      %p387 = scmp.eq.s32.totalorder %s386, 0
      %s389 = sadd.s32 %s388, 1
      %s390 = scalar_select %p387, %s388, %s389
      %p393 = pneg %p387
      %p394 = scmp.eq.s32.totalorder %s50, 3
      %p395 = por %p393, %p394
      %p396 = scmp.ne.s32.totalorder %s388, %s391
      %p397 = scmp.eq.s32.totalorder %s50, 0
      %p398 = por %p396, %p397
      %p399 = scmp.ne.s32.totalorder %s388, %s391
      %p400 = scmp.eq.s32.totalorder %s55, 3
      %p401 = por %p399, %p400
      %p402 = scmp.ne.s32.totalorder %s391, %s392
      %p403 = scmp.eq.s32.totalorder %s55, 0
      %p404 = por %p402, %p403
      %p405 = scmp.ne.s32.totalorder %s391, %s392
      %p406 = scmp.eq.s32.totalorder %s56, 3
      %p407 = por %p405, %p406
      %p409 = scmp.ne.s32.totalorder %s392, %s408
      %p410 = scmp.eq.s32.totalorder %s56, 0
      %p411 = por %p409, %p410
      %s412 = ssub.s32 %s50, %s57
      %p413 = scmp.eq.s32.totalorder %s412, 0
      %s415 = sadd.s32 %s414, 1
      %s416 = scalar_select %p413, %s414, %s415
      %p419 = pneg %p413
      %p420 = scmp.eq.s32.totalorder %s50, 3
      %p421 = por %p419, %p420
      %p422 = scmp.ne.s32.totalorder %s414, %s417
      %p423 = scmp.eq.s32.totalorder %s50, 0
      %p424 = por %p422, %p423
      %p425 = scmp.ne.s32.totalorder %s414, %s417
      %p426 = scmp.eq.s32.totalorder %s55, 3
      %p427 = por %p425, %p426
      %p428 = scmp.ne.s32.totalorder %s417, %s418
      %p429 = scmp.eq.s32.totalorder %s55, 0
      %p430 = por %p428, %p429
      %p431 = scmp.ne.s32.totalorder %s417, %s418
      %p432 = scmp.eq.s32.totalorder %s56, 3
      %p433 = por %p431, %p432
      %p435 = scmp.ne.s32.totalorder %s418, %s434
      %p436 = scmp.eq.s32.totalorder %s56, 0
      %p437 = por %p435, %p436
      %s438 = ssub.s32 %s50, %s57
      %p439 = scmp.eq.s32.totalorder %s438, 0
      %s441 = sadd.s32 %s440, 1
      %s442 = scalar_select %p439, %s440, %s441
      %p445 = pneg %p439
      %p446 = scmp.eq.s32.totalorder %s50, 3
      %p447 = por %p445, %p446
      %p448 = scmp.ne.s32.totalorder %s440, %s443
      %p449 = scmp.eq.s32.totalorder %s50, 0
      %p450 = por %p448, %p449
      %p451 = scmp.ne.s32.totalorder %s440, %s443
      %p452 = scmp.eq.s32.totalorder %s55, 3
      %p453 = por %p451, %p452
      %p454 = scmp.ne.s32.totalorder %s443, %s444
      %p455 = scmp.eq.s32.totalorder %s55, 0
      %p456 = por %p454, %p455
      %p457 = scmp.ne.s32.totalorder %s443, %s444
      %p458 = scmp.eq.s32.totalorder %s56, 3
      %p459 = por %p457, %p458
      %p461 = scmp.ne.s32.totalorder %s444, %s460
      %p462 = scmp.eq.s32.totalorder %s56, 0
      %p463 = por %p461, %p462
      %s464 = ssub.s32 %s50, %s57
      %p465 = scmp.eq.s32.totalorder %s464, 0
      %s467 = sadd.s32 %s466, 1
      %s468 = scalar_select %p465, %s466, %s467
      %p471 = pneg %p465
      %p472 = scmp.eq.s32.totalorder %s50, 3
      %p473 = por %p471, %p472
      %p474 = scmp.ne.s32.totalorder %s466, %s469
      %p475 = scmp.eq.s32.totalorder %s50, 0
      %p476 = por %p474, %p475
      %p477 = scmp.ne.s32.totalorder %s466, %s469
      %p478 = scmp.eq.s32.totalorder %s55, 3
      %p479 = por %p477, %p478
      %p480 = scmp.ne.s32.totalorder %s469, %s470
      %p481 = scmp.eq.s32.totalorder %s55, 0
      %p482 = por %p480, %p481
      %p483 = scmp.ne.s32.totalorder %s469, %s470
      %p484 = scmp.eq.s32.totalorder %s56, 3
      %p485 = por %p483, %p484
      %p487 = scmp.ne.s32.totalorder %s470, %s486
      %p488 = scmp.eq.s32.totalorder %s56, 0
      %p489 = por %p487, %p488
      %s490 = ssub.s32 %s50, %s57
      %p491 = scmp.eq.s32.totalorder %s490, 0
      %s493 = sadd.s32 %s492, 1
      %s494 = scalar_select %p491, %s492, %s493
      %p497 = pneg %p491
      %p498 = scmp.eq.s32.totalorder %s50, 3
      %p499 = por %p497, %p498
      %p500 = scmp.ne.s32.totalorder %s492, %s495
      %p501 = scmp.eq.s32.totalorder %s50, 0
      %p502 = por %p500, %p501
      %p503 = scmp.ne.s32.totalorder %s492, %s495
      %p504 = scmp.eq.s32.totalorder %s55, 3
      %p505 = por %p503, %p504
      %p506 = scmp.ne.s32.totalorder %s495, %s496
      %p507 = scmp.eq.s32.totalorder %s55, 0
      %p508 = por %p506, %p507
      %p509 = scmp.ne.s32.totalorder %s495, %s496
      %p510 = scmp.eq.s32.totalorder %s56, 3
      %p511 = por %p509, %p510
      %p513 = scmp.ne.s32.totalorder %s496, %s512
      %p514 = scmp.eq.s32.totalorder %s56, 0
      %p515 = por %p513, %p514
      %s517 = sadd.s32 %s516, 1
      %p520 = scmp.eq.s32.totalorder %s50, 3
      %p521 = scmp.ne.s32.totalorder %s516, %s518
      %p522 = scmp.eq.s32.totalorder %s50, 0
      %p523 = por %p521, %p522
      %p524 = scmp.ne.s32.totalorder %s516, %s518
      %p525 = scmp.eq.s32.totalorder %s55, 3
      %p526 = por %p524, %p525
      %p527 = scmp.ne.s32.totalorder %s518, %s519
      %p528 = scmp.eq.s32.totalorder %s55, 0
      %p529 = por %p527, %p528
      %p530 = scmp.ne.s32.totalorder %s518, %s519
      %p531 = scmp.eq.s32.totalorder %s56, 3
      %p532 = por %p530, %p531
      %p534 = scmp.ne.s32.totalorder %s519, %s533
      %p535 = scmp.eq.s32.totalorder %s56, 0
      %p536 = por %p534, %p535
      %p537 = scmp.le.s32.totalorder 1, %s50
      %p538 = scmp.lt.s32.totalorder %s50, 5
      %p539 = pnand %p537, %p538
      %p540 = pneg %p539
      // Predicated region
      $region9: #{basic_net4_forward.1} parent=5 // pred_check
        _
      $region10: #{basic_net4_forward.1} parent=5 // pred_check_branch
        %542 = sbr.rel (%p539) target = $region12
      $region11: #{basic_net4_forward.1} parent=5 // pred_region
        %s543 = ssub.s32 %s50, 1
        // Predicated region
        $region13: #{basic_net4_forward.1} parent=11 // pred_check
          %p544 = pneg %p71
        $region14: #{basic_net4_forward.1} parent=11 // pred_check_branch
          %546 = sbr.rel (%p544) target = $region16
        $region15: #{basic_net4_forward.1} parent=11 // pred_region
          _
        $region16: #{basic_net4_forward.1} parent=11 // pred_fallthru
          _
        // Predicated region
        $region17: #{basic_net4_forward.1} parent=11 // pred_check
          %p547 = pneg %p92
        $region18: #{basic_net4_forward.1} parent=11 // pred_check_branch
          %549 = sbr.rel (%p547) target = $region20
        $region19: #{basic_net4_forward.1} parent=11 // pred_region
          %s551 = ssub.s32 256, 256
          %552 = vsyncadd [#allocation8], %s551
          %s553 = sshll.u32 [#allocation7], 4
          %s554 = int_to_ptr.vmem [resolvable:$true] %s553
          %559 = dma.hbm_to_vmem [thread:$0]  %s1, 256, %s554, [#allocation8], 128, 128, 8
        $region20: #{basic_net4_forward.1} parent=11 // pred_fallthru
          _
      $region12: #{basic_net4_forward.1} parent=5 // pred_fallthru
        _
      %p560 = scmp.lt.s32.totalorder %s50, 4
      // Predicated region
      $region21: #{basic_net4_forward.1} parent=5 // pred_check
        %p561 = pneg %p560
      $region22: #{basic_net4_forward.1} parent=5 // pred_check_branch
        %563 = sbr.rel (%p561) target = $region24
      $region23: #{basic_net4_forward.1} parent=5 // pred_region
        // Predicated region
        $region25: #{basic_net4_forward.1} parent=23 // pred_check
          %p564 = pneg %p112
        $region26: #{basic_net4_forward.1} parent=23 // pred_check_branch
          %566 = sbr.rel (%p564) target = $region28
        $region27: #{basic_net4_forward.1} parent=23 // pred_region
          %s567 = sand.u32 %s50, 1
          %s568 = scalar_lea.sflag [#allocation11], %s567
          %s569 = sand.u32 %s102, 1
          %s570 = smul.addr %s569, 4
          %s571 = scalar_lea.vmem [#allocation10], %s570
          %s573 = ssub.s32 64, 64
          %574 = vsyncadd %s568, %s573
          %s575 = smul.addr %s50, 4
          %s576 = smul.addr %s575, 16
          %s577 = scalar_lea.hbm %s2, %s576
          %s579 = sshll.u32 %s571, 4
          %s580 = int_to_ptr.vmem [resolvable:$true] %s579
          %582 = dma.hbm_to_vmem [thread:$0]  %s577, 64, %s580, %s568
        $region28: #{basic_net4_forward.1} parent=23 // pred_fallthru
          _
        // Predicated region
        $region29: #{basic_net4_forward.1} parent=23 // pred_check
          %p583 = pneg %p138
        $region30: #{basic_net4_forward.1} parent=23 // pred_check_branch
          %585 = sbr.rel (%p583) target = $region32
        $region31: #{basic_net4_forward.1} parent=23 // pred_region
          %s586 = sand.u32 %s50, 1
          %s587 = scalar_lea.sflag [#allocation11], %s586
          %s588 = sand.u32 %s128, 1
          %s589 = smul.addr %s588, 4
          %s590 = scalar_lea.vmem [#allocation12], %s589
          %s592 = ssub.s32 64, 64
          %593 = vsyncadd %s587, %s592
          %s594 = smul.addr %s50, 4
          %s595 = smul.addr %s594, 16
          %s596 = scalar_lea.hbm %s3, %s595
          %s598 = sshll.u32 %s590, 4
          %s599 = int_to_ptr.vmem [resolvable:$true] %s598
          %601 = dma.hbm_to_vmem [thread:$0]  %s596, 64, %s599, %s587
        $region32: #{basic_net4_forward.1} parent=23 // pred_fallthru
          _
        // Predicated region
        $region33: #{basic_net4_forward.1} parent=23 // pred_check
          %p602 = pneg %p164
        $region34: #{basic_net4_forward.1} parent=23 // pred_check_branch
          %604 = sbr.rel (%p602) target = $region36
        $region35: #{basic_net4_forward.1} parent=23 // pred_region
          %s605 = sand.u32 %s50, 1
          %s606 = scalar_lea.sflag [#allocation14], %s605
          %s607 = sand.u32 %s154, 1
          %s608 = smul.addr %s607, 2048
          %s609 = scalar_lea.vmem [#allocation13], %s608
          %s611 = ssub.s32 32768, 32768
          %612 = vsyncadd %s606, %s611
          %s613 = smul.addr %s50, 256
          %s614 = smul.addr %s613, 128
          %s615 = scalar_lea.hbm %s4, %s614
          %s616 = sshll.u32 %s609, 4
          %s617 = int_to_ptr.vmem [resolvable:$true] %s616
          %622 = dma.hbm_to_vmem [thread:$0]  %s615, 32768, %s617, %s606, 512, 512, 32
        $region36: #{basic_net4_forward.1} parent=23 // pred_fallthru
          _
        // Predicated region
        $region37: #{basic_net4_forward.1} parent=23 // pred_check
          %p623 = pneg %p190
        $region38: #{basic_net4_forward.1} parent=23 // pred_check_branch
          %625 = sbr.rel (%p623) target = $region40
        $region39: #{basic_net4_forward.1} parent=23 // pred_region
          %s626 = sand.u32 %s50, 1
          %s627 = scalar_lea.sflag [#allocation14], %s626
          %s628 = sand.u32 %s180, 1
          %s629 = smul.addr %s628, 4
          %s630 = scalar_lea.vmem [#allocation15], %s629
          %s632 = ssub.s32 64, 64
          %633 = vsyncadd %s627, %s632
          %s634 = smul.addr %s50, 4
          %s635 = smul.addr %s634, 16
          %s636 = scalar_lea.hbm %s5, %s635
          %s638 = sshll.u32 %s630, 4
          %s639 = int_to_ptr.vmem [resolvable:$true] %s638
          %641 = dma.hbm_to_vmem [thread:$0]  %s636, 64, %s639, %s627
        $region40: #{basic_net4_forward.1} parent=23 // pred_fallthru
          _
        // Predicated region
        $region41: #{basic_net4_forward.1} parent=23 // pred_check
          %p642 = pneg %p216
        $region42: #{basic_net4_forward.1} parent=23 // pred_check_branch
          %644 = sbr.rel (%p642) target = $region44
        $region43: #{basic_net4_forward.1} parent=23 // pred_region
          %s645 = sand.u32 %s50, 1
          %s646 = scalar_lea.sflag [#allocation17], %s645
          %s647 = sand.u32 %s206, 1
          %s648 = smul.addr %s647, 4096
          %s649 = scalar_lea.vmem [#allocation16], %s648
          %s651 = ssub.s32 65536, 65536
          %652 = vsyncadd %s646, %s651
          %s653 = smul.addr %s50, 512
          %s654 = smul.addr %s653, 128
          %s655 = scalar_lea.hbm %s6, %s654
          %s656 = sshll.u32 %s649, 4
          %s657 = int_to_ptr.vmem [resolvable:$true] %s656
          %662 = dma.hbm_to_vmem [thread:$0]  %s655, 65536, %s657, %s646, 1024, 1024, 64
        $region44: #{basic_net4_forward.1} parent=23 // pred_fallthru
          _
        // Predicated region
        $region45: #{basic_net4_forward.1} parent=23 // pred_check
          %p663 = pneg %p242
        $region46: #{basic_net4_forward.1} parent=23 // pred_check_branch
          %665 = sbr.rel (%p663) target = $region48
        $region47: #{basic_net4_forward.1} parent=23 // pred_region
          %s666 = sand.u32 %s50, 1
          %s667 = scalar_lea.sflag [#allocation17], %s666
          %s668 = sand.u32 %s232, 1
          %s669 = smul.addr %s668, 8
          %s670 = scalar_lea.vmem [#allocation18], %s669
          %s672 = ssub.s32 128, 128
          %673 = vsyncadd %s667, %s672
          %s674 = smul.addr %s50, 8
          %s675 = smul.addr %s674, 16
          %s676 = scalar_lea.hbm %s7, %s675
          %s678 = sshll.u32 %s670, 4
          %s679 = int_to_ptr.vmem [resolvable:$true] %s678
          %681 = dma.hbm_to_vmem [thread:$0]  %s676, 128, %s679, %s667
        $region48: #{basic_net4_forward.1} parent=23 // pred_fallthru
          _
        // Predicated region
        $region49: #{basic_net4_forward.1} parent=23 // pred_check
          %p682 = pneg %p268
        $region50: #{basic_net4_forward.1} parent=23 // pred_check_branch
          %684 = sbr.rel (%p682) target = $region52
        $region51: #{basic_net4_forward.1} parent=23 // pred_region
          %s685 = sand.u32 %s50, 1
          %s686 = scalar_lea.sflag [#allocation20], %s685
          %s687 = sand.u32 %s258, 1
          %s688 = smul.addr %s687, 2048
          %s689 = scalar_lea.vmem [#allocation19], %s688
          %s691 = ssub.s32 32768, 32768
          %692 = vsyncadd %s686, %s691
          %s693 = smul.addr %s50, 256
          %s694 = smul.addr %s693, 128
          %s695 = scalar_lea.hbm %s8, %s694
          %s696 = sshll.u32 %s689, 4
          %s697 = int_to_ptr.vmem [resolvable:$true] %s696
          %702 = dma.hbm_to_vmem [thread:$0]  %s695, 32768, %s697, %s686, 512, 512, 32
        $region52: #{basic_net4_forward.1} parent=23 // pred_fallthru
          _
        // Predicated region
        $region53: #{basic_net4_forward.1} parent=23 // pred_check
          %p703 = pneg %p294
        $region54: #{basic_net4_forward.1} parent=23 // pred_check_branch
          %705 = sbr.rel (%p703) target = $region56
        $region55: #{basic_net4_forward.1} parent=23 // pred_region
          %s706 = sand.u32 %s50, 1
          %s707 = scalar_lea.sflag [#allocation20], %s706
          %s708 = sand.u32 %s284, 1
          %s709 = smul.addr %s708, 4
          %s710 = scalar_lea.vmem [#allocation21], %s709
          %s712 = ssub.s32 64, 64
          %713 = vsyncadd %s707, %s712
          %s714 = smul.addr %s50, 4
          %s715 = smul.addr %s714, 16
          %s716 = scalar_lea.hbm %s9, %s715
          %s718 = sshll.u32 %s710, 4
          %s719 = int_to_ptr.vmem [resolvable:$true] %s718
          %721 = dma.hbm_to_vmem [thread:$0]  %s716, 64, %s719, %s707
        $region56: #{basic_net4_forward.1} parent=23 // pred_fallthru
          _
        // Predicated region
        $region57: #{basic_net4_forward.1} parent=23 // pred_check
          %p722 = pneg %p320
        $region58: #{basic_net4_forward.1} parent=23 // pred_check_branch
          %724 = sbr.rel (%p722) target = $region60
        $region59: #{basic_net4_forward.1} parent=23 // pred_region
          %s725 = sand.u32 %s50, 1
          %s726 = scalar_lea.sflag [#allocation23], %s725
          %s727 = sand.u32 %s310, 1
          %s728 = smul.addr %s727, 4
          %s729 = scalar_lea.vmem [#allocation22], %s728
          %s731 = ssub.s32 64, 64
          %732 = vsyncadd %s726, %s731
          %s733 = smul.addr %s50, 4
          %s734 = smul.addr %s733, 16
          %s735 = scalar_lea.hbm %s10, %s734
          %s737 = sshll.u32 %s729, 4
          %s738 = int_to_ptr.vmem [resolvable:$true] %s737
          %740 = dma.hbm_to_vmem [thread:$0]  %s735, 64, %s738, %s726
        $region60: #{basic_net4_forward.1} parent=23 // pred_fallthru
          _
        // Predicated region
        $region61: #{basic_net4_forward.1} parent=23 // pred_check
          %p741 = pneg %p346
        $region62: #{basic_net4_forward.1} parent=23 // pred_check_branch
          %743 = sbr.rel (%p741) target = $region64
        $region63: #{basic_net4_forward.1} parent=23 // pred_region
          %s744 = sand.u32 %s50, 1
          %s745 = scalar_lea.sflag [#allocation23], %s744
          %s746 = sand.u32 %s336, 1
          %s747 = smul.addr %s746, 4
          %s748 = scalar_lea.vmem [#allocation24], %s747
          %s750 = ssub.s32 64, 64
          %751 = vsyncadd %s745, %s750
          %s752 = smul.addr %s50, 4
          %s753 = smul.addr %s752, 16
          %s754 = scalar_lea.hbm %s11, %s753
          %s756 = sshll.u32 %s748, 4
          %s757 = int_to_ptr.vmem [resolvable:$true] %s756
          %759 = dma.hbm_to_vmem [thread:$0]  %s754, 64, %s757, %s745
        $region64: #{basic_net4_forward.1} parent=23 // pred_fallthru
          _
        // Predicated region
        $region65: #{basic_net4_forward.1} parent=23 // pred_check
          %p760 = pneg %p372
        $region66: #{basic_net4_forward.1} parent=23 // pred_check_branch
          %762 = sbr.rel (%p760) target = $region68
        $region67: #{basic_net4_forward.1} parent=23 // pred_region
          %s763 = sand.u32 %s50, 1
          %s764 = scalar_lea.sflag [#allocation26], %s763
          %s765 = sand.u32 %s362, 1
          %s766 = smul.addr %s765, 512
          %s767 = scalar_lea.vmem [#allocation25], %s766
          %s769 = ssub.s32 8192, 8192
          %770 = vsyncadd %s764, %s769
          %s771 = smul.addr %s50, 64
          %s772 = smul.addr %s771, 128
          %s773 = scalar_lea.hbm %s12, %s772
          %s774 = sshll.u32 %s767, 4
          %s775 = int_to_ptr.vmem [resolvable:$true] %s774
          %780 = dma.hbm_to_vmem [thread:$0]  %s773, 8192, %s775, %s764, 128, 128, 8
        $region68: #{basic_net4_forward.1} parent=23 // pred_fallthru
          _
        // Predicated region
        $region69: #{basic_net4_forward.1} parent=23 // pred_check
          %p781 = pneg %p398
        $region70: #{basic_net4_forward.1} parent=23 // pred_check_branch
          %783 = sbr.rel (%p781) target = $region72
        $region71: #{basic_net4_forward.1} parent=23 // pred_region
          %s784 = sand.u32 %s50, 1
          %s785 = scalar_lea.sflag [#allocation26], %s784
          %s786 = sand.u32 %s388, 1
          %s787 = scalar_lea.vmem [#allocation27], %s786
          %s789 = ssub.s32 16, 16
          %790 = vsyncadd %s785, %s789
          %s791 = smul.addr %s50, 16
          %s792 = scalar_lea.hbm %s13, %s791
          %s794 = sshll.u32 %s787, 4
          %s795 = int_to_ptr.vmem [resolvable:$true] %s794
          %797 = dma.hbm_to_vmem [thread:$0]  %s792, 16, %s795, %s785
        $region72: #{basic_net4_forward.1} parent=23 // pred_fallthru
          _
        // Predicated region
        $region73: #{basic_net4_forward.1} parent=23 // pred_check
          %p798 = pneg %p424
        $region74: #{basic_net4_forward.1} parent=23 // pred_check_branch
          %800 = sbr.rel (%p798) target = $region76
        $region75: #{basic_net4_forward.1} parent=23 // pred_region
          %s801 = sand.u32 %s50, 1
          %s802 = scalar_lea.sflag [#allocation29], %s801
          %s803 = sand.u32 %s414, 1
          %s804 = smul.addr %s803, 512
          %s805 = scalar_lea.vmem [#allocation28], %s804
          %s807 = ssub.s32 8192, 8192
          %808 = vsyncadd %s802, %s807
          %s809 = smul.addr %s50, 64
          %s810 = smul.addr %s809, 128
          %s811 = scalar_lea.hbm %s14, %s810
          %s812 = sshll.u32 %s805, 4
          %s813 = int_to_ptr.vmem [resolvable:$true] %s812
          %818 = dma.hbm_to_vmem [thread:$0]  %s811, 8192, %s813, %s802, 512, 512, 32
        $region76: #{basic_net4_forward.1} parent=23 // pred_fallthru
          _
        // Predicated region
        $region77: #{basic_net4_forward.1} parent=23 // pred_check
          %p819 = pneg %p450
        $region78: #{basic_net4_forward.1} parent=23 // pred_check_branch
          %821 = sbr.rel (%p819) target = $region80
        $region79: #{basic_net4_forward.1} parent=23 // pred_region
          %s822 = sand.u32 %s50, 1
          %s823 = scalar_lea.sflag [#allocation29], %s822
          %s824 = sand.u32 %s440, 1
          %s825 = smul.addr %s824, 4
          %s826 = scalar_lea.vmem [#allocation30], %s825
          %s828 = ssub.s32 64, 64
          %829 = vsyncadd %s823, %s828
          %s830 = smul.addr %s50, 4
          %s831 = smul.addr %s830, 16
          %s832 = scalar_lea.hbm %s15, %s831
          %s834 = sshll.u32 %s826, 4
          %s835 = int_to_ptr.vmem [resolvable:$true] %s834
          %837 = dma.hbm_to_vmem [thread:$0]  %s832, 64, %s835, %s823
        $region80: #{basic_net4_forward.1} parent=23 // pred_fallthru
          _
        // Predicated region
        $region81: #{basic_net4_forward.1} parent=23 // pred_check
          %p838 = pneg %p476
        $region82: #{basic_net4_forward.1} parent=23 // pred_check_branch
          %840 = sbr.rel (%p838) target = $region84
        $region83: #{basic_net4_forward.1} parent=23 // pred_region
          %s841 = sand.u32 %s50, 1
          %s842 = scalar_lea.sflag [#allocation32], %s841
          %s843 = sand.u32 %s466, 1
          %s844 = smul.addr %s843, 4
          %s845 = scalar_lea.vmem [#allocation31], %s844
          %s847 = ssub.s32 64, 64
          %848 = vsyncadd %s842, %s847
          %s849 = smul.addr %s50, 4
          %s850 = smul.addr %s849, 16
          %s851 = scalar_lea.hbm %s16, %s850
          %s853 = sshll.u32 %s845, 4
          %s854 = int_to_ptr.vmem [resolvable:$true] %s853
          %856 = dma.hbm_to_vmem [thread:$0]  %s851, 64, %s854, %s842
        $region84: #{basic_net4_forward.1} parent=23 // pred_fallthru
          _
        // Predicated region
        $region85: #{basic_net4_forward.1} parent=23 // pred_check
          %p857 = pneg %p502
        $region86: #{basic_net4_forward.1} parent=23 // pred_check_branch
          %859 = sbr.rel (%p857) target = $region88
        $region87: #{basic_net4_forward.1} parent=23 // pred_region
          %s860 = sand.u32 %s50, 1
          %s861 = scalar_lea.sflag [#allocation32], %s860
          %s862 = sand.u32 %s492, 1
          %s863 = smul.addr %s862, 4
          %s864 = scalar_lea.vmem [#allocation33], %s863
          %s866 = ssub.s32 64, 64
          %867 = vsyncadd %s861, %s866
          %s868 = smul.addr %s50, 4
          %s869 = smul.addr %s868, 16
          %s870 = scalar_lea.hbm %s17, %s869
          %s872 = sshll.u32 %s864, 4
          %s873 = int_to_ptr.vmem [resolvable:$true] %s872
          %875 = dma.hbm_to_vmem [thread:$0]  %s870, 64, %s873, %s861
        $region88: #{basic_net4_forward.1} parent=23 // pred_fallthru
          _
      $region24: #{basic_net4_forward.1} parent=5 // pred_fallthru
        _
      %p876 = scmp.le.s32.totalorder 1, %s50
      %p877 = scmp.lt.s32.totalorder %s50, 5
      %p878 = pnand %p876, %p877
      %p879 = pneg %p878
      // Predicated region
      $region89: #{basic_net4_forward.1} parent=5 // pred_check
        _
      $region90: #{basic_net4_forward.1} parent=5 // pred_check_branch
        %881 = sbr.rel (%p878) target = $region92
      $region91: #{basic_net4_forward.1} parent=5 // pred_region
        %s882 = ssub.s32 %s50, 1
        // Predicated region
        $region93: #{basic_net4_forward.1} parent=91 // pred_check
          %p883 = pneg %p92
        $region94: #{basic_net4_forward.1} parent=91 // pred_check_branch
          %885 = sbr.rel (%p883) target = $region96
        $region95: #{basic_net4_forward.1} parent=91 // pred_region
          %886 = dma.done [#allocation8], 256
        $region96: #{basic_net4_forward.1} parent=91 // pred_fallthru
          _
        %s887 = sand.u32 %s55, 1
        %s888 = scalar_lea.sflag [#allocation11], %s887
        %s889 = sand.u32 %s105, 1
        %s890 = smul.addr %s889, 4
        %s891 = scalar_lea.vmem [#allocation10], %s890
        // Predicated region
        $region97: #{basic_net4_forward.1} parent=91 // pred_check
          %p892 = pneg %p118
        $region98: #{basic_net4_forward.1} parent=91 // pred_check_branch
          %894 = sbr.rel (%p892) target = $region100
        $region99: #{basic_net4_forward.1} parent=91 // pred_region
          %895 = dma.done %s888, 64
        $region100: #{basic_net4_forward.1} parent=91 // pred_fallthru
          _
        %s896 = sand.u32 %s55, 1
        %s897 = scalar_lea.sflag [#allocation11], %s896
        %s898 = sand.u32 %s131, 1
        %s899 = smul.addr %s898, 4
        %s900 = scalar_lea.vmem [#allocation12], %s899
        // Predicated region
        $region101: #{basic_net4_forward.1} parent=91 // pred_check
          %p901 = pneg %p144
        $region102: #{basic_net4_forward.1} parent=91 // pred_check_branch
          %903 = sbr.rel (%p901) target = $region104
        $region103: #{basic_net4_forward.1} parent=91 // pred_region
          %904 = dma.done %s897, 64
        $region104: #{basic_net4_forward.1} parent=91 // pred_fallthru
          _
        %s905 = sand.u32 %s55, 1
        %s906 = scalar_lea.sflag [#allocation14], %s905
        %s907 = sand.u32 %s157, 1
        %s908 = smul.addr %s907, 2048
        %s909 = scalar_lea.vmem [#allocation13], %s908
        // Predicated region
        $region105: #{basic_net4_forward.1} parent=91 // pred_check
          %p910 = pneg %p170
        $region106: #{basic_net4_forward.1} parent=91 // pred_check_branch
          %912 = sbr.rel (%p910) target = $region108
        $region107: #{basic_net4_forward.1} parent=91 // pred_region
          %913 = dma.done %s906, 32768
        $region108: #{basic_net4_forward.1} parent=91 // pred_fallthru
          _
        %s914 = sand.u32 %s55, 1
        %s915 = scalar_lea.sflag [#allocation14], %s914
        %s916 = sand.u32 %s183, 1
        %s917 = smul.addr %s916, 4
        %s918 = scalar_lea.vmem [#allocation15], %s917
        // Predicated region
        $region109: #{basic_net4_forward.1} parent=91 // pred_check
          %p919 = pneg %p196
        $region110: #{basic_net4_forward.1} parent=91 // pred_check_branch
          %921 = sbr.rel (%p919) target = $region112
        $region111: #{basic_net4_forward.1} parent=91 // pred_region
          %922 = dma.done %s915, 64
        $region112: #{basic_net4_forward.1} parent=91 // pred_fallthru
          _
        %s923 = sand.u32 %s55, 1
        %s924 = scalar_lea.sflag [#allocation17], %s923
        %s925 = sand.u32 %s209, 1
        %s926 = smul.addr %s925, 4096
        %s927 = scalar_lea.vmem [#allocation16], %s926
        // Predicated region
        $region113: #{basic_net4_forward.1} parent=91 // pred_check
          %p928 = pneg %p222
        $region114: #{basic_net4_forward.1} parent=91 // pred_check_branch
          %930 = sbr.rel (%p928) target = $region116
        $region115: #{basic_net4_forward.1} parent=91 // pred_region
          %931 = dma.done %s924, 65536
        $region116: #{basic_net4_forward.1} parent=91 // pred_fallthru
          _
        %s932 = sand.u32 %s55, 1
        %s933 = scalar_lea.sflag [#allocation17], %s932
        %s934 = sand.u32 %s235, 1
        %s935 = smul.addr %s934, 8
        %s936 = scalar_lea.vmem [#allocation18], %s935
        // Predicated region
        $region117: #{basic_net4_forward.1} parent=91 // pred_check
          %p937 = pneg %p248
        $region118: #{basic_net4_forward.1} parent=91 // pred_check_branch
          %939 = sbr.rel (%p937) target = $region120
        $region119: #{basic_net4_forward.1} parent=91 // pred_region
          %940 = dma.done %s933, 128
        $region120: #{basic_net4_forward.1} parent=91 // pred_fallthru
          _
        %s941 = sand.u32 %s55, 1
        %s942 = scalar_lea.sflag [#allocation20], %s941
        %s943 = sand.u32 %s261, 1
        %s944 = smul.addr %s943, 2048
        %s945 = scalar_lea.vmem [#allocation19], %s944
        // Predicated region
        $region121: #{basic_net4_forward.1} parent=91 // pred_check
          %p946 = pneg %p274
        $region122: #{basic_net4_forward.1} parent=91 // pred_check_branch
          %948 = sbr.rel (%p946) target = $region124
        $region123: #{basic_net4_forward.1} parent=91 // pred_region
          %949 = dma.done %s942, 32768
        $region124: #{basic_net4_forward.1} parent=91 // pred_fallthru
          _
        %s950 = sand.u32 %s55, 1
        %s951 = scalar_lea.sflag [#allocation20], %s950
        %s952 = sand.u32 %s287, 1
        %s953 = smul.addr %s952, 4
        %s954 = scalar_lea.vmem [#allocation21], %s953
        // Predicated region
        $region125: #{basic_net4_forward.1} parent=91 // pred_check
          %p955 = pneg %p300
        $region126: #{basic_net4_forward.1} parent=91 // pred_check_branch
          %957 = sbr.rel (%p955) target = $region128
        $region127: #{basic_net4_forward.1} parent=91 // pred_region
          %958 = dma.done %s951, 64
        $region128: #{basic_net4_forward.1} parent=91 // pred_fallthru
          _
        %s959 = sand.u32 %s55, 1
        %s960 = scalar_lea.sflag [#allocation23], %s959
        %s961 = sand.u32 %s313, 1
        %s962 = smul.addr %s961, 4
        %s963 = scalar_lea.vmem [#allocation22], %s962
        // Predicated region
        $region129: #{basic_net4_forward.1} parent=91 // pred_check
          %p964 = pneg %p326
        $region130: #{basic_net4_forward.1} parent=91 // pred_check_branch
          %966 = sbr.rel (%p964) target = $region132
        $region131: #{basic_net4_forward.1} parent=91 // pred_region
          %967 = dma.done %s960, 64
        $region132: #{basic_net4_forward.1} parent=91 // pred_fallthru
          _
        %s968 = sand.u32 %s55, 1
        %s969 = scalar_lea.sflag [#allocation23], %s968
        %s970 = sand.u32 %s339, 1
        %s971 = smul.addr %s970, 4
        %s972 = scalar_lea.vmem [#allocation24], %s971
        // Predicated region
        $region133: #{basic_net4_forward.1} parent=91 // pred_check
          %p973 = pneg %p352
        $region134: #{basic_net4_forward.1} parent=91 // pred_check_branch
          %975 = sbr.rel (%p973) target = $region136
        $region135: #{basic_net4_forward.1} parent=91 // pred_region
          %976 = dma.done %s969, 64
        $region136: #{basic_net4_forward.1} parent=91 // pred_fallthru
          _
        %s977 = sand.u32 %s55, 1
        %s978 = scalar_lea.sflag [#allocation26], %s977
        %s979 = sand.u32 %s365, 1
        %s980 = smul.addr %s979, 512
        %s981 = scalar_lea.vmem [#allocation25], %s980
        // Predicated region
        $region137: #{basic_net4_forward.1} parent=91 // pred_check
          %p982 = pneg %p378
        $region138: #{basic_net4_forward.1} parent=91 // pred_check_branch
          %984 = sbr.rel (%p982) target = $region140
        $region139: #{basic_net4_forward.1} parent=91 // pred_region
          %985 = dma.done %s978, 8192
        $region140: #{basic_net4_forward.1} parent=91 // pred_fallthru
          _
        %s986 = sand.u32 %s55, 1
        %s987 = scalar_lea.sflag [#allocation26], %s986
        %s988 = sand.u32 %s391, 1
        %s989 = scalar_lea.vmem [#allocation27], %s988
        // Predicated region
        $region141: #{basic_net4_forward.1} parent=91 // pred_check
          %p990 = pneg %p404
        $region142: #{basic_net4_forward.1} parent=91 // pred_check_branch
          %992 = sbr.rel (%p990) target = $region144
        $region143: #{basic_net4_forward.1} parent=91 // pred_region
          %993 = dma.done %s987, 16
        $region144: #{basic_net4_forward.1} parent=91 // pred_fallthru
          _
        %s994 = sand.u32 %s55, 1
        %s995 = scalar_lea.sflag [#allocation29], %s994
        %s996 = sand.u32 %s417, 1
        %s997 = smul.addr %s996, 512
        %s998 = scalar_lea.vmem [#allocation28], %s997
        // Predicated region
        $region145: #{basic_net4_forward.1} parent=91 // pred_check
          %p999 = pneg %p430
        $region146: #{basic_net4_forward.1} parent=91 // pred_check_branch
          %1001 = sbr.rel (%p999) target = $region148
        $region147: #{basic_net4_forward.1} parent=91 // pred_region
          %1002 = dma.done %s995, 8192
        $region148: #{basic_net4_forward.1} parent=91 // pred_fallthru
          _
        %s1003 = sand.u32 %s55, 1
        %s1004 = scalar_lea.sflag [#allocation29], %s1003
        %s1005 = sand.u32 %s443, 1
        %s1006 = smul.addr %s1005, 4
        %s1007 = scalar_lea.vmem [#allocation30], %s1006
        // Predicated region
        $region149: #{basic_net4_forward.1} parent=91 // pred_check
          %p1008 = pneg %p456
        $region150: #{basic_net4_forward.1} parent=91 // pred_check_branch
          %1010 = sbr.rel (%p1008) target = $region152
        $region151: #{basic_net4_forward.1} parent=91 // pred_region
          %1011 = dma.done %s1004, 64
        $region152: #{basic_net4_forward.1} parent=91 // pred_fallthru
          _
        %s1012 = sand.u32 %s55, 1
        %s1013 = scalar_lea.sflag [#allocation32], %s1012
        %s1014 = sand.u32 %s469, 1
        %s1015 = smul.addr %s1014, 4
        %s1016 = scalar_lea.vmem [#allocation31], %s1015
        // Predicated region
        $region153: #{basic_net4_forward.1} parent=91 // pred_check
          %p1017 = pneg %p482
        $region154: #{basic_net4_forward.1} parent=91 // pred_check_branch
          %1019 = sbr.rel (%p1017) target = $region156
        $region155: #{basic_net4_forward.1} parent=91 // pred_region
          %1020 = dma.done %s1013, 64
        $region156: #{basic_net4_forward.1} parent=91 // pred_fallthru
          _
        %s1021 = sand.u32 %s55, 1
        %s1022 = scalar_lea.sflag [#allocation32], %s1021
        %s1023 = sand.u32 %s495, 1
        %s1024 = smul.addr %s1023, 4
        %s1025 = scalar_lea.vmem [#allocation33], %s1024
        // Predicated region
        $region157: #{basic_net4_forward.1} parent=91 // pred_check
          %p1026 = pneg %p508
        $region158: #{basic_net4_forward.1} parent=91 // pred_check_branch
          %1028 = sbr.rel (%p1026) target = $region160
        $region159: #{basic_net4_forward.1} parent=91 // pred_region
          %1029 = dma.done %s1022, 64
        $region160: #{basic_net4_forward.1} parent=91 // pred_fallthru
          _
        %p1030 = pneg %p71
        %p1031 = pneg %p68
        %p1032 = pneg %p92
        %p1033 = pneg %p89
        %s1034 = sand.u32 %s55, 1
        %s1035 = scalar_lea.sflag [#allocation11], %s1034
        %s1036 = sand.u32 %s105, 1
        %s1037 = smul.addr %s1036, 4
        %s1038 = scalar_lea.vmem [#allocation10], %s1037
        %p1039 = pneg %p118
        %p1040 = pneg %p115
        %s1041 = sand.u32 %s55, 1
        %s1042 = scalar_lea.sflag [#allocation11], %s1041
        %s1043 = sand.u32 %s131, 1
        %s1044 = smul.addr %s1043, 4
        %s1045 = scalar_lea.vmem [#allocation12], %s1044
        %p1046 = pneg %p144
        %p1047 = pneg %p141
        %s1048 = sand.u32 %s55, 1
        %s1049 = scalar_lea.sflag [#allocation14], %s1048
        %s1050 = sand.u32 %s157, 1
        %s1051 = smul.addr %s1050, 2048
        %s1052 = scalar_lea.vmem [#allocation13], %s1051
        %p1053 = pneg %p170
        %p1054 = pneg %p167
        %s1055 = sand.u32 %s55, 1
        %s1056 = scalar_lea.sflag [#allocation14], %s1055
        %s1057 = sand.u32 %s183, 1
        %s1058 = smul.addr %s1057, 4
        %s1059 = scalar_lea.vmem [#allocation15], %s1058
        %p1060 = pneg %p196
        %p1061 = pneg %p193
        %s1062 = sand.u32 %s55, 1
        %s1063 = scalar_lea.sflag [#allocation17], %s1062
        %s1064 = sand.u32 %s209, 1
        %s1065 = smul.addr %s1064, 4096
        %s1066 = scalar_lea.vmem [#allocation16], %s1065
        %p1067 = pneg %p222
        %p1068 = pneg %p219
        %s1069 = sand.u32 %s55, 1
        %s1070 = scalar_lea.sflag [#allocation17], %s1069
        %s1071 = sand.u32 %s235, 1
        %s1072 = smul.addr %s1071, 8
        %s1073 = scalar_lea.vmem [#allocation18], %s1072
        %p1074 = pneg %p248
        %p1075 = pneg %p245
        %s1076 = sand.u32 %s55, 1
        %s1077 = scalar_lea.sflag [#allocation20], %s1076
        %s1078 = sand.u32 %s261, 1
        %s1079 = smul.addr %s1078, 2048
        %s1080 = scalar_lea.vmem [#allocation19], %s1079
        %p1081 = pneg %p274
        %p1082 = pneg %p271
        %s1083 = sand.u32 %s55, 1
        %s1084 = scalar_lea.sflag [#allocation20], %s1083
        %s1085 = sand.u32 %s287, 1
        %s1086 = smul.addr %s1085, 4
        %s1087 = scalar_lea.vmem [#allocation21], %s1086
        %p1088 = pneg %p300
        %p1089 = pneg %p297
        %s1090 = sand.u32 %s55, 1
        %s1091 = scalar_lea.sflag [#allocation23], %s1090
        %s1092 = sand.u32 %s313, 1
        %s1093 = smul.addr %s1092, 4
        %s1094 = scalar_lea.vmem [#allocation22], %s1093
        %p1095 = pneg %p326
        %p1096 = pneg %p323
        %s1097 = sand.u32 %s55, 1
        %s1098 = scalar_lea.sflag [#allocation23], %s1097
        %s1099 = sand.u32 %s339, 1
        %s1100 = smul.addr %s1099, 4
        %s1101 = scalar_lea.vmem [#allocation24], %s1100
        %p1102 = pneg %p352
        %p1103 = pneg %p349
        %s1104 = sand.u32 %s55, 1
        %s1105 = scalar_lea.sflag [#allocation26], %s1104
        %s1106 = sand.u32 %s365, 1
        %s1107 = smul.addr %s1106, 512
        %s1108 = scalar_lea.vmem [#allocation25], %s1107
        %p1109 = pneg %p378
        %p1110 = pneg %p375
        %s1111 = sand.u32 %s55, 1
        %s1112 = scalar_lea.sflag [#allocation26], %s1111
        %s1113 = sand.u32 %s391, 1
        %s1114 = scalar_lea.vmem [#allocation27], %s1113
        %p1115 = pneg %p404
        %p1116 = pneg %p401
        %s1117 = sand.u32 %s55, 1
        %s1118 = scalar_lea.sflag [#allocation29], %s1117
        %s1119 = sand.u32 %s417, 1
        %s1120 = smul.addr %s1119, 512
        %s1121 = scalar_lea.vmem [#allocation28], %s1120
        %p1122 = pneg %p430
        %p1123 = pneg %p427
        %s1124 = sand.u32 %s55, 1
        %s1125 = scalar_lea.sflag [#allocation29], %s1124
        %s1126 = sand.u32 %s443, 1
        %s1127 = smul.addr %s1126, 4
        %s1128 = scalar_lea.vmem [#allocation30], %s1127
        %p1129 = pneg %p456
        %p1130 = pneg %p453
        %s1131 = sand.u32 %s55, 1
        %s1132 = scalar_lea.sflag [#allocation32], %s1131
        %s1133 = sand.u32 %s469, 1
        %s1134 = smul.addr %s1133, 4
        %s1135 = scalar_lea.vmem [#allocation31], %s1134
        %p1136 = pneg %p482
        %p1137 = pneg %p479
        %s1138 = sand.u32 %s55, 1
        %s1139 = scalar_lea.sflag [#allocation32], %s1138
        %s1140 = sand.u32 %s495, 1
        %s1141 = smul.addr %s1140, 4
        %s1142 = scalar_lea.vmem [#allocation33], %s1141
        %p1143 = pneg %p508
        %p1144 = pneg %p505
        %p1145 = pneg %p529
        %p1146 = pneg %p526
        %p1147 = scmp.eq.s32.totalorder %s55, 0
        // Predicated region
        $region161: #{basic_net4_forward.1} parent=91 // pred_check
          %p1148 = pneg %p1147
        $region162: #{basic_net4_forward.1} parent=91 // pred_check_branch
          %1150 = sbr.rel (%p1148) target = $region164
        $region163: #{basic_net4_forward.1} parent=91 // pred_region
          %v1151 = vld [vmem:[%s0] sm:$0xff]
          %v1152 = vld [vmem:[%s0 + $0x8] sm:$0xff]
          %v1153 = vld [vmem:[%s0 + $0x10] sm:$0xff]
          %v1154 = vld [vmem:[%s0 + $0x18] sm:$0xff]
          %v1155 = vld [vmem:[%s0 + $0x20] sm:$0xff]
          %v1156 = vld [vmem:[%s0 + $0x28] sm:$0xff]
          %v1157 = vld [vmem:[%s0 + $0x30] sm:$0xff]
          %v1158 = vld [vmem:[%s0 + $0x38] sm:$0xff]
          %v1159 = vld [vmem:[%s0 + $0x40] sm:$0xf]
          %v1160 = vld [vmem:[%s0 + $0x48] sm:$0xf]
          %v1161 = vld [vmem:[%s0 + $0x50] sm:$0xf]
          %v1162 = vld [vmem:[%s0 + $0x58] sm:$0xf]
          %1163 = vst [vmem:[#allocation2] sm:$0xff] %v1151
          %1164 = vst [vmem:[#allocation2 + $0x8] sm:$0xff] %v1152
          %1165 = vst [vmem:[#allocation2 + $0x10] sm:$0xff] %v1153
          %1166 = vst [vmem:[#allocation2 + $0x18] sm:$0xff] %v1154
          %1167 = vst [vmem:[#allocation2 + $0x20] sm:$0xff] %v1155
          %1168 = vst [vmem:[#allocation2 + $0x28] sm:$0xff] %v1156
          %1169 = vst [vmem:[#allocation2 + $0x30] sm:$0xff] %v1157
          %1170 = vst [vmem:[#allocation2 + $0x38] sm:$0xff] %v1158
          %1171 = vst [vmem:[#allocation2 + $0x40] sm:$0xf] %v1159
          %1172 = vst [vmem:[#allocation2 + $0x48] sm:$0xf] %v1160
          %1173 = vst [vmem:[#allocation2 + $0x50] sm:$0xf] %v1161
          %1174 = vst [vmem:[#allocation2 + $0x58] sm:$0xf] %v1162
        $region164: #{basic_net4_forward.1} parent=91 // pred_fallthru
          _
        %v1175 = vld [vmem:[#allocation2] sm:$0xff]
        %v1176 = vld [vmem:[#allocation2 + $0x8] sm:$0xff]
        %v1177 = vld [vmem:[#allocation2 + $0x10] sm:$0xff]
        %v1178 = vld [vmem:[#allocation2 + $0x18] sm:$0xff]
        %v1179 = vld [vmem:[#allocation2 + $0x20] sm:$0xff]
        %v1180 = vld [vmem:[#allocation2 + $0x28] sm:$0xff]
        %v1181 = vld [vmem:[#allocation2 + $0x30] sm:$0xff]
        %v1182 = vld [vmem:[#allocation2 + $0x38] sm:$0xff]
        %v1183 = vld [vmem:[#allocation2 + $0x40] sm:$0xf]
        %v1184 = vld [vmem:[#allocation2 + $0x48] sm:$0xf]
        %v1185 = vld [vmem:[#allocation2 + $0x50] sm:$0xf]
        %v1186 = vld [vmem:[#allocation2 + $0x58] sm:$0xf]
        %v1187 = vld [vmem:[%s891] sm:$0xf]
        %v1188 = vld [vmem:[%s900] sm:$0xf]
        %v1189 = vadd.f32 %v1175, %v1176
        %v1190 = vadd.f32 %v1189, %v1177
        %v1191 = vadd.f32 %v1190, %v1178
        %1192 = vadd.xlane.f32.xlu0 %v1191
        %v1193 = vpop.xlane.xlu0 %1192
        %v1194 = vadd.f32 %v1179, %v1180
        %v1195 = vadd.f32 %v1194, %v1181
        %v1196 = vadd.f32 %v1195, %v1182
        %1197 = vadd.xlane.f32.xlu0 %v1196
        %v1198 = vpop.xlane.xlu0 %1197
        %vm1199 = vcmask 1043456
        %v1200 = vsel %vm1199, %v1183, 0.0
        %v1201 = vsel %vm1199, %v1184, 0.0
        %v1202 = vadd.f32 %v1200, %v1201
        %v1203 = vsel %vm1199, %v1185, 0.0
        %v1204 = vadd.f32 %v1202, %v1203
        %v1205 = vsel %vm1199, %v1186, 0.0
        %v1206 = vadd.f32 %v1204, %v1205
        %1207 = vadd.xlane.f32.xlu0 %v1206
        %v1208 = vpop.xlane.xlu0 %1207
        %v1209 = vrcp.pop 512.0
        %v1210 = vmul.f32 %v1193, %v1209
        %v1211 = vmul.f32 %v1198, %v1209
        %v1212 = vmul.f32 %v1208, %v1209
        %v1213 = vsub.f32 %v1175, %v1210
        %v1214 = vsub.f32 %v1176, %v1210
        %v1215 = vsub.f32 %v1177, %v1210
        %v1216 = vsub.f32 %v1178, %v1210
        %v1217 = vsub.f32 %v1179, %v1211
        %v1218 = vsub.f32 %v1180, %v1211
        %v1219 = vsub.f32 %v1181, %v1211
        %v1220 = vsub.f32 %v1182, %v1211
        %v1221 = vsub.f32 %v1183, %v1212
        %v1222 = vsub.f32 %v1184, %v1212
        %v1223 = vsub.f32 %v1185, %v1212
        %v1224 = vsub.f32 %v1186, %v1212
        %v1225 = vmul.f32 %v1213, %v1213
        %v1226 = vmul.f32 %v1214, %v1214
        %v1227 = vmul.f32 %v1215, %v1215
        %v1228 = vmul.f32 %v1216, %v1216
        %v1229 = vmul.f32 %v1217, %v1217
        %v1230 = vmul.f32 %v1218, %v1218
        %v1231 = vmul.f32 %v1219, %v1219
        %v1232 = vmul.f32 %v1220, %v1220
        %v1233 = vmul.f32 %v1221, %v1221
        %v1234 = vmul.f32 %v1222, %v1222
        %v1235 = vmul.f32 %v1223, %v1223
        %v1236 = vmul.f32 %v1224, %v1224
        %v1237 = vadd.f32 %v1225, %v1226
        %v1238 = vadd.f32 %v1237, %v1227
        %v1239 = vadd.f32 %v1238, %v1228
        %1240 = vadd.xlane.f32.xlu0 %v1239
        %v1241 = vpop.xlane.xlu0 %1240
        %v1242 = vadd.f32 %v1229, %v1230
        %v1243 = vadd.f32 %v1242, %v1231
        %v1244 = vadd.f32 %v1243, %v1232
        %1245 = vadd.xlane.f32.xlu0 %v1244
        %v1246 = vpop.xlane.xlu0 %1245
        %v1247 = vsel %vm1199, %v1233, 0.0
        %v1248 = vsel %vm1199, %v1234, 0.0
        %v1249 = vadd.f32 %v1247, %v1248
        %v1250 = vsel %vm1199, %v1235, 0.0
        %v1251 = vadd.f32 %v1249, %v1250
        %v1252 = vsel %vm1199, %v1236, 0.0
        %v1253 = vadd.f32 %v1251, %v1252
        %1254 = vadd.xlane.f32.xlu0 %v1253
        %v1255 = vpop.xlane.xlu0 %1254
        %v1256 = vmul.f32 %v1241, %v1209
        %v1257 = vmul.f32 %v1246, %v1209
        %v1258 = vmul.f32 %v1255, %v1209
        %v1259 = vadd.f32 %v1256, 1e-05
        %v1260 = vadd.f32 %v1257, 1e-05
        %v1261 = vadd.f32 %v1258, 1e-05
        %v1262 = vrsqrt.pop %v1259
        %v1263 = vrsqrt.pop %v1260
        %v1264 = vrsqrt.pop %v1261
        %v1265 = vmul.f32 %v1213, %v1262
        %v1266 = vmul.f32 %v1214, %v1262
        %v1267 = vmul.f32 %v1215, %v1262
        %v1268 = vmul.f32 %v1216, %v1262
        %v1269 = vmul.f32 %v1217, %v1263
        %v1270 = vmul.f32 %v1218, %v1263
        %v1271 = vmul.f32 %v1219, %v1263
        %v1272 = vmul.f32 %v1220, %v1263
        %v1273 = vmul.f32 %v1221, %v1264
        %v1274 = vmul.f32 %v1222, %v1264
        %v1275 = vmul.f32 %v1223, %v1264
        %v1276 = vmul.f32 %v1224, %v1264
        %v1278 = vlaneseq
        %v1279 = vshrl.u32 %v1278, 7
        %v1280 = vsub.s32 0, %v1279
        %v1281 = vrot.slane %v1187, %v1280
        %v1282 = vlaneseq
        %v1283 = vshrl.u32 %v1282, 7
        %v1284 = vsub.s32 1, %v1283
        %v1285 = vrot.slane %v1187, %v1284
        %v1286 = vlaneseq
        %v1287 = vshrl.u32 %v1286, 7
        %v1288 = vsub.s32 2, %v1287
        %v1289 = vrot.slane %v1187, %v1288
        %v1290 = vlaneseq
        %v1291 = vshrl.u32 %v1290, 7
        %v1292 = vsub.s32 3, %v1291
        %v1293 = vrot.slane %v1187, %v1292
        %v1298 = vmul.f32 %v1265, %v1281
        %v1299 = vmul.f32 %v1266, %v1285
        %v1300 = vmul.f32 %v1267, %v1289
        %v1301 = vmul.f32 %v1268, %v1293
        %v1302 = vmul.f32 %v1269, %v1281
        %v1303 = vmul.f32 %v1270, %v1285
        %v1304 = vmul.f32 %v1271, %v1289
        %v1305 = vmul.f32 %v1272, %v1293
        %v1306 = vmul.f32 %v1273, %v1281
        %v1307 = vmul.f32 %v1274, %v1285
        %v1308 = vmul.f32 %v1275, %v1289
        %v1309 = vmul.f32 %v1276, %v1293
        %v1311 = vlaneseq
        %v1312 = vshrl.u32 %v1311, 7
        %v1313 = vsub.s32 0, %v1312
        %v1314 = vrot.slane %v1188, %v1313
        %v1315 = vlaneseq
        %v1316 = vshrl.u32 %v1315, 7
        %v1317 = vsub.s32 1, %v1316
        %v1318 = vrot.slane %v1188, %v1317
        %v1319 = vlaneseq
        %v1320 = vshrl.u32 %v1319, 7
        %v1321 = vsub.s32 2, %v1320
        %v1322 = vrot.slane %v1188, %v1321
        %v1323 = vlaneseq
        %v1324 = vshrl.u32 %v1323, 7
        %v1325 = vsub.s32 3, %v1324
        %v1326 = vrot.slane %v1188, %v1325
        %v1331 = vadd.f32 %v1298, %v1314
        %v1332 = vadd.f32 %v1299, %v1318
        %v1333 = vadd.f32 %v1300, %v1322
        %v1334 = vadd.f32 %v1301, %v1326
        %v1335 = vadd.f32 %v1302, %v1314
        %v1336 = vadd.f32 %v1303, %v1318
        %v1337 = vadd.f32 %v1304, %v1322
        %v1338 = vadd.f32 %v1305, %v1326
        %v1339 = vadd.f32 %v1306, %v1314
        %v1340 = vadd.f32 %v1307, %v1318
        %v1341 = vadd.f32 %v1308, %v1322
        %v1342 = vadd.f32 %v1309, %v1326
        %v1343 = vld [vmem:[%s909] sm:$0xff]
        %v1344 = vld [vmem:[%s909 + $0x8] sm:$0xff]
        %v1345 = vld [vmem:[%s909 + $0x10] sm:$0xff]
        %v1346 = vld [vmem:[%s909 + $0x18] sm:$0xff]
        %v1347 = vld [vmem:[%s909 + $0x20] sm:$0xff]
        %v1348 = vld [vmem:[%s909 + $0x28] sm:$0xff]
        %v1349 = vld [vmem:[%s909 + $0x30] sm:$0xff]
        %v1350 = vld [vmem:[%s909 + $0x38] sm:$0xff]
        %v1351 = vld [vmem:[%s909 + $0x40] sm:$0xff]
        %v1352 = vld [vmem:[%s909 + $0x48] sm:$0xff]
        %v1353 = vld [vmem:[%s909 + $0x50] sm:$0xff]
        %v1354 = vld [vmem:[%s909 + $0x58] sm:$0xff]
        %v1355 = vld [vmem:[%s909 + $0x60] sm:$0xff]
        %v1356 = vld [vmem:[%s909 + $0x68] sm:$0xff]
        %v1357 = vld [vmem:[%s909 + $0x70] sm:$0xff]
        %v1358 = vld [vmem:[%s909 + $0x78] sm:$0xff]
        %v1359 = vld [vmem:[%s909 + $0x80] sm:$0xff]
        %v1360 = vld [vmem:[%s909 + $0x88] sm:$0xff]
        %v1361 = vld [vmem:[%s909 + $0x90] sm:$0xff]
        %v1362 = vld [vmem:[%s909 + $0x98] sm:$0xff]
        %v1363 = vld [vmem:[%s909 + $0xa0] sm:$0xff]
        %v1364 = vld [vmem:[%s909 + $0xa8] sm:$0xff]
        %v1365 = vld [vmem:[%s909 + $0xb0] sm:$0xff]
        %v1366 = vld [vmem:[%s909 + $0xb8] sm:$0xff]
        %v1367 = vld [vmem:[%s909 + $0xc0] sm:$0xff]
        %v1368 = vld [vmem:[%s909 + $0xc8] sm:$0xff]
        %v1369 = vld [vmem:[%s909 + $0xd0] sm:$0xff]
        %v1370 = vld [vmem:[%s909 + $0xd8] sm:$0xff]
        %v1371 = vld [vmem:[%s909 + $0xe0] sm:$0xff]
        %v1372 = vld [vmem:[%s909 + $0xe8] sm:$0xff]
        %v1373 = vld [vmem:[%s909 + $0xf0] sm:$0xff]
        %v1374 = vld [vmem:[%s909 + $0xf8] sm:$0xff]
        %v1375 = vld [vmem:[%s909 + $0x100] sm:$0xff]
        %v1376 = vld [vmem:[%s909 + $0x108] sm:$0xff]
        %v1377 = vld [vmem:[%s909 + $0x110] sm:$0xff]
        %v1378 = vld [vmem:[%s909 + $0x118] sm:$0xff]
        %v1379 = vld [vmem:[%s909 + $0x120] sm:$0xff]
        %v1380 = vld [vmem:[%s909 + $0x128] sm:$0xff]
        %v1381 = vld [vmem:[%s909 + $0x130] sm:$0xff]
        %v1382 = vld [vmem:[%s909 + $0x138] sm:$0xff]
        %v1383 = vld [vmem:[%s909 + $0x140] sm:$0xff]
        %v1384 = vld [vmem:[%s909 + $0x148] sm:$0xff]
        %v1385 = vld [vmem:[%s909 + $0x150] sm:$0xff]
        %v1386 = vld [vmem:[%s909 + $0x158] sm:$0xff]
        %v1387 = vld [vmem:[%s909 + $0x160] sm:$0xff]
        %v1388 = vld [vmem:[%s909 + $0x168] sm:$0xff]
        %v1389 = vld [vmem:[%s909 + $0x170] sm:$0xff]
        %v1390 = vld [vmem:[%s909 + $0x178] sm:$0xff]
        %v1391 = vld [vmem:[%s909 + $0x180] sm:$0xff]
        %v1392 = vld [vmem:[%s909 + $0x188] sm:$0xff]
        %v1393 = vld [vmem:[%s909 + $0x190] sm:$0xff]
        %v1394 = vld [vmem:[%s909 + $0x198] sm:$0xff]
        %v1395 = vld [vmem:[%s909 + $0x1a0] sm:$0xff]
        %v1396 = vld [vmem:[%s909 + $0x1a8] sm:$0xff]
        %v1397 = vld [vmem:[%s909 + $0x1b0] sm:$0xff]
        %v1398 = vld [vmem:[%s909 + $0x1b8] sm:$0xff]
        %v1399 = vld [vmem:[%s909 + $0x1c0] sm:$0xff]
        %v1400 = vld [vmem:[%s909 + $0x1c8] sm:$0xff]
        %v1401 = vld [vmem:[%s909 + $0x1d0] sm:$0xff]
        %v1402 = vld [vmem:[%s909 + $0x1d8] sm:$0xff]
        %v1403 = vld [vmem:[%s909 + $0x1e0] sm:$0xff]
        %v1404 = vld [vmem:[%s909 + $0x1e8] sm:$0xff]
        %v1405 = vld [vmem:[%s909 + $0x1f0] sm:$0xff]
        %v1406 = vld [vmem:[%s909 + $0x1f8] sm:$0xff]
        %v1407 = vld [vmem:[%s909 + $0x200] sm:$0xff]
        %v1408 = vld [vmem:[%s909 + $0x208] sm:$0xff]
        %v1409 = vld [vmem:[%s909 + $0x210] sm:$0xff]
        %v1410 = vld [vmem:[%s909 + $0x218] sm:$0xff]
        %v1411 = vld [vmem:[%s909 + $0x220] sm:$0xff]
        %v1412 = vld [vmem:[%s909 + $0x228] sm:$0xff]
        %v1413 = vld [vmem:[%s909 + $0x230] sm:$0xff]
        %v1414 = vld [vmem:[%s909 + $0x238] sm:$0xff]
        %v1415 = vld [vmem:[%s909 + $0x240] sm:$0xff]
        %v1416 = vld [vmem:[%s909 + $0x248] sm:$0xff]
        %v1417 = vld [vmem:[%s909 + $0x250] sm:$0xff]
        %v1418 = vld [vmem:[%s909 + $0x258] sm:$0xff]
        %v1419 = vld [vmem:[%s909 + $0x260] sm:$0xff]
        %v1420 = vld [vmem:[%s909 + $0x268] sm:$0xff]
        %v1421 = vld [vmem:[%s909 + $0x270] sm:$0xff]
        %v1422 = vld [vmem:[%s909 + $0x278] sm:$0xff]
        %v1423 = vld [vmem:[%s909 + $0x280] sm:$0xff]
        %v1424 = vld [vmem:[%s909 + $0x288] sm:$0xff]
        %v1425 = vld [vmem:[%s909 + $0x290] sm:$0xff]
        %v1426 = vld [vmem:[%s909 + $0x298] sm:$0xff]
        %v1427 = vld [vmem:[%s909 + $0x2a0] sm:$0xff]
        %v1428 = vld [vmem:[%s909 + $0x2a8] sm:$0xff]
        %v1429 = vld [vmem:[%s909 + $0x2b0] sm:$0xff]
        %v1430 = vld [vmem:[%s909 + $0x2b8] sm:$0xff]
        %v1431 = vld [vmem:[%s909 + $0x2c0] sm:$0xff]
        %v1432 = vld [vmem:[%s909 + $0x2c8] sm:$0xff]
        %v1433 = vld [vmem:[%s909 + $0x2d0] sm:$0xff]
        %v1434 = vld [vmem:[%s909 + $0x2d8] sm:$0xff]
        %v1435 = vld [vmem:[%s909 + $0x2e0] sm:$0xff]
        %v1436 = vld [vmem:[%s909 + $0x2e8] sm:$0xff]
        %v1437 = vld [vmem:[%s909 + $0x2f0] sm:$0xff]
        %v1438 = vld [vmem:[%s909 + $0x2f8] sm:$0xff]
        %v1439 = vld [vmem:[%s909 + $0x300] sm:$0xff]
        %v1440 = vld [vmem:[%s909 + $0x308] sm:$0xff]
        %v1441 = vld [vmem:[%s909 + $0x310] sm:$0xff]
        %v1442 = vld [vmem:[%s909 + $0x318] sm:$0xff]
        %v1443 = vld [vmem:[%s909 + $0x320] sm:$0xff]
        %v1444 = vld [vmem:[%s909 + $0x328] sm:$0xff]
        %v1445 = vld [vmem:[%s909 + $0x330] sm:$0xff]
        %v1446 = vld [vmem:[%s909 + $0x338] sm:$0xff]
        %v1447 = vld [vmem:[%s909 + $0x340] sm:$0xff]
        %v1448 = vld [vmem:[%s909 + $0x348] sm:$0xff]
        %v1449 = vld [vmem:[%s909 + $0x350] sm:$0xff]
        %v1450 = vld [vmem:[%s909 + $0x358] sm:$0xff]
        %v1451 = vld [vmem:[%s909 + $0x360] sm:$0xff]
        %v1452 = vld [vmem:[%s909 + $0x368] sm:$0xff]
        %v1453 = vld [vmem:[%s909 + $0x370] sm:$0xff]
        %v1454 = vld [vmem:[%s909 + $0x378] sm:$0xff]
        %v1455 = vld [vmem:[%s909 + $0x380] sm:$0xff]
        %v1456 = vld [vmem:[%s909 + $0x388] sm:$0xff]
        %v1457 = vld [vmem:[%s909 + $0x390] sm:$0xff]
        %v1458 = vld [vmem:[%s909 + $0x398] sm:$0xff]
        %v1459 = vld [vmem:[%s909 + $0x3a0] sm:$0xff]
        %v1460 = vld [vmem:[%s909 + $0x3a8] sm:$0xff]
        %v1461 = vld [vmem:[%s909 + $0x3b0] sm:$0xff]
        %v1462 = vld [vmem:[%s909 + $0x3b8] sm:$0xff]
        %v1463 = vld [vmem:[%s909 + $0x3c0] sm:$0xff]
        %v1464 = vld [vmem:[%s909 + $0x3c8] sm:$0xff]
        %v1465 = vld [vmem:[%s909 + $0x3d0] sm:$0xff]
        %v1466 = vld [vmem:[%s909 + $0x3d8] sm:$0xff]
        %v1467 = vld [vmem:[%s909 + $0x3e0] sm:$0xff]
        %v1468 = vld [vmem:[%s909 + $0x3e8] sm:$0xff]
        %v1469 = vld [vmem:[%s909 + $0x3f0] sm:$0xff]
        %v1470 = vld [vmem:[%s909 + $0x3f8] sm:$0xff]
        %v1471 = vld [vmem:[%s909 + $0x400] sm:$0xff]
        %v1472 = vld [vmem:[%s909 + $0x408] sm:$0xff]
        %v1473 = vld [vmem:[%s909 + $0x410] sm:$0xff]
        %v1474 = vld [vmem:[%s909 + $0x418] sm:$0xff]
        %v1475 = vld [vmem:[%s909 + $0x420] sm:$0xff]
        %v1476 = vld [vmem:[%s909 + $0x428] sm:$0xff]
        %v1477 = vld [vmem:[%s909 + $0x430] sm:$0xff]
        %v1478 = vld [vmem:[%s909 + $0x438] sm:$0xff]
        %v1479 = vld [vmem:[%s909 + $0x440] sm:$0xff]
        %v1480 = vld [vmem:[%s909 + $0x448] sm:$0xff]
        %v1481 = vld [vmem:[%s909 + $0x450] sm:$0xff]
        %v1482 = vld [vmem:[%s909 + $0x458] sm:$0xff]
        %v1483 = vld [vmem:[%s909 + $0x460] sm:$0xff]
        %v1484 = vld [vmem:[%s909 + $0x468] sm:$0xff]
        %v1485 = vld [vmem:[%s909 + $0x470] sm:$0xff]
        %v1486 = vld [vmem:[%s909 + $0x478] sm:$0xff]
        %v1487 = vld [vmem:[%s909 + $0x480] sm:$0xff]
        %v1488 = vld [vmem:[%s909 + $0x488] sm:$0xff]
        %v1489 = vld [vmem:[%s909 + $0x490] sm:$0xff]
        %v1490 = vld [vmem:[%s909 + $0x498] sm:$0xff]
        %v1491 = vld [vmem:[%s909 + $0x4a0] sm:$0xff]
        %v1492 = vld [vmem:[%s909 + $0x4a8] sm:$0xff]
        %v1493 = vld [vmem:[%s909 + $0x4b0] sm:$0xff]
        %v1494 = vld [vmem:[%s909 + $0x4b8] sm:$0xff]
        %v1495 = vld [vmem:[%s909 + $0x4c0] sm:$0xff]
        %v1496 = vld [vmem:[%s909 + $0x4c8] sm:$0xff]
        %v1497 = vld [vmem:[%s909 + $0x4d0] sm:$0xff]
        %v1498 = vld [vmem:[%s909 + $0x4d8] sm:$0xff]
        %v1499 = vld [vmem:[%s909 + $0x4e0] sm:$0xff]
        %v1500 = vld [vmem:[%s909 + $0x4e8] sm:$0xff]
        %v1501 = vld [vmem:[%s909 + $0x4f0] sm:$0xff]
        %v1502 = vld [vmem:[%s909 + $0x4f8] sm:$0xff]
        %v1503 = vld [vmem:[%s909 + $0x500] sm:$0xff]
        %v1504 = vld [vmem:[%s909 + $0x508] sm:$0xff]
        %v1505 = vld [vmem:[%s909 + $0x510] sm:$0xff]
        %v1506 = vld [vmem:[%s909 + $0x518] sm:$0xff]
        %v1507 = vld [vmem:[%s909 + $0x520] sm:$0xff]
        %v1508 = vld [vmem:[%s909 + $0x528] sm:$0xff]
        %v1509 = vld [vmem:[%s909 + $0x530] sm:$0xff]
        %v1510 = vld [vmem:[%s909 + $0x538] sm:$0xff]
        %v1511 = vld [vmem:[%s909 + $0x540] sm:$0xff]
        %v1512 = vld [vmem:[%s909 + $0x548] sm:$0xff]
        %v1513 = vld [vmem:[%s909 + $0x550] sm:$0xff]
        %v1514 = vld [vmem:[%s909 + $0x558] sm:$0xff]
        %v1515 = vld [vmem:[%s909 + $0x560] sm:$0xff]
        %v1516 = vld [vmem:[%s909 + $0x568] sm:$0xff]
        %v1517 = vld [vmem:[%s909 + $0x570] sm:$0xff]
        %v1518 = vld [vmem:[%s909 + $0x578] sm:$0xff]
        %v1519 = vld [vmem:[%s909 + $0x580] sm:$0xff]
        %v1520 = vld [vmem:[%s909 + $0x588] sm:$0xff]
        %v1521 = vld [vmem:[%s909 + $0x590] sm:$0xff]
        %v1522 = vld [vmem:[%s909 + $0x598] sm:$0xff]
        %v1523 = vld [vmem:[%s909 + $0x5a0] sm:$0xff]
        %v1524 = vld [vmem:[%s909 + $0x5a8] sm:$0xff]
        %v1525 = vld [vmem:[%s909 + $0x5b0] sm:$0xff]
        %v1526 = vld [vmem:[%s909 + $0x5b8] sm:$0xff]
        %v1527 = vld [vmem:[%s909 + $0x5c0] sm:$0xff]
        %v1528 = vld [vmem:[%s909 + $0x5c8] sm:$0xff]
        %v1529 = vld [vmem:[%s909 + $0x5d0] sm:$0xff]
        %v1530 = vld [vmem:[%s909 + $0x5d8] sm:$0xff]
        %v1531 = vld [vmem:[%s909 + $0x5e0] sm:$0xff]
        %v1532 = vld [vmem:[%s909 + $0x5e8] sm:$0xff]
        %v1533 = vld [vmem:[%s909 + $0x5f0] sm:$0xff]
        %v1534 = vld [vmem:[%s909 + $0x5f8] sm:$0xff]
        %v1535 = vld [vmem:[%s909 + $0x600] sm:$0xff]
        %v1536 = vld [vmem:[%s909 + $0x608] sm:$0xff]
        %v1537 = vld [vmem:[%s909 + $0x610] sm:$0xff]
        %v1538 = vld [vmem:[%s909 + $0x618] sm:$0xff]
        %v1539 = vld [vmem:[%s909 + $0x620] sm:$0xff]
        %v1540 = vld [vmem:[%s909 + $0x628] sm:$0xff]
        %v1541 = vld [vmem:[%s909 + $0x630] sm:$0xff]
        %v1542 = vld [vmem:[%s909 + $0x638] sm:$0xff]
        %v1543 = vld [vmem:[%s909 + $0x640] sm:$0xff]
        %v1544 = vld [vmem:[%s909 + $0x648] sm:$0xff]
        %v1545 = vld [vmem:[%s909 + $0x650] sm:$0xff]
        %v1546 = vld [vmem:[%s909 + $0x658] sm:$0xff]
        %v1547 = vld [vmem:[%s909 + $0x660] sm:$0xff]
        %v1548 = vld [vmem:[%s909 + $0x668] sm:$0xff]
        %v1549 = vld [vmem:[%s909 + $0x670] sm:$0xff]
        %v1550 = vld [vmem:[%s909 + $0x678] sm:$0xff]
        %v1551 = vld [vmem:[%s909 + $0x680] sm:$0xff]
        %v1552 = vld [vmem:[%s909 + $0x688] sm:$0xff]
        %v1553 = vld [vmem:[%s909 + $0x690] sm:$0xff]
        %v1554 = vld [vmem:[%s909 + $0x698] sm:$0xff]
        %v1555 = vld [vmem:[%s909 + $0x6a0] sm:$0xff]
        %v1556 = vld [vmem:[%s909 + $0x6a8] sm:$0xff]
        %v1557 = vld [vmem:[%s909 + $0x6b0] sm:$0xff]
        %v1558 = vld [vmem:[%s909 + $0x6b8] sm:$0xff]
        %v1559 = vld [vmem:[%s909 + $0x6c0] sm:$0xff]
        %v1560 = vld [vmem:[%s909 + $0x6c8] sm:$0xff]
        %v1561 = vld [vmem:[%s909 + $0x6d0] sm:$0xff]
        %v1562 = vld [vmem:[%s909 + $0x6d8] sm:$0xff]
        %v1563 = vld [vmem:[%s909 + $0x6e0] sm:$0xff]
        %v1564 = vld [vmem:[%s909 + $0x6e8] sm:$0xff]
        %v1565 = vld [vmem:[%s909 + $0x6f0] sm:$0xff]
        %v1566 = vld [vmem:[%s909 + $0x6f8] sm:$0xff]
        %v1567 = vld [vmem:[%s909 + $0x700] sm:$0xff]
        %v1568 = vld [vmem:[%s909 + $0x708] sm:$0xff]
        %v1569 = vld [vmem:[%s909 + $0x710] sm:$0xff]
        %v1570 = vld [vmem:[%s909 + $0x718] sm:$0xff]
        %v1571 = vld [vmem:[%s909 + $0x720] sm:$0xff]
        %v1572 = vld [vmem:[%s909 + $0x728] sm:$0xff]
        %v1573 = vld [vmem:[%s909 + $0x730] sm:$0xff]
        %v1574 = vld [vmem:[%s909 + $0x738] sm:$0xff]
        %v1575 = vld [vmem:[%s909 + $0x740] sm:$0xff]
        %v1576 = vld [vmem:[%s909 + $0x748] sm:$0xff]
        %v1577 = vld [vmem:[%s909 + $0x750] sm:$0xff]
        %v1578 = vld [vmem:[%s909 + $0x758] sm:$0xff]
        %v1579 = vld [vmem:[%s909 + $0x760] sm:$0xff]
        %v1580 = vld [vmem:[%s909 + $0x768] sm:$0xff]
        %v1581 = vld [vmem:[%s909 + $0x770] sm:$0xff]
        %v1582 = vld [vmem:[%s909 + $0x778] sm:$0xff]
        %v1583 = vld [vmem:[%s909 + $0x780] sm:$0xff]
        %v1584 = vld [vmem:[%s909 + $0x788] sm:$0xff]
        %v1585 = vld [vmem:[%s909 + $0x790] sm:$0xff]
        %v1586 = vld [vmem:[%s909 + $0x798] sm:$0xff]
        %v1587 = vld [vmem:[%s909 + $0x7a0] sm:$0xff]
        %v1588 = vld [vmem:[%s909 + $0x7a8] sm:$0xff]
        %v1589 = vld [vmem:[%s909 + $0x7b0] sm:$0xff]
        %v1590 = vld [vmem:[%s909 + $0x7b8] sm:$0xff]
        %v1591 = vld [vmem:[%s909 + $0x7c0] sm:$0xff]
        %v1592 = vld [vmem:[%s909 + $0x7c8] sm:$0xff]
        %v1593 = vld [vmem:[%s909 + $0x7d0] sm:$0xff]
        %v1594 = vld [vmem:[%s909 + $0x7d8] sm:$0xff]
        %v1595 = vld [vmem:[%s909 + $0x7e0] sm:$0xff]
        %v1596 = vld [vmem:[%s909 + $0x7e8] sm:$0xff]
        %v1597 = vld [vmem:[%s909 + $0x7f0] sm:$0xff]
        %v1598 = vld [vmem:[%s909 + $0x7f8] sm:$0xff]
        %v1599 = vld [vmem:[%s918] sm:$0xf]
        %v1601 = vlaneseq
        %v1602 = vshrl.u32 %v1601, 7
        %v1603 = vsub.s32 0, %v1602
        %v1604 = vrot.slane %v1599, %v1603
        %v1605 = vlaneseq
        %v1606 = vshrl.u32 %v1605, 7
        %v1607 = vsub.s32 1, %v1606
        %v1608 = vrot.slane %v1599, %v1607
        %v1609 = vlaneseq
        %v1610 = vshrl.u32 %v1609, 7
        %v1611 = vsub.s32 2, %v1610
        %v1612 = vrot.slane %v1599, %v1611
        %v1613 = vlaneseq
        %v1614 = vshrl.u32 %v1613, 7
        %v1615 = vsub.s32 3, %v1614
        %v1616 = vrot.slane %v1599, %v1615
        %1621 = vmatprep.subr.mxu0 %v1404
        %1622 = vmatpush1.msra.mxu0 %v1403
        %1623 = vmatprep.subr.mxu0 %v1400
        %1624 = vmatpush1.msra.mxu0 %v1399
        %1625 = vmatprep.subr.mxu0 %v1396
        %1626 = vmatpush1.msra.mxu0 %v1395
        %1627 = vmatprep.subr.mxu0 %v1392
        %1628 = vmatpush1.msra.mxu0 %v1391
        %1629 = vmatprep.subr.mxu0 %v1388
        %1630 = vmatpush1.msra.mxu0 %v1387
        %1631 = vmatprep.subr.mxu0 %v1384
        %1632 = vmatpush1.msra.mxu0 %v1383
        %1633 = vmatprep.subr.mxu0 %v1380
        %1634 = vmatpush1.msra.mxu0 %v1379
        %1635 = vmatprep.subr.mxu0 %v1376
        %1636 = vmatpush1.msra.mxu0 %v1375
        %1637 = vmatprep.subr.mxu0 %v1372
        %1638 = vmatpush1.msra.mxu0 %v1371
        %1639 = vmatprep.subr.mxu0 %v1368
        %1640 = vmatpush1.msra.mxu0 %v1367
        %1641 = vmatprep.subr.mxu0 %v1364
        %1642 = vmatpush1.msra.mxu0 %v1363
        %1643 = vmatprep.subr.mxu0 %v1360
        %1644 = vmatpush1.msra.mxu0 %v1359
        %1645 = vmatprep.subr.mxu0 %v1356
        %1646 = vmatpush1.msra.mxu0 %v1355
        %1647 = vmatprep.subr.mxu0 %v1352
        %1648 = vmatpush1.msra.mxu0 %v1351
        %1649 = vmatprep.subr.mxu0 %v1348
        %1650 = vmatpush1.msra.mxu0 %v1347
        %1651 = vmatprep.subr.mxu0 %v1344
        %1652 = vmatpush1.msra.mxu0 %v1343
        %1653 = vmatprep.subr.mxu0 %v1468
        %1654 = vmatpush2.msra.mxu0 %v1467
        %1655 = vmatprep.subr.mxu0 %v1464
        %1656 = vmatpush2.msra.mxu0 %v1463
        %1657 = vmatprep.subr.mxu0 %v1460
        %1658 = vmatpush2.msra.mxu0 %v1459
        %1659 = vmatprep.subr.mxu0 %v1456
        %1660 = vmatpush2.msra.mxu0 %v1455
        %1661 = vmatprep.subr.mxu0 %v1452
        %1662 = vmatpush2.msra.mxu0 %v1451
        %1663 = vmatprep.subr.mxu0 %v1448
        %1664 = vmatpush2.msra.mxu0 %v1447
        %1665 = vmatprep.subr.mxu0 %v1444
        %1666 = vmatpush2.msra.mxu0 %v1443
        %1667 = vmatprep.subr.mxu0 %v1440
        %1668 = vmatpush2.msra.mxu0 %v1439
        %1669 = vmatprep.subr.mxu0 %v1436
        %1670 = vmatpush2.msra.mxu0 %v1435
        %1671 = vmatprep.subr.mxu0 %v1432
        %1672 = vmatpush2.msra.mxu0 %v1431
        %1673 = vmatprep.subr.mxu0 %v1428
        %1674 = vmatpush2.msra.mxu0 %v1427
        %1675 = vmatprep.subr.mxu0 %v1424
        %1676 = vmatpush2.msra.mxu0 %v1423
        %1677 = vmatprep.subr.mxu0 %v1420
        %1678 = vmatpush2.msra.mxu0 %v1419
        %1679 = vmatprep.subr.mxu0 %v1416
        %1680 = vmatpush2.msra.mxu0 %v1415
        %1681 = vmatprep.subr.mxu0 %v1412
        %1682 = vmatpush2.msra.mxu0 %v1411
        %1683 = vmatprep.subr.mxu0 %v1408
        %1684 = vmatpush2.msra.mxu0 %v1407
        %1685 = vmatprep.mubr.f32.mxu0 %v1332
        %1686 = vmatmul.mubr.f32.gmra.mxu0 %v1331
        %v1687 = vpop.f32.mrf.mxu0
        %v1688 = vadd.f32 %v1604, %v1687
        %v1689 = vpop.f32.mrf.mxu0
        %v1690 = vadd.f32 %v1608, %v1689
        %1691 = vmatprep.mubr.f32.mxu0 %v1336
        %1692 = vmatmul.mubr.f32.gmra.mxu0 %v1335
        %v1693 = vpop.f32.mrf.mxu0
        %v1694 = vadd.f32 %v1604, %v1693
        %v1695 = vpop.f32.mrf.mxu0
        %v1696 = vadd.f32 %v1608, %v1695
        %1697 = vmatprep.mubr.f32.mxu0 %v1340
        %1698 = vmatmul.mubr.f32.gmra.mxu0 %v1339
        %v1699 = vpop.f32.mrf.mxu0
        %v1700 = vadd.f32 %v1604, %v1699
        %v1701 = vpop.f32.mrf.mxu0
        %v1702 = vadd.f32 %v1608, %v1701
        %1703 = vdwg.mxu0
        %1704 = vmatprep.subr.mxu0 %v1532
        %1705 = vmatpush1.msra.mxu0 %v1531
        %1706 = vmatprep.subr.mxu0 %v1528
        %1707 = vmatpush1.msra.mxu0 %v1527
        %1708 = vmatprep.subr.mxu0 %v1524
        %1709 = vmatpush1.msra.mxu0 %v1523
        %1710 = vmatprep.subr.mxu0 %v1520
        %1711 = vmatpush1.msra.mxu0 %v1519
        %1712 = vmatprep.subr.mxu0 %v1516
        %1713 = vmatpush1.msra.mxu0 %v1515
        %1714 = vmatprep.subr.mxu0 %v1512
        %1715 = vmatpush1.msra.mxu0 %v1511
        %1716 = vmatprep.subr.mxu0 %v1508
        %1717 = vmatpush1.msra.mxu0 %v1507
        %1718 = vmatprep.subr.mxu0 %v1504
        %1719 = vmatpush1.msra.mxu0 %v1503
        %1720 = vmatprep.subr.mxu0 %v1500
        %1721 = vmatpush1.msra.mxu0 %v1499
        %1722 = vmatprep.subr.mxu0 %v1496
        %1723 = vmatpush1.msra.mxu0 %v1495
        %1724 = vmatprep.subr.mxu0 %v1492
        %1725 = vmatpush1.msra.mxu0 %v1491
        %1726 = vmatprep.subr.mxu0 %v1488
        %1727 = vmatpush1.msra.mxu0 %v1487
        %1728 = vmatprep.subr.mxu0 %v1484
        %1729 = vmatpush1.msra.mxu0 %v1483
        %1730 = vmatprep.subr.mxu0 %v1480
        %1731 = vmatpush1.msra.mxu0 %v1479
        %1732 = vmatprep.subr.mxu0 %v1476
        %1733 = vmatpush1.msra.mxu0 %v1475
        %1734 = vmatprep.subr.mxu0 %v1472
        %1735 = vmatpush1.msra.mxu0 %v1471
        %1736 = vmatprep.subr.mxu0 %v1596
        %1737 = vmatpush2.msra.mxu0 %v1595
        %1738 = vmatprep.subr.mxu0 %v1592
        %1739 = vmatpush2.msra.mxu0 %v1591
        %1740 = vmatprep.subr.mxu0 %v1588
        %1741 = vmatpush2.msra.mxu0 %v1587
        %1742 = vmatprep.subr.mxu0 %v1584
        %1743 = vmatpush2.msra.mxu0 %v1583
        %1744 = vmatprep.subr.mxu0 %v1580
        %1745 = vmatpush2.msra.mxu0 %v1579
        %1746 = vmatprep.subr.mxu0 %v1576
        %1747 = vmatpush2.msra.mxu0 %v1575
        %1748 = vmatprep.subr.mxu0 %v1572
        %1749 = vmatpush2.msra.mxu0 %v1571
        %1750 = vmatprep.subr.mxu0 %v1568
        %1751 = vmatpush2.msra.mxu0 %v1567
        %1752 = vmatprep.subr.mxu0 %v1564
        %1753 = vmatpush2.msra.mxu0 %v1563
        %1754 = vmatprep.subr.mxu0 %v1560
        %1755 = vmatpush2.msra.mxu0 %v1559
        %1756 = vmatprep.subr.mxu0 %v1556
        %1757 = vmatpush2.msra.mxu0 %v1555
        %1758 = vmatprep.subr.mxu0 %v1552
        %1759 = vmatpush2.msra.mxu0 %v1551
        %1760 = vmatprep.subr.mxu0 %v1548
        %1761 = vmatpush2.msra.mxu0 %v1547
        %1762 = vmatprep.subr.mxu0 %v1544
        %1763 = vmatpush2.msra.mxu0 %v1543
        %1764 = vmatprep.subr.mxu0 %v1540
        %1765 = vmatpush2.msra.mxu0 %v1539
        %1766 = vmatprep.subr.mxu0 %v1536
        %1767 = vmatpush2.msra.mxu0 %v1535
        %1768 = vmatprep.mubr.f32.mxu0 %v1334
        %1769 = vmatmul.mubr.f32.gmra.mxu0 %v1333
        %v1770 = vpop.f32.mrf.mxu0
        %v1771 = vadd.f32 %v1688, %v1770
        %v1772 = vpop.f32.mrf.mxu0
        %v1773 = vadd.f32 %v1690, %v1772
        %1774 = vmatprep.mubr.f32.mxu0 %v1338
        %1775 = vmatmul.mubr.f32.gmra.mxu0 %v1337
        %v1776 = vpop.f32.mrf.mxu0
        %v1777 = vadd.f32 %v1694, %v1776
        %v1778 = vpop.f32.mrf.mxu0
        %v1779 = vadd.f32 %v1696, %v1778
        %1780 = vmatprep.mubr.f32.mxu0 %v1342
        %1781 = vmatmul.mubr.f32.gmra.mxu0 %v1341
        %v1782 = vpop.f32.mrf.mxu0
        %v1783 = vadd.f32 %v1700, %v1782
        %v1784 = vpop.f32.mrf.mxu0
        %v1785 = vadd.f32 %v1702, %v1784
        %1786 = vdwg.mxu0
        %1787 = vmatprep.subr.mxu0 %v1406
        %1788 = vmatpush1.msra.mxu0 %v1405
        %1789 = vmatprep.subr.mxu0 %v1402
        %1790 = vmatpush1.msra.mxu0 %v1401
        %1791 = vmatprep.subr.mxu0 %v1398
        %1792 = vmatpush1.msra.mxu0 %v1397
        %1793 = vmatprep.subr.mxu0 %v1394
        %1794 = vmatpush1.msra.mxu0 %v1393
        %1795 = vmatprep.subr.mxu0 %v1390
        %1796 = vmatpush1.msra.mxu0 %v1389
        %1797 = vmatprep.subr.mxu0 %v1386
        %1798 = vmatpush1.msra.mxu0 %v1385
        %1799 = vmatprep.subr.mxu0 %v1382
        %1800 = vmatpush1.msra.mxu0 %v1381
        %1801 = vmatprep.subr.mxu0 %v1378
        %1802 = vmatpush1.msra.mxu0 %v1377
        %1803 = vmatprep.subr.mxu0 %v1374
        %1804 = vmatpush1.msra.mxu0 %v1373
        %1805 = vmatprep.subr.mxu0 %v1370
        %1806 = vmatpush1.msra.mxu0 %v1369
        %1807 = vmatprep.subr.mxu0 %v1366
        %1808 = vmatpush1.msra.mxu0 %v1365
        %1809 = vmatprep.subr.mxu0 %v1362
        %1810 = vmatpush1.msra.mxu0 %v1361
        %1811 = vmatprep.subr.mxu0 %v1358
        %1812 = vmatpush1.msra.mxu0 %v1357
        %1813 = vmatprep.subr.mxu0 %v1354
        %1814 = vmatpush1.msra.mxu0 %v1353
        %1815 = vmatprep.subr.mxu0 %v1350
        %1816 = vmatpush1.msra.mxu0 %v1349
        %1817 = vmatprep.subr.mxu0 %v1346
        %1818 = vmatpush1.msra.mxu0 %v1345
        %1819 = vmatprep.subr.mxu0 %v1470
        %1820 = vmatpush2.msra.mxu0 %v1469
        %1821 = vmatprep.subr.mxu0 %v1466
        %1822 = vmatpush2.msra.mxu0 %v1465
        %1823 = vmatprep.subr.mxu0 %v1462
        %1824 = vmatpush2.msra.mxu0 %v1461
        %1825 = vmatprep.subr.mxu0 %v1458
        %1826 = vmatpush2.msra.mxu0 %v1457
        %1827 = vmatprep.subr.mxu0 %v1454
        %1828 = vmatpush2.msra.mxu0 %v1453
        %1829 = vmatprep.subr.mxu0 %v1450
        %1830 = vmatpush2.msra.mxu0 %v1449
        %1831 = vmatprep.subr.mxu0 %v1446
        %1832 = vmatpush2.msra.mxu0 %v1445
        %1833 = vmatprep.subr.mxu0 %v1442
        %1834 = vmatpush2.msra.mxu0 %v1441
        %1835 = vmatprep.subr.mxu0 %v1438
        %1836 = vmatpush2.msra.mxu0 %v1437
        %1837 = vmatprep.subr.mxu0 %v1434
        %1838 = vmatpush2.msra.mxu0 %v1433
        %1839 = vmatprep.subr.mxu0 %v1430
        %1840 = vmatpush2.msra.mxu0 %v1429
        %1841 = vmatprep.subr.mxu0 %v1426
        %1842 = vmatpush2.msra.mxu0 %v1425
        %1843 = vmatprep.subr.mxu0 %v1422
        %1844 = vmatpush2.msra.mxu0 %v1421
        %1845 = vmatprep.subr.mxu0 %v1418
        %1846 = vmatpush2.msra.mxu0 %v1417
        %1847 = vmatprep.subr.mxu0 %v1414
        %1848 = vmatpush2.msra.mxu0 %v1413
        %1849 = vmatprep.subr.mxu0 %v1410
        %1850 = vmatpush2.msra.mxu0 %v1409
        %1851 = vmatprep.mubr.f32.mxu0 %v1332
        %1852 = vmatmul.mubr.f32.gmra.mxu0 %v1331
        %v1853 = vpop.f32.mrf.mxu0
        %v1854 = vadd.f32 %v1612, %v1853
        %v1855 = vpop.f32.mrf.mxu0
        %v1856 = vadd.f32 %v1616, %v1855
        %1857 = vmatprep.mubr.f32.mxu0 %v1336
        %1858 = vmatmul.mubr.f32.gmra.mxu0 %v1335
        %v1859 = vpop.f32.mrf.mxu0
        %v1860 = vadd.f32 %v1612, %v1859
        %v1861 = vpop.f32.mrf.mxu0
        %v1862 = vadd.f32 %v1616, %v1861
        %1863 = vmatprep.mubr.f32.mxu0 %v1340
        %1864 = vmatmul.mubr.f32.gmra.mxu0 %v1339
        %v1865 = vpop.f32.mrf.mxu0
        %v1866 = vadd.f32 %v1612, %v1865
        %v1867 = vpop.f32.mrf.mxu0
        %v1868 = vadd.f32 %v1616, %v1867
        %1869 = vdwg.mxu0
        %1870 = vmatprep.subr.mxu0 %v1534
        %1871 = vmatpush1.msra.mxu0 %v1533
        %1872 = vmatprep.subr.mxu0 %v1530
        %1873 = vmatpush1.msra.mxu0 %v1529
        %1874 = vmatprep.subr.mxu0 %v1526
        %1875 = vmatpush1.msra.mxu0 %v1525
        %1876 = vmatprep.subr.mxu0 %v1522
        %1877 = vmatpush1.msra.mxu0 %v1521
        %1878 = vmatprep.subr.mxu0 %v1518
        %1879 = vmatpush1.msra.mxu0 %v1517
        %1880 = vmatprep.subr.mxu0 %v1514
        %1881 = vmatpush1.msra.mxu0 %v1513
        %1882 = vmatprep.subr.mxu0 %v1510
        %1883 = vmatpush1.msra.mxu0 %v1509
        %1884 = vmatprep.subr.mxu0 %v1506
        %1885 = vmatpush1.msra.mxu0 %v1505
        %1886 = vmatprep.subr.mxu0 %v1502
        %1887 = vmatpush1.msra.mxu0 %v1501
        %1888 = vmatprep.subr.mxu0 %v1498
        %1889 = vmatpush1.msra.mxu0 %v1497
        %1890 = vmatprep.subr.mxu0 %v1494
        %1891 = vmatpush1.msra.mxu0 %v1493
        %1892 = vmatprep.subr.mxu0 %v1490
        %1893 = vmatpush1.msra.mxu0 %v1489
        %1894 = vmatprep.subr.mxu0 %v1486
        %1895 = vmatpush1.msra.mxu0 %v1485
        %1896 = vmatprep.subr.mxu0 %v1482
        %1897 = vmatpush1.msra.mxu0 %v1481
        %1898 = vmatprep.subr.mxu0 %v1478
        %1899 = vmatpush1.msra.mxu0 %v1477
        %1900 = vmatprep.subr.mxu0 %v1474
        %1901 = vmatpush1.msra.mxu0 %v1473
        %1902 = vmatprep.subr.mxu0 %v1598
        %1903 = vmatpush2.msra.mxu0 %v1597
        %1904 = vmatprep.subr.mxu0 %v1594
        %1905 = vmatpush2.msra.mxu0 %v1593
        %1906 = vmatprep.subr.mxu0 %v1590
        %1907 = vmatpush2.msra.mxu0 %v1589
        %1908 = vmatprep.subr.mxu0 %v1586
        %1909 = vmatpush2.msra.mxu0 %v1585
        %1910 = vmatprep.subr.mxu0 %v1582
        %1911 = vmatpush2.msra.mxu0 %v1581
        %1912 = vmatprep.subr.mxu0 %v1578
        %1913 = vmatpush2.msra.mxu0 %v1577
        %1914 = vmatprep.subr.mxu0 %v1574
        %1915 = vmatpush2.msra.mxu0 %v1573
        %1916 = vmatprep.subr.mxu0 %v1570
        %1917 = vmatpush2.msra.mxu0 %v1569
        %1918 = vmatprep.subr.mxu0 %v1566
        %1919 = vmatpush2.msra.mxu0 %v1565
        %1920 = vmatprep.subr.mxu0 %v1562
        %1921 = vmatpush2.msra.mxu0 %v1561
        %1922 = vmatprep.subr.mxu0 %v1558
        %1923 = vmatpush2.msra.mxu0 %v1557
        %1924 = vmatprep.subr.mxu0 %v1554
        %1925 = vmatpush2.msra.mxu0 %v1553
        %1926 = vmatprep.subr.mxu0 %v1550
        %1927 = vmatpush2.msra.mxu0 %v1549
        %1928 = vmatprep.subr.mxu0 %v1546
        %1929 = vmatpush2.msra.mxu0 %v1545
        %1930 = vmatprep.subr.mxu0 %v1542
        %1931 = vmatpush2.msra.mxu0 %v1541
        %1932 = vmatprep.subr.mxu0 %v1538
        %1933 = vmatpush2.msra.mxu0 %v1537
        %1934 = vmatprep.mubr.f32.mxu0 %v1334
        %1935 = vmatmul.mubr.f32.gmra.mxu0 %v1333
        %v1936 = vpop.f32.mrf.mxu0
        %v1937 = vadd.f32 %v1854, %v1936
        %v1938 = vpop.f32.mrf.mxu0
        %v1939 = vadd.f32 %v1856, %v1938
        %1940 = vmatprep.mubr.f32.mxu0 %v1338
        %1941 = vmatmul.mubr.f32.gmra.mxu0 %v1337
        %v1942 = vpop.f32.mrf.mxu0
        %v1943 = vadd.f32 %v1860, %v1942
        %v1944 = vpop.f32.mrf.mxu0
        %v1945 = vadd.f32 %v1862, %v1944
        %1946 = vmatprep.mubr.f32.mxu0 %v1342
        %1947 = vmatmul.mubr.f32.gmra.mxu0 %v1341
        %v1948 = vpop.f32.mrf.mxu0
        %v1949 = vadd.f32 %v1866, %v1948
        %v1950 = vpop.f32.mrf.mxu0
        %v1951 = vadd.f32 %v1868, %v1950
        %1952 = vdwg.mxu0
        %v1953 = vmul.f32 %v1771, 0.088388346
        %v1954 = vmul.f32 %v1773, 0.088388346
        %v1955 = vmul.f32 %v1937, 0.088388346
        %v1956 = vmul.f32 %v1939, 0.088388346
        %v1957 = vmul.f32 %v1777, 0.088388346
        %v1958 = vmul.f32 %v1779, 0.088388346
        %v1959 = vmul.f32 %v1943, 0.088388346
        %v1960 = vmul.f32 %v1945, 0.088388346
        %v1961 = vmul.f32 %v1783, 0.088388346
        %v1962 = vmul.f32 %v1785, 0.088388346
        %v1963 = vmul.f32 %v1949, 0.088388346
        %v1964 = vmul.f32 %v1951, 0.088388346
        %1965 = vst [vmem:[#allocation3] sm:$0xff] %v1953
        %1966 = vst [vmem:[#allocation3 + $0x8] sm:$0xff] %v1954
        %1967 = vst [vmem:[#allocation3 + $0x10] sm:$0xff] %v1955
        %1968 = vst [vmem:[#allocation3 + $0x18] sm:$0xff] %v1956
        %1969 = vst [vmem:[#allocation3 + $0x20] sm:$0xff] %v1957
        %1970 = vst [vmem:[#allocation3 + $0x28] sm:$0xff] %v1958
        %1971 = vst [vmem:[#allocation3 + $0x30] sm:$0xff] %v1959
        %1972 = vst [vmem:[#allocation3 + $0x38] sm:$0xff] %v1960
        %1973 = vst [vmem:[#allocation3 + $0x40] sm:$0xf] %v1961
        %1974 = vst [vmem:[#allocation3 + $0x48] sm:$0xf] %v1962
        %1975 = vst [vmem:[#allocation3 + $0x50] sm:$0xf] %v1963
        %1976 = vst [vmem:[#allocation3 + $0x58] sm:$0xf] %v1964
        %v1977 = vld [vmem:[%s927] sm:$0xff]
        %v1978 = vld [vmem:[%s927 + $0x8] sm:$0xff]
        %v1979 = vld [vmem:[%s927 + $0x10] sm:$0xff]
        %v1980 = vld [vmem:[%s927 + $0x18] sm:$0xff]
        %v1981 = vld [vmem:[%s927 + $0x20] sm:$0xff]
        %v1982 = vld [vmem:[%s927 + $0x28] sm:$0xff]
        %v1983 = vld [vmem:[%s927 + $0x30] sm:$0xff]
        %v1984 = vld [vmem:[%s927 + $0x38] sm:$0xff]
        %v1985 = vld [vmem:[%s927 + $0x40] sm:$0xff]
        %v1986 = vld [vmem:[%s927 + $0x48] sm:$0xff]
        %v1987 = vld [vmem:[%s927 + $0x50] sm:$0xff]
        %v1988 = vld [vmem:[%s927 + $0x58] sm:$0xff]
        %v1989 = vld [vmem:[%s927 + $0x60] sm:$0xff]
        %v1990 = vld [vmem:[%s927 + $0x68] sm:$0xff]
        %v1991 = vld [vmem:[%s927 + $0x70] sm:$0xff]
        %v1992 = vld [vmem:[%s927 + $0x78] sm:$0xff]
        %v1993 = vld [vmem:[%s927 + $0x80] sm:$0xff]
        %v1994 = vld [vmem:[%s927 + $0x88] sm:$0xff]
        %v1995 = vld [vmem:[%s927 + $0x90] sm:$0xff]
        %v1996 = vld [vmem:[%s927 + $0x98] sm:$0xff]
        %v1997 = vld [vmem:[%s927 + $0xa0] sm:$0xff]
        %v1998 = vld [vmem:[%s927 + $0xa8] sm:$0xff]
        %v1999 = vld [vmem:[%s927 + $0xb0] sm:$0xff]
        %v2000 = vld [vmem:[%s927 + $0xb8] sm:$0xff]
        %v2001 = vld [vmem:[%s927 + $0xc0] sm:$0xff]
        %v2002 = vld [vmem:[%s927 + $0xc8] sm:$0xff]
        %v2003 = vld [vmem:[%s927 + $0xd0] sm:$0xff]
        %v2004 = vld [vmem:[%s927 + $0xd8] sm:$0xff]
        %v2005 = vld [vmem:[%s927 + $0xe0] sm:$0xff]
        %v2006 = vld [vmem:[%s927 + $0xe8] sm:$0xff]
        %v2007 = vld [vmem:[%s927 + $0xf0] sm:$0xff]
        %v2008 = vld [vmem:[%s927 + $0xf8] sm:$0xff]
        %v2009 = vld [vmem:[%s927 + $0x100] sm:$0xff]
        %v2010 = vld [vmem:[%s927 + $0x108] sm:$0xff]
        %v2011 = vld [vmem:[%s927 + $0x110] sm:$0xff]
        %v2012 = vld [vmem:[%s927 + $0x118] sm:$0xff]
        %v2013 = vld [vmem:[%s927 + $0x120] sm:$0xff]
        %v2014 = vld [vmem:[%s927 + $0x128] sm:$0xff]
        %v2015 = vld [vmem:[%s927 + $0x130] sm:$0xff]
        %v2016 = vld [vmem:[%s927 + $0x138] sm:$0xff]
        %v2017 = vld [vmem:[%s927 + $0x140] sm:$0xff]
        %v2018 = vld [vmem:[%s927 + $0x148] sm:$0xff]
        %v2019 = vld [vmem:[%s927 + $0x150] sm:$0xff]
        %v2020 = vld [vmem:[%s927 + $0x158] sm:$0xff]
        %v2021 = vld [vmem:[%s927 + $0x160] sm:$0xff]
        %v2022 = vld [vmem:[%s927 + $0x168] sm:$0xff]
        %v2023 = vld [vmem:[%s927 + $0x170] sm:$0xff]
        %v2024 = vld [vmem:[%s927 + $0x178] sm:$0xff]
        %v2025 = vld [vmem:[%s927 + $0x180] sm:$0xff]
        %v2026 = vld [vmem:[%s927 + $0x188] sm:$0xff]
        %v2027 = vld [vmem:[%s927 + $0x190] sm:$0xff]
        %v2028 = vld [vmem:[%s927 + $0x198] sm:$0xff]
        %v2029 = vld [vmem:[%s927 + $0x1a0] sm:$0xff]
        %v2030 = vld [vmem:[%s927 + $0x1a8] sm:$0xff]
        %v2031 = vld [vmem:[%s927 + $0x1b0] sm:$0xff]
        %v2032 = vld [vmem:[%s927 + $0x1b8] sm:$0xff]
        %v2033 = vld [vmem:[%s927 + $0x1c0] sm:$0xff]
        %v2034 = vld [vmem:[%s927 + $0x1c8] sm:$0xff]
        %v2035 = vld [vmem:[%s927 + $0x1d0] sm:$0xff]
        %v2036 = vld [vmem:[%s927 + $0x1d8] sm:$0xff]
        %v2037 = vld [vmem:[%s927 + $0x1e0] sm:$0xff]
        %v2038 = vld [vmem:[%s927 + $0x1e8] sm:$0xff]
        %v2039 = vld [vmem:[%s927 + $0x1f0] sm:$0xff]
        %v2040 = vld [vmem:[%s927 + $0x1f8] sm:$0xff]
        %v2041 = vld [vmem:[%s927 + $0x200] sm:$0xff]
        %v2042 = vld [vmem:[%s927 + $0x208] sm:$0xff]
        %v2043 = vld [vmem:[%s927 + $0x210] sm:$0xff]
        %v2044 = vld [vmem:[%s927 + $0x218] sm:$0xff]
        %v2045 = vld [vmem:[%s927 + $0x220] sm:$0xff]
        %v2046 = vld [vmem:[%s927 + $0x228] sm:$0xff]
        %v2047 = vld [vmem:[%s927 + $0x230] sm:$0xff]
        %v2048 = vld [vmem:[%s927 + $0x238] sm:$0xff]
        %v2049 = vld [vmem:[%s927 + $0x240] sm:$0xff]
        %v2050 = vld [vmem:[%s927 + $0x248] sm:$0xff]
        %v2051 = vld [vmem:[%s927 + $0x250] sm:$0xff]
        %v2052 = vld [vmem:[%s927 + $0x258] sm:$0xff]
        %v2053 = vld [vmem:[%s927 + $0x260] sm:$0xff]
        %v2054 = vld [vmem:[%s927 + $0x268] sm:$0xff]
        %v2055 = vld [vmem:[%s927 + $0x270] sm:$0xff]
        %v2056 = vld [vmem:[%s927 + $0x278] sm:$0xff]
        %v2057 = vld [vmem:[%s927 + $0x280] sm:$0xff]
        %v2058 = vld [vmem:[%s927 + $0x288] sm:$0xff]
        %v2059 = vld [vmem:[%s927 + $0x290] sm:$0xff]
        %v2060 = vld [vmem:[%s927 + $0x298] sm:$0xff]
        %v2061 = vld [vmem:[%s927 + $0x2a0] sm:$0xff]
        %v2062 = vld [vmem:[%s927 + $0x2a8] sm:$0xff]
        %v2063 = vld [vmem:[%s927 + $0x2b0] sm:$0xff]
        %v2064 = vld [vmem:[%s927 + $0x2b8] sm:$0xff]
        %v2065 = vld [vmem:[%s927 + $0x2c0] sm:$0xff]
        %v2066 = vld [vmem:[%s927 + $0x2c8] sm:$0xff]
        %v2067 = vld [vmem:[%s927 + $0x2d0] sm:$0xff]
        %v2068 = vld [vmem:[%s927 + $0x2d8] sm:$0xff]
        %v2069 = vld [vmem:[%s927 + $0x2e0] sm:$0xff]
        %v2070 = vld [vmem:[%s927 + $0x2e8] sm:$0xff]
        %v2071 = vld [vmem:[%s927 + $0x2f0] sm:$0xff]
        %v2072 = vld [vmem:[%s927 + $0x2f8] sm:$0xff]
        %v2073 = vld [vmem:[%s927 + $0x300] sm:$0xff]
        %v2074 = vld [vmem:[%s927 + $0x308] sm:$0xff]
        %v2075 = vld [vmem:[%s927 + $0x310] sm:$0xff]
        %v2076 = vld [vmem:[%s927 + $0x318] sm:$0xff]
        %v2077 = vld [vmem:[%s927 + $0x320] sm:$0xff]
        %v2078 = vld [vmem:[%s927 + $0x328] sm:$0xff]
        %v2079 = vld [vmem:[%s927 + $0x330] sm:$0xff]
        %v2080 = vld [vmem:[%s927 + $0x338] sm:$0xff]
        %v2081 = vld [vmem:[%s927 + $0x340] sm:$0xff]
        %v2082 = vld [vmem:[%s927 + $0x348] sm:$0xff]
        %v2083 = vld [vmem:[%s927 + $0x350] sm:$0xff]
        %v2084 = vld [vmem:[%s927 + $0x358] sm:$0xff]
        %v2085 = vld [vmem:[%s927 + $0x360] sm:$0xff]
        %v2086 = vld [vmem:[%s927 + $0x368] sm:$0xff]
        %v2087 = vld [vmem:[%s927 + $0x370] sm:$0xff]
        %v2088 = vld [vmem:[%s927 + $0x378] sm:$0xff]
        %v2089 = vld [vmem:[%s927 + $0x380] sm:$0xff]
        %v2090 = vld [vmem:[%s927 + $0x388] sm:$0xff]
        %v2091 = vld [vmem:[%s927 + $0x390] sm:$0xff]
        %v2092 = vld [vmem:[%s927 + $0x398] sm:$0xff]
        %v2093 = vld [vmem:[%s927 + $0x3a0] sm:$0xff]
        %v2094 = vld [vmem:[%s927 + $0x3a8] sm:$0xff]
        %v2095 = vld [vmem:[%s927 + $0x3b0] sm:$0xff]
        %v2096 = vld [vmem:[%s927 + $0x3b8] sm:$0xff]
        %v2097 = vld [vmem:[%s927 + $0x3c0] sm:$0xff]
        %v2098 = vld [vmem:[%s927 + $0x3c8] sm:$0xff]
        %v2099 = vld [vmem:[%s927 + $0x3d0] sm:$0xff]
        %v2100 = vld [vmem:[%s927 + $0x3d8] sm:$0xff]
        %v2101 = vld [vmem:[%s927 + $0x3e0] sm:$0xff]
        %v2102 = vld [vmem:[%s927 + $0x3e8] sm:$0xff]
        %v2103 = vld [vmem:[%s927 + $0x3f0] sm:$0xff]
        %v2104 = vld [vmem:[%s927 + $0x3f8] sm:$0xff]
        %v2105 = vld [vmem:[%s927 + $0x400] sm:$0xff]
        %v2106 = vld [vmem:[%s927 + $0x408] sm:$0xff]
        %v2107 = vld [vmem:[%s927 + $0x410] sm:$0xff]
        %v2108 = vld [vmem:[%s927 + $0x418] sm:$0xff]
        %v2109 = vld [vmem:[%s927 + $0x420] sm:$0xff]
        %v2110 = vld [vmem:[%s927 + $0x428] sm:$0xff]
        %v2111 = vld [vmem:[%s927 + $0x430] sm:$0xff]
        %v2112 = vld [vmem:[%s927 + $0x438] sm:$0xff]
        %v2113 = vld [vmem:[%s927 + $0x440] sm:$0xff]
        %v2114 = vld [vmem:[%s927 + $0x448] sm:$0xff]
        %v2115 = vld [vmem:[%s927 + $0x450] sm:$0xff]
        %v2116 = vld [vmem:[%s927 + $0x458] sm:$0xff]
        %v2117 = vld [vmem:[%s927 + $0x460] sm:$0xff]
        %v2118 = vld [vmem:[%s927 + $0x468] sm:$0xff]
        %v2119 = vld [vmem:[%s927 + $0x470] sm:$0xff]
        %v2120 = vld [vmem:[%s927 + $0x478] sm:$0xff]
        %v2121 = vld [vmem:[%s927 + $0x480] sm:$0xff]
        %v2122 = vld [vmem:[%s927 + $0x488] sm:$0xff]
        %v2123 = vld [vmem:[%s927 + $0x490] sm:$0xff]
        %v2124 = vld [vmem:[%s927 + $0x498] sm:$0xff]
        %v2125 = vld [vmem:[%s927 + $0x4a0] sm:$0xff]
        %v2126 = vld [vmem:[%s927 + $0x4a8] sm:$0xff]
        %v2127 = vld [vmem:[%s927 + $0x4b0] sm:$0xff]
        %v2128 = vld [vmem:[%s927 + $0x4b8] sm:$0xff]
        %v2129 = vld [vmem:[%s927 + $0x4c0] sm:$0xff]
        %v2130 = vld [vmem:[%s927 + $0x4c8] sm:$0xff]
        %v2131 = vld [vmem:[%s927 + $0x4d0] sm:$0xff]
        %v2132 = vld [vmem:[%s927 + $0x4d8] sm:$0xff]
        %v2133 = vld [vmem:[%s927 + $0x4e0] sm:$0xff]
        %v2134 = vld [vmem:[%s927 + $0x4e8] sm:$0xff]
        %v2135 = vld [vmem:[%s927 + $0x4f0] sm:$0xff]
        %v2136 = vld [vmem:[%s927 + $0x4f8] sm:$0xff]
        %v2137 = vld [vmem:[%s927 + $0x500] sm:$0xff]
        %v2138 = vld [vmem:[%s927 + $0x508] sm:$0xff]
        %v2139 = vld [vmem:[%s927 + $0x510] sm:$0xff]
        %v2140 = vld [vmem:[%s927 + $0x518] sm:$0xff]
        %v2141 = vld [vmem:[%s927 + $0x520] sm:$0xff]
        %v2142 = vld [vmem:[%s927 + $0x528] sm:$0xff]
        %v2143 = vld [vmem:[%s927 + $0x530] sm:$0xff]
        %v2144 = vld [vmem:[%s927 + $0x538] sm:$0xff]
        %v2145 = vld [vmem:[%s927 + $0x540] sm:$0xff]
        %v2146 = vld [vmem:[%s927 + $0x548] sm:$0xff]
        %v2147 = vld [vmem:[%s927 + $0x550] sm:$0xff]
        %v2148 = vld [vmem:[%s927 + $0x558] sm:$0xff]
        %v2149 = vld [vmem:[%s927 + $0x560] sm:$0xff]
        %v2150 = vld [vmem:[%s927 + $0x568] sm:$0xff]
        %v2151 = vld [vmem:[%s927 + $0x570] sm:$0xff]
        %v2152 = vld [vmem:[%s927 + $0x578] sm:$0xff]
        %v2153 = vld [vmem:[%s927 + $0x580] sm:$0xff]
        %v2154 = vld [vmem:[%s927 + $0x588] sm:$0xff]
        %v2155 = vld [vmem:[%s927 + $0x590] sm:$0xff]
        %v2156 = vld [vmem:[%s927 + $0x598] sm:$0xff]
        %v2157 = vld [vmem:[%s927 + $0x5a0] sm:$0xff]
        %v2158 = vld [vmem:[%s927 + $0x5a8] sm:$0xff]
        %v2159 = vld [vmem:[%s927 + $0x5b0] sm:$0xff]
        %v2160 = vld [vmem:[%s927 + $0x5b8] sm:$0xff]
        %v2161 = vld [vmem:[%s927 + $0x5c0] sm:$0xff]
        %v2162 = vld [vmem:[%s927 + $0x5c8] sm:$0xff]
        %v2163 = vld [vmem:[%s927 + $0x5d0] sm:$0xff]
        %v2164 = vld [vmem:[%s927 + $0x5d8] sm:$0xff]
        %v2165 = vld [vmem:[%s927 + $0x5e0] sm:$0xff]
        %v2166 = vld [vmem:[%s927 + $0x5e8] sm:$0xff]
        %v2167 = vld [vmem:[%s927 + $0x5f0] sm:$0xff]
        %v2168 = vld [vmem:[%s927 + $0x5f8] sm:$0xff]
        %v2169 = vld [vmem:[%s927 + $0x600] sm:$0xff]
        %v2170 = vld [vmem:[%s927 + $0x608] sm:$0xff]
        %v2171 = vld [vmem:[%s927 + $0x610] sm:$0xff]
        %v2172 = vld [vmem:[%s927 + $0x618] sm:$0xff]
        %v2173 = vld [vmem:[%s927 + $0x620] sm:$0xff]
        %v2174 = vld [vmem:[%s927 + $0x628] sm:$0xff]
        %v2175 = vld [vmem:[%s927 + $0x630] sm:$0xff]
        %v2176 = vld [vmem:[%s927 + $0x638] sm:$0xff]
        %v2177 = vld [vmem:[%s927 + $0x640] sm:$0xff]
        %v2178 = vld [vmem:[%s927 + $0x648] sm:$0xff]
        %v2179 = vld [vmem:[%s927 + $0x650] sm:$0xff]
        %v2180 = vld [vmem:[%s927 + $0x658] sm:$0xff]
        %v2181 = vld [vmem:[%s927 + $0x660] sm:$0xff]
        %v2182 = vld [vmem:[%s927 + $0x668] sm:$0xff]
        %v2183 = vld [vmem:[%s927 + $0x670] sm:$0xff]
        %v2184 = vld [vmem:[%s927 + $0x678] sm:$0xff]
        %v2185 = vld [vmem:[%s927 + $0x680] sm:$0xff]
        %v2186 = vld [vmem:[%s927 + $0x688] sm:$0xff]
        %v2187 = vld [vmem:[%s927 + $0x690] sm:$0xff]
        %v2188 = vld [vmem:[%s927 + $0x698] sm:$0xff]
        %v2189 = vld [vmem:[%s927 + $0x6a0] sm:$0xff]
        %v2190 = vld [vmem:[%s927 + $0x6a8] sm:$0xff]
        %v2191 = vld [vmem:[%s927 + $0x6b0] sm:$0xff]
        %v2192 = vld [vmem:[%s927 + $0x6b8] sm:$0xff]
        %v2193 = vld [vmem:[%s927 + $0x6c0] sm:$0xff]
        %v2194 = vld [vmem:[%s927 + $0x6c8] sm:$0xff]
        %v2195 = vld [vmem:[%s927 + $0x6d0] sm:$0xff]
        %v2196 = vld [vmem:[%s927 + $0x6d8] sm:$0xff]
        %v2197 = vld [vmem:[%s927 + $0x6e0] sm:$0xff]
        %v2198 = vld [vmem:[%s927 + $0x6e8] sm:$0xff]
        %v2199 = vld [vmem:[%s927 + $0x6f0] sm:$0xff]
        %v2200 = vld [vmem:[%s927 + $0x6f8] sm:$0xff]
        %v2201 = vld [vmem:[%s927 + $0x700] sm:$0xff]
        %v2202 = vld [vmem:[%s927 + $0x708] sm:$0xff]
        %v2203 = vld [vmem:[%s927 + $0x710] sm:$0xff]
        %v2204 = vld [vmem:[%s927 + $0x718] sm:$0xff]
        %v2205 = vld [vmem:[%s927 + $0x720] sm:$0xff]
        %v2206 = vld [vmem:[%s927 + $0x728] sm:$0xff]
        %v2207 = vld [vmem:[%s927 + $0x730] sm:$0xff]
        %v2208 = vld [vmem:[%s927 + $0x738] sm:$0xff]
        %v2209 = vld [vmem:[%s927 + $0x740] sm:$0xff]
        %v2210 = vld [vmem:[%s927 + $0x748] sm:$0xff]
        %v2211 = vld [vmem:[%s927 + $0x750] sm:$0xff]
        %v2212 = vld [vmem:[%s927 + $0x758] sm:$0xff]
        %v2213 = vld [vmem:[%s927 + $0x760] sm:$0xff]
        %v2214 = vld [vmem:[%s927 + $0x768] sm:$0xff]
        %v2215 = vld [vmem:[%s927 + $0x770] sm:$0xff]
        %v2216 = vld [vmem:[%s927 + $0x778] sm:$0xff]
        %v2217 = vld [vmem:[%s927 + $0x780] sm:$0xff]
        %v2218 = vld [vmem:[%s927 + $0x788] sm:$0xff]
        %v2219 = vld [vmem:[%s927 + $0x790] sm:$0xff]
        %v2220 = vld [vmem:[%s927 + $0x798] sm:$0xff]
        %v2221 = vld [vmem:[%s927 + $0x7a0] sm:$0xff]
        %v2222 = vld [vmem:[%s927 + $0x7a8] sm:$0xff]
        %v2223 = vld [vmem:[%s927 + $0x7b0] sm:$0xff]
        %v2224 = vld [vmem:[%s927 + $0x7b8] sm:$0xff]
        %v2225 = vld [vmem:[%s927 + $0x7c0] sm:$0xff]
        %v2226 = vld [vmem:[%s927 + $0x7c8] sm:$0xff]
        %v2227 = vld [vmem:[%s927 + $0x7d0] sm:$0xff]
        %v2228 = vld [vmem:[%s927 + $0x7d8] sm:$0xff]
        %v2229 = vld [vmem:[%s927 + $0x7e0] sm:$0xff]
        %v2230 = vld [vmem:[%s927 + $0x7e8] sm:$0xff]
        %v2231 = vld [vmem:[%s927 + $0x7f0] sm:$0xff]
        %v2232 = vld [vmem:[%s927 + $0x7f8] sm:$0xff]
        %v2233 = vld [vmem:[%s927 + $0x800] sm:$0xff]
        %v2234 = vld [vmem:[%s927 + $0x808] sm:$0xff]
        %v2235 = vld [vmem:[%s927 + $0x810] sm:$0xff]
        %v2236 = vld [vmem:[%s927 + $0x818] sm:$0xff]
        %v2237 = vld [vmem:[%s927 + $0x820] sm:$0xff]
        %v2238 = vld [vmem:[%s927 + $0x828] sm:$0xff]
        %v2239 = vld [vmem:[%s927 + $0x830] sm:$0xff]
        %v2240 = vld [vmem:[%s927 + $0x838] sm:$0xff]
        %v2241 = vld [vmem:[%s927 + $0x840] sm:$0xff]
        %v2242 = vld [vmem:[%s927 + $0x848] sm:$0xff]
        %v2243 = vld [vmem:[%s927 + $0x850] sm:$0xff]
        %v2244 = vld [vmem:[%s927 + $0x858] sm:$0xff]
        %v2245 = vld [vmem:[%s927 + $0x860] sm:$0xff]
        %v2246 = vld [vmem:[%s927 + $0x868] sm:$0xff]
        %v2247 = vld [vmem:[%s927 + $0x870] sm:$0xff]
        %v2248 = vld [vmem:[%s927 + $0x878] sm:$0xff]
        %v2249 = vld [vmem:[%s927 + $0x880] sm:$0xff]
        %v2250 = vld [vmem:[%s927 + $0x888] sm:$0xff]
        %v2251 = vld [vmem:[%s927 + $0x890] sm:$0xff]
        %v2252 = vld [vmem:[%s927 + $0x898] sm:$0xff]
        %v2253 = vld [vmem:[%s927 + $0x8a0] sm:$0xff]
        %v2254 = vld [vmem:[%s927 + $0x8a8] sm:$0xff]
        %v2255 = vld [vmem:[%s927 + $0x8b0] sm:$0xff]
        %v2256 = vld [vmem:[%s927 + $0x8b8] sm:$0xff]
        %v2257 = vld [vmem:[%s927 + $0x8c0] sm:$0xff]
        %v2258 = vld [vmem:[%s927 + $0x8c8] sm:$0xff]
        %v2259 = vld [vmem:[%s927 + $0x8d0] sm:$0xff]
        %v2260 = vld [vmem:[%s927 + $0x8d8] sm:$0xff]
        %v2261 = vld [vmem:[%s927 + $0x8e0] sm:$0xff]
        %v2262 = vld [vmem:[%s927 + $0x8e8] sm:$0xff]
        %v2263 = vld [vmem:[%s927 + $0x8f0] sm:$0xff]
        %v2264 = vld [vmem:[%s927 + $0x8f8] sm:$0xff]
        %v2265 = vld [vmem:[%s927 + $0x900] sm:$0xff]
        %v2266 = vld [vmem:[%s927 + $0x908] sm:$0xff]
        %v2267 = vld [vmem:[%s927 + $0x910] sm:$0xff]
        %v2268 = vld [vmem:[%s927 + $0x918] sm:$0xff]
        %v2269 = vld [vmem:[%s927 + $0x920] sm:$0xff]
        %v2270 = vld [vmem:[%s927 + $0x928] sm:$0xff]
        %v2271 = vld [vmem:[%s927 + $0x930] sm:$0xff]
        %v2272 = vld [vmem:[%s927 + $0x938] sm:$0xff]
        %v2273 = vld [vmem:[%s927 + $0x940] sm:$0xff]
        %v2274 = vld [vmem:[%s927 + $0x948] sm:$0xff]
        %v2275 = vld [vmem:[%s927 + $0x950] sm:$0xff]
        %v2276 = vld [vmem:[%s927 + $0x958] sm:$0xff]
        %v2277 = vld [vmem:[%s927 + $0x960] sm:$0xff]
        %v2278 = vld [vmem:[%s927 + $0x968] sm:$0xff]
        %v2279 = vld [vmem:[%s927 + $0x970] sm:$0xff]
        %v2280 = vld [vmem:[%s927 + $0x978] sm:$0xff]
        %v2281 = vld [vmem:[%s927 + $0x980] sm:$0xff]
        %v2282 = vld [vmem:[%s927 + $0x988] sm:$0xff]
        %v2283 = vld [vmem:[%s927 + $0x990] sm:$0xff]
        %v2284 = vld [vmem:[%s927 + $0x998] sm:$0xff]
        %v2285 = vld [vmem:[%s927 + $0x9a0] sm:$0xff]
        %v2286 = vld [vmem:[%s927 + $0x9a8] sm:$0xff]
        %v2287 = vld [vmem:[%s927 + $0x9b0] sm:$0xff]
        %v2288 = vld [vmem:[%s927 + $0x9b8] sm:$0xff]
        %v2289 = vld [vmem:[%s927 + $0x9c0] sm:$0xff]
        %v2290 = vld [vmem:[%s927 + $0x9c8] sm:$0xff]
        %v2291 = vld [vmem:[%s927 + $0x9d0] sm:$0xff]
        %v2292 = vld [vmem:[%s927 + $0x9d8] sm:$0xff]
        %v2293 = vld [vmem:[%s927 + $0x9e0] sm:$0xff]
        %v2294 = vld [vmem:[%s927 + $0x9e8] sm:$0xff]
        %v2295 = vld [vmem:[%s927 + $0x9f0] sm:$0xff]
        %v2296 = vld [vmem:[%s927 + $0x9f8] sm:$0xff]
        %v2297 = vld [vmem:[%s927 + $0xa00] sm:$0xff]
        %v2298 = vld [vmem:[%s927 + $0xa08] sm:$0xff]
        %v2299 = vld [vmem:[%s927 + $0xa10] sm:$0xff]
        %v2300 = vld [vmem:[%s927 + $0xa18] sm:$0xff]
        %v2301 = vld [vmem:[%s927 + $0xa20] sm:$0xff]
        %v2302 = vld [vmem:[%s927 + $0xa28] sm:$0xff]
        %v2303 = vld [vmem:[%s927 + $0xa30] sm:$0xff]
        %v2304 = vld [vmem:[%s927 + $0xa38] sm:$0xff]
        %v2305 = vld [vmem:[%s927 + $0xa40] sm:$0xff]
        %v2306 = vld [vmem:[%s927 + $0xa48] sm:$0xff]
        %v2307 = vld [vmem:[%s927 + $0xa50] sm:$0xff]
        %v2308 = vld [vmem:[%s927 + $0xa58] sm:$0xff]
        %v2309 = vld [vmem:[%s927 + $0xa60] sm:$0xff]
        %v2310 = vld [vmem:[%s927 + $0xa68] sm:$0xff]
        %v2311 = vld [vmem:[%s927 + $0xa70] sm:$0xff]
        %v2312 = vld [vmem:[%s927 + $0xa78] sm:$0xff]
        %v2313 = vld [vmem:[%s927 + $0xa80] sm:$0xff]
        %v2314 = vld [vmem:[%s927 + $0xa88] sm:$0xff]
        %v2315 = vld [vmem:[%s927 + $0xa90] sm:$0xff]
        %v2316 = vld [vmem:[%s927 + $0xa98] sm:$0xff]
        %v2317 = vld [vmem:[%s927 + $0xaa0] sm:$0xff]
        %v2318 = vld [vmem:[%s927 + $0xaa8] sm:$0xff]
        %v2319 = vld [vmem:[%s927 + $0xab0] sm:$0xff]
        %v2320 = vld [vmem:[%s927 + $0xab8] sm:$0xff]
        %v2321 = vld [vmem:[%s927 + $0xac0] sm:$0xff]
        %v2322 = vld [vmem:[%s927 + $0xac8] sm:$0xff]
        %v2323 = vld [vmem:[%s927 + $0xad0] sm:$0xff]
        %v2324 = vld [vmem:[%s927 + $0xad8] sm:$0xff]
        %v2325 = vld [vmem:[%s927 + $0xae0] sm:$0xff]
        %v2326 = vld [vmem:[%s927 + $0xae8] sm:$0xff]
        %v2327 = vld [vmem:[%s927 + $0xaf0] sm:$0xff]
        %v2328 = vld [vmem:[%s927 + $0xaf8] sm:$0xff]
        %v2329 = vld [vmem:[%s927 + $0xb00] sm:$0xff]
        %v2330 = vld [vmem:[%s927 + $0xb08] sm:$0xff]
        %v2331 = vld [vmem:[%s927 + $0xb10] sm:$0xff]
        %v2332 = vld [vmem:[%s927 + $0xb18] sm:$0xff]
        %v2333 = vld [vmem:[%s927 + $0xb20] sm:$0xff]
        %v2334 = vld [vmem:[%s927 + $0xb28] sm:$0xff]
        %v2335 = vld [vmem:[%s927 + $0xb30] sm:$0xff]
        %v2336 = vld [vmem:[%s927 + $0xb38] sm:$0xff]
        %v2337 = vld [vmem:[%s927 + $0xb40] sm:$0xff]
        %v2338 = vld [vmem:[%s927 + $0xb48] sm:$0xff]
        %v2339 = vld [vmem:[%s927 + $0xb50] sm:$0xff]
        %v2340 = vld [vmem:[%s927 + $0xb58] sm:$0xff]
        %v2341 = vld [vmem:[%s927 + $0xb60] sm:$0xff]
        %v2342 = vld [vmem:[%s927 + $0xb68] sm:$0xff]
        %v2343 = vld [vmem:[%s927 + $0xb70] sm:$0xff]
        %v2344 = vld [vmem:[%s927 + $0xb78] sm:$0xff]
        %v2345 = vld [vmem:[%s927 + $0xb80] sm:$0xff]
        %v2346 = vld [vmem:[%s927 + $0xb88] sm:$0xff]
        %v2347 = vld [vmem:[%s927 + $0xb90] sm:$0xff]
        %v2348 = vld [vmem:[%s927 + $0xb98] sm:$0xff]
        %v2349 = vld [vmem:[%s927 + $0xba0] sm:$0xff]
        %v2350 = vld [vmem:[%s927 + $0xba8] sm:$0xff]
        %v2351 = vld [vmem:[%s927 + $0xbb0] sm:$0xff]
        %v2352 = vld [vmem:[%s927 + $0xbb8] sm:$0xff]
        %v2353 = vld [vmem:[%s927 + $0xbc0] sm:$0xff]
        %v2354 = vld [vmem:[%s927 + $0xbc8] sm:$0xff]
        %v2355 = vld [vmem:[%s927 + $0xbd0] sm:$0xff]
        %v2356 = vld [vmem:[%s927 + $0xbd8] sm:$0xff]
        %v2357 = vld [vmem:[%s927 + $0xbe0] sm:$0xff]
        %v2358 = vld [vmem:[%s927 + $0xbe8] sm:$0xff]
        %v2359 = vld [vmem:[%s927 + $0xbf0] sm:$0xff]
        %v2360 = vld [vmem:[%s927 + $0xbf8] sm:$0xff]
        %v2361 = vld [vmem:[%s927 + $0xc00] sm:$0xff]
        %v2362 = vld [vmem:[%s927 + $0xc08] sm:$0xff]
        %v2363 = vld [vmem:[%s927 + $0xc10] sm:$0xff]
        %v2364 = vld [vmem:[%s927 + $0xc18] sm:$0xff]
        %v2365 = vld [vmem:[%s927 + $0xc20] sm:$0xff]
        %v2366 = vld [vmem:[%s927 + $0xc28] sm:$0xff]
        %v2367 = vld [vmem:[%s927 + $0xc30] sm:$0xff]
        %v2368 = vld [vmem:[%s927 + $0xc38] sm:$0xff]
        %v2369 = vld [vmem:[%s927 + $0xc40] sm:$0xff]
        %v2370 = vld [vmem:[%s927 + $0xc48] sm:$0xff]
        %v2371 = vld [vmem:[%s927 + $0xc50] sm:$0xff]
        %v2372 = vld [vmem:[%s927 + $0xc58] sm:$0xff]
        %v2373 = vld [vmem:[%s927 + $0xc60] sm:$0xff]
        %v2374 = vld [vmem:[%s927 + $0xc68] sm:$0xff]
        %v2375 = vld [vmem:[%s927 + $0xc70] sm:$0xff]
        %v2376 = vld [vmem:[%s927 + $0xc78] sm:$0xff]
        %v2377 = vld [vmem:[%s927 + $0xc80] sm:$0xff]
        %v2378 = vld [vmem:[%s927 + $0xc88] sm:$0xff]
        %v2379 = vld [vmem:[%s927 + $0xc90] sm:$0xff]
        %v2380 = vld [vmem:[%s927 + $0xc98] sm:$0xff]
        %v2381 = vld [vmem:[%s927 + $0xca0] sm:$0xff]
        %v2382 = vld [vmem:[%s927 + $0xca8] sm:$0xff]
        %v2383 = vld [vmem:[%s927 + $0xcb0] sm:$0xff]
        %v2384 = vld [vmem:[%s927 + $0xcb8] sm:$0xff]
        %v2385 = vld [vmem:[%s927 + $0xcc0] sm:$0xff]
        %v2386 = vld [vmem:[%s927 + $0xcc8] sm:$0xff]
        %v2387 = vld [vmem:[%s927 + $0xcd0] sm:$0xff]
        %v2388 = vld [vmem:[%s927 + $0xcd8] sm:$0xff]
        %v2389 = vld [vmem:[%s927 + $0xce0] sm:$0xff]
        %v2390 = vld [vmem:[%s927 + $0xce8] sm:$0xff]
        %v2391 = vld [vmem:[%s927 + $0xcf0] sm:$0xff]
        %v2392 = vld [vmem:[%s927 + $0xcf8] sm:$0xff]
        %v2393 = vld [vmem:[%s927 + $0xd00] sm:$0xff]
        %v2394 = vld [vmem:[%s927 + $0xd08] sm:$0xff]
        %v2395 = vld [vmem:[%s927 + $0xd10] sm:$0xff]
        %v2396 = vld [vmem:[%s927 + $0xd18] sm:$0xff]
        %v2397 = vld [vmem:[%s927 + $0xd20] sm:$0xff]
        %v2398 = vld [vmem:[%s927 + $0xd28] sm:$0xff]
        %v2399 = vld [vmem:[%s927 + $0xd30] sm:$0xff]
        %v2400 = vld [vmem:[%s927 + $0xd38] sm:$0xff]
        %v2401 = vld [vmem:[%s927 + $0xd40] sm:$0xff]
        %v2402 = vld [vmem:[%s927 + $0xd48] sm:$0xff]
        %v2403 = vld [vmem:[%s927 + $0xd50] sm:$0xff]
        %v2404 = vld [vmem:[%s927 + $0xd58] sm:$0xff]
        %v2405 = vld [vmem:[%s927 + $0xd60] sm:$0xff]
        %v2406 = vld [vmem:[%s927 + $0xd68] sm:$0xff]
        %v2407 = vld [vmem:[%s927 + $0xd70] sm:$0xff]
        %v2408 = vld [vmem:[%s927 + $0xd78] sm:$0xff]
        %v2409 = vld [vmem:[%s927 + $0xd80] sm:$0xff]
        %v2410 = vld [vmem:[%s927 + $0xd88] sm:$0xff]
        %v2411 = vld [vmem:[%s927 + $0xd90] sm:$0xff]
        %v2412 = vld [vmem:[%s927 + $0xd98] sm:$0xff]
        %v2413 = vld [vmem:[%s927 + $0xda0] sm:$0xff]
        %v2414 = vld [vmem:[%s927 + $0xda8] sm:$0xff]
        %v2415 = vld [vmem:[%s927 + $0xdb0] sm:$0xff]
        %v2416 = vld [vmem:[%s927 + $0xdb8] sm:$0xff]
        %v2417 = vld [vmem:[%s927 + $0xdc0] sm:$0xff]
        %v2418 = vld [vmem:[%s927 + $0xdc8] sm:$0xff]
        %v2419 = vld [vmem:[%s927 + $0xdd0] sm:$0xff]
        %v2420 = vld [vmem:[%s927 + $0xdd8] sm:$0xff]
        %v2421 = vld [vmem:[%s927 + $0xde0] sm:$0xff]
        %v2422 = vld [vmem:[%s927 + $0xde8] sm:$0xff]
        %v2423 = vld [vmem:[%s927 + $0xdf0] sm:$0xff]
        %v2424 = vld [vmem:[%s927 + $0xdf8] sm:$0xff]
        %v2425 = vld [vmem:[%s927 + $0xe00] sm:$0xff]
        %v2426 = vld [vmem:[%s927 + $0xe08] sm:$0xff]
        %v2427 = vld [vmem:[%s927 + $0xe10] sm:$0xff]
        %v2428 = vld [vmem:[%s927 + $0xe18] sm:$0xff]
        %v2429 = vld [vmem:[%s927 + $0xe20] sm:$0xff]
        %v2430 = vld [vmem:[%s927 + $0xe28] sm:$0xff]
        %v2431 = vld [vmem:[%s927 + $0xe30] sm:$0xff]
        %v2432 = vld [vmem:[%s927 + $0xe38] sm:$0xff]
        %v2433 = vld [vmem:[%s927 + $0xe40] sm:$0xff]
        %v2434 = vld [vmem:[%s927 + $0xe48] sm:$0xff]
        %v2435 = vld [vmem:[%s927 + $0xe50] sm:$0xff]
        %v2436 = vld [vmem:[%s927 + $0xe58] sm:$0xff]
        %v2437 = vld [vmem:[%s927 + $0xe60] sm:$0xff]
        %v2438 = vld [vmem:[%s927 + $0xe68] sm:$0xff]
        %v2439 = vld [vmem:[%s927 + $0xe70] sm:$0xff]
        %v2440 = vld [vmem:[%s927 + $0xe78] sm:$0xff]
        %v2441 = vld [vmem:[%s927 + $0xe80] sm:$0xff]
        %v2442 = vld [vmem:[%s927 + $0xe88] sm:$0xff]
        %v2443 = vld [vmem:[%s927 + $0xe90] sm:$0xff]
        %v2444 = vld [vmem:[%s927 + $0xe98] sm:$0xff]
        %v2445 = vld [vmem:[%s927 + $0xea0] sm:$0xff]
        %v2446 = vld [vmem:[%s927 + $0xea8] sm:$0xff]
        %v2447 = vld [vmem:[%s927 + $0xeb0] sm:$0xff]
        %v2448 = vld [vmem:[%s927 + $0xeb8] sm:$0xff]
        %v2449 = vld [vmem:[%s927 + $0xec0] sm:$0xff]
        %v2450 = vld [vmem:[%s927 + $0xec8] sm:$0xff]
        %v2451 = vld [vmem:[%s927 + $0xed0] sm:$0xff]
        %v2452 = vld [vmem:[%s927 + $0xed8] sm:$0xff]
        %v2453 = vld [vmem:[%s927 + $0xee0] sm:$0xff]
        %v2454 = vld [vmem:[%s927 + $0xee8] sm:$0xff]
        %v2455 = vld [vmem:[%s927 + $0xef0] sm:$0xff]
        %v2456 = vld [vmem:[%s927 + $0xef8] sm:$0xff]
        %v2457 = vld [vmem:[%s927 + $0xf00] sm:$0xff]
        %v2458 = vld [vmem:[%s927 + $0xf08] sm:$0xff]
        %v2459 = vld [vmem:[%s927 + $0xf10] sm:$0xff]
        %v2460 = vld [vmem:[%s927 + $0xf18] sm:$0xff]
        %v2461 = vld [vmem:[%s927 + $0xf20] sm:$0xff]
        %v2462 = vld [vmem:[%s927 + $0xf28] sm:$0xff]
        %v2463 = vld [vmem:[%s927 + $0xf30] sm:$0xff]
        %v2464 = vld [vmem:[%s927 + $0xf38] sm:$0xff]
        %v2465 = vld [vmem:[%s927 + $0xf40] sm:$0xff]
        %v2466 = vld [vmem:[%s927 + $0xf48] sm:$0xff]
        %v2467 = vld [vmem:[%s927 + $0xf50] sm:$0xff]
        %v2468 = vld [vmem:[%s927 + $0xf58] sm:$0xff]
        %v2469 = vld [vmem:[%s927 + $0xf60] sm:$0xff]
        %v2470 = vld [vmem:[%s927 + $0xf68] sm:$0xff]
        %v2471 = vld [vmem:[%s927 + $0xf70] sm:$0xff]
        %v2472 = vld [vmem:[%s927 + $0xf78] sm:$0xff]
        %v2473 = vld [vmem:[%s927 + $0xf80] sm:$0xff]
        %v2474 = vld [vmem:[%s927 + $0xf88] sm:$0xff]
        %v2475 = vld [vmem:[%s927 + $0xf90] sm:$0xff]
        %v2476 = vld [vmem:[%s927 + $0xf98] sm:$0xff]
        %v2477 = vld [vmem:[%s927 + $0xfa0] sm:$0xff]
        %v2478 = vld [vmem:[%s927 + $0xfa8] sm:$0xff]
        %v2479 = vld [vmem:[%s927 + $0xfb0] sm:$0xff]
        %v2480 = vld [vmem:[%s927 + $0xfb8] sm:$0xff]
        %v2481 = vld [vmem:[%s927 + $0xfc0] sm:$0xff]
        %v2482 = vld [vmem:[%s927 + $0xfc8] sm:$0xff]
        %v2483 = vld [vmem:[%s927 + $0xfd0] sm:$0xff]
        %v2484 = vld [vmem:[%s927 + $0xfd8] sm:$0xff]
        %v2485 = vld [vmem:[%s927 + $0xfe0] sm:$0xff]
        %v2486 = vld [vmem:[%s927 + $0xfe8] sm:$0xff]
        %v2487 = vld [vmem:[%s927 + $0xff0] sm:$0xff]
        %v2488 = vld [vmem:[%s927 + $0xff8] sm:$0xff]
        %v2489 = vld [vmem:[%s936] sm:$0xff]
        %v2491 = vlaneseq
        %v2492 = vshrl.u32 %v2491, 7
        %v2493 = vsub.s32 0, %v2492
        %v2494 = vrot.slane %v2489, %v2493
        %v2495 = vlaneseq
        %v2496 = vshrl.u32 %v2495, 7
        %v2497 = vsub.s32 1, %v2496
        %v2498 = vrot.slane %v2489, %v2497
        %v2499 = vlaneseq
        %v2500 = vshrl.u32 %v2499, 7
        %v2501 = vsub.s32 2, %v2500
        %v2502 = vrot.slane %v2489, %v2501
        %v2503 = vlaneseq
        %v2504 = vshrl.u32 %v2503, 7
        %v2505 = vsub.s32 3, %v2504
        %v2506 = vrot.slane %v2489, %v2505
        %v2507 = vlaneseq
        %v2508 = vshrl.u32 %v2507, 7
        %v2509 = vsub.s32 4, %v2508
        %v2510 = vrot.slane %v2489, %v2509
        %v2511 = vlaneseq
        %v2512 = vshrl.u32 %v2511, 7
        %v2513 = vsub.s32 5, %v2512
        %v2514 = vrot.slane %v2489, %v2513
        %v2515 = vlaneseq
        %v2516 = vshrl.u32 %v2515, 7
        %v2517 = vsub.s32 6, %v2516
        %v2518 = vrot.slane %v2489, %v2517
        %v2519 = vlaneseq
        %v2520 = vshrl.u32 %v2519, 7
        %v2521 = vsub.s32 7, %v2520
        %v2522 = vrot.slane %v2489, %v2521
        %2531 = vmatprep.subr.mxu0 %v2098
        %2532 = vmatpush1.msra.mxu0 %v2097
        %2533 = vmatprep.subr.mxu0 %v2090
        %2534 = vmatpush1.msra.mxu0 %v2089
        %2535 = vmatprep.subr.mxu0 %v2082
        %2536 = vmatpush1.msra.mxu0 %v2081
        %2537 = vmatprep.subr.mxu0 %v2074
        %2538 = vmatpush1.msra.mxu0 %v2073
        %2539 = vmatprep.subr.mxu0 %v2066
        %2540 = vmatpush1.msra.mxu0 %v2065
        %2541 = vmatprep.subr.mxu0 %v2058
        %2542 = vmatpush1.msra.mxu0 %v2057
        %2543 = vmatprep.subr.mxu0 %v2050
        %2544 = vmatpush1.msra.mxu0 %v2049
        %2545 = vmatprep.subr.mxu0 %v2042
        %2546 = vmatpush1.msra.mxu0 %v2041
        %2547 = vmatprep.subr.mxu0 %v2034
        %2548 = vmatpush1.msra.mxu0 %v2033
        %2549 = vmatprep.subr.mxu0 %v2026
        %2550 = vmatpush1.msra.mxu0 %v2025
        %2551 = vmatprep.subr.mxu0 %v2018
        %2552 = vmatpush1.msra.mxu0 %v2017
        %2553 = vmatprep.subr.mxu0 %v2010
        %2554 = vmatpush1.msra.mxu0 %v2009
        %2555 = vmatprep.subr.mxu0 %v2002
        %2556 = vmatpush1.msra.mxu0 %v2001
        %2557 = vmatprep.subr.mxu0 %v1994
        %2558 = vmatpush1.msra.mxu0 %v1993
        %2559 = vmatprep.subr.mxu0 %v1986
        %2560 = vmatpush1.msra.mxu0 %v1985
        %2561 = vmatprep.subr.mxu0 %v1978
        %2562 = vmatpush1.msra.mxu0 %v1977
        %2563 = vmatprep.subr.mxu0 %v2226
        %2564 = vmatpush2.msra.mxu0 %v2225
        %2565 = vmatprep.subr.mxu0 %v2218
        %2566 = vmatpush2.msra.mxu0 %v2217
        %2567 = vmatprep.subr.mxu0 %v2210
        %2568 = vmatpush2.msra.mxu0 %v2209
        %2569 = vmatprep.subr.mxu0 %v2202
        %2570 = vmatpush2.msra.mxu0 %v2201
        %2571 = vmatprep.subr.mxu0 %v2194
        %2572 = vmatpush2.msra.mxu0 %v2193
        %2573 = vmatprep.subr.mxu0 %v2186
        %2574 = vmatpush2.msra.mxu0 %v2185
        %2575 = vmatprep.subr.mxu0 %v2178
        %2576 = vmatpush2.msra.mxu0 %v2177
        %2577 = vmatprep.subr.mxu0 %v2170
        %2578 = vmatpush2.msra.mxu0 %v2169
        %2579 = vmatprep.subr.mxu0 %v2162
        %2580 = vmatpush2.msra.mxu0 %v2161
        %2581 = vmatprep.subr.mxu0 %v2154
        %2582 = vmatpush2.msra.mxu0 %v2153
        %2583 = vmatprep.subr.mxu0 %v2146
        %2584 = vmatpush2.msra.mxu0 %v2145
        %2585 = vmatprep.subr.mxu0 %v2138
        %2586 = vmatpush2.msra.mxu0 %v2137
        %2587 = vmatprep.subr.mxu0 %v2130
        %2588 = vmatpush2.msra.mxu0 %v2129
        %2589 = vmatprep.subr.mxu0 %v2122
        %2590 = vmatpush2.msra.mxu0 %v2121
        %2591 = vmatprep.subr.mxu0 %v2114
        %2592 = vmatpush2.msra.mxu0 %v2113
        %2593 = vmatprep.subr.mxu0 %v2106
        %2594 = vmatpush2.msra.mxu0 %v2105
        %2595 = vmatprep.mubr.f32.mxu0 %v1332
        %2596 = vmatmul.mubr.f32.gmra.mxu0 %v1331
        %v2597 = vpop.f32.mrf.mxu0
        %v2598 = vadd.f32 %v2494, %v2597
        %v2599 = vpop.f32.mrf.mxu0
        %v2600 = vadd.f32 %v2498, %v2599
        %2601 = vmatprep.mubr.f32.mxu0 %v1336
        %2602 = vmatmul.mubr.f32.gmra.mxu0 %v1335
        %v2603 = vpop.f32.mrf.mxu0
        %v2604 = vadd.f32 %v2494, %v2603
        %v2605 = vpop.f32.mrf.mxu0
        %v2606 = vadd.f32 %v2498, %v2605
        %2607 = vmatprep.mubr.f32.mxu0 %v1340
        %2608 = vmatmul.mubr.f32.gmra.mxu0 %v1339
        %v2609 = vpop.f32.mrf.mxu0
        %v2610 = vadd.f32 %v2494, %v2609
        %v2611 = vpop.f32.mrf.mxu0
        %v2612 = vadd.f32 %v2498, %v2611
        %2613 = vdwg.mxu0
        %2614 = vmatprep.subr.mxu0 %v2354
        %2615 = vmatpush1.msra.mxu0 %v2353
        %2616 = vmatprep.subr.mxu0 %v2346
        %2617 = vmatpush1.msra.mxu0 %v2345
        %2618 = vmatprep.subr.mxu0 %v2338
        %2619 = vmatpush1.msra.mxu0 %v2337
        %2620 = vmatprep.subr.mxu0 %v2330
        %2621 = vmatpush1.msra.mxu0 %v2329
        %2622 = vmatprep.subr.mxu0 %v2322
        %2623 = vmatpush1.msra.mxu0 %v2321
        %2624 = vmatprep.subr.mxu0 %v2314
        %2625 = vmatpush1.msra.mxu0 %v2313
        %2626 = vmatprep.subr.mxu0 %v2306
        %2627 = vmatpush1.msra.mxu0 %v2305
        %2628 = vmatprep.subr.mxu0 %v2298
        %2629 = vmatpush1.msra.mxu0 %v2297
        %2630 = vmatprep.subr.mxu0 %v2290
        %2631 = vmatpush1.msra.mxu0 %v2289
        %2632 = vmatprep.subr.mxu0 %v2282
        %2633 = vmatpush1.msra.mxu0 %v2281
        %2634 = vmatprep.subr.mxu0 %v2274
        %2635 = vmatpush1.msra.mxu0 %v2273
        %2636 = vmatprep.subr.mxu0 %v2266
        %2637 = vmatpush1.msra.mxu0 %v2265
        %2638 = vmatprep.subr.mxu0 %v2258
        %2639 = vmatpush1.msra.mxu0 %v2257
        %2640 = vmatprep.subr.mxu0 %v2250
        %2641 = vmatpush1.msra.mxu0 %v2249
        %2642 = vmatprep.subr.mxu0 %v2242
        %2643 = vmatpush1.msra.mxu0 %v2241
        %2644 = vmatprep.subr.mxu0 %v2234
        %2645 = vmatpush1.msra.mxu0 %v2233
        %2646 = vmatprep.subr.mxu0 %v2482
        %2647 = vmatpush2.msra.mxu0 %v2481
        %2648 = vmatprep.subr.mxu0 %v2474
        %2649 = vmatpush2.msra.mxu0 %v2473
        %2650 = vmatprep.subr.mxu0 %v2466
        %2651 = vmatpush2.msra.mxu0 %v2465
        %2652 = vmatprep.subr.mxu0 %v2458
        %2653 = vmatpush2.msra.mxu0 %v2457
        %2654 = vmatprep.subr.mxu0 %v2450
        %2655 = vmatpush2.msra.mxu0 %v2449
        %2656 = vmatprep.subr.mxu0 %v2442
        %2657 = vmatpush2.msra.mxu0 %v2441
        %2658 = vmatprep.subr.mxu0 %v2434
        %2659 = vmatpush2.msra.mxu0 %v2433
        %2660 = vmatprep.subr.mxu0 %v2426
        %2661 = vmatpush2.msra.mxu0 %v2425
        %2662 = vmatprep.subr.mxu0 %v2418
        %2663 = vmatpush2.msra.mxu0 %v2417
        %2664 = vmatprep.subr.mxu0 %v2410
        %2665 = vmatpush2.msra.mxu0 %v2409
        %2666 = vmatprep.subr.mxu0 %v2402
        %2667 = vmatpush2.msra.mxu0 %v2401
        %2668 = vmatprep.subr.mxu0 %v2394
        %2669 = vmatpush2.msra.mxu0 %v2393
        %2670 = vmatprep.subr.mxu0 %v2386
        %2671 = vmatpush2.msra.mxu0 %v2385
        %2672 = vmatprep.subr.mxu0 %v2378
        %2673 = vmatpush2.msra.mxu0 %v2377
        %2674 = vmatprep.subr.mxu0 %v2370
        %2675 = vmatpush2.msra.mxu0 %v2369
        %2676 = vmatprep.subr.mxu0 %v2362
        %2677 = vmatpush2.msra.mxu0 %v2361
        %2678 = vmatprep.mubr.f32.mxu0 %v1334
        %2679 = vmatmul.mubr.f32.gmra.mxu0 %v1333
        %v2680 = vpop.f32.mrf.mxu0
        %v2681 = vadd.f32 %v2598, %v2680
        %v2682 = vpop.f32.mrf.mxu0
        %v2683 = vadd.f32 %v2600, %v2682
        %2684 = vmatprep.mubr.f32.mxu0 %v1338
        %2685 = vmatmul.mubr.f32.gmra.mxu0 %v1337
        %v2686 = vpop.f32.mrf.mxu0
        %v2687 = vadd.f32 %v2604, %v2686
        %v2688 = vpop.f32.mrf.mxu0
        %v2689 = vadd.f32 %v2606, %v2688
        %2690 = vmatprep.mubr.f32.mxu0 %v1342
        %2691 = vmatmul.mubr.f32.gmra.mxu0 %v1341
        %v2692 = vpop.f32.mrf.mxu0
        %v2693 = vadd.f32 %v2610, %v2692
        %v2694 = vpop.f32.mrf.mxu0
        %v2695 = vadd.f32 %v2612, %v2694
        %2696 = vdwg.mxu0
        %2697 = vmatprep.subr.mxu0 %v2100
        %2698 = vmatpush1.msra.mxu0 %v2099
        %2699 = vmatprep.subr.mxu0 %v2092
        %2700 = vmatpush1.msra.mxu0 %v2091
        %2701 = vmatprep.subr.mxu0 %v2084
        %2702 = vmatpush1.msra.mxu0 %v2083
        %2703 = vmatprep.subr.mxu0 %v2076
        %2704 = vmatpush1.msra.mxu0 %v2075
        %2705 = vmatprep.subr.mxu0 %v2068
        %2706 = vmatpush1.msra.mxu0 %v2067
        %2707 = vmatprep.subr.mxu0 %v2060
        %2708 = vmatpush1.msra.mxu0 %v2059
        %2709 = vmatprep.subr.mxu0 %v2052
        %2710 = vmatpush1.msra.mxu0 %v2051
        %2711 = vmatprep.subr.mxu0 %v2044
        %2712 = vmatpush1.msra.mxu0 %v2043
        %2713 = vmatprep.subr.mxu0 %v2036
        %2714 = vmatpush1.msra.mxu0 %v2035
        %2715 = vmatprep.subr.mxu0 %v2028
        %2716 = vmatpush1.msra.mxu0 %v2027
        %2717 = vmatprep.subr.mxu0 %v2020
        %2718 = vmatpush1.msra.mxu0 %v2019
        %2719 = vmatprep.subr.mxu0 %v2012
        %2720 = vmatpush1.msra.mxu0 %v2011
        %2721 = vmatprep.subr.mxu0 %v2004
        %2722 = vmatpush1.msra.mxu0 %v2003
        %2723 = vmatprep.subr.mxu0 %v1996
        %2724 = vmatpush1.msra.mxu0 %v1995
        %2725 = vmatprep.subr.mxu0 %v1988
        %2726 = vmatpush1.msra.mxu0 %v1987
        %2727 = vmatprep.subr.mxu0 %v1980
        %2728 = vmatpush1.msra.mxu0 %v1979
        %2729 = vmatprep.subr.mxu0 %v2228
        %2730 = vmatpush2.msra.mxu0 %v2227
        %2731 = vmatprep.subr.mxu0 %v2220
        %2732 = vmatpush2.msra.mxu0 %v2219
        %2733 = vmatprep.subr.mxu0 %v2212
        %2734 = vmatpush2.msra.mxu0 %v2211
        %2735 = vmatprep.subr.mxu0 %v2204
        %2736 = vmatpush2.msra.mxu0 %v2203
        %2737 = vmatprep.subr.mxu0 %v2196
        %2738 = vmatpush2.msra.mxu0 %v2195
        %2739 = vmatprep.subr.mxu0 %v2188
        %2740 = vmatpush2.msra.mxu0 %v2187
        %2741 = vmatprep.subr.mxu0 %v2180
        %2742 = vmatpush2.msra.mxu0 %v2179
        %2743 = vmatprep.subr.mxu0 %v2172
        %2744 = vmatpush2.msra.mxu0 %v2171
        %2745 = vmatprep.subr.mxu0 %v2164
        %2746 = vmatpush2.msra.mxu0 %v2163
        %2747 = vmatprep.subr.mxu0 %v2156
        %2748 = vmatpush2.msra.mxu0 %v2155
        %2749 = vmatprep.subr.mxu0 %v2148
        %2750 = vmatpush2.msra.mxu0 %v2147
        %2751 = vmatprep.subr.mxu0 %v2140
        %2752 = vmatpush2.msra.mxu0 %v2139
        %2753 = vmatprep.subr.mxu0 %v2132
        %2754 = vmatpush2.msra.mxu0 %v2131
        %2755 = vmatprep.subr.mxu0 %v2124
        %2756 = vmatpush2.msra.mxu0 %v2123
        %2757 = vmatprep.subr.mxu0 %v2116
        %2758 = vmatpush2.msra.mxu0 %v2115
        %2759 = vmatprep.subr.mxu0 %v2108
        %2760 = vmatpush2.msra.mxu0 %v2107
        %2761 = vmatprep.mubr.f32.mxu0 %v1332
        %2762 = vmatmul.mubr.f32.gmra.mxu0 %v1331
        %v2763 = vpop.f32.mrf.mxu0
        %v2764 = vadd.f32 %v2502, %v2763
        %v2765 = vpop.f32.mrf.mxu0
        %v2766 = vadd.f32 %v2506, %v2765
        %2767 = vmatprep.mubr.f32.mxu0 %v1336
        %2768 = vmatmul.mubr.f32.gmra.mxu0 %v1335
        %v2769 = vpop.f32.mrf.mxu0
        %v2770 = vadd.f32 %v2502, %v2769
        %v2771 = vpop.f32.mrf.mxu0
        %v2772 = vadd.f32 %v2506, %v2771
        %2773 = vmatprep.mubr.f32.mxu0 %v1340
        %2774 = vmatmul.mubr.f32.gmra.mxu0 %v1339
        %v2775 = vpop.f32.mrf.mxu0
        %v2776 = vadd.f32 %v2502, %v2775
        %v2777 = vpop.f32.mrf.mxu0
        %v2778 = vadd.f32 %v2506, %v2777
        %2779 = vdwg.mxu0
        %2780 = vmatprep.subr.mxu0 %v2356
        %2781 = vmatpush1.msra.mxu0 %v2355
        %2782 = vmatprep.subr.mxu0 %v2348
        %2783 = vmatpush1.msra.mxu0 %v2347
        %2784 = vmatprep.subr.mxu0 %v2340
        %2785 = vmatpush1.msra.mxu0 %v2339
        %2786 = vmatprep.subr.mxu0 %v2332
        %2787 = vmatpush1.msra.mxu0 %v2331
        %2788 = vmatprep.subr.mxu0 %v2324
        %2789 = vmatpush1.msra.mxu0 %v2323
        %2790 = vmatprep.subr.mxu0 %v2316
        %2791 = vmatpush1.msra.mxu0 %v2315
        %2792 = vmatprep.subr.mxu0 %v2308
        %2793 = vmatpush1.msra.mxu0 %v2307
        %2794 = vmatprep.subr.mxu0 %v2300
        %2795 = vmatpush1.msra.mxu0 %v2299
        %2796 = vmatprep.subr.mxu0 %v2292
        %2797 = vmatpush1.msra.mxu0 %v2291
        %2798 = vmatprep.subr.mxu0 %v2284
        %2799 = vmatpush1.msra.mxu0 %v2283
        %2800 = vmatprep.subr.mxu0 %v2276
        %2801 = vmatpush1.msra.mxu0 %v2275
        %2802 = vmatprep.subr.mxu0 %v2268
        %2803 = vmatpush1.msra.mxu0 %v2267
        %2804 = vmatprep.subr.mxu0 %v2260
        %2805 = vmatpush1.msra.mxu0 %v2259
        %2806 = vmatprep.subr.mxu0 %v2252
        %2807 = vmatpush1.msra.mxu0 %v2251
        %2808 = vmatprep.subr.mxu0 %v2244
        %2809 = vmatpush1.msra.mxu0 %v2243
        %2810 = vmatprep.subr.mxu0 %v2236
        %2811 = vmatpush1.msra.mxu0 %v2235
        %2812 = vmatprep.subr.mxu0 %v2484
        %2813 = vmatpush2.msra.mxu0 %v2483
        %2814 = vmatprep.subr.mxu0 %v2476
        %2815 = vmatpush2.msra.mxu0 %v2475
        %2816 = vmatprep.subr.mxu0 %v2468
        %2817 = vmatpush2.msra.mxu0 %v2467
        %2818 = vmatprep.subr.mxu0 %v2460
        %2819 = vmatpush2.msra.mxu0 %v2459
        %2820 = vmatprep.subr.mxu0 %v2452
        %2821 = vmatpush2.msra.mxu0 %v2451
        %2822 = vmatprep.subr.mxu0 %v2444
        %2823 = vmatpush2.msra.mxu0 %v2443
        %2824 = vmatprep.subr.mxu0 %v2436
        %2825 = vmatpush2.msra.mxu0 %v2435
        %2826 = vmatprep.subr.mxu0 %v2428
        %2827 = vmatpush2.msra.mxu0 %v2427
        %2828 = vmatprep.subr.mxu0 %v2420
        %2829 = vmatpush2.msra.mxu0 %v2419
        %2830 = vmatprep.subr.mxu0 %v2412
        %2831 = vmatpush2.msra.mxu0 %v2411
        %2832 = vmatprep.subr.mxu0 %v2404
        %2833 = vmatpush2.msra.mxu0 %v2403
        %2834 = vmatprep.subr.mxu0 %v2396
        %2835 = vmatpush2.msra.mxu0 %v2395
        %2836 = vmatprep.subr.mxu0 %v2388
        %2837 = vmatpush2.msra.mxu0 %v2387
        %2838 = vmatprep.subr.mxu0 %v2380
        %2839 = vmatpush2.msra.mxu0 %v2379
        %2840 = vmatprep.subr.mxu0 %v2372
        %2841 = vmatpush2.msra.mxu0 %v2371
        %2842 = vmatprep.subr.mxu0 %v2364
        %2843 = vmatpush2.msra.mxu0 %v2363
        %2844 = vmatprep.mubr.f32.mxu0 %v1334
        %2845 = vmatmul.mubr.f32.gmra.mxu0 %v1333
        %v2846 = vpop.f32.mrf.mxu0
        %v2847 = vadd.f32 %v2764, %v2846
        %v2848 = vpop.f32.mrf.mxu0
        %v2849 = vadd.f32 %v2766, %v2848
        %2850 = vmatprep.mubr.f32.mxu0 %v1338
        %2851 = vmatmul.mubr.f32.gmra.mxu0 %v1337
        %v2852 = vpop.f32.mrf.mxu0
        %v2853 = vadd.f32 %v2770, %v2852
        %v2854 = vpop.f32.mrf.mxu0
        %v2855 = vadd.f32 %v2772, %v2854
        %2856 = vmatprep.mubr.f32.mxu0 %v1342
        %2857 = vmatmul.mubr.f32.gmra.mxu0 %v1341
        %v2858 = vpop.f32.mrf.mxu0
        %v2859 = vadd.f32 %v2776, %v2858
        %v2860 = vpop.f32.mrf.mxu0
        %v2861 = vadd.f32 %v2778, %v2860
        %2862 = vdwg.mxu0
        %2863 = vmatprep.subr.mxu0 %v2102
        %2864 = vmatpush1.msra.mxu0 %v2101
        %2865 = vmatprep.subr.mxu0 %v2094
        %2866 = vmatpush1.msra.mxu0 %v2093
        %2867 = vmatprep.subr.mxu0 %v2086
        %2868 = vmatpush1.msra.mxu0 %v2085
        %2869 = vmatprep.subr.mxu0 %v2078
        %2870 = vmatpush1.msra.mxu0 %v2077
        %2871 = vmatprep.subr.mxu0 %v2070
        %2872 = vmatpush1.msra.mxu0 %v2069
        %2873 = vmatprep.subr.mxu0 %v2062
        %2874 = vmatpush1.msra.mxu0 %v2061
        %2875 = vmatprep.subr.mxu0 %v2054
        %2876 = vmatpush1.msra.mxu0 %v2053
        %2877 = vmatprep.subr.mxu0 %v2046
        %2878 = vmatpush1.msra.mxu0 %v2045
        %2879 = vmatprep.subr.mxu0 %v2038
        %2880 = vmatpush1.msra.mxu0 %v2037
        %2881 = vmatprep.subr.mxu0 %v2030
        %2882 = vmatpush1.msra.mxu0 %v2029
        %2883 = vmatprep.subr.mxu0 %v2022
        %2884 = vmatpush1.msra.mxu0 %v2021
        %2885 = vmatprep.subr.mxu0 %v2014
        %2886 = vmatpush1.msra.mxu0 %v2013
        %2887 = vmatprep.subr.mxu0 %v2006
        %2888 = vmatpush1.msra.mxu0 %v2005
        %2889 = vmatprep.subr.mxu0 %v1998
        %2890 = vmatpush1.msra.mxu0 %v1997
        %2891 = vmatprep.subr.mxu0 %v1990
        %2892 = vmatpush1.msra.mxu0 %v1989
        %2893 = vmatprep.subr.mxu0 %v1982
        %2894 = vmatpush1.msra.mxu0 %v1981
        %2895 = vmatprep.subr.mxu0 %v2230
        %2896 = vmatpush2.msra.mxu0 %v2229
        %2897 = vmatprep.subr.mxu0 %v2222
        %2898 = vmatpush2.msra.mxu0 %v2221
        %2899 = vmatprep.subr.mxu0 %v2214
        %2900 = vmatpush2.msra.mxu0 %v2213
        %2901 = vmatprep.subr.mxu0 %v2206
        %2902 = vmatpush2.msra.mxu0 %v2205
        %2903 = vmatprep.subr.mxu0 %v2198
        %2904 = vmatpush2.msra.mxu0 %v2197
        %2905 = vmatprep.subr.mxu0 %v2190
        %2906 = vmatpush2.msra.mxu0 %v2189
        %2907 = vmatprep.subr.mxu0 %v2182
        %2908 = vmatpush2.msra.mxu0 %v2181
        %2909 = vmatprep.subr.mxu0 %v2174
        %2910 = vmatpush2.msra.mxu0 %v2173
        %2911 = vmatprep.subr.mxu0 %v2166
        %2912 = vmatpush2.msra.mxu0 %v2165
        %2913 = vmatprep.subr.mxu0 %v2158
        %2914 = vmatpush2.msra.mxu0 %v2157
        %2915 = vmatprep.subr.mxu0 %v2150
        %2916 = vmatpush2.msra.mxu0 %v2149
        %2917 = vmatprep.subr.mxu0 %v2142
        %2918 = vmatpush2.msra.mxu0 %v2141
        %2919 = vmatprep.subr.mxu0 %v2134
        %2920 = vmatpush2.msra.mxu0 %v2133
        %2921 = vmatprep.subr.mxu0 %v2126
        %2922 = vmatpush2.msra.mxu0 %v2125
        %2923 = vmatprep.subr.mxu0 %v2118
        %2924 = vmatpush2.msra.mxu0 %v2117
        %2925 = vmatprep.subr.mxu0 %v2110
        %2926 = vmatpush2.msra.mxu0 %v2109
        %2927 = vmatprep.mubr.f32.mxu0 %v1332
        %2928 = vmatmul.mubr.f32.gmra.mxu0 %v1331
        %v2929 = vpop.f32.mrf.mxu0
        %v2930 = vadd.f32 %v2510, %v2929
        %v2931 = vpop.f32.mrf.mxu0
        %v2932 = vadd.f32 %v2514, %v2931
        %2933 = vmatprep.mubr.f32.mxu0 %v1336
        %2934 = vmatmul.mubr.f32.gmra.mxu0 %v1335
        %v2935 = vpop.f32.mrf.mxu0
        %v2936 = vadd.f32 %v2510, %v2935
        %v2937 = vpop.f32.mrf.mxu0
        %v2938 = vadd.f32 %v2514, %v2937
        %2939 = vmatprep.mubr.f32.mxu0 %v1340
        %2940 = vmatmul.mubr.f32.gmra.mxu0 %v1339
        %v2941 = vpop.f32.mrf.mxu0
        %v2942 = vadd.f32 %v2510, %v2941
        %v2943 = vpop.f32.mrf.mxu0
        %v2944 = vadd.f32 %v2514, %v2943
        %2945 = vdwg.mxu0
        %2946 = vmatprep.subr.mxu0 %v2358
        %2947 = vmatpush1.msra.mxu0 %v2357
        %2948 = vmatprep.subr.mxu0 %v2350
        %2949 = vmatpush1.msra.mxu0 %v2349
        %2950 = vmatprep.subr.mxu0 %v2342
        %2951 = vmatpush1.msra.mxu0 %v2341
        %2952 = vmatprep.subr.mxu0 %v2334
        %2953 = vmatpush1.msra.mxu0 %v2333
        %2954 = vmatprep.subr.mxu0 %v2326
        %2955 = vmatpush1.msra.mxu0 %v2325
        %2956 = vmatprep.subr.mxu0 %v2318
        %2957 = vmatpush1.msra.mxu0 %v2317
        %2958 = vmatprep.subr.mxu0 %v2310
        %2959 = vmatpush1.msra.mxu0 %v2309
        %2960 = vmatprep.subr.mxu0 %v2302
        %2961 = vmatpush1.msra.mxu0 %v2301
        %2962 = vmatprep.subr.mxu0 %v2294
        %2963 = vmatpush1.msra.mxu0 %v2293
        %2964 = vmatprep.subr.mxu0 %v2286
        %2965 = vmatpush1.msra.mxu0 %v2285
        %2966 = vmatprep.subr.mxu0 %v2278
        %2967 = vmatpush1.msra.mxu0 %v2277
        %2968 = vmatprep.subr.mxu0 %v2270
        %2969 = vmatpush1.msra.mxu0 %v2269
        %2970 = vmatprep.subr.mxu0 %v2262
        %2971 = vmatpush1.msra.mxu0 %v2261
        %2972 = vmatprep.subr.mxu0 %v2254
        %2973 = vmatpush1.msra.mxu0 %v2253
        %2974 = vmatprep.subr.mxu0 %v2246
        %2975 = vmatpush1.msra.mxu0 %v2245
        %2976 = vmatprep.subr.mxu0 %v2238
        %2977 = vmatpush1.msra.mxu0 %v2237
        %2978 = vmatprep.subr.mxu0 %v2486
        %2979 = vmatpush2.msra.mxu0 %v2485
        %2980 = vmatprep.subr.mxu0 %v2478
        %2981 = vmatpush2.msra.mxu0 %v2477
        %2982 = vmatprep.subr.mxu0 %v2470
        %2983 = vmatpush2.msra.mxu0 %v2469
        %2984 = vmatprep.subr.mxu0 %v2462
        %2985 = vmatpush2.msra.mxu0 %v2461
        %2986 = vmatprep.subr.mxu0 %v2454
        %2987 = vmatpush2.msra.mxu0 %v2453
        %2988 = vmatprep.subr.mxu0 %v2446
        %2989 = vmatpush2.msra.mxu0 %v2445
        %2990 = vmatprep.subr.mxu0 %v2438
        %2991 = vmatpush2.msra.mxu0 %v2437
        %2992 = vmatprep.subr.mxu0 %v2430
        %2993 = vmatpush2.msra.mxu0 %v2429
        %2994 = vmatprep.subr.mxu0 %v2422
        %2995 = vmatpush2.msra.mxu0 %v2421
        %2996 = vmatprep.subr.mxu0 %v2414
        %2997 = vmatpush2.msra.mxu0 %v2413
        %2998 = vmatprep.subr.mxu0 %v2406
        %2999 = vmatpush2.msra.mxu0 %v2405
        %3000 = vmatprep.subr.mxu0 %v2398
        %3001 = vmatpush2.msra.mxu0 %v2397
        %3002 = vmatprep.subr.mxu0 %v2390
        %3003 = vmatpush2.msra.mxu0 %v2389
        %3004 = vmatprep.subr.mxu0 %v2382
        %3005 = vmatpush2.msra.mxu0 %v2381
        %3006 = vmatprep.subr.mxu0 %v2374
        %3007 = vmatpush2.msra.mxu0 %v2373
        %3008 = vmatprep.subr.mxu0 %v2366
        %3009 = vmatpush2.msra.mxu0 %v2365
        %3010 = vmatprep.mubr.f32.mxu0 %v1334
        %3011 = vmatmul.mubr.f32.gmra.mxu0 %v1333
        %v3012 = vpop.f32.mrf.mxu0
        %v3013 = vadd.f32 %v2930, %v3012
        %v3014 = vpop.f32.mrf.mxu0
        %v3015 = vadd.f32 %v2932, %v3014
        %3016 = vmatprep.mubr.f32.mxu0 %v1338
        %3017 = vmatmul.mubr.f32.gmra.mxu0 %v1337
        %v3018 = vpop.f32.mrf.mxu0
        %v3019 = vadd.f32 %v2936, %v3018
        %v3020 = vpop.f32.mrf.mxu0
        %v3021 = vadd.f32 %v2938, %v3020
        %3022 = vmatprep.mubr.f32.mxu0 %v1342
        %3023 = vmatmul.mubr.f32.gmra.mxu0 %v1341
        %v3024 = vpop.f32.mrf.mxu0
        %v3025 = vadd.f32 %v2942, %v3024
        %v3026 = vpop.f32.mrf.mxu0
        %v3027 = vadd.f32 %v2944, %v3026
        %3028 = vdwg.mxu0
        %3029 = vmatprep.subr.mxu0 %v2104
        %3030 = vmatpush1.msra.mxu0 %v2103
        %3031 = vmatprep.subr.mxu0 %v2096
        %3032 = vmatpush1.msra.mxu0 %v2095
        %3033 = vmatprep.subr.mxu0 %v2088
        %3034 = vmatpush1.msra.mxu0 %v2087
        %3035 = vmatprep.subr.mxu0 %v2080
        %3036 = vmatpush1.msra.mxu0 %v2079
        %3037 = vmatprep.subr.mxu0 %v2072
        %3038 = vmatpush1.msra.mxu0 %v2071
        %3039 = vmatprep.subr.mxu0 %v2064
        %3040 = vmatpush1.msra.mxu0 %v2063
        %3041 = vmatprep.subr.mxu0 %v2056
        %3042 = vmatpush1.msra.mxu0 %v2055
        %3043 = vmatprep.subr.mxu0 %v2048
        %3044 = vmatpush1.msra.mxu0 %v2047
        %3045 = vmatprep.subr.mxu0 %v2040
        %3046 = vmatpush1.msra.mxu0 %v2039
        %3047 = vmatprep.subr.mxu0 %v2032
        %3048 = vmatpush1.msra.mxu0 %v2031
        %3049 = vmatprep.subr.mxu0 %v2024
        %3050 = vmatpush1.msra.mxu0 %v2023
        %3051 = vmatprep.subr.mxu0 %v2016
        %3052 = vmatpush1.msra.mxu0 %v2015
        %3053 = vmatprep.subr.mxu0 %v2008
        %3054 = vmatpush1.msra.mxu0 %v2007
        %3055 = vmatprep.subr.mxu0 %v2000
        %3056 = vmatpush1.msra.mxu0 %v1999
        %3057 = vmatprep.subr.mxu0 %v1992
        %3058 = vmatpush1.msra.mxu0 %v1991
        %3059 = vmatprep.subr.mxu0 %v1984
        %3060 = vmatpush1.msra.mxu0 %v1983
        %3061 = vmatprep.subr.mxu0 %v2232
        %3062 = vmatpush2.msra.mxu0 %v2231
        %3063 = vmatprep.subr.mxu0 %v2224
        %3064 = vmatpush2.msra.mxu0 %v2223
        %3065 = vmatprep.subr.mxu0 %v2216
        %3066 = vmatpush2.msra.mxu0 %v2215
        %3067 = vmatprep.subr.mxu0 %v2208
        %3068 = vmatpush2.msra.mxu0 %v2207
        %3069 = vmatprep.subr.mxu0 %v2200
        %3070 = vmatpush2.msra.mxu0 %v2199
        %3071 = vmatprep.subr.mxu0 %v2192
        %3072 = vmatpush2.msra.mxu0 %v2191
        %3073 = vmatprep.subr.mxu0 %v2184
        %3074 = vmatpush2.msra.mxu0 %v2183
        %3075 = vmatprep.subr.mxu0 %v2176
        %3076 = vmatpush2.msra.mxu0 %v2175
        %3077 = vmatprep.subr.mxu0 %v2168
        %3078 = vmatpush2.msra.mxu0 %v2167
        %3079 = vmatprep.subr.mxu0 %v2160
        %3080 = vmatpush2.msra.mxu0 %v2159
        %3081 = vmatprep.subr.mxu0 %v2152
        %3082 = vmatpush2.msra.mxu0 %v2151
        %3083 = vmatprep.subr.mxu0 %v2144
        %3084 = vmatpush2.msra.mxu0 %v2143
        %3085 = vmatprep.subr.mxu0 %v2136
        %3086 = vmatpush2.msra.mxu0 %v2135
        %3087 = vmatprep.subr.mxu0 %v2128
        %3088 = vmatpush2.msra.mxu0 %v2127
        %3089 = vmatprep.subr.mxu0 %v2120
        %3090 = vmatpush2.msra.mxu0 %v2119
        %3091 = vmatprep.subr.mxu0 %v2112
        %3092 = vmatpush2.msra.mxu0 %v2111
        %3093 = vmatprep.mubr.f32.mxu0 %v1332
        %3094 = vmatmul.mubr.f32.gmra.mxu0 %v1331
        %v3095 = vpop.f32.mrf.mxu0
        %v3096 = vadd.f32 %v2518, %v3095
        %v3097 = vpop.f32.mrf.mxu0
        %v3098 = vadd.f32 %v2522, %v3097
        %3099 = vmatprep.mubr.f32.mxu0 %v1336
        %3100 = vmatmul.mubr.f32.gmra.mxu0 %v1335
        %v3101 = vpop.f32.mrf.mxu0
        %v3102 = vadd.f32 %v2518, %v3101
        %v3103 = vpop.f32.mrf.mxu0
        %v3104 = vadd.f32 %v2522, %v3103
        %3105 = vmatprep.mubr.f32.mxu0 %v1340
        %3106 = vmatmul.mubr.f32.gmra.mxu0 %v1339
        %v3107 = vpop.f32.mrf.mxu0
        %v3108 = vadd.f32 %v2518, %v3107
        %v3109 = vpop.f32.mrf.mxu0
        %v3110 = vadd.f32 %v2522, %v3109
        %3111 = vdwg.mxu0
        %3112 = vmatprep.subr.mxu0 %v2360
        %3113 = vmatpush1.msra.mxu0 %v2359
        %3114 = vmatprep.subr.mxu0 %v2352
        %3115 = vmatpush1.msra.mxu0 %v2351
        %3116 = vmatprep.subr.mxu0 %v2344
        %3117 = vmatpush1.msra.mxu0 %v2343
        %3118 = vmatprep.subr.mxu0 %v2336
        %3119 = vmatpush1.msra.mxu0 %v2335
        %3120 = vmatprep.subr.mxu0 %v2328
        %3121 = vmatpush1.msra.mxu0 %v2327
        %3122 = vmatprep.subr.mxu0 %v2320
        %3123 = vmatpush1.msra.mxu0 %v2319
        %3124 = vmatprep.subr.mxu0 %v2312
        %3125 = vmatpush1.msra.mxu0 %v2311
        %3126 = vmatprep.subr.mxu0 %v2304
        %3127 = vmatpush1.msra.mxu0 %v2303
        %3128 = vmatprep.subr.mxu0 %v2296
        %3129 = vmatpush1.msra.mxu0 %v2295
        %3130 = vmatprep.subr.mxu0 %v2288
        %3131 = vmatpush1.msra.mxu0 %v2287
        %3132 = vmatprep.subr.mxu0 %v2280
        %3133 = vmatpush1.msra.mxu0 %v2279
        %3134 = vmatprep.subr.mxu0 %v2272
        %3135 = vmatpush1.msra.mxu0 %v2271
        %3136 = vmatprep.subr.mxu0 %v2264
        %3137 = vmatpush1.msra.mxu0 %v2263
        %3138 = vmatprep.subr.mxu0 %v2256
        %3139 = vmatpush1.msra.mxu0 %v2255
        %3140 = vmatprep.subr.mxu0 %v2248
        %3141 = vmatpush1.msra.mxu0 %v2247
        %3142 = vmatprep.subr.mxu0 %v2240
        %3143 = vmatpush1.msra.mxu0 %v2239
        %3144 = vmatprep.subr.mxu0 %v2488
        %3145 = vmatpush2.msra.mxu0 %v2487
        %3146 = vmatprep.subr.mxu0 %v2480
        %3147 = vmatpush2.msra.mxu0 %v2479
        %3148 = vmatprep.subr.mxu0 %v2472
        %3149 = vmatpush2.msra.mxu0 %v2471
        %3150 = vmatprep.subr.mxu0 %v2464
        %3151 = vmatpush2.msra.mxu0 %v2463
        %3152 = vmatprep.subr.mxu0 %v2456
        %3153 = vmatpush2.msra.mxu0 %v2455
        %3154 = vmatprep.subr.mxu0 %v2448
        %3155 = vmatpush2.msra.mxu0 %v2447
        %3156 = vmatprep.subr.mxu0 %v2440
        %3157 = vmatpush2.msra.mxu0 %v2439
        %3158 = vmatprep.subr.mxu0 %v2432
        %3159 = vmatpush2.msra.mxu0 %v2431
        %3160 = vmatprep.subr.mxu0 %v2424
        %3161 = vmatpush2.msra.mxu0 %v2423
        %3162 = vmatprep.subr.mxu0 %v2416
        %3163 = vmatpush2.msra.mxu0 %v2415
        %3164 = vmatprep.subr.mxu0 %v2408
        %3165 = vmatpush2.msra.mxu0 %v2407
        %3166 = vmatprep.subr.mxu0 %v2400
        %3167 = vmatpush2.msra.mxu0 %v2399
        %3168 = vmatprep.subr.mxu0 %v2392
        %3169 = vmatpush2.msra.mxu0 %v2391
        %3170 = vmatprep.subr.mxu0 %v2384
        %3171 = vmatpush2.msra.mxu0 %v2383
        %3172 = vmatprep.subr.mxu0 %v2376
        %3173 = vmatpush2.msra.mxu0 %v2375
        %3174 = vmatprep.subr.mxu0 %v2368
        %3175 = vmatpush2.msra.mxu0 %v2367
        %3176 = vmatprep.mubr.f32.mxu0 %v1334
        %3177 = vmatmul.mubr.f32.gmra.mxu0 %v1333
        %v3178 = vpop.f32.mrf.mxu0
        %v3179 = vadd.f32 %v3096, %v3178
        %v3180 = vpop.f32.mrf.mxu0
        %v3181 = vadd.f32 %v3098, %v3180
        %3182 = vmatprep.mubr.f32.mxu0 %v1338
        %3183 = vmatmul.mubr.f32.gmra.mxu0 %v1337
        %v3184 = vpop.f32.mrf.mxu0
        %v3185 = vadd.f32 %v3102, %v3184
        %v3186 = vpop.f32.mrf.mxu0
        %v3187 = vadd.f32 %v3104, %v3186
        %3188 = vmatprep.mubr.f32.mxu0 %v1342
        %3189 = vmatmul.mubr.f32.gmra.mxu0 %v1341
        %v3190 = vpop.f32.mrf.mxu0
        %v3191 = vadd.f32 %v3108, %v3190
        %v3192 = vpop.f32.mrf.mxu0
        %v3193 = vadd.f32 %v3110, %v3192
        %3194 = vdwg.mxu0
        %3195 = vst [vmem:[#allocation4] sm:$0xff] %v2681
        %3196 = vst [vmem:[#allocation4 + $0x8] sm:$0xff] %v2683
        %3197 = vst [vmem:[#allocation4 + $0x10] sm:$0xff] %v2847
        %3198 = vst [vmem:[#allocation4 + $0x18] sm:$0xff] %v2849
        %3199 = vst [vmem:[#allocation4 + $0x20] sm:$0xff] %v2687
        %3200 = vst [vmem:[#allocation4 + $0x28] sm:$0xff] %v2689
        %3201 = vst [vmem:[#allocation4 + $0x30] sm:$0xff] %v2853
        %3202 = vst [vmem:[#allocation4 + $0x38] sm:$0xff] %v2855
        %3203 = vst [vmem:[#allocation4 + $0x40] sm:$0xf] %v2693
        %3204 = vst [vmem:[#allocation4 + $0x48] sm:$0xf] %v2695
        %3205 = vst [vmem:[#allocation4 + $0x50] sm:$0xf] %v2859
        %3206 = vst [vmem:[#allocation4 + $0x58] sm:$0xf] %v2861
        %3207 = vst [vmem:[#allocation5] sm:$0xff] %v3013
        %3208 = vst [vmem:[#allocation5 + $0x8] sm:$0xff] %v3015
        %3209 = vst [vmem:[#allocation5 + $0x10] sm:$0xff] %v3179
        %3210 = vst [vmem:[#allocation5 + $0x18] sm:$0xff] %v3181
        %3211 = vst [vmem:[#allocation5 + $0x20] sm:$0xff] %v3019
        %3212 = vst [vmem:[#allocation5 + $0x28] sm:$0xff] %v3021
        %3213 = vst [vmem:[#allocation5 + $0x30] sm:$0xff] %v3185
        %3214 = vst [vmem:[#allocation5 + $0x38] sm:$0xff] %v3187
        %3215 = vst [vmem:[#allocation5 + $0x40] sm:$0xf] %v3025
        %3216 = vst [vmem:[#allocation5 + $0x48] sm:$0xf] %v3027
        %3217 = vst [vmem:[#allocation5 + $0x50] sm:$0xf] %v3191
        %3218 = vst [vmem:[#allocation5 + $0x58] sm:$0xf] %v3193
        %v3219 = vld [vmem:[#allocation7] sm:$0xff]
        %v3220 = vld [vmem:[#allocation7 + $0x8] sm:$0x3]
        %v3221 = vld [vmem:[#allocation3] sm:$0xff]
        %v3222 = vld [vmem:[#allocation3 + $0x20] sm:$0x3]
        %v3223 = vld [vmem:[#allocation4] sm:$0xff]
        %v3224 = vld [vmem:[#allocation4 + $0x20] sm:$0x3]
        %v3225 = vld [vmem:[#allocation5] sm:$0xff]
        %v3226 = vld [vmem:[#allocation5 + $0x20] sm:$0x3]
        %3227 = vmatprep.subr.mxu0 0.0
        %3228 = vmatpush1.xpose.msra.mxu0 0.0
        %3229 = vmatprep.subr.mxu0 0.0
        %3230 = vmatpush1.xpose.msra.mxu0 0.0
        %3231 = vmatprep.subr.mxu0 0.0
        %3232 = vmatpush1.xpose.msra.mxu0 0.0
        %3233 = vmatprep.subr.mxu0 0.0
        %3234 = vmatpush1.xpose.msra.mxu0 0.0
        %3235 = vmatprep.subr.mxu0 0.0
        %3236 = vmatpush1.xpose.msra.mxu0 0.0
        %3237 = vmatprep.subr.mxu0 0.0
        %3238 = vmatpush1.xpose.msra.mxu0 0.0
        %3239 = vmatprep.subr.mxu0 0.0
        %3240 = vmatpush1.xpose.msra.mxu0 0.0
        %3241 = vmatprep.subr.mxu0 0.0
        %3242 = vmatpush1.xpose.msra.mxu0 0.0
        %3243 = vmatprep.subr.mxu0 0.0
        %3244 = vmatpush1.xpose.msra.mxu0 0.0
        %3245 = vmatprep.subr.mxu0 0.0
        %3246 = vmatpush1.xpose.msra.mxu0 0.0
        %3247 = vmatprep.subr.mxu0 0.0
        %3248 = vmatpush1.xpose.msra.mxu0 0.0
        %3249 = vmatprep.subr.mxu0 0.0
        %3250 = vmatpush1.xpose.msra.mxu0 0.0
        %3251 = vmatprep.subr.mxu0 0.0
        %3252 = vmatpush1.xpose.msra.mxu0 0.0
        %3253 = vmatprep.subr.mxu0 0.0
        %3254 = vmatpush1.xpose.msra.mxu0 0.0
        %3255 = vmatprep.subr.mxu0 0.0
        %3256 = vmatpush1.xpose.msra.mxu0 %v3224
        %3257 = vmatprep.subr.mxu0 0.0
        %3258 = vmatpush1.xpose.msra.mxu0 %v3223
        %3259 = vmatprep.subr.mxu0 0.0
        %3260 = vmatpush2.xpose.msra.mxu0 0.0
        %3261 = vmatprep.subr.mxu0 0.0
        %3262 = vmatpush2.xpose.msra.mxu0 0.0
        %3263 = vmatprep.subr.mxu0 0.0
        %3264 = vmatpush2.xpose.msra.mxu0 0.0
        %3265 = vmatprep.subr.mxu0 0.0
        %3266 = vmatpush2.xpose.msra.mxu0 0.0
        %3267 = vmatprep.subr.mxu0 0.0
        %3268 = vmatpush2.xpose.msra.mxu0 0.0
        %3269 = vmatprep.subr.mxu0 0.0
        %3270 = vmatpush2.xpose.msra.mxu0 0.0
        %3271 = vmatprep.subr.mxu0 0.0
        %3272 = vmatpush2.xpose.msra.mxu0 0.0
        %3273 = vmatprep.subr.mxu0 0.0
        %3274 = vmatpush2.xpose.msra.mxu0 0.0
        %3275 = vmatprep.subr.mxu0 0.0
        %3276 = vmatpush2.xpose.msra.mxu0 0.0
        %3277 = vmatprep.subr.mxu0 0.0
        %3278 = vmatpush2.xpose.msra.mxu0 0.0
        %3279 = vmatprep.subr.mxu0 0.0
        %3280 = vmatpush2.xpose.msra.mxu0 0.0
        %3281 = vmatprep.subr.mxu0 0.0
        %3282 = vmatpush2.xpose.msra.mxu0 0.0
        %3283 = vmatprep.subr.mxu0 0.0
        %3284 = vmatpush2.xpose.msra.mxu0 0.0
        %3285 = vmatprep.subr.mxu0 0.0
        %3286 = vmatpush2.xpose.msra.mxu0 0.0
        %3287 = vmatprep.subr.mxu0 0.0
        %3288 = vmatpush2.xpose.msra.mxu0 0.0
        %3289 = vmatprep.subr.mxu0 0.0
        %3290 = vmatpush2.xpose.msra.mxu0 0.0
        %3291 = vmatprep.mubr.f32.mxu0 0.0
        %3292 = vmatmul.mubr.f32.gmra.mxu0 %v3221
        %v3293 = vpop.f32.mrf.mxu0
        %v3294 = vadd.f32 %v3219, %v3293
        %v3295 = vpop.f32.mrf.mxu0
        %3296 = vmatprep.mubr.f32.mxu0 0.0
        %3297 = vmatmul.mubr.f32.gmra.mxu0 %v3222
        %v3298 = vpop.f32.mrf.mxu0
        %v3299 = vadd.f32 %v3220, %v3298
        %v3300 = vpop.f32.mrf.mxu0
        %3301 = vdwg.mxu0
        %vm3302 = vcmask 80896
        %v3303 = vsel %vm3302, %v3294, -inf
        %3304 = vmax.xlane.f32.xlu0 %v3303
        %v3305 = vpop.xlane.xlu0 %3304
        %vm3306 = vcmask 74752
        %v3307 = vsel %vm3306, %v3299, -inf
        %3308 = vmax.xlane.f32.xlu0 %v3307
        %v3309 = vpop.xlane.xlu0 %3308
        %v3310 = vsub.f32 %v3294, %v3305
        %v3311 = vsub.f32 %v3299, %v3309
        %v3312 = vmul.f32 %v3310, 1.442695
        %v3313 = vpow.pop %v3312
        %v3314 = vmul.f32 %v3311, 1.442695
        %v3315 = vpow.pop %v3314
        %v3316 = vsel %vm3302, %v3313, 0.0
        %3317 = vadd.xlane.f32.xlu0 %v3316
        %v3318 = vpop.xlane.xlu0 %3317
        %v3319 = vsel %vm3306, %v3315, 0.0
        %3320 = vadd.xlane.f32.xlu0 %v3319
        %v3321 = vpop.xlane.xlu0 %3320
        %v3322 = vrcp.pop %v3318
        %v3323 = vrcp.pop %v3321
        %v3324 = vmul.f32 %v3313, %v3322
        %v3325 = vmul.f32 %v3315, %v3323
        %v3327 = vsel %vm3302, %v3324, 0
        %v3330 = vsel %vm3302, %v3325, 0
        %vm3332 = vcmask 1041408
        %v3334 = vsel %vm3332, %v3226, 0
        %3336 = vmatprep.subr.mxu0 0.0
        %3337 = vmatpush1.msra.mxu0 0.0
        %3338 = vmatprep.subr.mxu0 0.0
        %3339 = vmatpush1.msra.mxu0 0.0
        %3340 = vmatprep.subr.mxu0 0.0
        %3341 = vmatpush1.msra.mxu0 0.0
        %3342 = vmatprep.subr.mxu0 0.0
        %3343 = vmatpush1.msra.mxu0 0.0
        %3344 = vmatprep.subr.mxu0 0.0
        %3345 = vmatpush1.msra.mxu0 0.0
        %3346 = vmatprep.subr.mxu0 0.0
        %3347 = vmatpush1.msra.mxu0 0.0
        %3348 = vmatprep.subr.mxu0 0.0
        %3349 = vmatpush1.msra.mxu0 0.0
        %3350 = vmatprep.subr.mxu0 0.0
        %3351 = vmatpush1.msra.mxu0 0.0
        %3352 = vmatprep.subr.mxu0 0.0
        %3353 = vmatpush1.msra.mxu0 0.0
        %3354 = vmatprep.subr.mxu0 0.0
        %3355 = vmatpush1.msra.mxu0 0.0
        %3356 = vmatprep.subr.mxu0 0.0
        %3357 = vmatpush1.msra.mxu0 0.0
        %3358 = vmatprep.subr.mxu0 0.0
        %3359 = vmatpush1.msra.mxu0 0.0
        %3360 = vmatprep.subr.mxu0 0.0
        %3361 = vmatpush1.msra.mxu0 0.0
        %3362 = vmatprep.subr.mxu0 0.0
        %3363 = vmatpush1.msra.mxu0 0.0
        %3364 = vmatprep.subr.mxu0 0.0
        %3365 = vmatpush1.msra.mxu0 %v3334
        %3366 = vmatprep.subr.mxu0 0.0
        %3367 = vmatpush1.msra.mxu0 %v3225
        %3368 = vmatprep.subr.mxu0 0.0
        %3369 = vmatpush2.msra.mxu0 0.0
        %3370 = vmatprep.subr.mxu0 0.0
        %3371 = vmatpush2.msra.mxu0 0.0
        %3372 = vmatprep.subr.mxu0 0.0
        %3373 = vmatpush2.msra.mxu0 0.0
        %3374 = vmatprep.subr.mxu0 0.0
        %3375 = vmatpush2.msra.mxu0 0.0
        %3376 = vmatprep.subr.mxu0 0.0
        %3377 = vmatpush2.msra.mxu0 0.0
        %3378 = vmatprep.subr.mxu0 0.0
        %3379 = vmatpush2.msra.mxu0 0.0
        %3380 = vmatprep.subr.mxu0 0.0
        %3381 = vmatpush2.msra.mxu0 0.0
        %3382 = vmatprep.subr.mxu0 0.0
        %3383 = vmatpush2.msra.mxu0 0.0
        %3384 = vmatprep.subr.mxu0 0.0
        %3385 = vmatpush2.msra.mxu0 0.0
        %3386 = vmatprep.subr.mxu0 0.0
        %3387 = vmatpush2.msra.mxu0 0.0
        %3388 = vmatprep.subr.mxu0 0.0
        %3389 = vmatpush2.msra.mxu0 0.0
        %3390 = vmatprep.subr.mxu0 0.0
        %3391 = vmatpush2.msra.mxu0 0.0
        %3392 = vmatprep.subr.mxu0 0.0
        %3393 = vmatpush2.msra.mxu0 0.0
        %3394 = vmatprep.subr.mxu0 0.0
        %3395 = vmatpush2.msra.mxu0 0.0
        %3396 = vmatprep.subr.mxu0 0.0
        %3397 = vmatpush2.msra.mxu0 0.0
        %3398 = vmatprep.subr.mxu0 0.0
        %3399 = vmatpush2.msra.mxu0 0.0
        %3400 = vmatprep.mubr.f32.mxu0 0.0
        %3401 = vmatmul.mubr.f32.gmra.mxu0 %v3327
        %v3402 = vpop.f32.mrf.mxu0
        %v3403 = vadd.f32 0.0, %v3402
        %v3404 = vpop.f32.mrf.mxu0
        %3405 = vmatprep.mubr.f32.mxu0 0.0
        %3406 = vmatmul.mubr.f32.gmra.mxu0 %v3330
        %v3407 = vpop.f32.mrf.mxu0
        %v3408 = vadd.f32 0.0, %v3407
        %v3409 = vpop.f32.mrf.mxu0
        %3410 = vdwg.mxu0
        %3411 = vst [vmem:[#allocation6] sm:$0xff] %v3403
        %3412 = vst [vmem:[#allocation6 + $0x20] sm:$0x3] %v3408
        %v3413 = vld [vmem:[#allocation3 + $0x8] sm:$0xff]
        %v3414 = vld [vmem:[#allocation3 + $0x28] sm:$0x3]
        %v3415 = vld [vmem:[#allocation4 + $0x8] sm:$0xff]
        %v3416 = vld [vmem:[#allocation4 + $0x28] sm:$0x3]
        %v3417 = vld [vmem:[#allocation5 + $0x8] sm:$0xff]
        %v3418 = vld [vmem:[#allocation5 + $0x28] sm:$0x3]
        %3419 = vmatprep.subr.mxu0 0.0
        %3420 = vmatpush1.xpose.msra.mxu0 0.0
        %3421 = vmatprep.subr.mxu0 0.0
        %3422 = vmatpush1.xpose.msra.mxu0 0.0
        %3423 = vmatprep.subr.mxu0 0.0
        %3424 = vmatpush1.xpose.msra.mxu0 0.0
        %3425 = vmatprep.subr.mxu0 0.0
        %3426 = vmatpush1.xpose.msra.mxu0 0.0
        %3427 = vmatprep.subr.mxu0 0.0
        %3428 = vmatpush1.xpose.msra.mxu0 0.0
        %3429 = vmatprep.subr.mxu0 0.0
        %3430 = vmatpush1.xpose.msra.mxu0 0.0
        %3431 = vmatprep.subr.mxu0 0.0
        %3432 = vmatpush1.xpose.msra.mxu0 0.0
        %3433 = vmatprep.subr.mxu0 0.0
        %3434 = vmatpush1.xpose.msra.mxu0 0.0
        %3435 = vmatprep.subr.mxu0 0.0
        %3436 = vmatpush1.xpose.msra.mxu0 0.0
        %3437 = vmatprep.subr.mxu0 0.0
        %3438 = vmatpush1.xpose.msra.mxu0 0.0
        %3439 = vmatprep.subr.mxu0 0.0
        %3440 = vmatpush1.xpose.msra.mxu0 0.0
        %3441 = vmatprep.subr.mxu0 0.0
        %3442 = vmatpush1.xpose.msra.mxu0 0.0
        %3443 = vmatprep.subr.mxu0 0.0
        %3444 = vmatpush1.xpose.msra.mxu0 0.0
        %3445 = vmatprep.subr.mxu0 0.0
        %3446 = vmatpush1.xpose.msra.mxu0 0.0
        %3447 = vmatprep.subr.mxu0 0.0
        %3448 = vmatpush1.xpose.msra.mxu0 %v3416
        %3449 = vmatprep.subr.mxu0 0.0
        %3450 = vmatpush1.xpose.msra.mxu0 %v3415
        %3451 = vmatprep.subr.mxu0 0.0
        %3452 = vmatpush2.xpose.msra.mxu0 0.0
        %3453 = vmatprep.subr.mxu0 0.0
        %3454 = vmatpush2.xpose.msra.mxu0 0.0
        %3455 = vmatprep.subr.mxu0 0.0
        %3456 = vmatpush2.xpose.msra.mxu0 0.0
        %3457 = vmatprep.subr.mxu0 0.0
        %3458 = vmatpush2.xpose.msra.mxu0 0.0
        %3459 = vmatprep.subr.mxu0 0.0
        %3460 = vmatpush2.xpose.msra.mxu0 0.0
        %3461 = vmatprep.subr.mxu0 0.0
        %3462 = vmatpush2.xpose.msra.mxu0 0.0
        %3463 = vmatprep.subr.mxu0 0.0
        %3464 = vmatpush2.xpose.msra.mxu0 0.0
        %3465 = vmatprep.subr.mxu0 0.0
        %3466 = vmatpush2.xpose.msra.mxu0 0.0
        %3467 = vmatprep.subr.mxu0 0.0
        %3468 = vmatpush2.xpose.msra.mxu0 0.0
        %3469 = vmatprep.subr.mxu0 0.0
        %3470 = vmatpush2.xpose.msra.mxu0 0.0
        %3471 = vmatprep.subr.mxu0 0.0
        %3472 = vmatpush2.xpose.msra.mxu0 0.0
        %3473 = vmatprep.subr.mxu0 0.0
        %3474 = vmatpush2.xpose.msra.mxu0 0.0
        %3475 = vmatprep.subr.mxu0 0.0
        %3476 = vmatpush2.xpose.msra.mxu0 0.0
        %3477 = vmatprep.subr.mxu0 0.0
        %3478 = vmatpush2.xpose.msra.mxu0 0.0
        %3479 = vmatprep.subr.mxu0 0.0
        %3480 = vmatpush2.xpose.msra.mxu0 0.0
        %3481 = vmatprep.subr.mxu0 0.0
        %3482 = vmatpush2.xpose.msra.mxu0 0.0
        %3483 = vmatprep.mubr.f32.mxu0 0.0
        %3484 = vmatmul.mubr.f32.gmra.mxu0 %v3413
        %v3485 = vpop.f32.mrf.mxu0
        %v3486 = vadd.f32 %v3219, %v3485
        %v3487 = vpop.f32.mrf.mxu0
        %3488 = vmatprep.mubr.f32.mxu0 0.0
        %3489 = vmatmul.mubr.f32.gmra.mxu0 %v3414
        %v3490 = vpop.f32.mrf.mxu0
        %v3491 = vadd.f32 %v3220, %v3490
        %v3492 = vpop.f32.mrf.mxu0
        %3493 = vdwg.mxu0
        %v3494 = vsel %vm3302, %v3486, -inf
        %3495 = vmax.xlane.f32.xlu0 %v3494
        %v3496 = vpop.xlane.xlu0 %3495
        %v3497 = vsel %vm3306, %v3491, -inf
        %3498 = vmax.xlane.f32.xlu0 %v3497
        %v3499 = vpop.xlane.xlu0 %3498
        %v3500 = vsub.f32 %v3486, %v3496
        %v3501 = vsub.f32 %v3491, %v3499
        %v3502 = vmul.f32 %v3500, 1.442695
        %v3503 = vpow.pop %v3502
        %v3504 = vmul.f32 %v3501, 1.442695
        %v3505 = vpow.pop %v3504
        %v3506 = vsel %vm3302, %v3503, 0.0
        %3507 = vadd.xlane.f32.xlu0 %v3506
        %v3508 = vpop.xlane.xlu0 %3507
        %v3509 = vsel %vm3306, %v3505, 0.0
        %3510 = vadd.xlane.f32.xlu0 %v3509
        %v3511 = vpop.xlane.xlu0 %3510
        %v3512 = vrcp.pop %v3508
        %v3513 = vrcp.pop %v3511
        %v3514 = vmul.f32 %v3503, %v3512
        %v3515 = vmul.f32 %v3505, %v3513
        %v3517 = vsel %vm3302, %v3514, 0
        %v3520 = vsel %vm3302, %v3515, 0
        %v3523 = vsel %vm3332, %v3418, 0
        %3525 = vmatprep.subr.mxu0 0.0
        %3526 = vmatpush1.msra.mxu0 0.0
        %3527 = vmatprep.subr.mxu0 0.0
        %3528 = vmatpush1.msra.mxu0 0.0
        %3529 = vmatprep.subr.mxu0 0.0
        %3530 = vmatpush1.msra.mxu0 0.0
        %3531 = vmatprep.subr.mxu0 0.0
        %3532 = vmatpush1.msra.mxu0 0.0
        %3533 = vmatprep.subr.mxu0 0.0
        %3534 = vmatpush1.msra.mxu0 0.0
        %3535 = vmatprep.subr.mxu0 0.0
        %3536 = vmatpush1.msra.mxu0 0.0
        %3537 = vmatprep.subr.mxu0 0.0
        %3538 = vmatpush1.msra.mxu0 0.0
        %3539 = vmatprep.subr.mxu0 0.0
        %3540 = vmatpush1.msra.mxu0 0.0
        %3541 = vmatprep.subr.mxu0 0.0
        %3542 = vmatpush1.msra.mxu0 0.0
        %3543 = vmatprep.subr.mxu0 0.0
        %3544 = vmatpush1.msra.mxu0 0.0
        %3545 = vmatprep.subr.mxu0 0.0
        %3546 = vmatpush1.msra.mxu0 0.0
        %3547 = vmatprep.subr.mxu0 0.0
        %3548 = vmatpush1.msra.mxu0 0.0
        %3549 = vmatprep.subr.mxu0 0.0
        %3550 = vmatpush1.msra.mxu0 0.0
        %3551 = vmatprep.subr.mxu0 0.0
        %3552 = vmatpush1.msra.mxu0 0.0
        %3553 = vmatprep.subr.mxu0 0.0
        %3554 = vmatpush1.msra.mxu0 %v3523
        %3555 = vmatprep.subr.mxu0 0.0
        %3556 = vmatpush1.msra.mxu0 %v3417
        %3557 = vmatprep.subr.mxu0 0.0
        %3558 = vmatpush2.msra.mxu0 0.0
        %3559 = vmatprep.subr.mxu0 0.0
        %3560 = vmatpush2.msra.mxu0 0.0
        %3561 = vmatprep.subr.mxu0 0.0
        %3562 = vmatpush2.msra.mxu0 0.0
        %3563 = vmatprep.subr.mxu0 0.0
        %3564 = vmatpush2.msra.mxu0 0.0
        %3565 = vmatprep.subr.mxu0 0.0
        %3566 = vmatpush2.msra.mxu0 0.0
        %3567 = vmatprep.subr.mxu0 0.0
        %3568 = vmatpush2.msra.mxu0 0.0
        %3569 = vmatprep.subr.mxu0 0.0
        %3570 = vmatpush2.msra.mxu0 0.0
        %3571 = vmatprep.subr.mxu0 0.0
        %3572 = vmatpush2.msra.mxu0 0.0
        %3573 = vmatprep.subr.mxu0 0.0
        %3574 = vmatpush2.msra.mxu0 0.0
        %3575 = vmatprep.subr.mxu0 0.0
        %3576 = vmatpush2.msra.mxu0 0.0
        %3577 = vmatprep.subr.mxu0 0.0
        %3578 = vmatpush2.msra.mxu0 0.0
        %3579 = vmatprep.subr.mxu0 0.0
        %3580 = vmatpush2.msra.mxu0 0.0
        %3581 = vmatprep.subr.mxu0 0.0
        %3582 = vmatpush2.msra.mxu0 0.0
        %3583 = vmatprep.subr.mxu0 0.0
        %3584 = vmatpush2.msra.mxu0 0.0
        %3585 = vmatprep.subr.mxu0 0.0
        %3586 = vmatpush2.msra.mxu0 0.0
        %3587 = vmatprep.subr.mxu0 0.0
        %3588 = vmatpush2.msra.mxu0 0.0
        %3589 = vmatprep.mubr.f32.mxu0 0.0
        %3590 = vmatmul.mubr.f32.gmra.mxu0 %v3517
        %v3591 = vpop.f32.mrf.mxu0
        %v3592 = vadd.f32 0.0, %v3591
        %v3593 = vpop.f32.mrf.mxu0
        %3594 = vmatprep.mubr.f32.mxu0 0.0
        %3595 = vmatmul.mubr.f32.gmra.mxu0 %v3520
        %v3596 = vpop.f32.mrf.mxu0
        %v3597 = vadd.f32 0.0, %v3596
        %v3598 = vpop.f32.mrf.mxu0
        %3599 = vdwg.mxu0
        %3600 = vst [vmem:[#allocation6 + $0x8] sm:$0xff] %v3592
        %3601 = vst [vmem:[#allocation6 + $0x28] sm:$0x3] %v3597
        %v3602 = vld [vmem:[#allocation3 + $0x10] sm:$0xff]
        %v3603 = vld [vmem:[#allocation3 + $0x30] sm:$0x3]
        %v3604 = vld [vmem:[#allocation4 + $0x10] sm:$0xff]
        %v3605 = vld [vmem:[#allocation4 + $0x30] sm:$0x3]
        %v3606 = vld [vmem:[#allocation5 + $0x10] sm:$0xff]
        %v3607 = vld [vmem:[#allocation5 + $0x30] sm:$0x3]
        %3608 = vmatprep.subr.mxu0 0.0
        %3609 = vmatpush1.xpose.msra.mxu0 0.0
        %3610 = vmatprep.subr.mxu0 0.0
        %3611 = vmatpush1.xpose.msra.mxu0 0.0
        %3612 = vmatprep.subr.mxu0 0.0
        %3613 = vmatpush1.xpose.msra.mxu0 0.0
        %3614 = vmatprep.subr.mxu0 0.0
        %3615 = vmatpush1.xpose.msra.mxu0 0.0
        %3616 = vmatprep.subr.mxu0 0.0
        %3617 = vmatpush1.xpose.msra.mxu0 0.0
        %3618 = vmatprep.subr.mxu0 0.0
        %3619 = vmatpush1.xpose.msra.mxu0 0.0
        %3620 = vmatprep.subr.mxu0 0.0
        %3621 = vmatpush1.xpose.msra.mxu0 0.0
        %3622 = vmatprep.subr.mxu0 0.0
        %3623 = vmatpush1.xpose.msra.mxu0 0.0
        %3624 = vmatprep.subr.mxu0 0.0
        %3625 = vmatpush1.xpose.msra.mxu0 0.0
        %3626 = vmatprep.subr.mxu0 0.0
        %3627 = vmatpush1.xpose.msra.mxu0 0.0
        %3628 = vmatprep.subr.mxu0 0.0
        %3629 = vmatpush1.xpose.msra.mxu0 0.0
        %3630 = vmatprep.subr.mxu0 0.0
        %3631 = vmatpush1.xpose.msra.mxu0 0.0
        %3632 = vmatprep.subr.mxu0 0.0
        %3633 = vmatpush1.xpose.msra.mxu0 0.0
        %3634 = vmatprep.subr.mxu0 0.0
        %3635 = vmatpush1.xpose.msra.mxu0 0.0
        %3636 = vmatprep.subr.mxu0 0.0
        %3637 = vmatpush1.xpose.msra.mxu0 %v3605
        %3638 = vmatprep.subr.mxu0 0.0
        %3639 = vmatpush1.xpose.msra.mxu0 %v3604
        %3640 = vmatprep.subr.mxu0 0.0
        %3641 = vmatpush2.xpose.msra.mxu0 0.0
        %3642 = vmatprep.subr.mxu0 0.0
        %3643 = vmatpush2.xpose.msra.mxu0 0.0
        %3644 = vmatprep.subr.mxu0 0.0
        %3645 = vmatpush2.xpose.msra.mxu0 0.0
        %3646 = vmatprep.subr.mxu0 0.0
        %3647 = vmatpush2.xpose.msra.mxu0 0.0
        %3648 = vmatprep.subr.mxu0 0.0
        %3649 = vmatpush2.xpose.msra.mxu0 0.0
        %3650 = vmatprep.subr.mxu0 0.0
        %3651 = vmatpush2.xpose.msra.mxu0 0.0
        %3652 = vmatprep.subr.mxu0 0.0
        %3653 = vmatpush2.xpose.msra.mxu0 0.0
        %3654 = vmatprep.subr.mxu0 0.0
        %3655 = vmatpush2.xpose.msra.mxu0 0.0
        %3656 = vmatprep.subr.mxu0 0.0
        %3657 = vmatpush2.xpose.msra.mxu0 0.0
        %3658 = vmatprep.subr.mxu0 0.0
        %3659 = vmatpush2.xpose.msra.mxu0 0.0
        %3660 = vmatprep.subr.mxu0 0.0
        %3661 = vmatpush2.xpose.msra.mxu0 0.0
        %3662 = vmatprep.subr.mxu0 0.0
        %3663 = vmatpush2.xpose.msra.mxu0 0.0
        %3664 = vmatprep.subr.mxu0 0.0
        %3665 = vmatpush2.xpose.msra.mxu0 0.0
        %3666 = vmatprep.subr.mxu0 0.0
        %3667 = vmatpush2.xpose.msra.mxu0 0.0
        %3668 = vmatprep.subr.mxu0 0.0
        %3669 = vmatpush2.xpose.msra.mxu0 0.0
        %3670 = vmatprep.subr.mxu0 0.0
        %3671 = vmatpush2.xpose.msra.mxu0 0.0
        %3672 = vmatprep.mubr.f32.mxu0 0.0
        %3673 = vmatmul.mubr.f32.gmra.mxu0 %v3602
        %v3674 = vpop.f32.mrf.mxu0
        %v3675 = vadd.f32 %v3219, %v3674
        %v3676 = vpop.f32.mrf.mxu0
        %3677 = vmatprep.mubr.f32.mxu0 0.0
        %3678 = vmatmul.mubr.f32.gmra.mxu0 %v3603
        %v3679 = vpop.f32.mrf.mxu0
        %v3680 = vadd.f32 %v3220, %v3679
        %v3681 = vpop.f32.mrf.mxu0
        %3682 = vdwg.mxu0
        %v3683 = vsel %vm3302, %v3675, -inf
        %3684 = vmax.xlane.f32.xlu0 %v3683
        %v3685 = vpop.xlane.xlu0 %3684
        %v3686 = vsel %vm3306, %v3680, -inf
        %3687 = vmax.xlane.f32.xlu0 %v3686
        %v3688 = vpop.xlane.xlu0 %3687
        %v3689 = vsub.f32 %v3675, %v3685
        %v3690 = vsub.f32 %v3680, %v3688
        %v3691 = vmul.f32 %v3689, 1.442695
        %v3692 = vpow.pop %v3691
        %v3693 = vmul.f32 %v3690, 1.442695
        %v3694 = vpow.pop %v3693
        %v3695 = vsel %vm3302, %v3692, 0.0
        %3696 = vadd.xlane.f32.xlu0 %v3695
        %v3697 = vpop.xlane.xlu0 %3696
        %v3698 = vsel %vm3306, %v3694, 0.0
        %3699 = vadd.xlane.f32.xlu0 %v3698
        %v3700 = vpop.xlane.xlu0 %3699
        %v3701 = vrcp.pop %v3697
        %v3702 = vrcp.pop %v3700
        %v3703 = vmul.f32 %v3692, %v3701
        %v3704 = vmul.f32 %v3694, %v3702
        %v3706 = vsel %vm3302, %v3703, 0
        %v3709 = vsel %vm3302, %v3704, 0
        %v3712 = vsel %vm3332, %v3607, 0
        %3714 = vmatprep.subr.mxu0 0.0
        %3715 = vmatpush1.msra.mxu0 0.0
        %3716 = vmatprep.subr.mxu0 0.0
        %3717 = vmatpush1.msra.mxu0 0.0
        %3718 = vmatprep.subr.mxu0 0.0
        %3719 = vmatpush1.msra.mxu0 0.0
        %3720 = vmatprep.subr.mxu0 0.0
        %3721 = vmatpush1.msra.mxu0 0.0
        %3722 = vmatprep.subr.mxu0 0.0
        %3723 = vmatpush1.msra.mxu0 0.0
        %3724 = vmatprep.subr.mxu0 0.0
        %3725 = vmatpush1.msra.mxu0 0.0
        %3726 = vmatprep.subr.mxu0 0.0
        %3727 = vmatpush1.msra.mxu0 0.0
        %3728 = vmatprep.subr.mxu0 0.0
        %3729 = vmatpush1.msra.mxu0 0.0
        %3730 = vmatprep.subr.mxu0 0.0
        %3731 = vmatpush1.msra.mxu0 0.0
        %3732 = vmatprep.subr.mxu0 0.0
        %3733 = vmatpush1.msra.mxu0 0.0
        %3734 = vmatprep.subr.mxu0 0.0
        %3735 = vmatpush1.msra.mxu0 0.0
        %3736 = vmatprep.subr.mxu0 0.0
        %3737 = vmatpush1.msra.mxu0 0.0
        %3738 = vmatprep.subr.mxu0 0.0
        %3739 = vmatpush1.msra.mxu0 0.0
        %3740 = vmatprep.subr.mxu0 0.0
        %3741 = vmatpush1.msra.mxu0 0.0
        %3742 = vmatprep.subr.mxu0 0.0
        %3743 = vmatpush1.msra.mxu0 %v3712
        %3744 = vmatprep.subr.mxu0 0.0
        %3745 = vmatpush1.msra.mxu0 %v3606
        %3746 = vmatprep.subr.mxu0 0.0
        %3747 = vmatpush2.msra.mxu0 0.0
        %3748 = vmatprep.subr.mxu0 0.0
        %3749 = vmatpush2.msra.mxu0 0.0
        %3750 = vmatprep.subr.mxu0 0.0
        %3751 = vmatpush2.msra.mxu0 0.0
        %3752 = vmatprep.subr.mxu0 0.0
        %3753 = vmatpush2.msra.mxu0 0.0
        %3754 = vmatprep.subr.mxu0 0.0
        %3755 = vmatpush2.msra.mxu0 0.0
        %3756 = vmatprep.subr.mxu0 0.0
        %3757 = vmatpush2.msra.mxu0 0.0
        %3758 = vmatprep.subr.mxu0 0.0
        %3759 = vmatpush2.msra.mxu0 0.0
        %3760 = vmatprep.subr.mxu0 0.0
        %3761 = vmatpush2.msra.mxu0 0.0
        %3762 = vmatprep.subr.mxu0 0.0
        %3763 = vmatpush2.msra.mxu0 0.0
        %3764 = vmatprep.subr.mxu0 0.0
        %3765 = vmatpush2.msra.mxu0 0.0
        %3766 = vmatprep.subr.mxu0 0.0
        %3767 = vmatpush2.msra.mxu0 0.0
        %3768 = vmatprep.subr.mxu0 0.0
        %3769 = vmatpush2.msra.mxu0 0.0
        %3770 = vmatprep.subr.mxu0 0.0
        %3771 = vmatpush2.msra.mxu0 0.0
        %3772 = vmatprep.subr.mxu0 0.0
        %3773 = vmatpush2.msra.mxu0 0.0
        %3774 = vmatprep.subr.mxu0 0.0
        %3775 = vmatpush2.msra.mxu0 0.0
        %3776 = vmatprep.subr.mxu0 0.0
        %3777 = vmatpush2.msra.mxu0 0.0
        %3778 = vmatprep.mubr.f32.mxu0 0.0
        %3779 = vmatmul.mubr.f32.gmra.mxu0 %v3706
        %v3780 = vpop.f32.mrf.mxu0
        %v3781 = vadd.f32 0.0, %v3780
        %v3782 = vpop.f32.mrf.mxu0
        %3783 = vmatprep.mubr.f32.mxu0 0.0
        %3784 = vmatmul.mubr.f32.gmra.mxu0 %v3709
        %v3785 = vpop.f32.mrf.mxu0
        %v3786 = vadd.f32 0.0, %v3785
        %v3787 = vpop.f32.mrf.mxu0
        %3788 = vdwg.mxu0
        %3789 = vst [vmem:[#allocation6 + $0x10] sm:$0xff] %v3781
        %3790 = vst [vmem:[#allocation6 + $0x30] sm:$0x3] %v3786
        %v3791 = vld [vmem:[#allocation3 + $0x18] sm:$0xff]
        %v3792 = vld [vmem:[#allocation3 + $0x38] sm:$0x3]
        %v3793 = vld [vmem:[#allocation4 + $0x18] sm:$0xff]
        %v3794 = vld [vmem:[#allocation4 + $0x38] sm:$0x3]
        %v3795 = vld [vmem:[#allocation5 + $0x18] sm:$0xff]
        %v3796 = vld [vmem:[#allocation5 + $0x38] sm:$0x3]
        %3797 = vmatprep.subr.mxu0 0.0
        %3798 = vmatpush1.xpose.msra.mxu0 0.0
        %3799 = vmatprep.subr.mxu0 0.0
        %3800 = vmatpush1.xpose.msra.mxu0 0.0
        %3801 = vmatprep.subr.mxu0 0.0
        %3802 = vmatpush1.xpose.msra.mxu0 0.0
        %3803 = vmatprep.subr.mxu0 0.0
        %3804 = vmatpush1.xpose.msra.mxu0 0.0
        %3805 = vmatprep.subr.mxu0 0.0
        %3806 = vmatpush1.xpose.msra.mxu0 0.0
        %3807 = vmatprep.subr.mxu0 0.0
        %3808 = vmatpush1.xpose.msra.mxu0 0.0
        %3809 = vmatprep.subr.mxu0 0.0
        %3810 = vmatpush1.xpose.msra.mxu0 0.0
        %3811 = vmatprep.subr.mxu0 0.0
        %3812 = vmatpush1.xpose.msra.mxu0 0.0
        %3813 = vmatprep.subr.mxu0 0.0
        %3814 = vmatpush1.xpose.msra.mxu0 0.0
        %3815 = vmatprep.subr.mxu0 0.0
        %3816 = vmatpush1.xpose.msra.mxu0 0.0
        %3817 = vmatprep.subr.mxu0 0.0
        %3818 = vmatpush1.xpose.msra.mxu0 0.0
        %3819 = vmatprep.subr.mxu0 0.0
        %3820 = vmatpush1.xpose.msra.mxu0 0.0
        %3821 = vmatprep.subr.mxu0 0.0
        %3822 = vmatpush1.xpose.msra.mxu0 0.0
        %3823 = vmatprep.subr.mxu0 0.0
        %3824 = vmatpush1.xpose.msra.mxu0 0.0
        %3825 = vmatprep.subr.mxu0 0.0
        %3826 = vmatpush1.xpose.msra.mxu0 %v3794
        %3827 = vmatprep.subr.mxu0 0.0
        %3828 = vmatpush1.xpose.msra.mxu0 %v3793
        %3829 = vmatprep.subr.mxu0 0.0
        %3830 = vmatpush2.xpose.msra.mxu0 0.0
        %3831 = vmatprep.subr.mxu0 0.0
        %3832 = vmatpush2.xpose.msra.mxu0 0.0
        %3833 = vmatprep.subr.mxu0 0.0
        %3834 = vmatpush2.xpose.msra.mxu0 0.0
        %3835 = vmatprep.subr.mxu0 0.0
        %3836 = vmatpush2.xpose.msra.mxu0 0.0
        %3837 = vmatprep.subr.mxu0 0.0
        %3838 = vmatpush2.xpose.msra.mxu0 0.0
        %3839 = vmatprep.subr.mxu0 0.0
        %3840 = vmatpush2.xpose.msra.mxu0 0.0
        %3841 = vmatprep.subr.mxu0 0.0
        %3842 = vmatpush2.xpose.msra.mxu0 0.0
        %3843 = vmatprep.subr.mxu0 0.0
        %3844 = vmatpush2.xpose.msra.mxu0 0.0
        %3845 = vmatprep.subr.mxu0 0.0
        %3846 = vmatpush2.xpose.msra.mxu0 0.0
        %3847 = vmatprep.subr.mxu0 0.0
        %3848 = vmatpush2.xpose.msra.mxu0 0.0
        %3849 = vmatprep.subr.mxu0 0.0
        %3850 = vmatpush2.xpose.msra.mxu0 0.0
        %3851 = vmatprep.subr.mxu0 0.0
        %3852 = vmatpush2.xpose.msra.mxu0 0.0
        %3853 = vmatprep.subr.mxu0 0.0
        %3854 = vmatpush2.xpose.msra.mxu0 0.0
        %3855 = vmatprep.subr.mxu0 0.0
        %3856 = vmatpush2.xpose.msra.mxu0 0.0
        %3857 = vmatprep.subr.mxu0 0.0
        %3858 = vmatpush2.xpose.msra.mxu0 0.0
        %3859 = vmatprep.subr.mxu0 0.0
        %3860 = vmatpush2.xpose.msra.mxu0 0.0
        %3861 = vmatprep.mubr.f32.mxu0 0.0
        %3862 = vmatmul.mubr.f32.gmra.mxu0 %v3791
        %v3863 = vpop.f32.mrf.mxu0
        %v3864 = vadd.f32 %v3219, %v3863
        %v3865 = vpop.f32.mrf.mxu0
        %3866 = vmatprep.mubr.f32.mxu0 0.0
        %3867 = vmatmul.mubr.f32.gmra.mxu0 %v3792
        %v3868 = vpop.f32.mrf.mxu0
        %v3869 = vadd.f32 %v3220, %v3868
        %v3870 = vpop.f32.mrf.mxu0
        %3871 = vdwg.mxu0
        %v3872 = vsel %vm3302, %v3864, -inf
        %3873 = vmax.xlane.f32.xlu0 %v3872
        %v3874 = vpop.xlane.xlu0 %3873
        %v3875 = vsel %vm3306, %v3869, -inf
        %3876 = vmax.xlane.f32.xlu0 %v3875
        %v3877 = vpop.xlane.xlu0 %3876
        %v3878 = vsub.f32 %v3864, %v3874
        %v3879 = vsub.f32 %v3869, %v3877
        %v3880 = vmul.f32 %v3878, 1.442695
        %v3881 = vpow.pop %v3880
        %v3882 = vmul.f32 %v3879, 1.442695
        %v3883 = vpow.pop %v3882
        %v3884 = vsel %vm3302, %v3881, 0.0
        %3885 = vadd.xlane.f32.xlu0 %v3884
        %v3886 = vpop.xlane.xlu0 %3885
        %v3887 = vsel %vm3306, %v3883, 0.0
        %3888 = vadd.xlane.f32.xlu0 %v3887
        %v3889 = vpop.xlane.xlu0 %3888
        %v3890 = vrcp.pop %v3886
        %v3891 = vrcp.pop %v3889
        %v3892 = vmul.f32 %v3881, %v3890
        %v3893 = vmul.f32 %v3883, %v3891
        %v3895 = vsel %vm3302, %v3892, 0
        %v3898 = vsel %vm3302, %v3893, 0
        %v3901 = vsel %vm3332, %v3796, 0
        %3903 = vmatprep.subr.mxu0 0.0
        %3904 = vmatpush1.msra.mxu0 0.0
        %3905 = vmatprep.subr.mxu0 0.0
        %3906 = vmatpush1.msra.mxu0 0.0
        %3907 = vmatprep.subr.mxu0 0.0
        %3908 = vmatpush1.msra.mxu0 0.0
        %3909 = vmatprep.subr.mxu0 0.0
        %3910 = vmatpush1.msra.mxu0 0.0
        %3911 = vmatprep.subr.mxu0 0.0
        %3912 = vmatpush1.msra.mxu0 0.0
        %3913 = vmatprep.subr.mxu0 0.0
        %3914 = vmatpush1.msra.mxu0 0.0
        %3915 = vmatprep.subr.mxu0 0.0
        %3916 = vmatpush1.msra.mxu0 0.0
        %3917 = vmatprep.subr.mxu0 0.0
        %3918 = vmatpush1.msra.mxu0 0.0
        %3919 = vmatprep.subr.mxu0 0.0
        %3920 = vmatpush1.msra.mxu0 0.0
        %3921 = vmatprep.subr.mxu0 0.0
        %3922 = vmatpush1.msra.mxu0 0.0
        %3923 = vmatprep.subr.mxu0 0.0
        %3924 = vmatpush1.msra.mxu0 0.0
        %3925 = vmatprep.subr.mxu0 0.0
        %3926 = vmatpush1.msra.mxu0 0.0
        %3927 = vmatprep.subr.mxu0 0.0
        %3928 = vmatpush1.msra.mxu0 0.0
        %3929 = vmatprep.subr.mxu0 0.0
        %3930 = vmatpush1.msra.mxu0 0.0
        %3931 = vmatprep.subr.mxu0 0.0
        %3932 = vmatpush1.msra.mxu0 %v3901
        %3933 = vmatprep.subr.mxu0 0.0
        %3934 = vmatpush1.msra.mxu0 %v3795
        %3935 = vmatprep.subr.mxu0 0.0
        %3936 = vmatpush2.msra.mxu0 0.0
        %3937 = vmatprep.subr.mxu0 0.0
        %3938 = vmatpush2.msra.mxu0 0.0
        %3939 = vmatprep.subr.mxu0 0.0
        %3940 = vmatpush2.msra.mxu0 0.0
        %3941 = vmatprep.subr.mxu0 0.0
        %3942 = vmatpush2.msra.mxu0 0.0
        %3943 = vmatprep.subr.mxu0 0.0
        %3944 = vmatpush2.msra.mxu0 0.0
        %3945 = vmatprep.subr.mxu0 0.0
        %3946 = vmatpush2.msra.mxu0 0.0
        %3947 = vmatprep.subr.mxu0 0.0
        %3948 = vmatpush2.msra.mxu0 0.0
        %3949 = vmatprep.subr.mxu0 0.0
        %3950 = vmatpush2.msra.mxu0 0.0
        %3951 = vmatprep.subr.mxu0 0.0
        %3952 = vmatpush2.msra.mxu0 0.0
        %3953 = vmatprep.subr.mxu0 0.0
        %3954 = vmatpush2.msra.mxu0 0.0
        %3955 = vmatprep.subr.mxu0 0.0
        %3956 = vmatpush2.msra.mxu0 0.0
        %3957 = vmatprep.subr.mxu0 0.0
        %3958 = vmatpush2.msra.mxu0 0.0
        %3959 = vmatprep.subr.mxu0 0.0
        %3960 = vmatpush2.msra.mxu0 0.0
        %3961 = vmatprep.subr.mxu0 0.0
        %3962 = vmatpush2.msra.mxu0 0.0
        %3963 = vmatprep.subr.mxu0 0.0
        %3964 = vmatpush2.msra.mxu0 0.0
        %3965 = vmatprep.subr.mxu0 0.0
        %3966 = vmatpush2.msra.mxu0 0.0
        %3967 = vmatprep.mubr.f32.mxu0 0.0
        %3968 = vmatmul.mubr.f32.gmra.mxu0 %v3895
        %v3969 = vpop.f32.mrf.mxu0
        %v3970 = vadd.f32 0.0, %v3969
        %v3971 = vpop.f32.mrf.mxu0
        %3972 = vmatprep.mubr.f32.mxu0 0.0
        %3973 = vmatmul.mubr.f32.gmra.mxu0 %v3898
        %v3974 = vpop.f32.mrf.mxu0
        %v3975 = vadd.f32 0.0, %v3974
        %v3976 = vpop.f32.mrf.mxu0
        %3977 = vdwg.mxu0
        %3978 = vst [vmem:[#allocation6 + $0x18] sm:$0xff] %v3970
        %3979 = vst [vmem:[#allocation6 + $0x38] sm:$0x3] %v3975
        %v3980 = vld [vmem:[#allocation3 + $0x20] sm:$0xfc]
        %v3981 = vld [vmem:[#allocation3 + $0x40] sm:$0xf]
        %v3982 = vld [vmem:[#allocation4 + $0x20] sm:$0xfc]
        %v3983 = vld [vmem:[#allocation4 + $0x40] sm:$0xf]
        %v3984 = vld [vmem:[#allocation5 + $0x20] sm:$0xfc]
        %v3985 = vld [vmem:[#allocation5 + $0x40] sm:$0xf]
        %vm3988 = vcmask 1045504
        %v3989 = vrot.slane %v3980, 2
        %v3990 = vrot.slane %v3981, 2
        %v3991 = vsel %vm3988, %v3989, %v3990
        %v3996 = vrot.slane %v3982, 2
        %v3997 = vrot.slane %v3983, 2
        %v3998 = vsel %vm3988, %v3996, %v3997
        %4001 = vmatprep.subr.mxu0 0.0
        %4002 = vmatpush1.xpose.msra.mxu0 0.0
        %4003 = vmatprep.subr.mxu0 0.0
        %4004 = vmatpush1.xpose.msra.mxu0 0.0
        %4005 = vmatprep.subr.mxu0 0.0
        %4006 = vmatpush1.xpose.msra.mxu0 0.0
        %4007 = vmatprep.subr.mxu0 0.0
        %4008 = vmatpush1.xpose.msra.mxu0 0.0
        %4009 = vmatprep.subr.mxu0 0.0
        %4010 = vmatpush1.xpose.msra.mxu0 0.0
        %4011 = vmatprep.subr.mxu0 0.0
        %4012 = vmatpush1.xpose.msra.mxu0 0.0
        %4013 = vmatprep.subr.mxu0 0.0
        %4014 = vmatpush1.xpose.msra.mxu0 0.0
        %4015 = vmatprep.subr.mxu0 0.0
        %4016 = vmatpush1.xpose.msra.mxu0 0.0
        %4017 = vmatprep.subr.mxu0 0.0
        %4018 = vmatpush1.xpose.msra.mxu0 0.0
        %4019 = vmatprep.subr.mxu0 0.0
        %4020 = vmatpush1.xpose.msra.mxu0 0.0
        %4021 = vmatprep.subr.mxu0 0.0
        %4022 = vmatpush1.xpose.msra.mxu0 0.0
        %4023 = vmatprep.subr.mxu0 0.0
        %4024 = vmatpush1.xpose.msra.mxu0 0.0
        %4025 = vmatprep.subr.mxu0 0.0
        %4026 = vmatpush1.xpose.msra.mxu0 0.0
        %4027 = vmatprep.subr.mxu0 0.0
        %4028 = vmatpush1.xpose.msra.mxu0 0.0
        %4029 = vmatprep.subr.mxu0 0.0
        %4030 = vmatpush1.xpose.msra.mxu0 %v3997
        %4031 = vmatprep.subr.mxu0 0.0
        %4032 = vmatpush1.xpose.msra.mxu0 %v3998
        %4033 = vmatprep.subr.mxu0 0.0
        %4034 = vmatpush2.xpose.msra.mxu0 0.0
        %4035 = vmatprep.subr.mxu0 0.0
        %4036 = vmatpush2.xpose.msra.mxu0 0.0
        %4037 = vmatprep.subr.mxu0 0.0
        %4038 = vmatpush2.xpose.msra.mxu0 0.0
        %4039 = vmatprep.subr.mxu0 0.0
        %4040 = vmatpush2.xpose.msra.mxu0 0.0
        %4041 = vmatprep.subr.mxu0 0.0
        %4042 = vmatpush2.xpose.msra.mxu0 0.0
        %4043 = vmatprep.subr.mxu0 0.0
        %4044 = vmatpush2.xpose.msra.mxu0 0.0
        %4045 = vmatprep.subr.mxu0 0.0
        %4046 = vmatpush2.xpose.msra.mxu0 0.0
        %4047 = vmatprep.subr.mxu0 0.0
        %4048 = vmatpush2.xpose.msra.mxu0 0.0
        %4049 = vmatprep.subr.mxu0 0.0
        %4050 = vmatpush2.xpose.msra.mxu0 0.0
        %4051 = vmatprep.subr.mxu0 0.0
        %4052 = vmatpush2.xpose.msra.mxu0 0.0
        %4053 = vmatprep.subr.mxu0 0.0
        %4054 = vmatpush2.xpose.msra.mxu0 0.0
        %4055 = vmatprep.subr.mxu0 0.0
        %4056 = vmatpush2.xpose.msra.mxu0 0.0
        %4057 = vmatprep.subr.mxu0 0.0
        %4058 = vmatpush2.xpose.msra.mxu0 0.0
        %4059 = vmatprep.subr.mxu0 0.0
        %4060 = vmatpush2.xpose.msra.mxu0 0.0
        %4061 = vmatprep.subr.mxu0 0.0
        %4062 = vmatpush2.xpose.msra.mxu0 0.0
        %4063 = vmatprep.subr.mxu0 0.0
        %4064 = vmatpush2.xpose.msra.mxu0 0.0
        %4065 = vmatprep.mubr.f32.mxu0 0.0
        %4066 = vmatmul.mubr.f32.gmra.mxu0 %v3991
        %v4067 = vpop.f32.mrf.mxu0
        %v4068 = vadd.f32 %v3219, %v4067
        %v4069 = vpop.f32.mrf.mxu0
        %4070 = vmatprep.mubr.f32.mxu0 0.0
        %4071 = vmatmul.mubr.f32.gmra.mxu0 %v3990
        %v4072 = vpop.f32.mrf.mxu0
        %v4073 = vadd.f32 %v3220, %v4072
        %v4074 = vpop.f32.mrf.mxu0
        %4075 = vdwg.mxu0
        %v4076 = vsel %vm3302, %v4068, -inf
        %4077 = vmax.xlane.f32.xlu0 %v4076
        %v4078 = vpop.xlane.xlu0 %4077
        %v4079 = vsel %vm3306, %v4073, -inf
        %4080 = vmax.xlane.f32.xlu0 %v4079
        %v4081 = vpop.xlane.xlu0 %4080
        %v4082 = vsub.f32 %v4068, %v4078
        %v4083 = vsub.f32 %v4073, %v4081
        %v4084 = vmul.f32 %v4082, 1.442695
        %v4085 = vpow.pop %v4084
        %v4086 = vmul.f32 %v4083, 1.442695
        %v4087 = vpow.pop %v4086
        %v4088 = vsel %vm3302, %v4085, 0.0
        %4089 = vadd.xlane.f32.xlu0 %v4088
        %v4090 = vpop.xlane.xlu0 %4089
        %v4091 = vsel %vm3306, %v4087, 0.0
        %4092 = vadd.xlane.f32.xlu0 %v4091
        %v4093 = vpop.xlane.xlu0 %4092
        %v4094 = vrcp.pop %v4090
        %v4095 = vrcp.pop %v4093
        %v4096 = vmul.f32 %v4085, %v4094
        %v4097 = vmul.f32 %v4087, %v4095
        %v4100 = vrot.slane %v3984, 2
        %v4101 = vrot.slane %v3985, 2
        %v4102 = vsel %vm3988, %v4100, %v4101
        %v4105 = vsel %vm3302, %v4096, 0
        %v4108 = vsel %vm3302, %v4097, 0
        %v4110 = vsel %vm3332, %v4101, 0
        %4112 = vmatprep.subr.mxu0 0.0
        %4113 = vmatpush1.msra.mxu0 0.0
        %4114 = vmatprep.subr.mxu0 0.0
        %4115 = vmatpush1.msra.mxu0 0.0
        %4116 = vmatprep.subr.mxu0 0.0
        %4117 = vmatpush1.msra.mxu0 0.0
        %4118 = vmatprep.subr.mxu0 0.0
        %4119 = vmatpush1.msra.mxu0 0.0
        %4120 = vmatprep.subr.mxu0 0.0
        %4121 = vmatpush1.msra.mxu0 0.0
        %4122 = vmatprep.subr.mxu0 0.0
        %4123 = vmatpush1.msra.mxu0 0.0
        %4124 = vmatprep.subr.mxu0 0.0
        %4125 = vmatpush1.msra.mxu0 0.0
        %4126 = vmatprep.subr.mxu0 0.0
        %4127 = vmatpush1.msra.mxu0 0.0
        %4128 = vmatprep.subr.mxu0 0.0
        %4129 = vmatpush1.msra.mxu0 0.0
        %4130 = vmatprep.subr.mxu0 0.0
        %4131 = vmatpush1.msra.mxu0 0.0
        %4132 = vmatprep.subr.mxu0 0.0
        %4133 = vmatpush1.msra.mxu0 0.0
        %4134 = vmatprep.subr.mxu0 0.0
        %4135 = vmatpush1.msra.mxu0 0.0
        %4136 = vmatprep.subr.mxu0 0.0
        %4137 = vmatpush1.msra.mxu0 0.0
        %4138 = vmatprep.subr.mxu0 0.0
        %4139 = vmatpush1.msra.mxu0 0.0
        %4140 = vmatprep.subr.mxu0 0.0
        %4141 = vmatpush1.msra.mxu0 %v4110
        %4142 = vmatprep.subr.mxu0 0.0
        %4143 = vmatpush1.msra.mxu0 %v4102
        %4144 = vmatprep.subr.mxu0 0.0
        %4145 = vmatpush2.msra.mxu0 0.0
        %4146 = vmatprep.subr.mxu0 0.0
        %4147 = vmatpush2.msra.mxu0 0.0
        %4148 = vmatprep.subr.mxu0 0.0
        %4149 = vmatpush2.msra.mxu0 0.0
        %4150 = vmatprep.subr.mxu0 0.0
        %4151 = vmatpush2.msra.mxu0 0.0
        %4152 = vmatprep.subr.mxu0 0.0
        %4153 = vmatpush2.msra.mxu0 0.0
        %4154 = vmatprep.subr.mxu0 0.0
        %4155 = vmatpush2.msra.mxu0 0.0
        %4156 = vmatprep.subr.mxu0 0.0
        %4157 = vmatpush2.msra.mxu0 0.0
        %4158 = vmatprep.subr.mxu0 0.0
        %4159 = vmatpush2.msra.mxu0 0.0
        %4160 = vmatprep.subr.mxu0 0.0
        %4161 = vmatpush2.msra.mxu0 0.0
        %4162 = vmatprep.subr.mxu0 0.0
        %4163 = vmatpush2.msra.mxu0 0.0
        %4164 = vmatprep.subr.mxu0 0.0
        %4165 = vmatpush2.msra.mxu0 0.0
        %4166 = vmatprep.subr.mxu0 0.0
        %4167 = vmatpush2.msra.mxu0 0.0
        %4168 = vmatprep.subr.mxu0 0.0
        %4169 = vmatpush2.msra.mxu0 0.0
        %4170 = vmatprep.subr.mxu0 0.0
        %4171 = vmatpush2.msra.mxu0 0.0
        %4172 = vmatprep.subr.mxu0 0.0
        %4173 = vmatpush2.msra.mxu0 0.0
        %4174 = vmatprep.subr.mxu0 0.0
        %4175 = vmatpush2.msra.mxu0 0.0
        %4176 = vmatprep.mubr.f32.mxu0 0.0
        %4177 = vmatmul.mubr.f32.gmra.mxu0 %v4105
        %v4178 = vpop.f32.mrf.mxu0
        %v4179 = vadd.f32 0.0, %v4178
        %v4180 = vpop.f32.mrf.mxu0
        %4181 = vmatprep.mubr.f32.mxu0 0.0
        %4182 = vmatmul.mubr.f32.gmra.mxu0 %v4108
        %v4183 = vpop.f32.mrf.mxu0
        %v4184 = vadd.f32 0.0, %v4183
        %v4185 = vpop.f32.mrf.mxu0
        %4186 = vdwg.mxu0
        %v4189 = vrot.slane %v4179, 6
        %v4190 = vrot.slane %v4184, 6
        %v4191 = vsel %vm3332, %v4189, %v4190
        %4194 = vst [vmem:[#allocation6 + $0x20] sm:$0xfc] %v4189
        %4195 = vst [vmem:[#allocation6 + $0x40] sm:$0xf] %v4191
        %v4196 = vld [vmem:[#allocation3 + $0x28] sm:$0xfc]
        %v4197 = vld [vmem:[#allocation3 + $0x48] sm:$0xf]
        %v4198 = vld [vmem:[#allocation4 + $0x28] sm:$0xfc]
        %v4199 = vld [vmem:[#allocation4 + $0x48] sm:$0xf]
        %v4200 = vld [vmem:[#allocation5 + $0x28] sm:$0xfc]
        %v4201 = vld [vmem:[#allocation5 + $0x48] sm:$0xf]
        %v4204 = vrot.slane %v4196, 2
        %v4205 = vrot.slane %v4197, 2
        %v4206 = vsel %vm3988, %v4204, %v4205
        %v4211 = vrot.slane %v4198, 2
        %v4212 = vrot.slane %v4199, 2
        %v4213 = vsel %vm3988, %v4211, %v4212
        %4216 = vmatprep.subr.mxu0 0.0
        %4217 = vmatpush1.xpose.msra.mxu0 0.0
        %4218 = vmatprep.subr.mxu0 0.0
        %4219 = vmatpush1.xpose.msra.mxu0 0.0
        %4220 = vmatprep.subr.mxu0 0.0
        %4221 = vmatpush1.xpose.msra.mxu0 0.0
        %4222 = vmatprep.subr.mxu0 0.0
        %4223 = vmatpush1.xpose.msra.mxu0 0.0
        %4224 = vmatprep.subr.mxu0 0.0
        %4225 = vmatpush1.xpose.msra.mxu0 0.0
        %4226 = vmatprep.subr.mxu0 0.0
        %4227 = vmatpush1.xpose.msra.mxu0 0.0
        %4228 = vmatprep.subr.mxu0 0.0
        %4229 = vmatpush1.xpose.msra.mxu0 0.0
        %4230 = vmatprep.subr.mxu0 0.0
        %4231 = vmatpush1.xpose.msra.mxu0 0.0
        %4232 = vmatprep.subr.mxu0 0.0
        %4233 = vmatpush1.xpose.msra.mxu0 0.0
        %4234 = vmatprep.subr.mxu0 0.0
        %4235 = vmatpush1.xpose.msra.mxu0 0.0
        %4236 = vmatprep.subr.mxu0 0.0
        %4237 = vmatpush1.xpose.msra.mxu0 0.0
        %4238 = vmatprep.subr.mxu0 0.0
        %4239 = vmatpush1.xpose.msra.mxu0 0.0
        %4240 = vmatprep.subr.mxu0 0.0
        %4241 = vmatpush1.xpose.msra.mxu0 0.0
        %4242 = vmatprep.subr.mxu0 0.0
        %4243 = vmatpush1.xpose.msra.mxu0 0.0
        %4244 = vmatprep.subr.mxu0 0.0
        %4245 = vmatpush1.xpose.msra.mxu0 %v4212
        %4246 = vmatprep.subr.mxu0 0.0
        %4247 = vmatpush1.xpose.msra.mxu0 %v4213
        %4248 = vmatprep.subr.mxu0 0.0
        %4249 = vmatpush2.xpose.msra.mxu0 0.0
        %4250 = vmatprep.subr.mxu0 0.0
        %4251 = vmatpush2.xpose.msra.mxu0 0.0
        %4252 = vmatprep.subr.mxu0 0.0
        %4253 = vmatpush2.xpose.msra.mxu0 0.0
        %4254 = vmatprep.subr.mxu0 0.0
        %4255 = vmatpush2.xpose.msra.mxu0 0.0
        %4256 = vmatprep.subr.mxu0 0.0
        %4257 = vmatpush2.xpose.msra.mxu0 0.0
        %4258 = vmatprep.subr.mxu0 0.0
        %4259 = vmatpush2.xpose.msra.mxu0 0.0
        %4260 = vmatprep.subr.mxu0 0.0
        %4261 = vmatpush2.xpose.msra.mxu0 0.0
        %4262 = vmatprep.subr.mxu0 0.0
        %4263 = vmatpush2.xpose.msra.mxu0 0.0
        %4264 = vmatprep.subr.mxu0 0.0
        %4265 = vmatpush2.xpose.msra.mxu0 0.0
        %4266 = vmatprep.subr.mxu0 0.0
        %4267 = vmatpush2.xpose.msra.mxu0 0.0
        %4268 = vmatprep.subr.mxu0 0.0
        %4269 = vmatpush2.xpose.msra.mxu0 0.0
        %4270 = vmatprep.subr.mxu0 0.0
        %4271 = vmatpush2.xpose.msra.mxu0 0.0
        %4272 = vmatprep.subr.mxu0 0.0
        %4273 = vmatpush2.xpose.msra.mxu0 0.0
        %4274 = vmatprep.subr.mxu0 0.0
        %4275 = vmatpush2.xpose.msra.mxu0 0.0
        %4276 = vmatprep.subr.mxu0 0.0
        %4277 = vmatpush2.xpose.msra.mxu0 0.0
        %4278 = vmatprep.subr.mxu0 0.0
        %4279 = vmatpush2.xpose.msra.mxu0 0.0
        %4280 = vmatprep.mubr.f32.mxu0 0.0
        %4281 = vmatmul.mubr.f32.gmra.mxu0 %v4206
        %v4282 = vpop.f32.mrf.mxu0
        %v4283 = vadd.f32 %v3219, %v4282
        %v4284 = vpop.f32.mrf.mxu0
        %4285 = vmatprep.mubr.f32.mxu0 0.0
        %4286 = vmatmul.mubr.f32.gmra.mxu0 %v4205
        %v4287 = vpop.f32.mrf.mxu0
        %v4288 = vadd.f32 %v3220, %v4287
        %v4289 = vpop.f32.mrf.mxu0
        %4290 = vdwg.mxu0
        %v4291 = vsel %vm3302, %v4283, -inf
        %4292 = vmax.xlane.f32.xlu0 %v4291
        %v4293 = vpop.xlane.xlu0 %4292
        %v4294 = vsel %vm3306, %v4288, -inf
        %4295 = vmax.xlane.f32.xlu0 %v4294
        %v4296 = vpop.xlane.xlu0 %4295
        %v4297 = vsub.f32 %v4283, %v4293
        %v4298 = vsub.f32 %v4288, %v4296
        %v4299 = vmul.f32 %v4297, 1.442695
        %v4300 = vpow.pop %v4299
        %v4301 = vmul.f32 %v4298, 1.442695
        %v4302 = vpow.pop %v4301
        %v4303 = vsel %vm3302, %v4300, 0.0
        %4304 = vadd.xlane.f32.xlu0 %v4303
        %v4305 = vpop.xlane.xlu0 %4304
        %v4306 = vsel %vm3306, %v4302, 0.0
        %4307 = vadd.xlane.f32.xlu0 %v4306
        %v4308 = vpop.xlane.xlu0 %4307
        %v4309 = vrcp.pop %v4305
        %v4310 = vrcp.pop %v4308
        %v4311 = vmul.f32 %v4300, %v4309
        %v4312 = vmul.f32 %v4302, %v4310
        %v4315 = vrot.slane %v4200, 2
        %v4316 = vrot.slane %v4201, 2
        %v4317 = vsel %vm3988, %v4315, %v4316
        %v4320 = vsel %vm3302, %v4311, 0
        %v4323 = vsel %vm3302, %v4312, 0
        %v4325 = vsel %vm3332, %v4316, 0
        %4327 = vmatprep.subr.mxu0 0.0
        %4328 = vmatpush1.msra.mxu0 0.0
        %4329 = vmatprep.subr.mxu0 0.0
        %4330 = vmatpush1.msra.mxu0 0.0
        %4331 = vmatprep.subr.mxu0 0.0
        %4332 = vmatpush1.msra.mxu0 0.0
        %4333 = vmatprep.subr.mxu0 0.0
        %4334 = vmatpush1.msra.mxu0 0.0
        %4335 = vmatprep.subr.mxu0 0.0
        %4336 = vmatpush1.msra.mxu0 0.0
        %4337 = vmatprep.subr.mxu0 0.0
        %4338 = vmatpush1.msra.mxu0 0.0
        %4339 = vmatprep.subr.mxu0 0.0
        %4340 = vmatpush1.msra.mxu0 0.0
        %4341 = vmatprep.subr.mxu0 0.0
        %4342 = vmatpush1.msra.mxu0 0.0
        %4343 = vmatprep.subr.mxu0 0.0
        %4344 = vmatpush1.msra.mxu0 0.0
        %4345 = vmatprep.subr.mxu0 0.0
        %4346 = vmatpush1.msra.mxu0 0.0
        %4347 = vmatprep.subr.mxu0 0.0
        %4348 = vmatpush1.msra.mxu0 0.0
        %4349 = vmatprep.subr.mxu0 0.0
        %4350 = vmatpush1.msra.mxu0 0.0
        %4351 = vmatprep.subr.mxu0 0.0
        %4352 = vmatpush1.msra.mxu0 0.0
        %4353 = vmatprep.subr.mxu0 0.0
        %4354 = vmatpush1.msra.mxu0 0.0
        %4355 = vmatprep.subr.mxu0 0.0
        %4356 = vmatpush1.msra.mxu0 %v4325
        %4357 = vmatprep.subr.mxu0 0.0
        %4358 = vmatpush1.msra.mxu0 %v4317
        %4359 = vmatprep.subr.mxu0 0.0
        %4360 = vmatpush2.msra.mxu0 0.0
        %4361 = vmatprep.subr.mxu0 0.0
        %4362 = vmatpush2.msra.mxu0 0.0
        %4363 = vmatprep.subr.mxu0 0.0
        %4364 = vmatpush2.msra.mxu0 0.0
        %4365 = vmatprep.subr.mxu0 0.0
        %4366 = vmatpush2.msra.mxu0 0.0
        %4367 = vmatprep.subr.mxu0 0.0
        %4368 = vmatpush2.msra.mxu0 0.0
        %4369 = vmatprep.subr.mxu0 0.0
        %4370 = vmatpush2.msra.mxu0 0.0
        %4371 = vmatprep.subr.mxu0 0.0
        %4372 = vmatpush2.msra.mxu0 0.0
        %4373 = vmatprep.subr.mxu0 0.0
        %4374 = vmatpush2.msra.mxu0 0.0
        %4375 = vmatprep.subr.mxu0 0.0
        %4376 = vmatpush2.msra.mxu0 0.0
        %4377 = vmatprep.subr.mxu0 0.0
        %4378 = vmatpush2.msra.mxu0 0.0
        %4379 = vmatprep.subr.mxu0 0.0
        %4380 = vmatpush2.msra.mxu0 0.0
        %4381 = vmatprep.subr.mxu0 0.0
        %4382 = vmatpush2.msra.mxu0 0.0
        %4383 = vmatprep.subr.mxu0 0.0
        %4384 = vmatpush2.msra.mxu0 0.0
        %4385 = vmatprep.subr.mxu0 0.0
        %4386 = vmatpush2.msra.mxu0 0.0
        %4387 = vmatprep.subr.mxu0 0.0
        %4388 = vmatpush2.msra.mxu0 0.0
        %4389 = vmatprep.subr.mxu0 0.0
        %4390 = vmatpush2.msra.mxu0 0.0
        %4391 = vmatprep.mubr.f32.mxu0 0.0
        %4392 = vmatmul.mubr.f32.gmra.mxu0 %v4320
        %v4393 = vpop.f32.mrf.mxu0
        %v4394 = vadd.f32 0.0, %v4393
        %v4395 = vpop.f32.mrf.mxu0
        %4396 = vmatprep.mubr.f32.mxu0 0.0
        %4397 = vmatmul.mubr.f32.gmra.mxu0 %v4323
        %v4398 = vpop.f32.mrf.mxu0
        %v4399 = vadd.f32 0.0, %v4398
        %v4400 = vpop.f32.mrf.mxu0
        %4401 = vdwg.mxu0
        %v4404 = vrot.slane %v4394, 6
        %v4405 = vrot.slane %v4399, 6
        %v4406 = vsel %vm3332, %v4404, %v4405
        %4409 = vst [vmem:[#allocation6 + $0x28] sm:$0xfc] %v4404
        %4410 = vst [vmem:[#allocation6 + $0x48] sm:$0xf] %v4406
        %v4411 = vld [vmem:[#allocation3 + $0x30] sm:$0xfc]
        %v4412 = vld [vmem:[#allocation3 + $0x50] sm:$0xf]
        %v4413 = vld [vmem:[#allocation4 + $0x30] sm:$0xfc]
        %v4414 = vld [vmem:[#allocation4 + $0x50] sm:$0xf]
        %v4415 = vld [vmem:[#allocation5 + $0x30] sm:$0xfc]
        %v4416 = vld [vmem:[#allocation5 + $0x50] sm:$0xf]
        %v4419 = vrot.slane %v4411, 2
        %v4420 = vrot.slane %v4412, 2
        %v4421 = vsel %vm3988, %v4419, %v4420
        %v4426 = vrot.slane %v4413, 2
        %v4427 = vrot.slane %v4414, 2
        %v4428 = vsel %vm3988, %v4426, %v4427
        %4431 = vmatprep.subr.mxu0 0.0
        %4432 = vmatpush1.xpose.msra.mxu0 0.0
        %4433 = vmatprep.subr.mxu0 0.0
        %4434 = vmatpush1.xpose.msra.mxu0 0.0
        %4435 = vmatprep.subr.mxu0 0.0
        %4436 = vmatpush1.xpose.msra.mxu0 0.0
        %4437 = vmatprep.subr.mxu0 0.0
        %4438 = vmatpush1.xpose.msra.mxu0 0.0
        %4439 = vmatprep.subr.mxu0 0.0
        %4440 = vmatpush1.xpose.msra.mxu0 0.0
        %4441 = vmatprep.subr.mxu0 0.0
        %4442 = vmatpush1.xpose.msra.mxu0 0.0
        %4443 = vmatprep.subr.mxu0 0.0
        %4444 = vmatpush1.xpose.msra.mxu0 0.0
        %4445 = vmatprep.subr.mxu0 0.0
        %4446 = vmatpush1.xpose.msra.mxu0 0.0
        %4447 = vmatprep.subr.mxu0 0.0
        %4448 = vmatpush1.xpose.msra.mxu0 0.0
        %4449 = vmatprep.subr.mxu0 0.0
        %4450 = vmatpush1.xpose.msra.mxu0 0.0
        %4451 = vmatprep.subr.mxu0 0.0
        %4452 = vmatpush1.xpose.msra.mxu0 0.0
        %4453 = vmatprep.subr.mxu0 0.0
        %4454 = vmatpush1.xpose.msra.mxu0 0.0
        %4455 = vmatprep.subr.mxu0 0.0
        %4456 = vmatpush1.xpose.msra.mxu0 0.0
        %4457 = vmatprep.subr.mxu0 0.0
        %4458 = vmatpush1.xpose.msra.mxu0 0.0
        %4459 = vmatprep.subr.mxu0 0.0
        %4460 = vmatpush1.xpose.msra.mxu0 %v4427
        %4461 = vmatprep.subr.mxu0 0.0
        %4462 = vmatpush1.xpose.msra.mxu0 %v4428
        %4463 = vmatprep.subr.mxu0 0.0
        %4464 = vmatpush2.xpose.msra.mxu0 0.0
        %4465 = vmatprep.subr.mxu0 0.0
        %4466 = vmatpush2.xpose.msra.mxu0 0.0
        %4467 = vmatprep.subr.mxu0 0.0
        %4468 = vmatpush2.xpose.msra.mxu0 0.0
        %4469 = vmatprep.subr.mxu0 0.0
        %4470 = vmatpush2.xpose.msra.mxu0 0.0
        %4471 = vmatprep.subr.mxu0 0.0
        %4472 = vmatpush2.xpose.msra.mxu0 0.0
        %4473 = vmatprep.subr.mxu0 0.0
        %4474 = vmatpush2.xpose.msra.mxu0 0.0
        %4475 = vmatprep.subr.mxu0 0.0
        %4476 = vmatpush2.xpose.msra.mxu0 0.0
        %4477 = vmatprep.subr.mxu0 0.0
        %4478 = vmatpush2.xpose.msra.mxu0 0.0
        %4479 = vmatprep.subr.mxu0 0.0
        %4480 = vmatpush2.xpose.msra.mxu0 0.0
        %4481 = vmatprep.subr.mxu0 0.0
        %4482 = vmatpush2.xpose.msra.mxu0 0.0
        %4483 = vmatprep.subr.mxu0 0.0
        %4484 = vmatpush2.xpose.msra.mxu0 0.0
        %4485 = vmatprep.subr.mxu0 0.0
        %4486 = vmatpush2.xpose.msra.mxu0 0.0
        %4487 = vmatprep.subr.mxu0 0.0
        %4488 = vmatpush2.xpose.msra.mxu0 0.0
        %4489 = vmatprep.subr.mxu0 0.0
        %4490 = vmatpush2.xpose.msra.mxu0 0.0
        %4491 = vmatprep.subr.mxu0 0.0
        %4492 = vmatpush2.xpose.msra.mxu0 0.0
        %4493 = vmatprep.subr.mxu0 0.0
        %4494 = vmatpush2.xpose.msra.mxu0 0.0
        %4495 = vmatprep.mubr.f32.mxu0 0.0
        %4496 = vmatmul.mubr.f32.gmra.mxu0 %v4421
        %v4497 = vpop.f32.mrf.mxu0
        %v4498 = vadd.f32 %v3219, %v4497
        %v4499 = vpop.f32.mrf.mxu0
        %4500 = vmatprep.mubr.f32.mxu0 0.0
        %4501 = vmatmul.mubr.f32.gmra.mxu0 %v4420
        %v4502 = vpop.f32.mrf.mxu0
        %v4503 = vadd.f32 %v3220, %v4502
        %v4504 = vpop.f32.mrf.mxu0
        %4505 = vdwg.mxu0
        %v4506 = vsel %vm3302, %v4498, -inf
        %4507 = vmax.xlane.f32.xlu0 %v4506
        %v4508 = vpop.xlane.xlu0 %4507
        %v4509 = vsel %vm3306, %v4503, -inf
        %4510 = vmax.xlane.f32.xlu0 %v4509
        %v4511 = vpop.xlane.xlu0 %4510
        %v4512 = vsub.f32 %v4498, %v4508
        %v4513 = vsub.f32 %v4503, %v4511
        %v4514 = vmul.f32 %v4512, 1.442695
        %v4515 = vpow.pop %v4514
        %v4516 = vmul.f32 %v4513, 1.442695
        %v4517 = vpow.pop %v4516
        %v4518 = vsel %vm3302, %v4515, 0.0
        %4519 = vadd.xlane.f32.xlu0 %v4518
        %v4520 = vpop.xlane.xlu0 %4519
        %v4521 = vsel %vm3306, %v4517, 0.0
        %4522 = vadd.xlane.f32.xlu0 %v4521
        %v4523 = vpop.xlane.xlu0 %4522
        %v4524 = vrcp.pop %v4520
        %v4525 = vrcp.pop %v4523
        %v4526 = vmul.f32 %v4515, %v4524
        %v4527 = vmul.f32 %v4517, %v4525
        %v4530 = vrot.slane %v4415, 2
        %v4531 = vrot.slane %v4416, 2
        %v4532 = vsel %vm3988, %v4530, %v4531
        %v4535 = vsel %vm3302, %v4526, 0
        %v4538 = vsel %vm3302, %v4527, 0
        %v4540 = vsel %vm3332, %v4531, 0
        %4542 = vmatprep.subr.mxu0 0.0
        %4543 = vmatpush1.msra.mxu0 0.0
        %4544 = vmatprep.subr.mxu0 0.0
        %4545 = vmatpush1.msra.mxu0 0.0
        %4546 = vmatprep.subr.mxu0 0.0
        %4547 = vmatpush1.msra.mxu0 0.0
        %4548 = vmatprep.subr.mxu0 0.0
        %4549 = vmatpush1.msra.mxu0 0.0
        %4550 = vmatprep.subr.mxu0 0.0
        %4551 = vmatpush1.msra.mxu0 0.0
        %4552 = vmatprep.subr.mxu0 0.0
        %4553 = vmatpush1.msra.mxu0 0.0
        %4554 = vmatprep.subr.mxu0 0.0
        %4555 = vmatpush1.msra.mxu0 0.0
        %4556 = vmatprep.subr.mxu0 0.0
        %4557 = vmatpush1.msra.mxu0 0.0
        %4558 = vmatprep.subr.mxu0 0.0
        %4559 = vmatpush1.msra.mxu0 0.0
        %4560 = vmatprep.subr.mxu0 0.0
        %4561 = vmatpush1.msra.mxu0 0.0
        %4562 = vmatprep.subr.mxu0 0.0
        %4563 = vmatpush1.msra.mxu0 0.0
        %4564 = vmatprep.subr.mxu0 0.0
        %4565 = vmatpush1.msra.mxu0 0.0
        %4566 = vmatprep.subr.mxu0 0.0
        %4567 = vmatpush1.msra.mxu0 0.0
        %4568 = vmatprep.subr.mxu0 0.0
        %4569 = vmatpush1.msra.mxu0 0.0
        %4570 = vmatprep.subr.mxu0 0.0
        %4571 = vmatpush1.msra.mxu0 %v4540
        %4572 = vmatprep.subr.mxu0 0.0
        %4573 = vmatpush1.msra.mxu0 %v4532
        %4574 = vmatprep.subr.mxu0 0.0
        %4575 = vmatpush2.msra.mxu0 0.0
        %4576 = vmatprep.subr.mxu0 0.0
        %4577 = vmatpush2.msra.mxu0 0.0
        %4578 = vmatprep.subr.mxu0 0.0
        %4579 = vmatpush2.msra.mxu0 0.0
        %4580 = vmatprep.subr.mxu0 0.0
        %4581 = vmatpush2.msra.mxu0 0.0
        %4582 = vmatprep.subr.mxu0 0.0
        %4583 = vmatpush2.msra.mxu0 0.0
        %4584 = vmatprep.subr.mxu0 0.0
        %4585 = vmatpush2.msra.mxu0 0.0
        %4586 = vmatprep.subr.mxu0 0.0
        %4587 = vmatpush2.msra.mxu0 0.0
        %4588 = vmatprep.subr.mxu0 0.0
        %4589 = vmatpush2.msra.mxu0 0.0
        %4590 = vmatprep.subr.mxu0 0.0
        %4591 = vmatpush2.msra.mxu0 0.0
        %4592 = vmatprep.subr.mxu0 0.0
        %4593 = vmatpush2.msra.mxu0 0.0
        %4594 = vmatprep.subr.mxu0 0.0
        %4595 = vmatpush2.msra.mxu0 0.0
        %4596 = vmatprep.subr.mxu0 0.0
        %4597 = vmatpush2.msra.mxu0 0.0
        %4598 = vmatprep.subr.mxu0 0.0
        %4599 = vmatpush2.msra.mxu0 0.0
        %4600 = vmatprep.subr.mxu0 0.0
        %4601 = vmatpush2.msra.mxu0 0.0
        %4602 = vmatprep.subr.mxu0 0.0
        %4603 = vmatpush2.msra.mxu0 0.0
        %4604 = vmatprep.subr.mxu0 0.0
        %4605 = vmatpush2.msra.mxu0 0.0
        %4606 = vmatprep.mubr.f32.mxu0 0.0
        %4607 = vmatmul.mubr.f32.gmra.mxu0 %v4535
        %v4608 = vpop.f32.mrf.mxu0
        %v4609 = vadd.f32 0.0, %v4608
        %v4610 = vpop.f32.mrf.mxu0
        %4611 = vmatprep.mubr.f32.mxu0 0.0
        %4612 = vmatmul.mubr.f32.gmra.mxu0 %v4538
        %v4613 = vpop.f32.mrf.mxu0
        %v4614 = vadd.f32 0.0, %v4613
        %v4615 = vpop.f32.mrf.mxu0
        %4616 = vdwg.mxu0
        %v4619 = vrot.slane %v4609, 6
        %v4620 = vrot.slane %v4614, 6
        %v4621 = vsel %vm3332, %v4619, %v4620
        %4624 = vst [vmem:[#allocation6 + $0x30] sm:$0xfc] %v4619
        %4625 = vst [vmem:[#allocation6 + $0x50] sm:$0xf] %v4621
        %v4626 = vld [vmem:[#allocation3 + $0x38] sm:$0xfc]
        %v4627 = vld [vmem:[#allocation3 + $0x58] sm:$0xf]
        %v4628 = vld [vmem:[#allocation4 + $0x38] sm:$0xfc]
        %v4629 = vld [vmem:[#allocation4 + $0x58] sm:$0xf]
        %v4630 = vld [vmem:[#allocation5 + $0x38] sm:$0xfc]
        %v4631 = vld [vmem:[#allocation5 + $0x58] sm:$0xf]
        %v4634 = vrot.slane %v4626, 2
        %v4635 = vrot.slane %v4627, 2
        %v4636 = vsel %vm3988, %v4634, %v4635
        %v4641 = vrot.slane %v4628, 2
        %v4642 = vrot.slane %v4629, 2
        %v4643 = vsel %vm3988, %v4641, %v4642
        %4646 = vmatprep.subr.mxu0 0.0
        %4647 = vmatpush1.xpose.msra.mxu0 0.0
        %4648 = vmatprep.subr.mxu0 0.0
        %4649 = vmatpush1.xpose.msra.mxu0 0.0
        %4650 = vmatprep.subr.mxu0 0.0
        %4651 = vmatpush1.xpose.msra.mxu0 0.0
        %4652 = vmatprep.subr.mxu0 0.0
        %4653 = vmatpush1.xpose.msra.mxu0 0.0
        %4654 = vmatprep.subr.mxu0 0.0
        %4655 = vmatpush1.xpose.msra.mxu0 0.0
        %4656 = vmatprep.subr.mxu0 0.0
        %4657 = vmatpush1.xpose.msra.mxu0 0.0
        %4658 = vmatprep.subr.mxu0 0.0
        %4659 = vmatpush1.xpose.msra.mxu0 0.0
        %4660 = vmatprep.subr.mxu0 0.0
        %4661 = vmatpush1.xpose.msra.mxu0 0.0
        %4662 = vmatprep.subr.mxu0 0.0
        %4663 = vmatpush1.xpose.msra.mxu0 0.0
        %4664 = vmatprep.subr.mxu0 0.0
        %4665 = vmatpush1.xpose.msra.mxu0 0.0
        %4666 = vmatprep.subr.mxu0 0.0
        %4667 = vmatpush1.xpose.msra.mxu0 0.0
        %4668 = vmatprep.subr.mxu0 0.0
        %4669 = vmatpush1.xpose.msra.mxu0 0.0
        %4670 = vmatprep.subr.mxu0 0.0
        %4671 = vmatpush1.xpose.msra.mxu0 0.0
        %4672 = vmatprep.subr.mxu0 0.0
        %4673 = vmatpush1.xpose.msra.mxu0 0.0
        %4674 = vmatprep.subr.mxu0 0.0
        %4675 = vmatpush1.xpose.msra.mxu0 %v4642
        %4676 = vmatprep.subr.mxu0 0.0
        %4677 = vmatpush1.xpose.msra.mxu0 %v4643
        %4678 = vmatprep.subr.mxu0 0.0
        %4679 = vmatpush2.xpose.msra.mxu0 0.0
        %4680 = vmatprep.subr.mxu0 0.0
        %4681 = vmatpush2.xpose.msra.mxu0 0.0
        %4682 = vmatprep.subr.mxu0 0.0
        %4683 = vmatpush2.xpose.msra.mxu0 0.0
        %4684 = vmatprep.subr.mxu0 0.0
        %4685 = vmatpush2.xpose.msra.mxu0 0.0
        %4686 = vmatprep.subr.mxu0 0.0
        %4687 = vmatpush2.xpose.msra.mxu0 0.0
        %4688 = vmatprep.subr.mxu0 0.0
        %4689 = vmatpush2.xpose.msra.mxu0 0.0
        %4690 = vmatprep.subr.mxu0 0.0
        %4691 = vmatpush2.xpose.msra.mxu0 0.0
        %4692 = vmatprep.subr.mxu0 0.0
        %4693 = vmatpush2.xpose.msra.mxu0 0.0
        %4694 = vmatprep.subr.mxu0 0.0
        %4695 = vmatpush2.xpose.msra.mxu0 0.0
        %4696 = vmatprep.subr.mxu0 0.0
        %4697 = vmatpush2.xpose.msra.mxu0 0.0
        %4698 = vmatprep.subr.mxu0 0.0
        %4699 = vmatpush2.xpose.msra.mxu0 0.0
        %4700 = vmatprep.subr.mxu0 0.0
        %4701 = vmatpush2.xpose.msra.mxu0 0.0
        %4702 = vmatprep.subr.mxu0 0.0
        %4703 = vmatpush2.xpose.msra.mxu0 0.0
        %4704 = vmatprep.subr.mxu0 0.0
        %4705 = vmatpush2.xpose.msra.mxu0 0.0
        %4706 = vmatprep.subr.mxu0 0.0
        %4707 = vmatpush2.xpose.msra.mxu0 0.0
        %4708 = vmatprep.subr.mxu0 0.0
        %4709 = vmatpush2.xpose.msra.mxu0 0.0
        %4710 = vmatprep.mubr.f32.mxu0 0.0
        %4711 = vmatmul.mubr.f32.gmra.mxu0 %v4636
        %v4712 = vpop.f32.mrf.mxu0
        %v4713 = vadd.f32 %v3219, %v4712
        %v4714 = vpop.f32.mrf.mxu0
        %4715 = vmatprep.mubr.f32.mxu0 0.0
        %4716 = vmatmul.mubr.f32.gmra.mxu0 %v4635
        %v4717 = vpop.f32.mrf.mxu0
        %v4718 = vadd.f32 %v3220, %v4717
        %v4719 = vpop.f32.mrf.mxu0
        %4720 = vdwg.mxu0
        %v4721 = vsel %vm3302, %v4713, -inf
        %4722 = vmax.xlane.f32.xlu0 %v4721
        %v4723 = vpop.xlane.xlu0 %4722
        %v4724 = vsel %vm3306, %v4718, -inf
        %4725 = vmax.xlane.f32.xlu0 %v4724
        %v4726 = vpop.xlane.xlu0 %4725
        %v4727 = vsub.f32 %v4713, %v4723
        %v4728 = vsub.f32 %v4718, %v4726
        %v4729 = vmul.f32 %v4727, 1.442695
        %v4730 = vpow.pop %v4729
        %v4731 = vmul.f32 %v4728, 1.442695
        %v4732 = vpow.pop %v4731
        %v4733 = vsel %vm3302, %v4730, 0.0
        %4734 = vadd.xlane.f32.xlu0 %v4733
        %v4735 = vpop.xlane.xlu0 %4734
        %v4736 = vsel %vm3306, %v4732, 0.0
        %4737 = vadd.xlane.f32.xlu0 %v4736
        %v4738 = vpop.xlane.xlu0 %4737
        %v4739 = vrcp.pop %v4735
        %v4740 = vrcp.pop %v4738
        %v4741 = vmul.f32 %v4730, %v4739
        %v4742 = vmul.f32 %v4732, %v4740
        %v4745 = vrot.slane %v4630, 2
        %v4746 = vrot.slane %v4631, 2
        %v4747 = vsel %vm3988, %v4745, %v4746
        %v4750 = vsel %vm3302, %v4741, 0
        %v4753 = vsel %vm3302, %v4742, 0
        %v4755 = vsel %vm3332, %v4746, 0
        %4757 = vmatprep.subr.mxu0 0.0
        %4758 = vmatpush1.msra.mxu0 0.0
        %4759 = vmatprep.subr.mxu0 0.0
        %4760 = vmatpush1.msra.mxu0 0.0
        %4761 = vmatprep.subr.mxu0 0.0
        %4762 = vmatpush1.msra.mxu0 0.0
        %4763 = vmatprep.subr.mxu0 0.0
        %4764 = vmatpush1.msra.mxu0 0.0
        %4765 = vmatprep.subr.mxu0 0.0
        %4766 = vmatpush1.msra.mxu0 0.0
        %4767 = vmatprep.subr.mxu0 0.0
        %4768 = vmatpush1.msra.mxu0 0.0
        %4769 = vmatprep.subr.mxu0 0.0
        %4770 = vmatpush1.msra.mxu0 0.0
        %4771 = vmatprep.subr.mxu0 0.0
        %4772 = vmatpush1.msra.mxu0 0.0
        %4773 = vmatprep.subr.mxu0 0.0
        %4774 = vmatpush1.msra.mxu0 0.0
        %4775 = vmatprep.subr.mxu0 0.0
        %4776 = vmatpush1.msra.mxu0 0.0
        %4777 = vmatprep.subr.mxu0 0.0
        %4778 = vmatpush1.msra.mxu0 0.0
        %4779 = vmatprep.subr.mxu0 0.0
        %4780 = vmatpush1.msra.mxu0 0.0
        %4781 = vmatprep.subr.mxu0 0.0
        %4782 = vmatpush1.msra.mxu0 0.0
        %4783 = vmatprep.subr.mxu0 0.0
        %4784 = vmatpush1.msra.mxu0 0.0
        %4785 = vmatprep.subr.mxu0 0.0
        %4786 = vmatpush1.msra.mxu0 %v4755
        %4787 = vmatprep.subr.mxu0 0.0
        %4788 = vmatpush1.msra.mxu0 %v4747
        %4789 = vmatprep.subr.mxu0 0.0
        %4790 = vmatpush2.msra.mxu0 0.0
        %4791 = vmatprep.subr.mxu0 0.0
        %4792 = vmatpush2.msra.mxu0 0.0
        %4793 = vmatprep.subr.mxu0 0.0
        %4794 = vmatpush2.msra.mxu0 0.0
        %4795 = vmatprep.subr.mxu0 0.0
        %4796 = vmatpush2.msra.mxu0 0.0
        %4797 = vmatprep.subr.mxu0 0.0
        %4798 = vmatpush2.msra.mxu0 0.0
        %4799 = vmatprep.subr.mxu0 0.0
        %4800 = vmatpush2.msra.mxu0 0.0
        %4801 = vmatprep.subr.mxu0 0.0
        %4802 = vmatpush2.msra.mxu0 0.0
        %4803 = vmatprep.subr.mxu0 0.0
        %4804 = vmatpush2.msra.mxu0 0.0
        %4805 = vmatprep.subr.mxu0 0.0
        %4806 = vmatpush2.msra.mxu0 0.0
        %4807 = vmatprep.subr.mxu0 0.0
        %4808 = vmatpush2.msra.mxu0 0.0
        %4809 = vmatprep.subr.mxu0 0.0
        %4810 = vmatpush2.msra.mxu0 0.0
        %4811 = vmatprep.subr.mxu0 0.0
        %4812 = vmatpush2.msra.mxu0 0.0
        %4813 = vmatprep.subr.mxu0 0.0
        %4814 = vmatpush2.msra.mxu0 0.0
        %4815 = vmatprep.subr.mxu0 0.0
        %4816 = vmatpush2.msra.mxu0 0.0
        %4817 = vmatprep.subr.mxu0 0.0
        %4818 = vmatpush2.msra.mxu0 0.0
        %4819 = vmatprep.subr.mxu0 0.0
        %4820 = vmatpush2.msra.mxu0 0.0
        %4821 = vmatprep.mubr.f32.mxu0 0.0
        %4822 = vmatmul.mubr.f32.gmra.mxu0 %v4750
        %v4823 = vpop.f32.mrf.mxu0
        %v4824 = vadd.f32 0.0, %v4823
        %v4825 = vpop.f32.mrf.mxu0
        %4826 = vmatprep.mubr.f32.mxu0 0.0
        %4827 = vmatmul.mubr.f32.gmra.mxu0 %v4753
        %v4828 = vpop.f32.mrf.mxu0
        %v4829 = vadd.f32 0.0, %v4828
        %v4830 = vpop.f32.mrf.mxu0
        %4831 = vdwg.mxu0
        %v4834 = vrot.slane %v4824, 6
        %v4835 = vrot.slane %v4829, 6
        %v4836 = vsel %vm3332, %v4834, %v4835
        %4839 = vst [vmem:[#allocation6 + $0x38] sm:$0xfc] %v4834
        %4840 = vst [vmem:[#allocation6 + $0x58] sm:$0xf] %v4836
        %v4841 = vld [vmem:[#allocation6] sm:$0xff]
        %v4842 = vld [vmem:[#allocation6 + $0x8] sm:$0xff]
        %v4843 = vld [vmem:[#allocation6 + $0x10] sm:$0xff]
        %v4844 = vld [vmem:[#allocation6 + $0x18] sm:$0xff]
        %v4845 = vld [vmem:[#allocation6 + $0x20] sm:$0xff]
        %v4846 = vld [vmem:[#allocation6 + $0x28] sm:$0xff]
        %v4847 = vld [vmem:[#allocation6 + $0x30] sm:$0xff]
        %v4848 = vld [vmem:[#allocation6 + $0x38] sm:$0xff]
        %v4849 = vld [vmem:[#allocation6 + $0x40] sm:$0xf]
        %v4850 = vld [vmem:[#allocation6 + $0x48] sm:$0xf]
        %v4851 = vld [vmem:[#allocation6 + $0x50] sm:$0xf]
        %v4852 = vld [vmem:[#allocation6 + $0x58] sm:$0xf]
        %v4853 = vld [vmem:[%s945] sm:$0xff]
        %v4854 = vld [vmem:[%s945 + $0x8] sm:$0xff]
        %v4855 = vld [vmem:[%s945 + $0x10] sm:$0xff]
        %v4856 = vld [vmem:[%s945 + $0x18] sm:$0xff]
        %v4857 = vld [vmem:[%s945 + $0x20] sm:$0xff]
        %v4858 = vld [vmem:[%s945 + $0x28] sm:$0xff]
        %v4859 = vld [vmem:[%s945 + $0x30] sm:$0xff]
        %v4860 = vld [vmem:[%s945 + $0x38] sm:$0xff]
        %v4861 = vld [vmem:[%s945 + $0x40] sm:$0xff]
        %v4862 = vld [vmem:[%s945 + $0x48] sm:$0xff]
        %v4863 = vld [vmem:[%s945 + $0x50] sm:$0xff]
        %v4864 = vld [vmem:[%s945 + $0x58] sm:$0xff]
        %v4865 = vld [vmem:[%s945 + $0x60] sm:$0xff]
        %v4866 = vld [vmem:[%s945 + $0x68] sm:$0xff]
        %v4867 = vld [vmem:[%s945 + $0x70] sm:$0xff]
        %v4868 = vld [vmem:[%s945 + $0x78] sm:$0xff]
        %v4869 = vld [vmem:[%s945 + $0x80] sm:$0xff]
        %v4870 = vld [vmem:[%s945 + $0x88] sm:$0xff]
        %v4871 = vld [vmem:[%s945 + $0x90] sm:$0xff]
        %v4872 = vld [vmem:[%s945 + $0x98] sm:$0xff]
        %v4873 = vld [vmem:[%s945 + $0xa0] sm:$0xff]
        %v4874 = vld [vmem:[%s945 + $0xa8] sm:$0xff]
        %v4875 = vld [vmem:[%s945 + $0xb0] sm:$0xff]
        %v4876 = vld [vmem:[%s945 + $0xb8] sm:$0xff]
        %v4877 = vld [vmem:[%s945 + $0xc0] sm:$0xff]
        %v4878 = vld [vmem:[%s945 + $0xc8] sm:$0xff]
        %v4879 = vld [vmem:[%s945 + $0xd0] sm:$0xff]
        %v4880 = vld [vmem:[%s945 + $0xd8] sm:$0xff]
        %v4881 = vld [vmem:[%s945 + $0xe0] sm:$0xff]
        %v4882 = vld [vmem:[%s945 + $0xe8] sm:$0xff]
        %v4883 = vld [vmem:[%s945 + $0xf0] sm:$0xff]
        %v4884 = vld [vmem:[%s945 + $0xf8] sm:$0xff]
        %v4885 = vld [vmem:[%s945 + $0x100] sm:$0xff]
        %v4886 = vld [vmem:[%s945 + $0x108] sm:$0xff]
        %v4887 = vld [vmem:[%s945 + $0x110] sm:$0xff]
        %v4888 = vld [vmem:[%s945 + $0x118] sm:$0xff]
        %v4889 = vld [vmem:[%s945 + $0x120] sm:$0xff]
        %v4890 = vld [vmem:[%s945 + $0x128] sm:$0xff]
        %v4891 = vld [vmem:[%s945 + $0x130] sm:$0xff]
        %v4892 = vld [vmem:[%s945 + $0x138] sm:$0xff]
        %v4893 = vld [vmem:[%s945 + $0x140] sm:$0xff]
        %v4894 = vld [vmem:[%s945 + $0x148] sm:$0xff]
        %v4895 = vld [vmem:[%s945 + $0x150] sm:$0xff]
        %v4896 = vld [vmem:[%s945 + $0x158] sm:$0xff]
        %v4897 = vld [vmem:[%s945 + $0x160] sm:$0xff]
        %v4898 = vld [vmem:[%s945 + $0x168] sm:$0xff]
        %v4899 = vld [vmem:[%s945 + $0x170] sm:$0xff]
        %v4900 = vld [vmem:[%s945 + $0x178] sm:$0xff]
        %v4901 = vld [vmem:[%s945 + $0x180] sm:$0xff]
        %v4902 = vld [vmem:[%s945 + $0x188] sm:$0xff]
        %v4903 = vld [vmem:[%s945 + $0x190] sm:$0xff]
        %v4904 = vld [vmem:[%s945 + $0x198] sm:$0xff]
        %v4905 = vld [vmem:[%s945 + $0x1a0] sm:$0xff]
        %v4906 = vld [vmem:[%s945 + $0x1a8] sm:$0xff]
        %v4907 = vld [vmem:[%s945 + $0x1b0] sm:$0xff]
        %v4908 = vld [vmem:[%s945 + $0x1b8] sm:$0xff]
        %v4909 = vld [vmem:[%s945 + $0x1c0] sm:$0xff]
        %v4910 = vld [vmem:[%s945 + $0x1c8] sm:$0xff]
        %v4911 = vld [vmem:[%s945 + $0x1d0] sm:$0xff]
        %v4912 = vld [vmem:[%s945 + $0x1d8] sm:$0xff]
        %v4913 = vld [vmem:[%s945 + $0x1e0] sm:$0xff]
        %v4914 = vld [vmem:[%s945 + $0x1e8] sm:$0xff]
        %v4915 = vld [vmem:[%s945 + $0x1f0] sm:$0xff]
        %v4916 = vld [vmem:[%s945 + $0x1f8] sm:$0xff]
        %v4917 = vld [vmem:[%s945 + $0x200] sm:$0xff]
        %v4918 = vld [vmem:[%s945 + $0x208] sm:$0xff]
        %v4919 = vld [vmem:[%s945 + $0x210] sm:$0xff]
        %v4920 = vld [vmem:[%s945 + $0x218] sm:$0xff]
        %v4921 = vld [vmem:[%s945 + $0x220] sm:$0xff]
        %v4922 = vld [vmem:[%s945 + $0x228] sm:$0xff]
        %v4923 = vld [vmem:[%s945 + $0x230] sm:$0xff]
        %v4924 = vld [vmem:[%s945 + $0x238] sm:$0xff]
        %v4925 = vld [vmem:[%s945 + $0x240] sm:$0xff]
        %v4926 = vld [vmem:[%s945 + $0x248] sm:$0xff]
        %v4927 = vld [vmem:[%s945 + $0x250] sm:$0xff]
        %v4928 = vld [vmem:[%s945 + $0x258] sm:$0xff]
        %v4929 = vld [vmem:[%s945 + $0x260] sm:$0xff]
        %v4930 = vld [vmem:[%s945 + $0x268] sm:$0xff]
        %v4931 = vld [vmem:[%s945 + $0x270] sm:$0xff]
        %v4932 = vld [vmem:[%s945 + $0x278] sm:$0xff]
        %v4933 = vld [vmem:[%s945 + $0x280] sm:$0xff]
        %v4934 = vld [vmem:[%s945 + $0x288] sm:$0xff]
        %v4935 = vld [vmem:[%s945 + $0x290] sm:$0xff]
        %v4936 = vld [vmem:[%s945 + $0x298] sm:$0xff]
        %v4937 = vld [vmem:[%s945 + $0x2a0] sm:$0xff]
        %v4938 = vld [vmem:[%s945 + $0x2a8] sm:$0xff]
        %v4939 = vld [vmem:[%s945 + $0x2b0] sm:$0xff]
        %v4940 = vld [vmem:[%s945 + $0x2b8] sm:$0xff]
        %v4941 = vld [vmem:[%s945 + $0x2c0] sm:$0xff]
        %v4942 = vld [vmem:[%s945 + $0x2c8] sm:$0xff]
        %v4943 = vld [vmem:[%s945 + $0x2d0] sm:$0xff]
        %v4944 = vld [vmem:[%s945 + $0x2d8] sm:$0xff]
        %v4945 = vld [vmem:[%s945 + $0x2e0] sm:$0xff]
        %v4946 = vld [vmem:[%s945 + $0x2e8] sm:$0xff]
        %v4947 = vld [vmem:[%s945 + $0x2f0] sm:$0xff]
        %v4948 = vld [vmem:[%s945 + $0x2f8] sm:$0xff]
        %v4949 = vld [vmem:[%s945 + $0x300] sm:$0xff]
        %v4950 = vld [vmem:[%s945 + $0x308] sm:$0xff]
        %v4951 = vld [vmem:[%s945 + $0x310] sm:$0xff]
        %v4952 = vld [vmem:[%s945 + $0x318] sm:$0xff]
        %v4953 = vld [vmem:[%s945 + $0x320] sm:$0xff]
        %v4954 = vld [vmem:[%s945 + $0x328] sm:$0xff]
        %v4955 = vld [vmem:[%s945 + $0x330] sm:$0xff]
        %v4956 = vld [vmem:[%s945 + $0x338] sm:$0xff]
        %v4957 = vld [vmem:[%s945 + $0x340] sm:$0xff]
        %v4958 = vld [vmem:[%s945 + $0x348] sm:$0xff]
        %v4959 = vld [vmem:[%s945 + $0x350] sm:$0xff]
        %v4960 = vld [vmem:[%s945 + $0x358] sm:$0xff]
        %v4961 = vld [vmem:[%s945 + $0x360] sm:$0xff]
        %v4962 = vld [vmem:[%s945 + $0x368] sm:$0xff]
        %v4963 = vld [vmem:[%s945 + $0x370] sm:$0xff]
        %v4964 = vld [vmem:[%s945 + $0x378] sm:$0xff]
        %v4965 = vld [vmem:[%s945 + $0x380] sm:$0xff]
        %v4966 = vld [vmem:[%s945 + $0x388] sm:$0xff]
        %v4967 = vld [vmem:[%s945 + $0x390] sm:$0xff]
        %v4968 = vld [vmem:[%s945 + $0x398] sm:$0xff]
        %v4969 = vld [vmem:[%s945 + $0x3a0] sm:$0xff]
        %v4970 = vld [vmem:[%s945 + $0x3a8] sm:$0xff]
        %v4971 = vld [vmem:[%s945 + $0x3b0] sm:$0xff]
        %v4972 = vld [vmem:[%s945 + $0x3b8] sm:$0xff]
        %v4973 = vld [vmem:[%s945 + $0x3c0] sm:$0xff]
        %v4974 = vld [vmem:[%s945 + $0x3c8] sm:$0xff]
        %v4975 = vld [vmem:[%s945 + $0x3d0] sm:$0xff]
        %v4976 = vld [vmem:[%s945 + $0x3d8] sm:$0xff]
        %v4977 = vld [vmem:[%s945 + $0x3e0] sm:$0xff]
        %v4978 = vld [vmem:[%s945 + $0x3e8] sm:$0xff]
        %v4979 = vld [vmem:[%s945 + $0x3f0] sm:$0xff]
        %v4980 = vld [vmem:[%s945 + $0x3f8] sm:$0xff]
        %v4981 = vld [vmem:[%s945 + $0x400] sm:$0xff]
        %v4982 = vld [vmem:[%s945 + $0x408] sm:$0xff]
        %v4983 = vld [vmem:[%s945 + $0x410] sm:$0xff]
        %v4984 = vld [vmem:[%s945 + $0x418] sm:$0xff]
        %v4985 = vld [vmem:[%s945 + $0x420] sm:$0xff]
        %v4986 = vld [vmem:[%s945 + $0x428] sm:$0xff]
        %v4987 = vld [vmem:[%s945 + $0x430] sm:$0xff]
        %v4988 = vld [vmem:[%s945 + $0x438] sm:$0xff]
        %v4989 = vld [vmem:[%s945 + $0x440] sm:$0xff]
        %v4990 = vld [vmem:[%s945 + $0x448] sm:$0xff]
        %v4991 = vld [vmem:[%s945 + $0x450] sm:$0xff]
        %v4992 = vld [vmem:[%s945 + $0x458] sm:$0xff]
        %v4993 = vld [vmem:[%s945 + $0x460] sm:$0xff]
        %v4994 = vld [vmem:[%s945 + $0x468] sm:$0xff]
        %v4995 = vld [vmem:[%s945 + $0x470] sm:$0xff]
        %v4996 = vld [vmem:[%s945 + $0x478] sm:$0xff]
        %v4997 = vld [vmem:[%s945 + $0x480] sm:$0xff]
        %v4998 = vld [vmem:[%s945 + $0x488] sm:$0xff]
        %v4999 = vld [vmem:[%s945 + $0x490] sm:$0xff]
        %v5000 = vld [vmem:[%s945 + $0x498] sm:$0xff]
        %v5001 = vld [vmem:[%s945 + $0x4a0] sm:$0xff]
        %v5002 = vld [vmem:[%s945 + $0x4a8] sm:$0xff]
        %v5003 = vld [vmem:[%s945 + $0x4b0] sm:$0xff]
        %v5004 = vld [vmem:[%s945 + $0x4b8] sm:$0xff]
        %v5005 = vld [vmem:[%s945 + $0x4c0] sm:$0xff]
        %v5006 = vld [vmem:[%s945 + $0x4c8] sm:$0xff]
        %v5007 = vld [vmem:[%s945 + $0x4d0] sm:$0xff]
        %v5008 = vld [vmem:[%s945 + $0x4d8] sm:$0xff]
        %v5009 = vld [vmem:[%s945 + $0x4e0] sm:$0xff]
        %v5010 = vld [vmem:[%s945 + $0x4e8] sm:$0xff]
        %v5011 = vld [vmem:[%s945 + $0x4f0] sm:$0xff]
        %v5012 = vld [vmem:[%s945 + $0x4f8] sm:$0xff]
        %v5013 = vld [vmem:[%s945 + $0x500] sm:$0xff]
        %v5014 = vld [vmem:[%s945 + $0x508] sm:$0xff]
        %v5015 = vld [vmem:[%s945 + $0x510] sm:$0xff]
        %v5016 = vld [vmem:[%s945 + $0x518] sm:$0xff]
        %v5017 = vld [vmem:[%s945 + $0x520] sm:$0xff]
        %v5018 = vld [vmem:[%s945 + $0x528] sm:$0xff]
        %v5019 = vld [vmem:[%s945 + $0x530] sm:$0xff]
        %v5020 = vld [vmem:[%s945 + $0x538] sm:$0xff]
        %v5021 = vld [vmem:[%s945 + $0x540] sm:$0xff]
        %v5022 = vld [vmem:[%s945 + $0x548] sm:$0xff]
        %v5023 = vld [vmem:[%s945 + $0x550] sm:$0xff]
        %v5024 = vld [vmem:[%s945 + $0x558] sm:$0xff]
        %v5025 = vld [vmem:[%s945 + $0x560] sm:$0xff]
        %v5026 = vld [vmem:[%s945 + $0x568] sm:$0xff]
        %v5027 = vld [vmem:[%s945 + $0x570] sm:$0xff]
        %v5028 = vld [vmem:[%s945 + $0x578] sm:$0xff]
        %v5029 = vld [vmem:[%s945 + $0x580] sm:$0xff]
        %v5030 = vld [vmem:[%s945 + $0x588] sm:$0xff]
        %v5031 = vld [vmem:[%s945 + $0x590] sm:$0xff]
        %v5032 = vld [vmem:[%s945 + $0x598] sm:$0xff]
        %v5033 = vld [vmem:[%s945 + $0x5a0] sm:$0xff]
        %v5034 = vld [vmem:[%s945 + $0x5a8] sm:$0xff]
        %v5035 = vld [vmem:[%s945 + $0x5b0] sm:$0xff]
        %v5036 = vld [vmem:[%s945 + $0x5b8] sm:$0xff]
        %v5037 = vld [vmem:[%s945 + $0x5c0] sm:$0xff]
        %v5038 = vld [vmem:[%s945 + $0x5c8] sm:$0xff]
        %v5039 = vld [vmem:[%s945 + $0x5d0] sm:$0xff]
        %v5040 = vld [vmem:[%s945 + $0x5d8] sm:$0xff]
        %v5041 = vld [vmem:[%s945 + $0x5e0] sm:$0xff]
        %v5042 = vld [vmem:[%s945 + $0x5e8] sm:$0xff]
        %v5043 = vld [vmem:[%s945 + $0x5f0] sm:$0xff]
        %v5044 = vld [vmem:[%s945 + $0x5f8] sm:$0xff]
        %v5045 = vld [vmem:[%s945 + $0x600] sm:$0xff]
        %v5046 = vld [vmem:[%s945 + $0x608] sm:$0xff]
        %v5047 = vld [vmem:[%s945 + $0x610] sm:$0xff]
        %v5048 = vld [vmem:[%s945 + $0x618] sm:$0xff]
        %v5049 = vld [vmem:[%s945 + $0x620] sm:$0xff]
        %v5050 = vld [vmem:[%s945 + $0x628] sm:$0xff]
        %v5051 = vld [vmem:[%s945 + $0x630] sm:$0xff]
        %v5052 = vld [vmem:[%s945 + $0x638] sm:$0xff]
        %v5053 = vld [vmem:[%s945 + $0x640] sm:$0xff]
        %v5054 = vld [vmem:[%s945 + $0x648] sm:$0xff]
        %v5055 = vld [vmem:[%s945 + $0x650] sm:$0xff]
        %v5056 = vld [vmem:[%s945 + $0x658] sm:$0xff]
        %v5057 = vld [vmem:[%s945 + $0x660] sm:$0xff]
        %v5058 = vld [vmem:[%s945 + $0x668] sm:$0xff]
        %v5059 = vld [vmem:[%s945 + $0x670] sm:$0xff]
        %v5060 = vld [vmem:[%s945 + $0x678] sm:$0xff]
        %v5061 = vld [vmem:[%s945 + $0x680] sm:$0xff]
        %v5062 = vld [vmem:[%s945 + $0x688] sm:$0xff]
        %v5063 = vld [vmem:[%s945 + $0x690] sm:$0xff]
        %v5064 = vld [vmem:[%s945 + $0x698] sm:$0xff]
        %v5065 = vld [vmem:[%s945 + $0x6a0] sm:$0xff]
        %v5066 = vld [vmem:[%s945 + $0x6a8] sm:$0xff]
        %v5067 = vld [vmem:[%s945 + $0x6b0] sm:$0xff]
        %v5068 = vld [vmem:[%s945 + $0x6b8] sm:$0xff]
        %v5069 = vld [vmem:[%s945 + $0x6c0] sm:$0xff]
        %v5070 = vld [vmem:[%s945 + $0x6c8] sm:$0xff]
        %v5071 = vld [vmem:[%s945 + $0x6d0] sm:$0xff]
        %v5072 = vld [vmem:[%s945 + $0x6d8] sm:$0xff]
        %v5073 = vld [vmem:[%s945 + $0x6e0] sm:$0xff]
        %v5074 = vld [vmem:[%s945 + $0x6e8] sm:$0xff]
        %v5075 = vld [vmem:[%s945 + $0x6f0] sm:$0xff]
        %v5076 = vld [vmem:[%s945 + $0x6f8] sm:$0xff]
        %v5077 = vld [vmem:[%s945 + $0x700] sm:$0xff]
        %v5078 = vld [vmem:[%s945 + $0x708] sm:$0xff]
        %v5079 = vld [vmem:[%s945 + $0x710] sm:$0xff]
        %v5080 = vld [vmem:[%s945 + $0x718] sm:$0xff]
        %v5081 = vld [vmem:[%s945 + $0x720] sm:$0xff]
        %v5082 = vld [vmem:[%s945 + $0x728] sm:$0xff]
        %v5083 = vld [vmem:[%s945 + $0x730] sm:$0xff]
        %v5084 = vld [vmem:[%s945 + $0x738] sm:$0xff]
        %v5085 = vld [vmem:[%s945 + $0x740] sm:$0xff]
        %v5086 = vld [vmem:[%s945 + $0x748] sm:$0xff]
        %v5087 = vld [vmem:[%s945 + $0x750] sm:$0xff]
        %v5088 = vld [vmem:[%s945 + $0x758] sm:$0xff]
        %v5089 = vld [vmem:[%s945 + $0x760] sm:$0xff]
        %v5090 = vld [vmem:[%s945 + $0x768] sm:$0xff]
        %v5091 = vld [vmem:[%s945 + $0x770] sm:$0xff]
        %v5092 = vld [vmem:[%s945 + $0x778] sm:$0xff]
        %v5093 = vld [vmem:[%s945 + $0x780] sm:$0xff]
        %v5094 = vld [vmem:[%s945 + $0x788] sm:$0xff]
        %v5095 = vld [vmem:[%s945 + $0x790] sm:$0xff]
        %v5096 = vld [vmem:[%s945 + $0x798] sm:$0xff]
        %v5097 = vld [vmem:[%s945 + $0x7a0] sm:$0xff]
        %v5098 = vld [vmem:[%s945 + $0x7a8] sm:$0xff]
        %v5099 = vld [vmem:[%s945 + $0x7b0] sm:$0xff]
        %v5100 = vld [vmem:[%s945 + $0x7b8] sm:$0xff]
        %v5101 = vld [vmem:[%s945 + $0x7c0] sm:$0xff]
        %v5102 = vld [vmem:[%s945 + $0x7c8] sm:$0xff]
        %v5103 = vld [vmem:[%s945 + $0x7d0] sm:$0xff]
        %v5104 = vld [vmem:[%s945 + $0x7d8] sm:$0xff]
        %v5105 = vld [vmem:[%s945 + $0x7e0] sm:$0xff]
        %v5106 = vld [vmem:[%s945 + $0x7e8] sm:$0xff]
        %v5107 = vld [vmem:[%s945 + $0x7f0] sm:$0xff]
        %v5108 = vld [vmem:[%s945 + $0x7f8] sm:$0xff]
        %v5109 = vld [vmem:[%s954] sm:$0xf]
        %v5111 = vlaneseq
        %v5112 = vshrl.u32 %v5111, 7
        %v5113 = vsub.s32 0, %v5112
        %v5114 = vrot.slane %v5109, %v5113
        %v5115 = vlaneseq
        %v5116 = vshrl.u32 %v5115, 7
        %v5117 = vsub.s32 1, %v5116
        %v5118 = vrot.slane %v5109, %v5117
        %v5119 = vlaneseq
        %v5120 = vshrl.u32 %v5119, 7
        %v5121 = vsub.s32 2, %v5120
        %v5122 = vrot.slane %v5109, %v5121
        %v5123 = vlaneseq
        %v5124 = vshrl.u32 %v5123, 7
        %v5125 = vsub.s32 3, %v5124
        %v5126 = vrot.slane %v5109, %v5125
        %5131 = vmatprep.subr.mxu0 %v4914
        %5132 = vmatpush1.msra.mxu0 %v4913
        %5133 = vmatprep.subr.mxu0 %v4910
        %5134 = vmatpush1.msra.mxu0 %v4909
        %5135 = vmatprep.subr.mxu0 %v4906
        %5136 = vmatpush1.msra.mxu0 %v4905
        %5137 = vmatprep.subr.mxu0 %v4902
        %5138 = vmatpush1.msra.mxu0 %v4901
        %5139 = vmatprep.subr.mxu0 %v4898
        %5140 = vmatpush1.msra.mxu0 %v4897
        %5141 = vmatprep.subr.mxu0 %v4894
        %5142 = vmatpush1.msra.mxu0 %v4893
        %5143 = vmatprep.subr.mxu0 %v4890
        %5144 = vmatpush1.msra.mxu0 %v4889
        %5145 = vmatprep.subr.mxu0 %v4886
        %5146 = vmatpush1.msra.mxu0 %v4885
        %5147 = vmatprep.subr.mxu0 %v4882
        %5148 = vmatpush1.msra.mxu0 %v4881
        %5149 = vmatprep.subr.mxu0 %v4878
        %5150 = vmatpush1.msra.mxu0 %v4877
        %5151 = vmatprep.subr.mxu0 %v4874
        %5152 = vmatpush1.msra.mxu0 %v4873
        %5153 = vmatprep.subr.mxu0 %v4870
        %5154 = vmatpush1.msra.mxu0 %v4869
        %5155 = vmatprep.subr.mxu0 %v4866
        %5156 = vmatpush1.msra.mxu0 %v4865
        %5157 = vmatprep.subr.mxu0 %v4862
        %5158 = vmatpush1.msra.mxu0 %v4861
        %5159 = vmatprep.subr.mxu0 %v4858
        %5160 = vmatpush1.msra.mxu0 %v4857
        %5161 = vmatprep.subr.mxu0 %v4854
        %5162 = vmatpush1.msra.mxu0 %v4853
        %5163 = vmatprep.subr.mxu0 %v4978
        %5164 = vmatpush2.msra.mxu0 %v4977
        %5165 = vmatprep.subr.mxu0 %v4974
        %5166 = vmatpush2.msra.mxu0 %v4973
        %5167 = vmatprep.subr.mxu0 %v4970
        %5168 = vmatpush2.msra.mxu0 %v4969
        %5169 = vmatprep.subr.mxu0 %v4966
        %5170 = vmatpush2.msra.mxu0 %v4965
        %5171 = vmatprep.subr.mxu0 %v4962
        %5172 = vmatpush2.msra.mxu0 %v4961
        %5173 = vmatprep.subr.mxu0 %v4958
        %5174 = vmatpush2.msra.mxu0 %v4957
        %5175 = vmatprep.subr.mxu0 %v4954
        %5176 = vmatpush2.msra.mxu0 %v4953
        %5177 = vmatprep.subr.mxu0 %v4950
        %5178 = vmatpush2.msra.mxu0 %v4949
        %5179 = vmatprep.subr.mxu0 %v4946
        %5180 = vmatpush2.msra.mxu0 %v4945
        %5181 = vmatprep.subr.mxu0 %v4942
        %5182 = vmatpush2.msra.mxu0 %v4941
        %5183 = vmatprep.subr.mxu0 %v4938
        %5184 = vmatpush2.msra.mxu0 %v4937
        %5185 = vmatprep.subr.mxu0 %v4934
        %5186 = vmatpush2.msra.mxu0 %v4933
        %5187 = vmatprep.subr.mxu0 %v4930
        %5188 = vmatpush2.msra.mxu0 %v4929
        %5189 = vmatprep.subr.mxu0 %v4926
        %5190 = vmatpush2.msra.mxu0 %v4925
        %5191 = vmatprep.subr.mxu0 %v4922
        %5192 = vmatpush2.msra.mxu0 %v4921
        %5193 = vmatprep.subr.mxu0 %v4918
        %5194 = vmatpush2.msra.mxu0 %v4917
        %5195 = vmatprep.mubr.f32.mxu0 %v4842
        %5196 = vmatmul.mubr.f32.gmra.mxu0 %v4841
        %v5197 = vpop.f32.mrf.mxu0
        %v5198 = vadd.f32 %v5114, %v5197
        %v5199 = vpop.f32.mrf.mxu0
        %v5200 = vadd.f32 %v5118, %v5199
        %5201 = vmatprep.mubr.f32.mxu0 %v4846
        %5202 = vmatmul.mubr.f32.gmra.mxu0 %v4845
        %v5203 = vpop.f32.mrf.mxu0
        %v5204 = vadd.f32 %v5114, %v5203
        %v5205 = vpop.f32.mrf.mxu0
        %v5206 = vadd.f32 %v5118, %v5205
        %5207 = vmatprep.mubr.f32.mxu0 %v4850
        %5208 = vmatmul.mubr.f32.gmra.mxu0 %v4849
        %v5209 = vpop.f32.mrf.mxu0
        %v5210 = vadd.f32 %v5114, %v5209
        %v5211 = vpop.f32.mrf.mxu0
        %v5212 = vadd.f32 %v5118, %v5211
        %5213 = vdwg.mxu0
        %5214 = vmatprep.subr.mxu0 %v5042
        %5215 = vmatpush1.msra.mxu0 %v5041
        %5216 = vmatprep.subr.mxu0 %v5038
        %5217 = vmatpush1.msra.mxu0 %v5037
        %5218 = vmatprep.subr.mxu0 %v5034
        %5219 = vmatpush1.msra.mxu0 %v5033
        %5220 = vmatprep.subr.mxu0 %v5030
        %5221 = vmatpush1.msra.mxu0 %v5029
        %5222 = vmatprep.subr.mxu0 %v5026
        %5223 = vmatpush1.msra.mxu0 %v5025
        %5224 = vmatprep.subr.mxu0 %v5022
        %5225 = vmatpush1.msra.mxu0 %v5021
        %5226 = vmatprep.subr.mxu0 %v5018
        %5227 = vmatpush1.msra.mxu0 %v5017
        %5228 = vmatprep.subr.mxu0 %v5014
        %5229 = vmatpush1.msra.mxu0 %v5013
        %5230 = vmatprep.subr.mxu0 %v5010
        %5231 = vmatpush1.msra.mxu0 %v5009
        %5232 = vmatprep.subr.mxu0 %v5006
        %5233 = vmatpush1.msra.mxu0 %v5005
        %5234 = vmatprep.subr.mxu0 %v5002
        %5235 = vmatpush1.msra.mxu0 %v5001
        %5236 = vmatprep.subr.mxu0 %v4998
        %5237 = vmatpush1.msra.mxu0 %v4997
        %5238 = vmatprep.subr.mxu0 %v4994
        %5239 = vmatpush1.msra.mxu0 %v4993
        %5240 = vmatprep.subr.mxu0 %v4990
        %5241 = vmatpush1.msra.mxu0 %v4989
        %5242 = vmatprep.subr.mxu0 %v4986
        %5243 = vmatpush1.msra.mxu0 %v4985
        %5244 = vmatprep.subr.mxu0 %v4982
        %5245 = vmatpush1.msra.mxu0 %v4981
        %5246 = vmatprep.subr.mxu0 %v5106
        %5247 = vmatpush2.msra.mxu0 %v5105
        %5248 = vmatprep.subr.mxu0 %v5102
        %5249 = vmatpush2.msra.mxu0 %v5101
        %5250 = vmatprep.subr.mxu0 %v5098
        %5251 = vmatpush2.msra.mxu0 %v5097
        %5252 = vmatprep.subr.mxu0 %v5094
        %5253 = vmatpush2.msra.mxu0 %v5093
        %5254 = vmatprep.subr.mxu0 %v5090
        %5255 = vmatpush2.msra.mxu0 %v5089
        %5256 = vmatprep.subr.mxu0 %v5086
        %5257 = vmatpush2.msra.mxu0 %v5085
        %5258 = vmatprep.subr.mxu0 %v5082
        %5259 = vmatpush2.msra.mxu0 %v5081
        %5260 = vmatprep.subr.mxu0 %v5078
        %5261 = vmatpush2.msra.mxu0 %v5077
        %5262 = vmatprep.subr.mxu0 %v5074
        %5263 = vmatpush2.msra.mxu0 %v5073
        %5264 = vmatprep.subr.mxu0 %v5070
        %5265 = vmatpush2.msra.mxu0 %v5069
        %5266 = vmatprep.subr.mxu0 %v5066
        %5267 = vmatpush2.msra.mxu0 %v5065
        %5268 = vmatprep.subr.mxu0 %v5062
        %5269 = vmatpush2.msra.mxu0 %v5061
        %5270 = vmatprep.subr.mxu0 %v5058
        %5271 = vmatpush2.msra.mxu0 %v5057
        %5272 = vmatprep.subr.mxu0 %v5054
        %5273 = vmatpush2.msra.mxu0 %v5053
        %5274 = vmatprep.subr.mxu0 %v5050
        %5275 = vmatpush2.msra.mxu0 %v5049
        %5276 = vmatprep.subr.mxu0 %v5046
        %5277 = vmatpush2.msra.mxu0 %v5045
        %5278 = vmatprep.mubr.f32.mxu0 %v4844
        %5279 = vmatmul.mubr.f32.gmra.mxu0 %v4843
        %v5280 = vpop.f32.mrf.mxu0
        %v5281 = vadd.f32 %v5198, %v5280
        %v5282 = vpop.f32.mrf.mxu0
        %v5283 = vadd.f32 %v5200, %v5282
        %5284 = vmatprep.mubr.f32.mxu0 %v4848
        %5285 = vmatmul.mubr.f32.gmra.mxu0 %v4847
        %v5286 = vpop.f32.mrf.mxu0
        %v5287 = vadd.f32 %v5204, %v5286
        %v5288 = vpop.f32.mrf.mxu0
        %v5289 = vadd.f32 %v5206, %v5288
        %5290 = vmatprep.mubr.f32.mxu0 %v4852
        %5291 = vmatmul.mubr.f32.gmra.mxu0 %v4851
        %v5292 = vpop.f32.mrf.mxu0
        %v5293 = vadd.f32 %v5210, %v5292
        %v5294 = vpop.f32.mrf.mxu0
        %v5295 = vadd.f32 %v5212, %v5294
        %5296 = vdwg.mxu0
        %5297 = vmatprep.subr.mxu0 %v4916
        %5298 = vmatpush1.msra.mxu0 %v4915
        %5299 = vmatprep.subr.mxu0 %v4912
        %5300 = vmatpush1.msra.mxu0 %v4911
        %5301 = vmatprep.subr.mxu0 %v4908
        %5302 = vmatpush1.msra.mxu0 %v4907
        %5303 = vmatprep.subr.mxu0 %v4904
        %5304 = vmatpush1.msra.mxu0 %v4903
        %5305 = vmatprep.subr.mxu0 %v4900
        %5306 = vmatpush1.msra.mxu0 %v4899
        %5307 = vmatprep.subr.mxu0 %v4896
        %5308 = vmatpush1.msra.mxu0 %v4895
        %5309 = vmatprep.subr.mxu0 %v4892
        %5310 = vmatpush1.msra.mxu0 %v4891
        %5311 = vmatprep.subr.mxu0 %v4888
        %5312 = vmatpush1.msra.mxu0 %v4887
        %5313 = vmatprep.subr.mxu0 %v4884
        %5314 = vmatpush1.msra.mxu0 %v4883
        %5315 = vmatprep.subr.mxu0 %v4880
        %5316 = vmatpush1.msra.mxu0 %v4879
        %5317 = vmatprep.subr.mxu0 %v4876
        %5318 = vmatpush1.msra.mxu0 %v4875
        %5319 = vmatprep.subr.mxu0 %v4872
        %5320 = vmatpush1.msra.mxu0 %v4871
        %5321 = vmatprep.subr.mxu0 %v4868
        %5322 = vmatpush1.msra.mxu0 %v4867
        %5323 = vmatprep.subr.mxu0 %v4864
        %5324 = vmatpush1.msra.mxu0 %v4863
        %5325 = vmatprep.subr.mxu0 %v4860
        %5326 = vmatpush1.msra.mxu0 %v4859
        %5327 = vmatprep.subr.mxu0 %v4856
        %5328 = vmatpush1.msra.mxu0 %v4855
        %5329 = vmatprep.subr.mxu0 %v4980
        %5330 = vmatpush2.msra.mxu0 %v4979
        %5331 = vmatprep.subr.mxu0 %v4976
        %5332 = vmatpush2.msra.mxu0 %v4975
        %5333 = vmatprep.subr.mxu0 %v4972
        %5334 = vmatpush2.msra.mxu0 %v4971
        %5335 = vmatprep.subr.mxu0 %v4968
        %5336 = vmatpush2.msra.mxu0 %v4967
        %5337 = vmatprep.subr.mxu0 %v4964
        %5338 = vmatpush2.msra.mxu0 %v4963
        %5339 = vmatprep.subr.mxu0 %v4960
        %5340 = vmatpush2.msra.mxu0 %v4959
        %5341 = vmatprep.subr.mxu0 %v4956
        %5342 = vmatpush2.msra.mxu0 %v4955
        %5343 = vmatprep.subr.mxu0 %v4952
        %5344 = vmatpush2.msra.mxu0 %v4951
        %5345 = vmatprep.subr.mxu0 %v4948
        %5346 = vmatpush2.msra.mxu0 %v4947
        %5347 = vmatprep.subr.mxu0 %v4944
        %5348 = vmatpush2.msra.mxu0 %v4943
        %5349 = vmatprep.subr.mxu0 %v4940
        %5350 = vmatpush2.msra.mxu0 %v4939
        %5351 = vmatprep.subr.mxu0 %v4936
        %5352 = vmatpush2.msra.mxu0 %v4935
        %5353 = vmatprep.subr.mxu0 %v4932
        %5354 = vmatpush2.msra.mxu0 %v4931
        %5355 = vmatprep.subr.mxu0 %v4928
        %5356 = vmatpush2.msra.mxu0 %v4927
        %5357 = vmatprep.subr.mxu0 %v4924
        %5358 = vmatpush2.msra.mxu0 %v4923
        %5359 = vmatprep.subr.mxu0 %v4920
        %5360 = vmatpush2.msra.mxu0 %v4919
        %5361 = vmatprep.mubr.f32.mxu0 %v4842
        %5362 = vmatmul.mubr.f32.gmra.mxu0 %v4841
        %v5363 = vpop.f32.mrf.mxu0
        %v5364 = vadd.f32 %v5122, %v5363
        %v5365 = vpop.f32.mrf.mxu0
        %v5366 = vadd.f32 %v5126, %v5365
        %5367 = vmatprep.mubr.f32.mxu0 %v4846
        %5368 = vmatmul.mubr.f32.gmra.mxu0 %v4845
        %v5369 = vpop.f32.mrf.mxu0
        %v5370 = vadd.f32 %v5122, %v5369
        %v5371 = vpop.f32.mrf.mxu0
        %v5372 = vadd.f32 %v5126, %v5371
        %5373 = vmatprep.mubr.f32.mxu0 %v4850
        %5374 = vmatmul.mubr.f32.gmra.mxu0 %v4849
        %v5375 = vpop.f32.mrf.mxu0
        %v5376 = vadd.f32 %v5122, %v5375
        %v5377 = vpop.f32.mrf.mxu0
        %v5378 = vadd.f32 %v5126, %v5377
        %5379 = vdwg.mxu0
        %5380 = vmatprep.subr.mxu0 %v5044
        %5381 = vmatpush1.msra.mxu0 %v5043
        %5382 = vmatprep.subr.mxu0 %v5040
        %5383 = vmatpush1.msra.mxu0 %v5039
        %5384 = vmatprep.subr.mxu0 %v5036
        %5385 = vmatpush1.msra.mxu0 %v5035
        %5386 = vmatprep.subr.mxu0 %v5032
        %5387 = vmatpush1.msra.mxu0 %v5031
        %5388 = vmatprep.subr.mxu0 %v5028
        %5389 = vmatpush1.msra.mxu0 %v5027
        %5390 = vmatprep.subr.mxu0 %v5024
        %5391 = vmatpush1.msra.mxu0 %v5023
        %5392 = vmatprep.subr.mxu0 %v5020
        %5393 = vmatpush1.msra.mxu0 %v5019
        %5394 = vmatprep.subr.mxu0 %v5016
        %5395 = vmatpush1.msra.mxu0 %v5015
        %5396 = vmatprep.subr.mxu0 %v5012
        %5397 = vmatpush1.msra.mxu0 %v5011
        %5398 = vmatprep.subr.mxu0 %v5008
        %5399 = vmatpush1.msra.mxu0 %v5007
        %5400 = vmatprep.subr.mxu0 %v5004
        %5401 = vmatpush1.msra.mxu0 %v5003
        %5402 = vmatprep.subr.mxu0 %v5000
        %5403 = vmatpush1.msra.mxu0 %v4999
        %5404 = vmatprep.subr.mxu0 %v4996
        %5405 = vmatpush1.msra.mxu0 %v4995
        %5406 = vmatprep.subr.mxu0 %v4992
        %5407 = vmatpush1.msra.mxu0 %v4991
        %5408 = vmatprep.subr.mxu0 %v4988
        %5409 = vmatpush1.msra.mxu0 %v4987
        %5410 = vmatprep.subr.mxu0 %v4984
        %5411 = vmatpush1.msra.mxu0 %v4983
        %5412 = vmatprep.subr.mxu0 %v5108
        %5413 = vmatpush2.msra.mxu0 %v5107
        %5414 = vmatprep.subr.mxu0 %v5104
        %5415 = vmatpush2.msra.mxu0 %v5103
        %5416 = vmatprep.subr.mxu0 %v5100
        %5417 = vmatpush2.msra.mxu0 %v5099
        %5418 = vmatprep.subr.mxu0 %v5096
        %5419 = vmatpush2.msra.mxu0 %v5095
        %5420 = vmatprep.subr.mxu0 %v5092
        %5421 = vmatpush2.msra.mxu0 %v5091
        %5422 = vmatprep.subr.mxu0 %v5088
        %5423 = vmatpush2.msra.mxu0 %v5087
        %5424 = vmatprep.subr.mxu0 %v5084
        %5425 = vmatpush2.msra.mxu0 %v5083
        %5426 = vmatprep.subr.mxu0 %v5080
        %5427 = vmatpush2.msra.mxu0 %v5079
        %5428 = vmatprep.subr.mxu0 %v5076
        %5429 = vmatpush2.msra.mxu0 %v5075
        %5430 = vmatprep.subr.mxu0 %v5072
        %5431 = vmatpush2.msra.mxu0 %v5071
        %5432 = vmatprep.subr.mxu0 %v5068
        %5433 = vmatpush2.msra.mxu0 %v5067
        %5434 = vmatprep.subr.mxu0 %v5064
        %5435 = vmatpush2.msra.mxu0 %v5063
        %5436 = vmatprep.subr.mxu0 %v5060
        %5437 = vmatpush2.msra.mxu0 %v5059
        %5438 = vmatprep.subr.mxu0 %v5056
        %5439 = vmatpush2.msra.mxu0 %v5055
        %5440 = vmatprep.subr.mxu0 %v5052
        %5441 = vmatpush2.msra.mxu0 %v5051
        %5442 = vmatprep.subr.mxu0 %v5048
        %5443 = vmatpush2.msra.mxu0 %v5047
        %5444 = vmatprep.mubr.f32.mxu0 %v4844
        %5445 = vmatmul.mubr.f32.gmra.mxu0 %v4843
        %v5446 = vpop.f32.mrf.mxu0
        %v5447 = vadd.f32 %v5364, %v5446
        %v5448 = vpop.f32.mrf.mxu0
        %v5449 = vadd.f32 %v5366, %v5448
        %5450 = vmatprep.mubr.f32.mxu0 %v4848
        %5451 = vmatmul.mubr.f32.gmra.mxu0 %v4847
        %v5452 = vpop.f32.mrf.mxu0
        %v5453 = vadd.f32 %v5370, %v5452
        %v5454 = vpop.f32.mrf.mxu0
        %v5455 = vadd.f32 %v5372, %v5454
        %5456 = vmatprep.mubr.f32.mxu0 %v4852
        %5457 = vmatmul.mubr.f32.gmra.mxu0 %v4851
        %v5458 = vpop.f32.mrf.mxu0
        %v5459 = vadd.f32 %v5376, %v5458
        %v5460 = vpop.f32.mrf.mxu0
        %v5461 = vadd.f32 %v5378, %v5460
        %5462 = vdwg.mxu0
        %v5463 = vadd.f32 %v5281, %v1175
        %v5464 = vadd.f32 %v5283, %v1176
        %v5465 = vadd.f32 %v5447, %v1177
        %v5466 = vadd.f32 %v5449, %v1178
        %v5467 = vadd.f32 %v5287, %v1179
        %v5468 = vadd.f32 %v5289, %v1180
        %v5469 = vadd.f32 %v5453, %v1181
        %v5470 = vadd.f32 %v5455, %v1182
        %v5471 = vadd.f32 %v5293, %v1183
        %v5472 = vadd.f32 %v5295, %v1184
        %v5473 = vadd.f32 %v5459, %v1185
        %v5474 = vadd.f32 %v5461, %v1186
        %v5475 = vld [vmem:[%s963] sm:$0xf]
        %v5476 = vld [vmem:[%s972] sm:$0xf]
        %v5477 = vadd.f32 %v5463, %v5464
        %v5478 = vadd.f32 %v5477, %v5465
        %v5479 = vadd.f32 %v5478, %v5466
        %5480 = vadd.xlane.f32.xlu0 %v5479
        %v5481 = vpop.xlane.xlu0 %5480
        %v5482 = vadd.f32 %v5467, %v5468
        %v5483 = vadd.f32 %v5482, %v5469
        %v5484 = vadd.f32 %v5483, %v5470
        %5485 = vadd.xlane.f32.xlu0 %v5484
        %v5486 = vpop.xlane.xlu0 %5485
        %v5487 = vsel %vm1199, %v5471, 0.0
        %v5488 = vsel %vm1199, %v5472, 0.0
        %v5489 = vadd.f32 %v5487, %v5488
        %v5490 = vsel %vm1199, %v5473, 0.0
        %v5491 = vadd.f32 %v5489, %v5490
        %v5492 = vsel %vm1199, %v5474, 0.0
        %v5493 = vadd.f32 %v5491, %v5492
        %5494 = vadd.xlane.f32.xlu0 %v5493
        %v5495 = vpop.xlane.xlu0 %5494
        %v5496 = vmul.f32 %v5481, %v1209
        %v5497 = vmul.f32 %v5486, %v1209
        %v5498 = vmul.f32 %v5495, %v1209
        %v5499 = vsub.f32 %v5463, %v5496
        %v5500 = vsub.f32 %v5464, %v5496
        %v5501 = vsub.f32 %v5465, %v5496
        %v5502 = vsub.f32 %v5466, %v5496
        %v5503 = vsub.f32 %v5467, %v5497
        %v5504 = vsub.f32 %v5468, %v5497
        %v5505 = vsub.f32 %v5469, %v5497
        %v5506 = vsub.f32 %v5470, %v5497
        %v5507 = vsub.f32 %v5471, %v5498
        %v5508 = vsub.f32 %v5472, %v5498
        %v5509 = vsub.f32 %v5473, %v5498
        %v5510 = vsub.f32 %v5474, %v5498
        %v5511 = vmul.f32 %v5499, %v5499
        %v5512 = vmul.f32 %v5500, %v5500
        %v5513 = vmul.f32 %v5501, %v5501
        %v5514 = vmul.f32 %v5502, %v5502
        %v5515 = vmul.f32 %v5503, %v5503
        %v5516 = vmul.f32 %v5504, %v5504
        %v5517 = vmul.f32 %v5505, %v5505
        %v5518 = vmul.f32 %v5506, %v5506
        %v5519 = vmul.f32 %v5507, %v5507
        %v5520 = vmul.f32 %v5508, %v5508
        %v5521 = vmul.f32 %v5509, %v5509
        %v5522 = vmul.f32 %v5510, %v5510
        %v5523 = vadd.f32 %v5511, %v5512
        %v5524 = vadd.f32 %v5523, %v5513
        %v5525 = vadd.f32 %v5524, %v5514
        %5526 = vadd.xlane.f32.xlu0 %v5525
        %v5527 = vpop.xlane.xlu0 %5526
        %v5528 = vadd.f32 %v5515, %v5516
        %v5529 = vadd.f32 %v5528, %v5517
        %v5530 = vadd.f32 %v5529, %v5518
        %5531 = vadd.xlane.f32.xlu0 %v5530
        %v5532 = vpop.xlane.xlu0 %5531
        %v5533 = vsel %vm1199, %v5519, 0.0
        %v5534 = vsel %vm1199, %v5520, 0.0
        %v5535 = vadd.f32 %v5533, %v5534
        %v5536 = vsel %vm1199, %v5521, 0.0
        %v5537 = vadd.f32 %v5535, %v5536
        %v5538 = vsel %vm1199, %v5522, 0.0
        %v5539 = vadd.f32 %v5537, %v5538
        %5540 = vadd.xlane.f32.xlu0 %v5539
        %v5541 = vpop.xlane.xlu0 %5540
        %v5542 = vmul.f32 %v5527, %v1209
        %v5543 = vmul.f32 %v5532, %v1209
        %v5544 = vmul.f32 %v5541, %v1209
        %v5545 = vadd.f32 %v5542, 1e-05
        %v5546 = vadd.f32 %v5543, 1e-05
        %v5547 = vadd.f32 %v5544, 1e-05
        %v5548 = vrsqrt.pop %v5545
        %v5549 = vrsqrt.pop %v5546
        %v5550 = vrsqrt.pop %v5547
        %v5551 = vmul.f32 %v5499, %v5548
        %v5552 = vmul.f32 %v5500, %v5548
        %v5553 = vmul.f32 %v5501, %v5548
        %v5554 = vmul.f32 %v5502, %v5548
        %v5555 = vmul.f32 %v5503, %v5549
        %v5556 = vmul.f32 %v5504, %v5549
        %v5557 = vmul.f32 %v5505, %v5549
        %v5558 = vmul.f32 %v5506, %v5549
        %v5559 = vmul.f32 %v5507, %v5550
        %v5560 = vmul.f32 %v5508, %v5550
        %v5561 = vmul.f32 %v5509, %v5550
        %v5562 = vmul.f32 %v5510, %v5550
        %v5564 = vlaneseq
        %v5565 = vshrl.u32 %v5564, 7
        %v5566 = vsub.s32 0, %v5565
        %v5567 = vrot.slane %v5475, %v5566
        %v5568 = vlaneseq
        %v5569 = vshrl.u32 %v5568, 7
        %v5570 = vsub.s32 1, %v5569
        %v5571 = vrot.slane %v5475, %v5570
        %v5572 = vlaneseq
        %v5573 = vshrl.u32 %v5572, 7
        %v5574 = vsub.s32 2, %v5573
        %v5575 = vrot.slane %v5475, %v5574
        %v5576 = vlaneseq
        %v5577 = vshrl.u32 %v5576, 7
        %v5578 = vsub.s32 3, %v5577
        %v5579 = vrot.slane %v5475, %v5578
        %v5584 = vmul.f32 %v5551, %v5567
        %v5585 = vmul.f32 %v5552, %v5571
        %v5586 = vmul.f32 %v5553, %v5575
        %v5587 = vmul.f32 %v5554, %v5579
        %v5588 = vmul.f32 %v5555, %v5567
        %v5589 = vmul.f32 %v5556, %v5571
        %v5590 = vmul.f32 %v5557, %v5575
        %v5591 = vmul.f32 %v5558, %v5579
        %v5592 = vmul.f32 %v5559, %v5567
        %v5593 = vmul.f32 %v5560, %v5571
        %v5594 = vmul.f32 %v5561, %v5575
        %v5595 = vmul.f32 %v5562, %v5579
        %v5597 = vlaneseq
        %v5598 = vshrl.u32 %v5597, 7
        %v5599 = vsub.s32 0, %v5598
        %v5600 = vrot.slane %v5476, %v5599
        %v5601 = vlaneseq
        %v5602 = vshrl.u32 %v5601, 7
        %v5603 = vsub.s32 1, %v5602
        %v5604 = vrot.slane %v5476, %v5603
        %v5605 = vlaneseq
        %v5606 = vshrl.u32 %v5605, 7
        %v5607 = vsub.s32 2, %v5606
        %v5608 = vrot.slane %v5476, %v5607
        %v5609 = vlaneseq
        %v5610 = vshrl.u32 %v5609, 7
        %v5611 = vsub.s32 3, %v5610
        %v5612 = vrot.slane %v5476, %v5611
        %v5617 = vadd.f32 %v5584, %v5600
        %v5618 = vadd.f32 %v5585, %v5604
        %v5619 = vadd.f32 %v5586, %v5608
        %v5620 = vadd.f32 %v5587, %v5612
        %v5621 = vadd.f32 %v5588, %v5600
        %v5622 = vadd.f32 %v5589, %v5604
        %v5623 = vadd.f32 %v5590, %v5608
        %v5624 = vadd.f32 %v5591, %v5612
        %v5625 = vadd.f32 %v5592, %v5600
        %v5626 = vadd.f32 %v5593, %v5604
        %v5627 = vadd.f32 %v5594, %v5608
        %v5628 = vadd.f32 %v5595, %v5612
        %v5629 = vld [vmem:[%s981] sm:$0xff]
        %v5630 = vld [vmem:[%s981 + $0x8] sm:$0xff]
        %v5631 = vld [vmem:[%s981 + $0x10] sm:$0xff]
        %v5632 = vld [vmem:[%s981 + $0x18] sm:$0xff]
        %v5633 = vld [vmem:[%s981 + $0x20] sm:$0xff]
        %v5634 = vld [vmem:[%s981 + $0x28] sm:$0xff]
        %v5635 = vld [vmem:[%s981 + $0x30] sm:$0xff]
        %v5636 = vld [vmem:[%s981 + $0x38] sm:$0xff]
        %v5637 = vld [vmem:[%s981 + $0x40] sm:$0xff]
        %v5638 = vld [vmem:[%s981 + $0x48] sm:$0xff]
        %v5639 = vld [vmem:[%s981 + $0x50] sm:$0xff]
        %v5640 = vld [vmem:[%s981 + $0x58] sm:$0xff]
        %v5641 = vld [vmem:[%s981 + $0x60] sm:$0xff]
        %v5642 = vld [vmem:[%s981 + $0x68] sm:$0xff]
        %v5643 = vld [vmem:[%s981 + $0x70] sm:$0xff]
        %v5644 = vld [vmem:[%s981 + $0x78] sm:$0xff]
        %v5645 = vld [vmem:[%s981 + $0x80] sm:$0xff]
        %v5646 = vld [vmem:[%s981 + $0x88] sm:$0xff]
        %v5647 = vld [vmem:[%s981 + $0x90] sm:$0xff]
        %v5648 = vld [vmem:[%s981 + $0x98] sm:$0xff]
        %v5649 = vld [vmem:[%s981 + $0xa0] sm:$0xff]
        %v5650 = vld [vmem:[%s981 + $0xa8] sm:$0xff]
        %v5651 = vld [vmem:[%s981 + $0xb0] sm:$0xff]
        %v5652 = vld [vmem:[%s981 + $0xb8] sm:$0xff]
        %v5653 = vld [vmem:[%s981 + $0xc0] sm:$0xff]
        %v5654 = vld [vmem:[%s981 + $0xc8] sm:$0xff]
        %v5655 = vld [vmem:[%s981 + $0xd0] sm:$0xff]
        %v5656 = vld [vmem:[%s981 + $0xd8] sm:$0xff]
        %v5657 = vld [vmem:[%s981 + $0xe0] sm:$0xff]
        %v5658 = vld [vmem:[%s981 + $0xe8] sm:$0xff]
        %v5659 = vld [vmem:[%s981 + $0xf0] sm:$0xff]
        %v5660 = vld [vmem:[%s981 + $0xf8] sm:$0xff]
        %v5661 = vld [vmem:[%s981 + $0x100] sm:$0xff]
        %v5662 = vld [vmem:[%s981 + $0x108] sm:$0xff]
        %v5663 = vld [vmem:[%s981 + $0x110] sm:$0xff]
        %v5664 = vld [vmem:[%s981 + $0x118] sm:$0xff]
        %v5665 = vld [vmem:[%s981 + $0x120] sm:$0xff]
        %v5666 = vld [vmem:[%s981 + $0x128] sm:$0xff]
        %v5667 = vld [vmem:[%s981 + $0x130] sm:$0xff]
        %v5668 = vld [vmem:[%s981 + $0x138] sm:$0xff]
        %v5669 = vld [vmem:[%s981 + $0x140] sm:$0xff]
        %v5670 = vld [vmem:[%s981 + $0x148] sm:$0xff]
        %v5671 = vld [vmem:[%s981 + $0x150] sm:$0xff]
        %v5672 = vld [vmem:[%s981 + $0x158] sm:$0xff]
        %v5673 = vld [vmem:[%s981 + $0x160] sm:$0xff]
        %v5674 = vld [vmem:[%s981 + $0x168] sm:$0xff]
        %v5675 = vld [vmem:[%s981 + $0x170] sm:$0xff]
        %v5676 = vld [vmem:[%s981 + $0x178] sm:$0xff]
        %v5677 = vld [vmem:[%s981 + $0x180] sm:$0xff]
        %v5678 = vld [vmem:[%s981 + $0x188] sm:$0xff]
        %v5679 = vld [vmem:[%s981 + $0x190] sm:$0xff]
        %v5680 = vld [vmem:[%s981 + $0x198] sm:$0xff]
        %v5681 = vld [vmem:[%s981 + $0x1a0] sm:$0xff]
        %v5682 = vld [vmem:[%s981 + $0x1a8] sm:$0xff]
        %v5683 = vld [vmem:[%s981 + $0x1b0] sm:$0xff]
        %v5684 = vld [vmem:[%s981 + $0x1b8] sm:$0xff]
        %v5685 = vld [vmem:[%s981 + $0x1c0] sm:$0xff]
        %v5686 = vld [vmem:[%s981 + $0x1c8] sm:$0xff]
        %v5687 = vld [vmem:[%s981 + $0x1d0] sm:$0xff]
        %v5688 = vld [vmem:[%s981 + $0x1d8] sm:$0xff]
        %v5689 = vld [vmem:[%s981 + $0x1e0] sm:$0xff]
        %v5690 = vld [vmem:[%s981 + $0x1e8] sm:$0xff]
        %v5691 = vld [vmem:[%s981 + $0x1f0] sm:$0xff]
        %v5692 = vld [vmem:[%s981 + $0x1f8] sm:$0xff]
        %v5693 = vld [vmem:[%s989] sm:$0x1]
        %v5695 = vlaneseq
        %v5696 = vshrl.u32 %v5695, 7
        %v5697 = vsub.s32 0, %v5696
        %v5698 = vrot.slane %v5693, %v5697
        %5700 = vmatprep.subr.mxu0 0.0
        %5701 = vmatpush1.msra.mxu0 %v5644
        %5702 = vmatprep.subr.mxu0 0.0
        %5703 = vmatpush1.msra.mxu0 %v5643
        %5704 = vmatprep.subr.mxu0 0.0
        %5705 = vmatpush1.msra.mxu0 %v5642
        %5706 = vmatprep.subr.mxu0 0.0
        %5707 = vmatpush1.msra.mxu0 %v5641
        %5708 = vmatprep.subr.mxu0 0.0
        %5709 = vmatpush1.msra.mxu0 %v5640
        %5710 = vmatprep.subr.mxu0 0.0
        %5711 = vmatpush1.msra.mxu0 %v5639
        %5712 = vmatprep.subr.mxu0 0.0
        %5713 = vmatpush1.msra.mxu0 %v5638
        %5714 = vmatprep.subr.mxu0 0.0
        %5715 = vmatpush1.msra.mxu0 %v5637
        %5716 = vmatprep.subr.mxu0 0.0
        %5717 = vmatpush1.msra.mxu0 %v5636
        %5718 = vmatprep.subr.mxu0 0.0
        %5719 = vmatpush1.msra.mxu0 %v5635
        %5720 = vmatprep.subr.mxu0 0.0
        %5721 = vmatpush1.msra.mxu0 %v5634
        %5722 = vmatprep.subr.mxu0 0.0
        %5723 = vmatpush1.msra.mxu0 %v5633
        %5724 = vmatprep.subr.mxu0 0.0
        %5725 = vmatpush1.msra.mxu0 %v5632
        %5726 = vmatprep.subr.mxu0 0.0
        %5727 = vmatpush1.msra.mxu0 %v5631
        %5728 = vmatprep.subr.mxu0 0.0
        %5729 = vmatpush1.msra.mxu0 %v5630
        %5730 = vmatprep.subr.mxu0 0.0
        %5731 = vmatpush1.msra.mxu0 %v5629
        %5732 = vmatprep.subr.mxu0 0.0
        %5733 = vmatpush2.msra.mxu0 %v5660
        %5734 = vmatprep.subr.mxu0 0.0
        %5735 = vmatpush2.msra.mxu0 %v5659
        %5736 = vmatprep.subr.mxu0 0.0
        %5737 = vmatpush2.msra.mxu0 %v5658
        %5738 = vmatprep.subr.mxu0 0.0
        %5739 = vmatpush2.msra.mxu0 %v5657
        %5740 = vmatprep.subr.mxu0 0.0
        %5741 = vmatpush2.msra.mxu0 %v5656
        %5742 = vmatprep.subr.mxu0 0.0
        %5743 = vmatpush2.msra.mxu0 %v5655
        %5744 = vmatprep.subr.mxu0 0.0
        %5745 = vmatpush2.msra.mxu0 %v5654
        %5746 = vmatprep.subr.mxu0 0.0
        %5747 = vmatpush2.msra.mxu0 %v5653
        %5748 = vmatprep.subr.mxu0 0.0
        %5749 = vmatpush2.msra.mxu0 %v5652
        %5750 = vmatprep.subr.mxu0 0.0
        %5751 = vmatpush2.msra.mxu0 %v5651
        %5752 = vmatprep.subr.mxu0 0.0
        %5753 = vmatpush2.msra.mxu0 %v5650
        %5754 = vmatprep.subr.mxu0 0.0
        %5755 = vmatpush2.msra.mxu0 %v5649
        %5756 = vmatprep.subr.mxu0 0.0
        %5757 = vmatpush2.msra.mxu0 %v5648
        %5758 = vmatprep.subr.mxu0 0.0
        %5759 = vmatpush2.msra.mxu0 %v5647
        %5760 = vmatprep.subr.mxu0 0.0
        %5761 = vmatpush2.msra.mxu0 %v5646
        %5762 = vmatprep.subr.mxu0 0.0
        %5763 = vmatpush2.msra.mxu0 %v5645
        %5764 = vmatprep.mubr.f32.mxu0 %v5618
        %5765 = vmatmul.mubr.f32.gmra.mxu0 %v5617
        %v5766 = vpop.f32.mrf.mxu0
        %v5767 = vadd.f32 %v5698, %v5766
        %v5768 = vpop.f32.mrf.mxu0
        %5769 = vmatprep.mubr.f32.mxu0 %v5622
        %5770 = vmatmul.mubr.f32.gmra.mxu0 %v5621
        %v5771 = vpop.f32.mrf.mxu0
        %v5772 = vadd.f32 %v5698, %v5771
        %v5773 = vpop.f32.mrf.mxu0
        %5774 = vmatprep.mubr.f32.mxu0 %v5626
        %5775 = vmatmul.mubr.f32.gmra.mxu0 %v5625
        %v5776 = vpop.f32.mrf.mxu0
        %v5777 = vadd.f32 %v5698, %v5776
        %v5778 = vpop.f32.mrf.mxu0
        %5779 = vdwg.mxu0
        %5780 = vmatprep.subr.mxu0 0.0
        %5781 = vmatpush1.msra.mxu0 %v5676
        %5782 = vmatprep.subr.mxu0 0.0
        %5783 = vmatpush1.msra.mxu0 %v5675
        %5784 = vmatprep.subr.mxu0 0.0
        %5785 = vmatpush1.msra.mxu0 %v5674
        %5786 = vmatprep.subr.mxu0 0.0
        %5787 = vmatpush1.msra.mxu0 %v5673
        %5788 = vmatprep.subr.mxu0 0.0
        %5789 = vmatpush1.msra.mxu0 %v5672
        %5790 = vmatprep.subr.mxu0 0.0
        %5791 = vmatpush1.msra.mxu0 %v5671
        %5792 = vmatprep.subr.mxu0 0.0
        %5793 = vmatpush1.msra.mxu0 %v5670
        %5794 = vmatprep.subr.mxu0 0.0
        %5795 = vmatpush1.msra.mxu0 %v5669
        %5796 = vmatprep.subr.mxu0 0.0
        %5797 = vmatpush1.msra.mxu0 %v5668
        %5798 = vmatprep.subr.mxu0 0.0
        %5799 = vmatpush1.msra.mxu0 %v5667
        %5800 = vmatprep.subr.mxu0 0.0
        %5801 = vmatpush1.msra.mxu0 %v5666
        %5802 = vmatprep.subr.mxu0 0.0
        %5803 = vmatpush1.msra.mxu0 %v5665
        %5804 = vmatprep.subr.mxu0 0.0
        %5805 = vmatpush1.msra.mxu0 %v5664
        %5806 = vmatprep.subr.mxu0 0.0
        %5807 = vmatpush1.msra.mxu0 %v5663
        %5808 = vmatprep.subr.mxu0 0.0
        %5809 = vmatpush1.msra.mxu0 %v5662
        %5810 = vmatprep.subr.mxu0 0.0
        %5811 = vmatpush1.msra.mxu0 %v5661
        %5812 = vmatprep.subr.mxu0 0.0
        %5813 = vmatpush2.msra.mxu0 %v5692
        %5814 = vmatprep.subr.mxu0 0.0
        %5815 = vmatpush2.msra.mxu0 %v5691
        %5816 = vmatprep.subr.mxu0 0.0
        %5817 = vmatpush2.msra.mxu0 %v5690
        %5818 = vmatprep.subr.mxu0 0.0
        %5819 = vmatpush2.msra.mxu0 %v5689
        %5820 = vmatprep.subr.mxu0 0.0
        %5821 = vmatpush2.msra.mxu0 %v5688
        %5822 = vmatprep.subr.mxu0 0.0
        %5823 = vmatpush2.msra.mxu0 %v5687
        %5824 = vmatprep.subr.mxu0 0.0
        %5825 = vmatpush2.msra.mxu0 %v5686
        %5826 = vmatprep.subr.mxu0 0.0
        %5827 = vmatpush2.msra.mxu0 %v5685
        %5828 = vmatprep.subr.mxu0 0.0
        %5829 = vmatpush2.msra.mxu0 %v5684
        %5830 = vmatprep.subr.mxu0 0.0
        %5831 = vmatpush2.msra.mxu0 %v5683
        %5832 = vmatprep.subr.mxu0 0.0
        %5833 = vmatpush2.msra.mxu0 %v5682
        %5834 = vmatprep.subr.mxu0 0.0
        %5835 = vmatpush2.msra.mxu0 %v5681
        %5836 = vmatprep.subr.mxu0 0.0
        %5837 = vmatpush2.msra.mxu0 %v5680
        %5838 = vmatprep.subr.mxu0 0.0
        %5839 = vmatpush2.msra.mxu0 %v5679
        %5840 = vmatprep.subr.mxu0 0.0
        %5841 = vmatpush2.msra.mxu0 %v5678
        %5842 = vmatprep.subr.mxu0 0.0
        %5843 = vmatpush2.msra.mxu0 %v5677
        %5844 = vmatprep.mubr.f32.mxu0 %v5620
        %5845 = vmatmul.mubr.f32.gmra.mxu0 %v5619
        %v5846 = vpop.f32.mrf.mxu0
        %v5847 = vadd.f32 %v5767, %v5846
        %v5848 = vpop.f32.mrf.mxu0
        %5849 = vmatprep.mubr.f32.mxu0 %v5624
        %5850 = vmatmul.mubr.f32.gmra.mxu0 %v5623
        %v5851 = vpop.f32.mrf.mxu0
        %v5852 = vadd.f32 %v5772, %v5851
        %v5853 = vpop.f32.mrf.mxu0
        %5854 = vmatprep.mubr.f32.mxu0 %v5628
        %5855 = vmatmul.mubr.f32.gmra.mxu0 %v5627
        %v5856 = vpop.f32.mrf.mxu0
        %v5857 = vadd.f32 %v5777, %v5856
        %v5858 = vpop.f32.mrf.mxu0
        %5859 = vdwg.mxu0
        %v5860 = vmax.f32 %v5847, 0.0
        %v5861 = vmax.f32 %v5852, 0.0
        %v5862 = vmax.f32 %v5857, 0.0
        %v5863 = vld [vmem:[%s998] sm:$0xff]
        %v5864 = vld [vmem:[%s998 + $0x8] sm:$0xff]
        %v5865 = vld [vmem:[%s998 + $0x10] sm:$0xff]
        %v5866 = vld [vmem:[%s998 + $0x18] sm:$0xff]
        %v5867 = vld [vmem:[%s998 + $0x20] sm:$0xff]
        %v5868 = vld [vmem:[%s998 + $0x28] sm:$0xff]
        %v5869 = vld [vmem:[%s998 + $0x30] sm:$0xff]
        %v5870 = vld [vmem:[%s998 + $0x38] sm:$0xff]
        %v5871 = vld [vmem:[%s998 + $0x40] sm:$0xff]
        %v5872 = vld [vmem:[%s998 + $0x48] sm:$0xff]
        %v5873 = vld [vmem:[%s998 + $0x50] sm:$0xff]
        %v5874 = vld [vmem:[%s998 + $0x58] sm:$0xff]
        %v5875 = vld [vmem:[%s998 + $0x60] sm:$0xff]
        %v5876 = vld [vmem:[%s998 + $0x68] sm:$0xff]
        %v5877 = vld [vmem:[%s998 + $0x70] sm:$0xff]
        %v5878 = vld [vmem:[%s998 + $0x78] sm:$0xff]
        %v5879 = vld [vmem:[%s998 + $0x80] sm:$0xff]
        %v5880 = vld [vmem:[%s998 + $0x88] sm:$0xff]
        %v5881 = vld [vmem:[%s998 + $0x90] sm:$0xff]
        %v5882 = vld [vmem:[%s998 + $0x98] sm:$0xff]
        %v5883 = vld [vmem:[%s998 + $0xa0] sm:$0xff]
        %v5884 = vld [vmem:[%s998 + $0xa8] sm:$0xff]
        %v5885 = vld [vmem:[%s998 + $0xb0] sm:$0xff]
        %v5886 = vld [vmem:[%s998 + $0xb8] sm:$0xff]
        %v5887 = vld [vmem:[%s998 + $0xc0] sm:$0xff]
        %v5888 = vld [vmem:[%s998 + $0xc8] sm:$0xff]
        %v5889 = vld [vmem:[%s998 + $0xd0] sm:$0xff]
        %v5890 = vld [vmem:[%s998 + $0xd8] sm:$0xff]
        %v5891 = vld [vmem:[%s998 + $0xe0] sm:$0xff]
        %v5892 = vld [vmem:[%s998 + $0xe8] sm:$0xff]
        %v5893 = vld [vmem:[%s998 + $0xf0] sm:$0xff]
        %v5894 = vld [vmem:[%s998 + $0xf8] sm:$0xff]
        %v5895 = vld [vmem:[%s998 + $0x100] sm:$0xff]
        %v5896 = vld [vmem:[%s998 + $0x108] sm:$0xff]
        %v5897 = vld [vmem:[%s998 + $0x110] sm:$0xff]
        %v5898 = vld [vmem:[%s998 + $0x118] sm:$0xff]
        %v5899 = vld [vmem:[%s998 + $0x120] sm:$0xff]
        %v5900 = vld [vmem:[%s998 + $0x128] sm:$0xff]
        %v5901 = vld [vmem:[%s998 + $0x130] sm:$0xff]
        %v5902 = vld [vmem:[%s998 + $0x138] sm:$0xff]
        %v5903 = vld [vmem:[%s998 + $0x140] sm:$0xff]
        %v5904 = vld [vmem:[%s998 + $0x148] sm:$0xff]
        %v5905 = vld [vmem:[%s998 + $0x150] sm:$0xff]
        %v5906 = vld [vmem:[%s998 + $0x158] sm:$0xff]
        %v5907 = vld [vmem:[%s998 + $0x160] sm:$0xff]
        %v5908 = vld [vmem:[%s998 + $0x168] sm:$0xff]
        %v5909 = vld [vmem:[%s998 + $0x170] sm:$0xff]
        %v5910 = vld [vmem:[%s998 + $0x178] sm:$0xff]
        %v5911 = vld [vmem:[%s998 + $0x180] sm:$0xff]
        %v5912 = vld [vmem:[%s998 + $0x188] sm:$0xff]
        %v5913 = vld [vmem:[%s998 + $0x190] sm:$0xff]
        %v5914 = vld [vmem:[%s998 + $0x198] sm:$0xff]
        %v5915 = vld [vmem:[%s998 + $0x1a0] sm:$0xff]
        %v5916 = vld [vmem:[%s998 + $0x1a8] sm:$0xff]
        %v5917 = vld [vmem:[%s998 + $0x1b0] sm:$0xff]
        %v5918 = vld [vmem:[%s998 + $0x1b8] sm:$0xff]
        %v5919 = vld [vmem:[%s998 + $0x1c0] sm:$0xff]
        %v5920 = vld [vmem:[%s998 + $0x1c8] sm:$0xff]
        %v5921 = vld [vmem:[%s998 + $0x1d0] sm:$0xff]
        %v5922 = vld [vmem:[%s998 + $0x1d8] sm:$0xff]
        %v5923 = vld [vmem:[%s998 + $0x1e0] sm:$0xff]
        %v5924 = vld [vmem:[%s998 + $0x1e8] sm:$0xff]
        %v5925 = vld [vmem:[%s998 + $0x1f0] sm:$0xff]
        %v5926 = vld [vmem:[%s998 + $0x1f8] sm:$0xff]
        %v5927 = vld [vmem:[%s1007] sm:$0xf]
        %v5929 = vlaneseq
        %v5930 = vshrl.u32 %v5929, 7
        %v5931 = vsub.s32 0, %v5930
        %v5932 = vrot.slane %v5927, %v5931
        %v5933 = vlaneseq
        %v5934 = vshrl.u32 %v5933, 7
        %v5935 = vsub.s32 1, %v5934
        %v5936 = vrot.slane %v5927, %v5935
        %v5937 = vlaneseq
        %v5938 = vshrl.u32 %v5937, 7
        %v5939 = vsub.s32 2, %v5938
        %v5940 = vrot.slane %v5927, %v5939
        %v5941 = vlaneseq
        %v5942 = vshrl.u32 %v5941, 7
        %v5943 = vsub.s32 3, %v5942
        %v5944 = vrot.slane %v5927, %v5943
        %5949 = vmatprep.subr.mxu0 %v5924
        %5950 = vmatpush1.msra.mxu0 %v5923
        %5951 = vmatprep.subr.mxu0 %v5920
        %5952 = vmatpush1.msra.mxu0 %v5919
        %5953 = vmatprep.subr.mxu0 %v5916
        %5954 = vmatpush1.msra.mxu0 %v5915
        %5955 = vmatprep.subr.mxu0 %v5912
        %5956 = vmatpush1.msra.mxu0 %v5911
        %5957 = vmatprep.subr.mxu0 %v5908
        %5958 = vmatpush1.msra.mxu0 %v5907
        %5959 = vmatprep.subr.mxu0 %v5904
        %5960 = vmatpush1.msra.mxu0 %v5903
        %5961 = vmatprep.subr.mxu0 %v5900
        %5962 = vmatpush1.msra.mxu0 %v5899
        %5963 = vmatprep.subr.mxu0 %v5896
        %5964 = vmatpush1.msra.mxu0 %v5895
        %5965 = vmatprep.subr.mxu0 %v5892
        %5966 = vmatpush1.msra.mxu0 %v5891
        %5967 = vmatprep.subr.mxu0 %v5888
        %5968 = vmatpush1.msra.mxu0 %v5887
        %5969 = vmatprep.subr.mxu0 %v5884
        %5970 = vmatpush1.msra.mxu0 %v5883
        %5971 = vmatprep.subr.mxu0 %v5880
        %5972 = vmatpush1.msra.mxu0 %v5879
        %5973 = vmatprep.subr.mxu0 %v5876
        %5974 = vmatpush1.msra.mxu0 %v5875
        %5975 = vmatprep.subr.mxu0 %v5872
        %5976 = vmatpush1.msra.mxu0 %v5871
        %5977 = vmatprep.subr.mxu0 %v5868
        %5978 = vmatpush1.msra.mxu0 %v5867
        %5979 = vmatprep.subr.mxu0 %v5864
        %5980 = vmatpush1.msra.mxu0 %v5863
        %5981 = vmatprep.subr.mxu0 0.0
        %5982 = vmatpush2.msra.mxu0 0.0
        %5983 = vmatprep.subr.mxu0 0.0
        %5984 = vmatpush2.msra.mxu0 0.0
        %5985 = vmatprep.subr.mxu0 0.0
        %5986 = vmatpush2.msra.mxu0 0.0
        %5987 = vmatprep.subr.mxu0 0.0
        %5988 = vmatpush2.msra.mxu0 0.0
        %5989 = vmatprep.subr.mxu0 0.0
        %5990 = vmatpush2.msra.mxu0 0.0
        %5991 = vmatprep.subr.mxu0 0.0
        %5992 = vmatpush2.msra.mxu0 0.0
        %5993 = vmatprep.subr.mxu0 0.0
        %5994 = vmatpush2.msra.mxu0 0.0
        %5995 = vmatprep.subr.mxu0 0.0
        %5996 = vmatpush2.msra.mxu0 0.0
        %5997 = vmatprep.subr.mxu0 0.0
        %5998 = vmatpush2.msra.mxu0 0.0
        %5999 = vmatprep.subr.mxu0 0.0
        %6000 = vmatpush2.msra.mxu0 0.0
        %6001 = vmatprep.subr.mxu0 0.0
        %6002 = vmatpush2.msra.mxu0 0.0
        %6003 = vmatprep.subr.mxu0 0.0
        %6004 = vmatpush2.msra.mxu0 0.0
        %6005 = vmatprep.subr.mxu0 0.0
        %6006 = vmatpush2.msra.mxu0 0.0
        %6007 = vmatprep.subr.mxu0 0.0
        %6008 = vmatpush2.msra.mxu0 0.0
        %6009 = vmatprep.subr.mxu0 0.0
        %6010 = vmatpush2.msra.mxu0 0.0
        %6011 = vmatprep.subr.mxu0 0.0
        %6012 = vmatpush2.msra.mxu0 0.0
        %6013 = vmatprep.mubr.f32.mxu0 0.0
        %6014 = vmatmul.mubr.f32.gmra.mxu0 %v5860
        %v6015 = vpop.f32.mrf.mxu0
        %v6016 = vadd.f32 %v5932, %v6015
        %v6017 = vpop.f32.mrf.mxu0
        %v6018 = vadd.f32 %v5936, %v6017
        %6019 = vmatprep.mubr.f32.mxu0 0.0
        %6020 = vmatmul.mubr.f32.gmra.mxu0 %v5861
        %v6021 = vpop.f32.mrf.mxu0
        %v6022 = vadd.f32 %v5932, %v6021
        %v6023 = vpop.f32.mrf.mxu0
        %v6024 = vadd.f32 %v5936, %v6023
        %6025 = vmatprep.mubr.f32.mxu0 0.0
        %6026 = vmatmul.mubr.f32.gmra.mxu0 %v5862
        %v6027 = vpop.f32.mrf.mxu0
        %v6028 = vadd.f32 %v5932, %v6027
        %v6029 = vpop.f32.mrf.mxu0
        %v6030 = vadd.f32 %v5936, %v6029
        %6031 = vdwg.mxu0
        %6032 = vmatprep.subr.mxu0 %v5926
        %6033 = vmatpush1.msra.mxu0 %v5925
        %6034 = vmatprep.subr.mxu0 %v5922
        %6035 = vmatpush1.msra.mxu0 %v5921
        %6036 = vmatprep.subr.mxu0 %v5918
        %6037 = vmatpush1.msra.mxu0 %v5917
        %6038 = vmatprep.subr.mxu0 %v5914
        %6039 = vmatpush1.msra.mxu0 %v5913
        %6040 = vmatprep.subr.mxu0 %v5910
        %6041 = vmatpush1.msra.mxu0 %v5909
        %6042 = vmatprep.subr.mxu0 %v5906
        %6043 = vmatpush1.msra.mxu0 %v5905
        %6044 = vmatprep.subr.mxu0 %v5902
        %6045 = vmatpush1.msra.mxu0 %v5901
        %6046 = vmatprep.subr.mxu0 %v5898
        %6047 = vmatpush1.msra.mxu0 %v5897
        %6048 = vmatprep.subr.mxu0 %v5894
        %6049 = vmatpush1.msra.mxu0 %v5893
        %6050 = vmatprep.subr.mxu0 %v5890
        %6051 = vmatpush1.msra.mxu0 %v5889
        %6052 = vmatprep.subr.mxu0 %v5886
        %6053 = vmatpush1.msra.mxu0 %v5885
        %6054 = vmatprep.subr.mxu0 %v5882
        %6055 = vmatpush1.msra.mxu0 %v5881
        %6056 = vmatprep.subr.mxu0 %v5878
        %6057 = vmatpush1.msra.mxu0 %v5877
        %6058 = vmatprep.subr.mxu0 %v5874
        %6059 = vmatpush1.msra.mxu0 %v5873
        %6060 = vmatprep.subr.mxu0 %v5870
        %6061 = vmatpush1.msra.mxu0 %v5869
        %6062 = vmatprep.subr.mxu0 %v5866
        %6063 = vmatpush1.msra.mxu0 %v5865
        %6064 = vmatprep.subr.mxu0 0.0
        %6065 = vmatpush2.msra.mxu0 0.0
        %6066 = vmatprep.subr.mxu0 0.0
        %6067 = vmatpush2.msra.mxu0 0.0
        %6068 = vmatprep.subr.mxu0 0.0
        %6069 = vmatpush2.msra.mxu0 0.0
        %6070 = vmatprep.subr.mxu0 0.0
        %6071 = vmatpush2.msra.mxu0 0.0
        %6072 = vmatprep.subr.mxu0 0.0
        %6073 = vmatpush2.msra.mxu0 0.0
        %6074 = vmatprep.subr.mxu0 0.0
        %6075 = vmatpush2.msra.mxu0 0.0
        %6076 = vmatprep.subr.mxu0 0.0
        %6077 = vmatpush2.msra.mxu0 0.0
        %6078 = vmatprep.subr.mxu0 0.0
        %6079 = vmatpush2.msra.mxu0 0.0
        %6080 = vmatprep.subr.mxu0 0.0
        %6081 = vmatpush2.msra.mxu0 0.0
        %6082 = vmatprep.subr.mxu0 0.0
        %6083 = vmatpush2.msra.mxu0 0.0
        %6084 = vmatprep.subr.mxu0 0.0
        %6085 = vmatpush2.msra.mxu0 0.0
        %6086 = vmatprep.subr.mxu0 0.0
        %6087 = vmatpush2.msra.mxu0 0.0
        %6088 = vmatprep.subr.mxu0 0.0
        %6089 = vmatpush2.msra.mxu0 0.0
        %6090 = vmatprep.subr.mxu0 0.0
        %6091 = vmatpush2.msra.mxu0 0.0
        %6092 = vmatprep.subr.mxu0 0.0
        %6093 = vmatpush2.msra.mxu0 0.0
        %6094 = vmatprep.subr.mxu0 0.0
        %6095 = vmatpush2.msra.mxu0 0.0
        %6096 = vmatprep.mubr.f32.mxu0 0.0
        %6097 = vmatmul.mubr.f32.gmra.mxu0 %v5860
        %v6098 = vpop.f32.mrf.mxu0
        %v6099 = vadd.f32 %v5940, %v6098
        %v6100 = vpop.f32.mrf.mxu0
        %v6101 = vadd.f32 %v5944, %v6100
        %6102 = vmatprep.mubr.f32.mxu0 0.0
        %6103 = vmatmul.mubr.f32.gmra.mxu0 %v5861
        %v6104 = vpop.f32.mrf.mxu0
        %v6105 = vadd.f32 %v5940, %v6104
        %v6106 = vpop.f32.mrf.mxu0
        %v6107 = vadd.f32 %v5944, %v6106
        %6108 = vmatprep.mubr.f32.mxu0 0.0
        %6109 = vmatmul.mubr.f32.gmra.mxu0 %v5862
        %v6110 = vpop.f32.mrf.mxu0
        %v6111 = vadd.f32 %v5940, %v6110
        %v6112 = vpop.f32.mrf.mxu0
        %v6113 = vadd.f32 %v5944, %v6112
        %6114 = vdwg.mxu0
        %v6115 = vadd.f32 %v6016, %v5463
        %v6116 = vadd.f32 %v6018, %v5464
        %v6117 = vadd.f32 %v6099, %v5465
        %v6118 = vadd.f32 %v6101, %v5466
        %v6119 = vadd.f32 %v6022, %v5467
        %v6120 = vadd.f32 %v6024, %v5468
        %v6121 = vadd.f32 %v6105, %v5469
        %v6122 = vadd.f32 %v6107, %v5470
        %v6123 = vadd.f32 %v6028, %v5471
        %v6124 = vadd.f32 %v6030, %v5472
        %v6125 = vadd.f32 %v6111, %v5473
        %v6126 = vadd.f32 %v6113, %v5474
        %v6127 = vld [vmem:[%s1016] sm:$0xf]
        %v6128 = vld [vmem:[%s1025] sm:$0xf]
        %v6129 = vadd.f32 %v6115, %v6116
        %v6130 = vadd.f32 %v6129, %v6117
        %v6131 = vadd.f32 %v6130, %v6118
        %6132 = vadd.xlane.f32.xlu0 %v6131
        %v6133 = vpop.xlane.xlu0 %6132
        %v6134 = vadd.f32 %v6119, %v6120
        %v6135 = vadd.f32 %v6134, %v6121
        %v6136 = vadd.f32 %v6135, %v6122
        %6137 = vadd.xlane.f32.xlu0 %v6136
        %v6138 = vpop.xlane.xlu0 %6137
        %v6139 = vsel %vm1199, %v6123, 0.0
        %v6140 = vsel %vm1199, %v6124, 0.0
        %v6141 = vadd.f32 %v6139, %v6140
        %v6142 = vsel %vm1199, %v6125, 0.0
        %v6143 = vadd.f32 %v6141, %v6142
        %v6144 = vsel %vm1199, %v6126, 0.0
        %v6145 = vadd.f32 %v6143, %v6144
        %6146 = vadd.xlane.f32.xlu0 %v6145
        %v6147 = vpop.xlane.xlu0 %6146
        %v6148 = vmul.f32 %v6133, %v1209
        %v6149 = vmul.f32 %v6138, %v1209
        %v6150 = vmul.f32 %v6147, %v1209
        %v6151 = vsub.f32 %v6115, %v6148
        %v6152 = vsub.f32 %v6116, %v6148
        %v6153 = vsub.f32 %v6117, %v6148
        %v6154 = vsub.f32 %v6118, %v6148
        %v6155 = vsub.f32 %v6119, %v6149
        %v6156 = vsub.f32 %v6120, %v6149
        %v6157 = vsub.f32 %v6121, %v6149
        %v6158 = vsub.f32 %v6122, %v6149
        %v6159 = vsub.f32 %v6123, %v6150
        %v6160 = vsub.f32 %v6124, %v6150
        %v6161 = vsub.f32 %v6125, %v6150
        %v6162 = vsub.f32 %v6126, %v6150
        %v6163 = vmul.f32 %v6151, %v6151
        %v6164 = vmul.f32 %v6152, %v6152
        %v6165 = vmul.f32 %v6153, %v6153
        %v6166 = vmul.f32 %v6154, %v6154
        %v6167 = vmul.f32 %v6155, %v6155
        %v6168 = vmul.f32 %v6156, %v6156
        %v6169 = vmul.f32 %v6157, %v6157
        %v6170 = vmul.f32 %v6158, %v6158
        %v6171 = vmul.f32 %v6159, %v6159
        %v6172 = vmul.f32 %v6160, %v6160
        %v6173 = vmul.f32 %v6161, %v6161
        %v6174 = vmul.f32 %v6162, %v6162
        %v6175 = vadd.f32 %v6163, %v6164
        %v6176 = vadd.f32 %v6175, %v6165
        %v6177 = vadd.f32 %v6176, %v6166
        %6178 = vadd.xlane.f32.xlu0 %v6177
        %v6179 = vpop.xlane.xlu0 %6178
        %v6180 = vadd.f32 %v6167, %v6168
        %v6181 = vadd.f32 %v6180, %v6169
        %v6182 = vadd.f32 %v6181, %v6170
        %6183 = vadd.xlane.f32.xlu0 %v6182
        %v6184 = vpop.xlane.xlu0 %6183
        %v6185 = vsel %vm1199, %v6171, 0.0
        %v6186 = vsel %vm1199, %v6172, 0.0
        %v6187 = vadd.f32 %v6185, %v6186
        %v6188 = vsel %vm1199, %v6173, 0.0
        %v6189 = vadd.f32 %v6187, %v6188
        %v6190 = vsel %vm1199, %v6174, 0.0
        %v6191 = vadd.f32 %v6189, %v6190
        %6192 = vadd.xlane.f32.xlu0 %v6191
        %v6193 = vpop.xlane.xlu0 %6192
        %v6194 = vmul.f32 %v6179, %v1209
        %v6195 = vmul.f32 %v6184, %v1209
        %v6196 = vmul.f32 %v6193, %v1209
        %v6197 = vadd.f32 %v6194, 1e-05
        %v6198 = vadd.f32 %v6195, 1e-05
        %v6199 = vadd.f32 %v6196, 1e-05
        %v6200 = vrsqrt.pop %v6197
        %v6201 = vrsqrt.pop %v6198
        %v6202 = vrsqrt.pop %v6199
        %v6203 = vmul.f32 %v6151, %v6200
        %v6204 = vmul.f32 %v6152, %v6200
        %v6205 = vmul.f32 %v6153, %v6200
        %v6206 = vmul.f32 %v6154, %v6200
        %v6207 = vmul.f32 %v6155, %v6201
        %v6208 = vmul.f32 %v6156, %v6201
        %v6209 = vmul.f32 %v6157, %v6201
        %v6210 = vmul.f32 %v6158, %v6201
        %v6211 = vmul.f32 %v6159, %v6202
        %v6212 = vmul.f32 %v6160, %v6202
        %v6213 = vmul.f32 %v6161, %v6202
        %v6214 = vmul.f32 %v6162, %v6202
        %v6216 = vlaneseq
        %v6217 = vshrl.u32 %v6216, 7
        %v6218 = vsub.s32 0, %v6217
        %v6219 = vrot.slane %v6127, %v6218
        %v6220 = vlaneseq
        %v6221 = vshrl.u32 %v6220, 7
        %v6222 = vsub.s32 1, %v6221
        %v6223 = vrot.slane %v6127, %v6222
        %v6224 = vlaneseq
        %v6225 = vshrl.u32 %v6224, 7
        %v6226 = vsub.s32 2, %v6225
        %v6227 = vrot.slane %v6127, %v6226
        %v6228 = vlaneseq
        %v6229 = vshrl.u32 %v6228, 7
        %v6230 = vsub.s32 3, %v6229
        %v6231 = vrot.slane %v6127, %v6230
        %v6236 = vmul.f32 %v6203, %v6219
        %v6237 = vmul.f32 %v6204, %v6223
        %v6238 = vmul.f32 %v6205, %v6227
        %v6239 = vmul.f32 %v6206, %v6231
        %v6240 = vmul.f32 %v6207, %v6219
        %v6241 = vmul.f32 %v6208, %v6223
        %v6242 = vmul.f32 %v6209, %v6227
        %v6243 = vmul.f32 %v6210, %v6231
        %v6244 = vmul.f32 %v6211, %v6219
        %v6245 = vmul.f32 %v6212, %v6223
        %v6246 = vmul.f32 %v6213, %v6227
        %v6247 = vmul.f32 %v6214, %v6231
        %v6249 = vlaneseq
        %v6250 = vshrl.u32 %v6249, 7
        %v6251 = vsub.s32 0, %v6250
        %v6252 = vrot.slane %v6128, %v6251
        %v6253 = vlaneseq
        %v6254 = vshrl.u32 %v6253, 7
        %v6255 = vsub.s32 1, %v6254
        %v6256 = vrot.slane %v6128, %v6255
        %v6257 = vlaneseq
        %v6258 = vshrl.u32 %v6257, 7
        %v6259 = vsub.s32 2, %v6258
        %v6260 = vrot.slane %v6128, %v6259
        %v6261 = vlaneseq
        %v6262 = vshrl.u32 %v6261, 7
        %v6263 = vsub.s32 3, %v6262
        %v6264 = vrot.slane %v6128, %v6263
        %v6269 = vadd.f32 %v6236, %v6252
        %v6270 = vadd.f32 %v6237, %v6256
        %v6271 = vadd.f32 %v6238, %v6260
        %v6272 = vadd.f32 %v6239, %v6264
        %v6273 = vadd.f32 %v6240, %v6252
        %v6274 = vadd.f32 %v6241, %v6256
        %v6275 = vadd.f32 %v6242, %v6260
        %v6276 = vadd.f32 %v6243, %v6264
        %v6277 = vadd.f32 %v6244, %v6252
        %v6278 = vadd.f32 %v6245, %v6256
        %v6279 = vadd.f32 %v6246, %v6260
        %v6280 = vadd.f32 %v6247, %v6264
        %6281 = vst [vmem:[#allocation2] sm:$0xff] %v6269
        %6282 = vst [vmem:[#allocation2 + $0x8] sm:$0xff] %v6270
        %6283 = vst [vmem:[#allocation2 + $0x10] sm:$0xff] %v6271
        %6284 = vst [vmem:[#allocation2 + $0x18] sm:$0xff] %v6272
        %6285 = vst [vmem:[#allocation2 + $0x20] sm:$0xff] %v6273
        %6286 = vst [vmem:[#allocation2 + $0x28] sm:$0xff] %v6274
        %6287 = vst [vmem:[#allocation2 + $0x30] sm:$0xff] %v6275
        %6288 = vst [vmem:[#allocation2 + $0x38] sm:$0xff] %v6276
        %6289 = vst [vmem:[#allocation2 + $0x40] sm:$0xf] %v6277
        %6290 = vst [vmem:[#allocation2 + $0x48] sm:$0xf] %v6278
        %6291 = vst [vmem:[#allocation2 + $0x50] sm:$0xf] %v6279
        %6292 = vst [vmem:[#allocation2 + $0x58] sm:$0xf] %v6280
        %p6293 = scmp.eq.s32.totalorder %s55, 3
        // Predicated region
        $region165: #{basic_net4_forward.1} parent=91 // pred_check
          %p6294 = pneg %p6293
        $region166: #{basic_net4_forward.1} parent=91 // pred_check_branch
          %6296 = sbr.rel (%p6294) target = $region168
        $region167: #{basic_net4_forward.1} parent=91 // pred_region
          %v6297 = vld [vmem:[#allocation2] sm:$0xfc]
          %v6298 = vld [vmem:[#allocation2 + $0x8] sm:$0xfc]
          %v6299 = vld [vmem:[#allocation2 + $0x10] sm:$0xfc]
          %v6300 = vld [vmem:[#allocation2 + $0x18] sm:$0xfc]
          %v6301 = vld [vmem:[#allocation2 + $0x20] sm:$0x3]
          %v6302 = vld [vmem:[#allocation2 + $0x28] sm:$0x3]
          %v6303 = vld [vmem:[#allocation2 + $0x30] sm:$0x3]
          %v6304 = vld [vmem:[#allocation2 + $0x38] sm:$0x3]
          %v6313 = vrot.slane %v6297, 2
          %v6314 = vrot.slane %v6301, 2
          %v6315 = vsel %vm3988, %v6313, %v6314
          %v6316 = vrot.slane %v6298, 2
          %v6317 = vrot.slane %v6302, 2
          %v6318 = vsel %vm3988, %v6316, %v6317
          %v6319 = vrot.slane %v6299, 2
          %v6320 = vrot.slane %v6303, 2
          %v6321 = vsel %vm3988, %v6319, %v6320
          %v6322 = vrot.slane %v6300, 2
          %v6323 = vrot.slane %v6304, 2
          %v6324 = vsel %vm3988, %v6322, %v6323
          %v6329 = vrot.slane %v6315, 4
          %v6330 = vadd.f32 %v6315, %v6329
          %v6331 = vrot.slane %v6330, 2
          %v6332 = vadd.f32 %v6330, %v6331
          %v6333 = vrot.slane %v6332, 1
          %v6334 = vadd.f32 %v6332, %v6333
          %v6335 = vrot.slane %v6318, 4
          %v6336 = vadd.f32 %v6318, %v6335
          %v6337 = vrot.slane %v6336, 2
          %v6338 = vadd.f32 %v6336, %v6337
          %v6339 = vrot.slane %v6338, 1
          %v6340 = vadd.f32 %v6338, %v6339
          %v6341 = vrot.slane %v6321, 4
          %v6342 = vadd.f32 %v6321, %v6341
          %v6343 = vrot.slane %v6342, 2
          %v6344 = vadd.f32 %v6342, %v6343
          %v6345 = vrot.slane %v6344, 1
          %v6346 = vadd.f32 %v6344, %v6345
          %v6347 = vrot.slane %v6324, 4
          %v6348 = vadd.f32 %v6324, %v6347
          %v6349 = vrot.slane %v6348, 2
          %v6350 = vadd.f32 %v6348, %v6349
          %v6351 = vrot.slane %v6350, 1
          %v6352 = vadd.f32 %v6350, %v6351
          %v6353 = vrcp.pop 8.0
          %v6354 = vmul.f32 %v6334, %v6353
          %v6355 = vmul.f32 %v6340, %v6353
          %v6356 = vmul.f32 %v6346, %v6353
          %v6357 = vmul.f32 %v6352, %v6353
          %v6362 = vcombine.low %v6354, %v6355
          %v6363 = vcombine.low %v6356, %v6357
          %v6365 = vunpack.c.l.s4 1966171168
          %v6366 = vunpack.c.0.s8 %v6365
          %v6367 = vlaneseq
          %v6368 = vshrl.u32 %v6367, 7
          %v6369 = vsub.s32 %v6366, %v6368
          %v6370 = vrot.slane %v6362, %v6369
          %v6372 = vunpack.c.l.s4 1966171168
          %v6373 = vunpack.c.0.s8 %v6372
          %v6374 = vlaneseq
          %v6375 = vshrl.u32 %v6374, 7
          %v6376 = vsub.s32 %v6373, %v6375
          %v6377 = vrot.slane %v6363, %v6376
          %v6378 = vcombine.low %v6370, %v6377
          %v6380 = vunpack.c.l.s4 1966171168
          %v6381 = vunpack.c.0.s8 %v6380
          %v6382 = vlaneseq
          %v6383 = vshrl.u32 %v6382, 7
          %v6384 = vsub.s32 %v6381, %v6383
          %v6385 = vrot.slane %v6378, %v6384
          %v6387 = vlaneseq
          %vm6388 = vcmp.ge.s32.totalorder %v6387, 0
          %vm6389 = vcmp.lt.s32.totalorder %v6387, 512
          %vm6390 = vmand %vm6388, %vm6389
          %6391 = vst.msk [vmem:[#allocation34] ss:$2 sm:$0xf] %vm6390, %v6385
          %v6392 = vld [vmem:[#allocation2 + $0x20] sm:$0xf0]
          %v6393 = vld [vmem:[#allocation2 + $0x28] sm:$0xf0]
          %v6394 = vld [vmem:[#allocation2 + $0x30] sm:$0xf0]
          %v6395 = vld [vmem:[#allocation2 + $0x38] sm:$0xf0]
          %v6396 = vld [vmem:[#allocation2 + $0x40] sm:$0xf]
          %v6397 = vld [vmem:[#allocation2 + $0x48] sm:$0xf]
          %v6398 = vld [vmem:[#allocation2 + $0x50] sm:$0xf]
          %v6399 = vld [vmem:[#allocation2 + $0x58] sm:$0xf]
          %v6408 = vrot.slane %v6392, 4
          %v6409 = vrot.slane %v6396, 4
          %v6410 = vsel %vm1199, %v6408, %v6409
          %v6411 = vrot.slane %v6393, 4
          %v6412 = vrot.slane %v6397, 4
          %v6413 = vsel %vm1199, %v6411, %v6412
          %v6414 = vrot.slane %v6394, 4
          %v6415 = vrot.slane %v6398, 4
          %v6416 = vsel %vm1199, %v6414, %v6415
          %v6417 = vrot.slane %v6395, 4
          %v6418 = vrot.slane %v6399, 4
          %v6419 = vsel %vm1199, %v6417, %v6418
          %v6424 = vrot.slane %v6410, 4
          %v6425 = vadd.f32 %v6410, %v6424
          %v6426 = vrot.slane %v6425, 2
          %v6427 = vadd.f32 %v6425, %v6426
          %v6428 = vrot.slane %v6427, 1
          %v6429 = vadd.f32 %v6427, %v6428
          %v6430 = vrot.slane %v6413, 4
          %v6431 = vadd.f32 %v6413, %v6430
          %v6432 = vrot.slane %v6431, 2
          %v6433 = vadd.f32 %v6431, %v6432
          %v6434 = vrot.slane %v6433, 1
          %v6435 = vadd.f32 %v6433, %v6434
          %v6436 = vrot.slane %v6416, 4
          %v6437 = vadd.f32 %v6416, %v6436
          %v6438 = vrot.slane %v6437, 2
          %v6439 = vadd.f32 %v6437, %v6438
          %v6440 = vrot.slane %v6439, 1
          %v6441 = vadd.f32 %v6439, %v6440
          %v6442 = vrot.slane %v6419, 4
          %v6443 = vadd.f32 %v6419, %v6442
          %v6444 = vrot.slane %v6443, 2
          %v6445 = vadd.f32 %v6443, %v6444
          %v6446 = vrot.slane %v6445, 1
          %v6447 = vadd.f32 %v6445, %v6446
          %v6448 = vmul.f32 %v6429, %v6353
          %v6449 = vmul.f32 %v6435, %v6353
          %v6450 = vmul.f32 %v6441, %v6353
          %v6451 = vmul.f32 %v6447, %v6353
          %v6456 = vcombine.low %v6448, %v6449
          %v6457 = vcombine.low %v6450, %v6451
          %v6459 = vunpack.c.l.s4 1966171168
          %v6460 = vunpack.c.0.s8 %v6459
          %v6461 = vlaneseq
          %v6462 = vshrl.u32 %v6461, 7
          %v6463 = vsub.s32 %v6460, %v6462
          %v6464 = vrot.slane %v6456, %v6463
          %v6466 = vunpack.c.l.s4 1966171168
          %v6467 = vunpack.c.0.s8 %v6466
          %v6468 = vlaneseq
          %v6469 = vshrl.u32 %v6468, 7
          %v6470 = vsub.s32 %v6467, %v6469
          %v6471 = vrot.slane %v6457, %v6470
          %v6472 = vcombine.low %v6464, %v6471
          %v6474 = vunpack.c.l.s4 1966171168
          %v6475 = vunpack.c.0.s8 %v6474
          %v6476 = vlaneseq
          %v6477 = vshrl.u32 %v6476, 7
          %v6478 = vsub.s32 %v6475, %v6477
          %v6479 = vrot.slane %v6472, %v6478
          %s6481 = scalar_lea.vmem [#allocation34], 1
          %6482 = vst.msk [vmem:[%s6481] ss:$2 sm:$0xf] %vm6390, %v6479
        $region168: #{basic_net4_forward.1} parent=91 // pred_fallthru
          _
        // Predicated region
        $region169: #{basic_net4_forward.1} parent=91 // pred_check
          %p6483 = pneg %p526
        $region170: #{basic_net4_forward.1} parent=91 // pred_check_branch
          %6485 = sbr.rel (%p6483) target = $region172
        $region171: #{basic_net4_forward.1} parent=91 // pred_region
          %s6487 = ssub.s32 128, 128
          %6488 = vsyncadd [#allocation9], %s6487
          %s6490 = sshll.u32 [#allocation34], 4
          %s6491 = int_to_ptr.vmem [resolvable:$true] %s6490
          %6493 = dma.vmem_to_hbm [thread:$0]  %s6491, 128, %s18, [#allocation9]
        $region172: #{basic_net4_forward.1} parent=91 // pred_fallthru
          _
        // Predicated region
        $region173: #{basic_net4_forward.1} parent=91 // pred_check
          %p6494 = pneg %p526
        $region174: #{basic_net4_forward.1} parent=91 // pred_check_branch
          %6496 = sbr.rel (%p6494) target = $region176
        $region175: #{basic_net4_forward.1} parent=91 // pred_region
          %6497 = dma.done [#allocation9], 128
        $region176: #{basic_net4_forward.1} parent=91 // pred_fallthru
          _
      $region92: #{basic_net4_forward.1} parent=5 // pred_fallthru
        _
      %p6498 = scmp.le.s32.totalorder 2, %s50
      // Predicated region
      $region177: #{basic_net4_forward.1} parent=5 // pred_check
        %p6499 = pneg %p6498
      $region178: #{basic_net4_forward.1} parent=5 // pred_check_branch
        %6501 = sbr.rel (%p6499) target = $region180
      $region179: #{basic_net4_forward.1} parent=5 // pred_region
        %s6502 = ssub.s32 %s50, 2
      $region180: #{basic_net4_forward.1} parent=5 // pred_fallthru
        _
    $region6: #{basic_net4_forward.1} parent=1 // loop_footer
      %s54 = sadd.s32 1, %s50
    $region7: #{basic_net4_forward.1} parent=1 // loop_footer_branch
      %49 = sbr.rel target = $region3
    $region8: #{basic_net4_forward.1} parent=1 // loop_exit
      _
    %6503 = vsyncpa [#allocation8], 1
    %s6504 = scalar_lea.sflag [#allocation8], 1
    %6505 = vsyncpa %s6504, 1
    %6506 = vsyncpa [#allocation11], 1
    %s6507 = scalar_lea.sflag [#allocation11], 1
    %6508 = vsyncpa %s6507, 1
    %6509 = vsyncpa [#allocation14], 1
    %s6510 = scalar_lea.sflag [#allocation14], 1
    %6511 = vsyncpa %s6510, 1
    %6512 = vsyncpa [#allocation17], 1
    %s6513 = scalar_lea.sflag [#allocation17], 1
    %6514 = vsyncpa %s6513, 1
    %6515 = vsyncpa [#allocation20], 1
    %s6516 = scalar_lea.sflag [#allocation20], 1
    %6517 = vsyncpa %s6516, 1
    %6518 = vsyncpa [#allocation23], 1
    %s6519 = scalar_lea.sflag [#allocation23], 1
    %6520 = vsyncpa %s6519, 1
    %6521 = vsyncpa [#allocation26], 1
    %s6522 = scalar_lea.sflag [#allocation26], 1
    %6523 = vsyncpa %s6522, 1
    %6524 = vsyncpa [#allocation29], 1
    %s6525 = scalar_lea.sflag [#allocation29], 1
    %6526 = vsyncpa %s6525, 1
    %6527 = vsyncpa [#allocation32], 1
    %s6528 = scalar_lea.sflag [#allocation32], 1
    %6529 = vsyncpa %s6528, 1
    %6530 = vsyncpa [#allocation9], 1
    %s6531 = scalar_lea.sflag [#allocation9], 1
    %6532 = vsyncpa %s6531, 1

</llo_original>
